<compile_context>
chip_gen: v7x
topology: tpu7x:2x2x1
jax: 0.10.0
libtpu: 0.0.40
codegen_flags: <defaults>
</compile_context>

<pallas_src>
import jax
import jax.numpy as jnp
from jax import lax
from jax.experimental import pallas as pl
from jax.experimental.pallas import tpu as pltpu

COMPUTE_DTYPE = jnp.bfloat16      # inter-kernel activation dtype (halves HBM traffic)
PAD = 128                         # lane halo of the in-VMEM tap buffer (needs W + 1 <= PAD)

# Static model configuration (kept OUT of the jitted params pytree).
BACKBONE_CHANNELS = (3, 8, 16, 32)   # synthetic 3-stage stride-2 conv backbone
CIN_PAD = 8                          # input channels zero-padded 3 -> 8 (sublane alignment)
DECODER_IN_CHANNELS = (32, 16, 8)    # deepest-first (IntermediateLayerGetter reversed)
DECODER_SCALES = (2, 2, 2)
OUT_CHANNELS = 2


# ----------------------------------------------------------------------------
# In-kernel helpers
# ----------------------------------------------------------------------------
def _is_pow2(v):
    return (v & (v - 1)) == 0


def _spatial_indices(L, H, W):
    """(1, L) int32 row / column indices of the row-major flattened HxW image(s)."""
    pos = lax.broadcasted_iota(jnp.int32, (1, L), 1)
    if _is_pow2(W):
        w_idx = pos & (W - 1)
        hq = pos >> (W.bit_length() - 1)
    else:
        w_idx = pos % W
        hq = pos // W
    h_idx = (hq & (H - 1)) if _is_pow2(H) else (hq % H)
    return h_idx, w_idx


def _emit_patches(patch_ref, xpad_ref, x, H, W):
    """Write the 9 (3x3) taps of x (C, L=H*W) into patch_ref (9*C, L) as one im2col slab.

    xpad_ref (C, L + 2*PAD) must have zero side strips; its middle is overwritten here.
    Tap row-block t = (dy+1)*3 + (dx+1) holds x shifted by (dy, dx) in the row-major
    flattened spatial domain, zeroed where the tap crosses an image border, so a single
    K = 9*C dot against patch_ref is exactly the zero-padded 3x3 "same" convolution.
    """
    C, L = x.shape
    xpad_ref[:, PAD:PAD + L] = x.astype(xpad_ref.dtype)
    h_idx, w_idx = _spatial_indices(L, H, W)
    t = 0
    for dy in (-1, 0, 1):
        my = None if dy == 0 else (h_idx >= 1 if dy < 0 else h_idx <= H - 2)
        for dx in (-1, 0, 1):
            mx = None if dx == 0 else (w_idx >= 1 if dx < 0 else w_idx <= W - 2)
            off = dy * W + dx
            tap = x if off == 0 else xpad_ref[:, PAD + off:PAD + off + L]
            if my is not None and mx is not None:
                m = jnp.logical_and(my, mx)
            else:
                m = my if my is not None else mx
            if m is not None:
                tap = jnp.where(m, tap, 0.0)
            patch_ref[t * C:(t + 1) * C, :] = tap.astype(patch_ref.dtype)
            t += 1


# ----------------------------------------------------------------------------
# Kernel 1: 3x3 "same" conv (folded BN) + ReLU (+ optional fused 1x1 head)
#           used for the backbone stages (stride-2 handled by JAX subsample).
# ----------------------------------------------------------------------------
def _make_conv3x3_kernel(H, W, has_head):
    def kernel(*refs):
        if has_head:
            x_ref, w_ref, s_ref, wh_ref, sh_ref, o_ref, patch_ref, xpad_ref = refs
        else:
            x_ref, w_ref, s_ref, o_ref, patch_ref, xpad_ref = refs
        xpad_ref[...] = jnp.zeros(xpad_ref.shape, xpad_ref.dtype)
        x = x_ref[0].astype(jnp.float32)                       # (Ci, L)
        _emit_patches(patch_ref, xpad_ref, x, H, W)
        t = jnp.dot(w_ref[...], patch_ref[...],                # single K = 9*Ci dot
                    preferred_element_type=jnp.float32)
        t = jnp.maximum(t + s_ref[...], 0.0)
        if has_head:
            y = jnp.dot(wh_ref[...], t, preferred_element_type=jnp.float32) + sh_ref[...]
        else:
            y = t
        o_ref[0] = y.astype(o_ref.dtype)
    return kernel


def conv3x3_bn_relu(x, w, s, H, W, head=None, out_dtype=COMPUTE_DTYPE):
    """x: (N, Ci, H*W) channel-first.  w: (Co, 9*Ci), s: (Co, 1); head=(Wh, sh) optional."""
    assert W + 1 <= PAD
    N, Ci, L = x.shape
    Co = w.shape[0]
    Cf = head[0].shape[0] if head is not None else Co
    in_specs = [
        pl.BlockSpec((1, Ci, L), lambda n: (n, 0, 0)),
        pl.BlockSpec(w.shape, lambda n: (0, 0)),
        pl.BlockSpec(s.shape, lambda n: (0, 0)),
    ]
    args = [x.astype(COMPUTE_DTYPE), w, s]
    if head is not None:
        in_specs += [pl.BlockSpec(head[0].shape, lambda n: (0, 0)),
                     pl.BlockSpec(head[1].shape, lambda n: (0, 0))]
        args += [head[0], head[1]]
    return pl.pallas_call(
        _make_conv3x3_kernel(H, W, head is not None),
        out_shape=jax.ShapeDtypeStruct((N, Cf, L), out_dtype),
        grid_spec=pltpu.PrefetchScalarGridSpec(
            num_scalar_prefetch=0,
            grid=(N,),
            in_specs=in_specs,
            out_specs=pl.BlockSpec((1, Cf, L), lambda n: (n, 0, 0)),
            scratch_shapes=[pltpu.VMEM((9 * Ci, L), jnp.float32),
                            pltpu.VMEM((Ci, L + 2 * PAD), jnp.float32)],
        ),
        compiler_params=pltpu.CompilerParams(dimension_semantics=("parallel",)),
    )(*args)


# ----------------------------------------------------------------------------
# Kernel 2: one full ExpansionBlock: [pre-ReLU] -> concat-free 1x1 merge ->
#           BasicBlock (two K=9*C-dot 3x3 convs, residual, ReLUs) -> 1x1 head.
# ----------------------------------------------------------------------------
def _make_block_kernel(H, W, has_merge, pre_relu, head_sigmoid):
    def kernel(*refs):
        if has_merge:
            (x1_ref, x2_ref, wt_ref, wb_ref, sm_ref, w1_ref, s1_ref,
             w2_ref, s2_ref, wh_ref, sh_ref, o_ref, patch_ref, xpad_ref) = refs
        else:
            (x1_ref, w1_ref, s1_ref, w2_ref, s2_ref,
             wh_ref, sh_ref, o_ref, patch_ref, xpad_ref) = refs
        xpad_ref[...] = jnp.zeros(xpad_ref.shape, xpad_ref.dtype)

        x1 = x1_ref[0].astype(jnp.float32)
        if pre_relu:                              # ReLU(bn0(upsample(scale0(.)))) fused here
            x1 = jnp.maximum(x1, 0.0)
        if has_merge:                             # cat((out, shortcut),1) + conv1x1 + bn1 + relu
            x2 = x2_ref[0].astype(jnp.float32)
            v = (jnp.dot(wt_ref[...], x1, preferred_element_type=jnp.float32)
                 + jnp.dot(wb_ref[...], x2, preferred_element_type=jnp.float32)
                 + sm_ref[...])
            v = jnp.maximum(v, 0.0)
        else:
            v = x1

        # BasicBlock: conv3x3-bn-relu -> conv3x3-bn (+ identity) -> relu
        _emit_patches(patch_ref, xpad_ref, v, H, W)
        h1 = jnp.dot(w1_ref[...], patch_ref[...], preferred_element_type=jnp.float32)
        h1 = jnp.maximum(h1 + s1_ref[...], 0.0)
        _emit_patches(patch_ref, xpad_ref, h1, H, W)
        r = jnp.dot(w2_ref[...], patch_ref[...], preferred_element_type=jnp.float32)
        r = jnp.maximum(r + s2_ref[...] + v, 0.0)

        # fused 1x1 head (next block's scale0+bn0 or OutputTransition conv + sigmoid)
        y = jnp.dot(wh_ref[...], r, preferred_element_type=jnp.float32) + sh_ref[...]
        if head_sigmoid:
            y = jax.nn.sigmoid(y)
        o_ref[0] = y.astype(o_ref.dtype)
    return kernel


def decoder_block(x1, x2, p, H, W, pre_relu=True, head_sigmoid=False,
                  out_dtype=COMPUTE_DTYPE):
    """x1: (N, C1, H*W) low-res path (scale0 output, already upsampled); x2: shortcut or None."""
    assert W + 1 <= PAD
    N, C1, L = x1.shape
    Cm = p["w1"].shape[0]
    Ch = p["head_w"].shape[0]
    has_merge = x2 is not None
    args = [x1.astype(COMPUTE_DTYPE)]
    in_specs = [pl.BlockSpec((1, C1, L), lambda n: (n, 0, 0))]
    if has_merge:
        C2 = x2.shape[1]
        args += [x2.astype(COMPUTE_DTYPE), p["wt"], p["wb"], p["sm"]]
        in_specs += [pl.BlockSpec((1, C2, L), lambda n: (n, 0, 0)),
                     pl.BlockSpec(p["wt"].shape, lambda n: (0, 0)),
                     pl.BlockSpec(p["wb"].shape, lambda n: (0, 0)),
                     pl.BlockSpec(p["sm"].shape, lambda n: (0, 0))]
    for k in ("w1", "s1", "w2", "s2", "head_w", "head_s"):
        args.append(p[k])
        in_specs.append(pl.BlockSpec(p[k].shape, lambda n: (0, 0)))
    return pl.pallas_call(
        _make_block_kernel(H, W, has_merge, pre_relu, head_sigmoid),
        out_shape=jax.ShapeDtypeStruct((N, Ch, L), out_dtype),
        grid_spec=pltpu.PrefetchScalarGridSpec(
            num_scalar_prefetch=0,
            grid=(N,),
            in_specs=in_specs,
            out_specs=pl.BlockSpec((1, Ch, L), lambda n: (n, 0, 0)),
            scratch_shapes=[pltpu.VMEM((9 * Cm, L), jnp.float32),
                            pltpu.VMEM((Cm, L + 2 * PAD), jnp.float32)],
        ),
        compiler_params=pltpu.CompilerParams(dimension_semantics=("parallel",)),
    )(*args)


# ----------------------------------------------------------------------------
# Bilinear resize (align_corners=True) — tiny JAX glue between kernels.
# ----------------------------------------------------------------------------
def bilinear_upsample(x, ho, wo):
    # TODO(synk): non-uniform gather weights; kept in JAX rather than fused in-kernel.
    n, c, h, w = x.shape
    if (h, w) == (ho, wo):
        return x
    xf = x.astype(jnp.float32)
    ys = jnp.arange(ho, dtype=jnp.float32) * ((h - 1) / max(ho - 1, 1))
    xs = jnp.arange(wo, dtype=jnp.float32) * ((w - 1) / max(wo - 1, 1))
    y0 = jnp.clip(jnp.floor(ys).astype(jnp.int32), 0, max(h - 2, 0))
    x0 = jnp.clip(jnp.floor(xs).astype(jnp.int32), 0, max(w - 2, 0))
    y1 = jnp.minimum(y0 + 1, h - 1)
    x1 = jnp.minimum(x0 + 1, w - 1)
    wy = (ys - y0.astype(jnp.float32)).reshape(1, 1, ho, 1)
    wx = (xs - x0.astype(jnp.float32)).reshape(1, 1, 1, wo)
    top = xf[:, :, y0, :] * (1.0 - wy) + xf[:, :, y1, :] * wy
    out = top[:, :, :, x0] * (1.0 - wx) + top[:, :, :, x1] * wx
    return out.astype(x.dtype)


# ----------------------------------------------------------------------------
# Parameter initialization (deterministic synthetic weights; BN folded).
# ----------------------------------------------------------------------------
def bn_fold(gamma, beta, mean, var, eps=1e-5):
    scale = gamma / jnp.sqrt(var + eps)
    return scale, beta - mean * scale


def init_conv(key, kh, kw, cin, cout):
    fan_in = kh * kw * cin
    bound = (3.0 / fan_in) ** 0.5                 # kaiming_uniform_(a=1)
    return jax.random.uniform(key, (kh, kw, cin, cout), jnp.float32, -bound, bound)


def init_bn(key, c):
    k1, k2, k3, k4 = jax.random.split(key, 4)
    gamma = jax.random.uniform(k1, (c,), jnp.float32, 0.5, 1.5)
    beta = jax.random.uniform(k2, (c,), jnp.float32, -0.1, 0.1)
    mean = jax.random.uniform(k3, (c,), jnp.float32, -0.1, 0.1)
    var = jax.random.uniform(k4, (c,), jnp.float32, 0.5, 1.5)
    return bn_fold(gamma, beta, mean, var)


def conv3x3_flat(w_hwio, scale=None):
    """(3,3,ci,co) -> (co, 9*ci), tap-major (ky, kx) then ci; BN scale folded into rows."""
    co = w_hwio.shape[-1]
    w = jnp.transpose(w_hwio, (3, 0, 1, 2)).reshape(co, -1)
    return w if scale is None else w * scale[:, None]


def conv1x1_flat(w_hwio, scale=None):
    """(1,1,ci,co) -> (co, ci); BN scale folded into rows."""
    ci, co = w_hwio.shape[-2], w_hwio.shape[-1]
    w = w_hwio.reshape(ci, co).T
    return w if scale is None else w * scale[:, None]


def _col(v):
    return v.reshape(-1, 1).astype(jnp.float32)


def init_resblock(key, c):
    k1, k2, k3, k4 = jax.random.split(key, 4)
    w1 = init_conv(k1, 3, 3, c, c)
    sc1, sh1 = init_bn(k2, c)
    w2 = init_conv(k3, 3, 3, c, c)
    sc2, sh2 = init_bn(k4, c)
    return {"w1": conv3x3_flat(w1, sc1), "s1": _col(sh1),
            "w2": conv3x3_flat(w2, sc2), "s2": _col(sh2)}


def init_scale0(key, cin, cout):
    k1, k2 = jax.random.split(key)
    w = init_conv(k1, 1, 1, cin, cout)
    sc, sh = init_bn(k2, cout)
    return conv1x1_flat(w, sc), _col(sh)


def init_merge(key, c_out, c_short):
    k1, k2 = jax.random.split(key)
    w = init_conv(k1, 1, 1, c_out + c_short, c_out).reshape(c_out + c_short, c_out)
    sc, sh = init_bn(k2, c_out)
    wt = w[:c_out].T * sc[:, None]     # rows of cat((out, shortcut), 1) acting on `out`
    wb = w[c_out:].T * sc[:, None]     # rows acting on `shortcut`
    return {"wt": wt, "wb": wb, "sm": _col(sh)}


def init_params(key):
    ks = jax.random.split(key, 15)
    c0, c1, c2, c3 = BACKBONE_CHANNELS
    d0, d1, d2 = DECODER_IN_CHANNELS
    p = {}
    # --- backbone (BN folded into conv weights) ---
    w = init_conv(ks[0], 3, 3, c0, c1)
    w = jnp.pad(w, ((0, 0), (0, 0), (0, CIN_PAD - c0), (0, 0)))   # zero rows for padded in-channels
    sc, sh = init_bn(ks[1], c1)
    p["stage1"] = {"w": conv3x3_flat(w, sc), "s": _col(sh)}
    w = init_conv(ks[2], 3, 3, c1, c2)
    sc, sh = init_bn(ks[3], c2)
    p["stage2"] = {"w": conv3x3_flat(w, sc), "s": _col(sh)}
    w = init_conv(ks[4], 3, 3, c2, c3)
    sc, sh = init_bn(ks[5], c3)
    hw, hs = init_scale0(ks[6], d0, d1)           # block0.scale0 (+bn0) fused as stage-3 head
    p["stage3"] = {"w": conv3x3_flat(w, sc), "s": _col(sh), "head_w": hw, "head_s": hs}
    # --- decoder blocks ---
    hw, hs = init_scale0(ks[7], d1, d2)           # block1.scale0 (+bn0) -> block0 head
    p["block0"] = {**init_merge(ks[8], d1, d1), **init_resblock(ks[9], d1),
                   "head_w": hw, "head_s": hs}
    hw, hs = init_scale0(ks[10], d2, d2)          # block2.scale0 (+bn0) -> block1 head
    p["block1"] = {**init_merge(ks[11], d2, d2), **init_resblock(ks[12], d2),
                   "head_w": hw, "head_s": hs}
    wout = init_conv(ks[14], 1, 1, d2, OUT_CHANNELS)   # OutputTransition conv (bias = 0)
    p["block2"] = {**init_resblock(ks[13], d2),
                   "head_w": conv1x1_flat(wout),
                   "head_s": jnp.zeros((OUT_CHANNELS, 1), jnp.float32)}
    return p


# ----------------------------------------------------------------------------
# Forward pass (eval mode: dropout = identity, BN uses folded running stats).
# ----------------------------------------------------------------------------
def unet_forward(params, x_nchw):
    n, cin, h0, w0 = x_nchw.shape
    xp = jnp.pad(x_nchw, ((0, 0), (0, CIN_PAD - cin), (0, 0), (0, 0))).astype(COMPUTE_DTYPE)

    def backbone_stage(x4, sp, head=None):
        nb, c, hh, ww = x4.shape
        y = conv3x3_bn_relu(x4.reshape(nb, c, hh * ww), sp["w"], sp["s"], hh, ww, head=head)
        # TODO(synk): stride-2 via JAX strided slice of the stride-1 "same" conv result
        # (identical to the reference stride-2/pad-1 conv; in-kernel strided taps not needed).
        return y.reshape(nb, -1, hh, ww)[:, :, ::2, ::2]

    f1 = backbone_stage(xp, params["stage1"])                   # (N,  8, H/2, W/2)
    f2 = backbone_stage(f1, params["stage2"])                   # (N, 16, H/4, W/4)
    z = backbone_stage(f2, params["stage3"],
                       head=(params["stage3"]["head_w"], params["stage3"]["head_s"]))
    # z = block0.scale0(feat3) + bn0 shift, at (N, 16, H/8, W/8)

    def run_block(z_low, shortcut, bp, scale, head_sigmoid, out_dtype):
        nb = z_low.shape[0]
        up = bilinear_upsample(z_low, z_low.shape[2] * scale, z_low.shape[3] * scale)
        pre_relu = True
        if shortcut is not None:
            sh_, sw_ = shortcut.shape[2], shortcut.shape[3]
            if (up.shape[2], up.shape[3]) != (sh_, sw_):
                # reference applies ReLU before resizing to the shortcut's spatial size
                up = bilinear_upsample(jnp.maximum(up.astype(jnp.float32), 0.0), sh_, sw_)
                pre_relu = False
            hh, ww = sh_, sw_
            x2 = shortcut.reshape(nb, shortcut.shape[1], hh * ww)
        else:
            hh, ww = up.shape[2], up.shape[3]
            x2 = None
        y = decoder_block(up.reshape(nb, up.shape[1], hh * ww), x2, bp, hh, ww,
                          pre_relu=pre_relu, head_sigmoid=head_sigmoid, out_dtype=out_dtype)
        return y.reshape(nb, -1, hh, ww)

    z = run_block(z, f2, params["block0"], DECODER_SCALES[0], False, COMPUTE_DTYPE)
    z = run_block(z, f1, params["block1"], DECODER_SCALES[1], False, COMPUTE_DTYPE)
    out = run_block(z, None, params["block2"], DECODER_SCALES[2], True, jnp.float32)
    return out                                                   # (N, 2, H, W) NCHW


@jax.jit
def unet_with_backbone(params, x_nchw):
    return unet_forward(params, x_nchw)


# ----------------------------------------------------------------------------
if __name__ == "__main__":
    key = jax.random.PRNGKey(0)
    k_param, k_input = jax.random.split(key)
    params = init_params(k_param)

    # NCHW input, like the PyTorch module
    x = jax.random.normal(k_input, (2, 3, 32, 32), jnp.float32)

    y = unet_with_backbone(params, x)
    y = jax.block_until_ready(y)

    assert y.shape == (2, 2, 32, 32), y.shape
    assert bool(jnp.all(jnp.isfinite(y)))
    assert bool(jnp.all((y >= 0.0) & (y <= 1.0)))   # sigmoid output range
    print("KERNEL_OK")
</pallas_src>

<mosaic_0001>
module attributes {stable_mosaic.version = 11 : i64} {
  func.func @kernel(%arg0: i32, %arg1: memref<1x8x1024xbf16, #tpu.memory_space<vmem>>, %arg2: memref<8x72xf32, #tpu.memory_space<vmem>>, %arg3: memref<8x1xf32, #tpu.memory_space<vmem>>, %arg4: memref<1x8x1024xbf16, #tpu.memory_space<vmem>>, %arg5: memref<72x1024xf32, #tpu.memory_space<vmem>>, %arg6: memref<8x1280xf32, #tpu.memory_space<vmem>>) attributes {dimension_semantics = [#tpu.dimension_semantics<parallel>], iteration_bounds = array<i64: 2>, scalar_prefetch = 0 : i64, scratch_operands = 2 : i64, tpu.core_type = #tpu.core_type<tc>, window_params = [{transform_indices = @transform_0, window_bounds = array<i64: 1, 8, 1024>}, {pipeline_mode = #tpu.pipeline_mode<synchronous>, transform_indices = @transform_1, window_bounds = array<i64: 8, 72>}, {pipeline_mode = #tpu.pipeline_mode<synchronous>, transform_indices = @transform_2, window_bounds = array<i64: 8, 1>}, {transform_indices = @transform_3, window_bounds = array<i64: 1, 8, 1024>}]} {
    %cst = arith.constant 0.000000e+00 : f32
    %0 = vector.broadcast %cst : f32 to vector<8x1280xf32>
    %c0 = arith.constant 0 : index
    %c0_0 = arith.constant 0 : index
    %1 = vector.load %arg6[%c0, %c0_0] : memref<8x1280xf32, #tpu.memory_space<vmem>>, vector<8x1280xf32>
    tpu.vector_store %arg6[%c0, %c0_0], %0 {strides = array<i32>} : memref<8x1280xf32, #tpu.memory_space<vmem>>, vector<8x1280xf32>,
    %c0_1 = arith.constant 0 : index
    %c0_2 = arith.constant 0 : index
    %c0_3 = arith.constant 0 : index
    %2 = vector.load %arg1[%c0_1, %c0_2, %c0_3] : memref<1x8x1024xbf16, #tpu.memory_space<vmem>>, vector<1x8x1024xbf16>
    %3 = vector.shape_cast %2 : vector<1x8x1024xbf16> to vector<8x1024xbf16>
    %4 = arith.extf %3 : vector<8x1024xbf16> to vector<8x1024xf32>
    %c0_4 = arith.constant 0 : index
    %c128 = arith.constant 128 : index
    %5 = vector.load %arg6[%c0_4, %c128] : memref<8x1280xf32, #tpu.memory_space<vmem>>, vector<8x1024xf32>
    tpu.vector_store %arg6[%c0_4, %c128], %4 {strides = array<i32>} : memref<8x1280xf32, #tpu.memory_space<vmem>>, vector<8x1024xf32>,
    %6 = tpu.iota {dimensions = array<i32: 1>} : vector<1x1024xi32>
    %c31_i32 = arith.constant 31 : i32
    %7 = vector.broadcast %c31_i32 : i32 to vector<1x1024xi32>
    %8 = arith.andi %6, %7 : vector<1x1024xi32>
    %c5_i32 = arith.constant 5 : i32
    %9 = vector.broadcast %c5_i32 : i32 to vector<1x1024xi32>
    %10 = arith.shrsi %6, %9 : vector<1x1024xi32>
    %c31_i32_5 = arith.constant 31 : i32
    %11 = vector.broadcast %c31_i32_5 : i32 to vector<1x1024xi32>
    %12 = arith.andi %10, %11 : vector<1x1024xi32>
    %c1_i32 = arith.constant 1 : i32
    %13 = vector.broadcast %c1_i32 : i32 to vector<1x1024xi32>
    %14 = arith.cmpi sge, %12, %13 : vector<1x1024xi32>
    %c1_i32_6 = arith.constant 1 : i32
    %15 = vector.broadcast %c1_i32_6 : i32 to vector<1x1024xi32>
    %16 = arith.cmpi sge, %8, %15 : vector<1x1024xi32>
    %c0_7 = arith.constant 0 : index
    %c95 = arith.constant 95 : index
    %17 = vector.load %arg6[%c0_7, %c95] : memref<8x1280xf32, #tpu.memory_space<vmem>>, vector<8x1024xf32>
    %18 = arith.andi %14, %16 : vector<1x1024xi1>
    %cst_8 = arith.constant 0.000000e+00 : f32
    %19 = vector.shape_cast %18 : vector<1x1024xi1> to vector<1x1024xi1>
    %20 = vector.broadcast %19 : vector<1x1024xi1> to vector<8x1024xi1>
    %21 = vector.broadcast %cst_8 : f32 to vector<8x1024xf32>
    %22 = arith.select %20, %17, %21 : vector<8x1024xi1>, vector<8x1024xf32>
    %c0_9 = arith.constant 0 : index
    %c0_10 = arith.constant 0 : index
    %23 = vector.load %arg5[%c0_9, %c0_10] : memref<72x1024xf32, #tpu.memory_space<vmem>>, vector<8x1024xf32>
    tpu.vector_store %arg5[%c0_9, %c0_10], %22 {strides = array<i32>} : memref<72x1024xf32, #tpu.memory_space<vmem>>, vector<8x1024xf32>,
    %c0_11 = arith.constant 0 : index
    %c96 = arith.constant 96 : index
    %24 = vector.load %arg6[%c0_11, %c96] : memref<8x1280xf32, #tpu.memory_space<vmem>>, vector<8x1024xf32>
    %cst_12 = arith.constant 0.000000e+00 : f32
    %25 = vector.shape_cast %14 : vector<1x1024xi1> to vector<1x1024xi1>
    %26 = vector.broadcast %25 : vector<1x1024xi1> to vector<8x1024xi1>
    %27 = vector.broadcast %cst_12 : f32 to vector<8x1024xf32>
    %28 = arith.select %26, %24, %27 : vector<8x1024xi1>, vector<8x1024xf32>
    %c8 = arith.constant 8 : index
    %c0_13 = arith.constant 0 : index
    %29 = vector.load %arg5[%c8, %c0_13] : memref<72x1024xf32, #tpu.memory_space<vmem>>, vector<8x1024xf32>
    tpu.vector_store %arg5[%c8, %c0_13], %28 {strides = array<i32>} : memref<72x1024xf32, #tpu.memory_space<vmem>>, vector<8x1024xf32>,
    %c30_i32 = arith.constant 30 : i32
    %30 = vector.broadcast %c30_i32 : i32 to vector<1x1024xi32>
    %31 = arith.cmpi sle, %8, %30 : vector<1x1024xi32>
    %c0_14 = arith.constant 0 : index
    %c97 = arith.constant 97 : index
    %32 = vector.load %arg6[%c0_14, %c97] : memref<8x1280xf32, #tpu.memory_space<vmem>>, vector<8x1024xf32>
    %33 = arith.andi %14, %31 : vector<1x1024xi1>
    %cst_15 = arith.constant 0.000000e+00 : f32
    %34 = vector.shape_cast %33 : vector<1x1024xi1> to vector<1x1024xi1>
    %35 = vector.broadcast %34 : vector<1x1024xi1> to vector<8x1024xi1>
    %36 = vector.broadcast %cst_15 : f32 to vector<8x1024xf32>
    %37 = arith.select %35, %32, %36 : vector<8x1024xi1>, vector<8x1024xf32>
    %c16 = arith.constant 16 : index
    %c0_16 = arith.constant 0 : index
    %38 = vector.load %arg5[%c16, %c0_16] : memref<72x1024xf32, #tpu.memory_space<vmem>>, vector<8x1024xf32>
    tpu.vector_store %arg5[%c16, %c0_16], %37 {strides = array<i32>} : memref<72x1024xf32, #tpu.memory_space<vmem>>, vector<8x1024xf32>,
    %c1_i32_17 = arith.constant 1 : i32
    %39 = vector.broadcast %c1_i32_17 : i32 to vector<1x1024xi32>
    %40 = arith.cmpi sge, %8, %39 : vector<1x1024xi32>
    %c0_18 = arith.constant 0 : index
    %c127 = arith.constant 127 : index
    %41 = vector.load %arg6[%c0_18, %c127] : memref<8x1280xf32, #tpu.memory_space<vmem>>, vector<8x1024xf32>
    %cst_19 = arith.constant 0.000000e+00 : f32
    %42 = vector.shape_cast %40 : vector<1x1024xi1> to vector<1x1024xi1>
    %43 = vector.broadcast %42 : vector<1x1024xi1> to vector<8x1024xi1>
    %44 = vector.broadcast %cst_19 : f32 to vector<8x1024xf32>
    %45 = arith.select %43, %41, %44 : vector<8x1024xi1>, vector<8x1024xf32>
    %c24 = arith.constant 24 : index
    %c0_20 = arith.constant 0 : index
    %46 = vector.load %arg5[%c24, %c0_20] : memref<72x1024xf32, #tpu.memory_space<vmem>>, vector<8x1024xf32>
    tpu.vector_store %arg5[%c24, %c0_20], %45 {strides = array<i32>} : memref<72x1024xf32, #tpu.memory_space<vmem>>, vector<8x1024xf32>,
    %c32 = arith.constant 32 : index
    %c0_21 = arith.constant 0 : index
    %47 = vector.load %arg5[%c32, %c0_21] : memref<72x1024xf32, #tpu.memory_space<vmem>>, vector<8x1024xf32>
    tpu.vector_store %arg5[%c32, %c0_21], %4 {strides = array<i32>} : memref<72x1024xf32, #tpu.memory_space<vmem>>, vector<8x1024xf32>,
    %c30_i32_22 = arith.constant 30 : i32
    %48 = vector.broadcast %c30_i32_22 : i32 to vector<1x1024xi32>
    %49 = arith.cmpi sle, %8, %48 : vector<1x1024xi32>
    %c0_23 = arith.constant 0 : index
    %c129 = arith.constant 129 : index
    %50 = vector.load %arg6[%c0_23, %c129] : memref<8x1280xf32, #tpu.memory_space<vmem>>, vector<8x1024xf32>
    %cst_24 = arith.constant 0.000000e+00 : f32
    %51 = vector.shape_cast %49 : vector<1x1024xi1> to vector<1x1024xi1>
    %52 = vector.broadcast %51 : vector<1x1024xi1> to vector<8x1024xi1>
    %53 = vector.broadcast %cst_24 : f32 to vector<8x1024xf32>
    %54 = arith.select %52, %50, %53 : vector<8x1024xi1>, vector<8x1024xf32>
    %c40 = arith.constant 40 : index
    %c0_25 = arith.constant 0 : index
    %55 = vector.load %arg5[%c40, %c0_25] : memref<72x1024xf32, #tpu.memory_space<vmem>>, vector<8x1024xf32>
    tpu.vector_store %arg5[%c40, %c0_25], %54 {strides = array<i32>} : memref<72x1024xf32, #tpu.memory_space<vmem>>, vector<8x1024xf32>,
    %c30_i32_26 = arith.constant 30 : i32
    %56 = vector.broadcast %c30_i32_26 : i32 to vector<1x1024xi32>
    %57 = arith.cmpi sle, %12, %56 : vector<1x1024xi32>
    %c1_i32_27 = arith.constant 1 : i32
    %58 = vector.broadcast %c1_i32_27 : i32 to vector<1x1024xi32>
    %59 = arith.cmpi sge, %8, %58 : vector<1x1024xi32>
    %c0_28 = arith.constant 0 : index
    %c159 = arith.constant 159 : index
    %60 = vector.load %arg6[%c0_28, %c159] : memref<8x1280xf32, #tpu.memory_space<vmem>>, vector<8x1024xf32>
    %61 = arith.andi %57, %59 : vector<1x1024xi1>
    %cst_29 = arith.constant 0.000000e+00 : f32
    %62 = vector.shape_cast %61 : vector<1x1024xi1> to vector<1x1024xi1>
    %63 = vector.broadcast %62 : vector<1x1024xi1> to vector<8x1024xi1>
    %64 = vector.broadcast %cst_29 : f32 to vector<8x1024xf32>
    %65 = arith.select %63, %60, %64 : vector<8x1024xi1>, vector<8x1024xf32>
    %c48 = arith.constant 48 : index
    %c0_30 = arith.constant 0 : index
    %66 = vector.load %arg5[%c48, %c0_30] : memref<72x1024xf32, #tpu.memory_space<vmem>>, vector<8x1024xf32>
    tpu.vector_store %arg5[%c48, %c0_30], %65 {strides = array<i32>} : memref<72x1024xf32, #tpu.memory_space<vmem>>, vector<8x1024xf32>,
    %c0_31 = arith.constant 0 : index
    %c160 = arith.constant 160 : index
    %67 = vector.load %arg6[%c0_31, %c160] : memref<8x1280xf32, #tpu.memory_space<vmem>>, vector<8x1024xf32>
    %cst_32 = arith.constant 0.000000e+00 : f32
    %68 = vector.shape_cast %57 : vector<1x1024xi1> to vector<1x1024xi1>
    %69 = vector.broadcast %68 : vector<1x1024xi1> to vector<8x1024xi1>
    %70 = vector.broadcast %cst_32 : f32 to vector<8x1024xf32>
    %71 = arith.select %69, %67, %70 : vector<8x1024xi1>, vector<8x1024xf32>
    %c56 = arith.constant 56 : index
    %c0_33 = arith.constant 0 : index
    %72 = vector.load %arg5[%c56, %c0_33] : memref<72x1024xf32, #tpu.memory_space<vmem>>, vector<8x1024xf32>
    tpu.vector_store %arg5[%c56, %c0_33], %71 {strides = array<i32>} : memref<72x1024xf32, #tpu.memory_space<vmem>>, vector<8x1024xf32>,
    %c30_i32_34 = arith.constant 30 : i32
    %73 = vector.broadcast %c30_i32_34 : i32 to vector<1x1024xi32>
    %74 = arith.cmpi sle, %8, %73 : vector<1x1024xi32>
    %c0_35 = arith.constant 0 : index
    %c161 = arith.constant 161 : index
    %75 = vector.load %arg6[%c0_35, %c161] : memref<8x1280xf32, #tpu.memory_space<vmem>>, vector<8x1024xf32>
    %76 = arith.andi %57, %74 : vector<1x1024xi1>
    %cst_36 = arith.constant 0.000000e+00 : f32
    %77 = vector.shape_cast %76 : vector<1x1024xi1> to vector<1x1024xi1>
    %78 = vector.broadcast %77 : vector<1x1024xi1> to vector<8x1024xi1>
    %79 = vector.broadcast %cst_36 : f32 to vector<8x1024xf32>
    %80 = arith.select %78, %75, %79 : vector<8x1024xi1>, vector<8x1024xf32>
    %c64 = arith.constant 64 : index
    %c0_37 = arith.constant 0 : index
    %81 = vector.load %arg5[%c64, %c0_37] : memref<72x1024xf32, #tpu.memory_space<vmem>>, vector<8x1024xf32>
    tpu.vector_store %arg5[%c64, %c0_37], %80 {strides = array<i32>} : memref<72x1024xf32, #tpu.memory_space<vmem>>, vector<8x1024xf32>,
    %c0_38 = arith.constant 0 : index
    %c0_39 = arith.constant 0 : index
    %82 = vector.load %arg2[%c0_38, %c0_39] : memref<8x72xf32, #tpu.memory_space<vmem>>, vector<8x72xf32>
    %c0_40 = arith.constant 0 : index
    %c0_41 = arith.constant 0 : index
    %83 = vector.load %arg5[%c0_40, %c0_41] : memref<72x1024xf32, #tpu.memory_space<vmem>>, vector<72x1024xf32>
    %cst_42 = arith.constant dense<0.000000e+00> : vector<8x1024xf32>
    %84 = tpu.matmul %82, %83, %cst_42 {dimension_numbers = #tpu.dot_dimension_numbers<[1], [0], [0], [1], [0, 0, 1, 1], [], []>} : vector<8x72xf32>, vector<72x1024xf32>, vector<8x1024xf32> -> vector<8x1024xf32>
    %c0_43 = arith.constant 0 : index
    %c0_44 = arith.constant 0 : index
    %85 = vector.load %arg3[%c0_43, %c0_44] : memref<8x1xf32, #tpu.memory_space<vmem>>, vector<8x1xf32>
    %86 = vector.broadcast %85 : vector<8x1xf32> to vector<8x1024xf32>
    %87 = arith.addf %84, %86 : vector<8x1024xf32>
    %cst_45 = arith.constant 0.000000e+00 : f32
    %88 = vector.broadcast %cst_45 : f32 to vector<8x1024xf32>
    %89 = arith.maximumf %87, %88 : vector<8x1024xf32>
    %90 = arith.truncf %89 : vector<8x1024xf32> to vector<8x1024xbf16>
    %c0_46 = arith.constant 0 : index
    %c0_47 = arith.constant 0 : index
    %c0_48 = arith.constant 0 : index
    %91 = vector.load %arg4[%c0_46, %c0_47, %c0_48] : memref<1x8x1024xbf16, #tpu.memory_space<vmem>>, vector<1x8x1024xbf16>
    %92 = vector.shape_cast %91 : vector<1x8x1024xbf16> to vector<8x1024xbf16>
    %93 = vector.shape_cast %90 : vector<8x1024xbf16> to vector<1x8x1024xbf16>
    tpu.vector_store %arg4[%c0_46, %c0_47, %c0_48], %93 {strides = array<i32>} : memref<1x8x1024xbf16, #tpu.memory_space<vmem>>, vector<1x8x1024xbf16>,
    return
  }
  func.func @transform_0(%arg0: i32) -> (i32, i32, i32) {
    %c0_i32 = arith.constant 0 : i32
    %c0_i32_0 = arith.constant 0 : i32
    %c0_i32_1 = arith.constant 0 : i32
    return %arg0, %c0_i32, %c0_i32_0 : i32, i32, i32
  }
  func.func @transform_1(%arg0: i32) -> (i32, i32) {
    %c0_i32 = arith.constant 0 : i32
    %c0_i32_0 = arith.constant 0 : i32
    %c0_i32_1 = arith.constant 0 : i32
    return %c0_i32, %c0_i32_0 : i32, i32
  }
  func.func @transform_2(%arg0: i32) -> (i32, i32) {
    %c0_i32 = arith.constant 0 : i32
    %c0_i32_0 = arith.constant 0 : i32
    %c0_i32_1 = arith.constant 0 : i32
    return %c0_i32, %c0_i32_0 : i32, i32
  }
  func.func @transform_3(%arg0: i32) -> (i32, i32, i32) {
    %c0_i32 = arith.constant 0 : i32
    %c0_i32_0 = arith.constant 0 : i32
    %c0_i32_1 = arith.constant 0 : i32
    return %arg0, %c0_i32, %c0_i32_0 : i32, i32, i32
  }
}

module attributes {stable_mosaic.version = 11 : i64} {
  func.func @kernel(%arg0: i32, %arg1: memref<1x8x256xbf16, #tpu.memory_space<vmem>>, %arg2: memref<16x72xf32, #tpu.memory_space<vmem>>, %arg3: memref<16x1xf32, #tpu.memory_space<vmem>>, %arg4: memref<1x16x256xbf16, #tpu.memory_space<vmem>>, %arg5: memref<72x256xf32, #tpu.memory_space<vmem>>, %arg6: memref<8x512xf32, #tpu.memory_space<vmem>>) attributes {dimension_semantics = [#tpu.dimension_semantics<parallel>], iteration_bounds = array<i64: 2>, scalar_prefetch = 0 : i64, scratch_operands = 2 : i64, tpu.core_type = #tpu.core_type<tc>, window_params = [{transform_indices = @transform_0, window_bounds = array<i64: 1, 8, 256>}, {pipeline_mode = #tpu.pipeline_mode<synchronous>, transform_indices = @transform_1, window_bounds = array<i64: 16, 72>}, {pipeline_mode = #tpu.pipeline_mode<synchronous>, transform_indices = @transform_2, window_bounds = array<i64: 16, 1>}, {transform_indices = @transform_3, window_bounds = array<i64: 1, 16, 256>}]} {
    %cst = arith.constant 0.000000e+00 : f32
    %0 = vector.broadcast %cst : f32 to vector<8x512xf32>
    %c0 = arith.constant 0 : index
    %c0_0 = arith.constant 0 : index
    %1 = vector.load %arg6[%c0, %c0_0] : memref<8x512xf32, #tpu.memory_space<vmem>>, vector<8x512xf32>
    tpu.vector_store %arg6[%c0, %c0_0], %0 {strides = array<i32>} : memref<8x512xf32, #tpu.memory_space<vmem>>, vector<8x512xf32>,
    %c0_1 = arith.constant 0 : index
    %c0_2 = arith.constant 0 : index
    %c0_3 = arith.constant 0 : index
    %2 = vector.load %arg1[%c0_1, %c0_2, %c0_3] : memref<1x8x256xbf16, #tpu.memory_space<vmem>>, vector<1x8x256xbf16>
    %3 = vector.shape_cast %2 : vector<1x8x256xbf16> to vector<8x256xbf16>
    %4 = arith.extf %3 : vector<8x256xbf16> to vector<8x256xf32>
    %c0_4 = arith.constant 0 : index
    %c128 = arith.constant 128 : index
    %5 = vector.load %arg6[%c0_4, %c128] : memref<8x512xf32, #tpu.memory_space<vmem>>, vector<8x256xf32>
    tpu.vector_store %arg6[%c0_4, %c128], %4 {strides = array<i32>} : memref<8x512xf32, #tpu.memory_space<vmem>>, vector<8x256xf32>,
    %6 = tpu.iota {dimensions = array<i32: 1>} : vector<1x256xi32>
    %c15_i32 = arith.constant 15 : i32
    %7 = vector.broadcast %c15_i32 : i32 to vector<1x256xi32>
    %8 = arith.andi %6, %7 : vector<1x256xi32>
    %c4_i32 = arith.constant 4 : i32
    %9 = vector.broadcast %c4_i32 : i32 to vector<1x256xi32>
    %10 = arith.shrsi %6, %9 : vector<1x256xi32>
    %c15_i32_5 = arith.constant 15 : i32
    %11 = vector.broadcast %c15_i32_5 : i32 to vector<1x256xi32>
    %12 = arith.andi %10, %11 : vector<1x256xi32>
    %c1_i32 = arith.constant 1 : i32
    %13 = vector.broadcast %c1_i32 : i32 to vector<1x256xi32>
    %14 = arith.cmpi sge, %12, %13 : vector<1x256xi32>
    %c1_i32_6 = arith.constant 1 : i32
    %15 = vector.broadcast %c1_i32_6 : i32 to vector<1x256xi32>
    %16 = arith.cmpi sge, %8, %15 : vector<1x256xi32>
    %c0_7 = arith.constant 0 : index
    %c111 = arith.constant 111 : index
    %17 = vector.load %arg6[%c0_7, %c111] : memref<8x512xf32, #tpu.memory_space<vmem>>, vector<8x256xf32>
    %18 = arith.andi %14, %16 : vector<1x256xi1>
    %cst_8 = arith.constant 0.000000e+00 : f32
    %19 = vector.shape_cast %18 : vector<1x256xi1> to vector<1x256xi1>
    %20 = vector.broadcast %19 : vector<1x256xi1> to vector<8x256xi1>
    %21 = vector.broadcast %cst_8 : f32 to vector<8x256xf32>
    %22 = arith.select %20, %17, %21 : vector<8x256xi1>, vector<8x256xf32>
    %c0_9 = arith.constant 0 : index
    %c0_10 = arith.constant 0 : index
    %23 = vector.load %arg5[%c0_9, %c0_10] : memref<72x256xf32, #tpu.memory_space<vmem>>, vector<8x256xf32>
    tpu.vector_store %arg5[%c0_9, %c0_10], %22 {strides = array<i32>} : memref<72x256xf32, #tpu.memory_space<vmem>>, vector<8x256xf32>,
    %c0_11 = arith.constant 0 : index
    %c112 = arith.constant 112 : index
    %24 = vector.load %arg6[%c0_11, %c112] : memref<8x512xf32, #tpu.memory_space<vmem>>, vector<8x256xf32>
    %cst_12 = arith.constant 0.000000e+00 : f32
    %25 = vector.shape_cast %14 : vector<1x256xi1> to vector<1x256xi1>
    %26 = vector.broadcast %25 : vector<1x256xi1> to vector<8x256xi1>
    %27 = vector.broadcast %cst_12 : f32 to vector<8x256xf32>
    %28 = arith.select %26, %24, %27 : vector<8x256xi1>, vector<8x256xf32>
    %c8 = arith.constant 8 : index
    %c0_13 = arith.constant 0 : index
    %29 = vector.load %arg5[%c8, %c0_13] : memref<72x256xf32, #tpu.memory_space<vmem>>, vector<8x256xf32>
    tpu.vector_store %arg5[%c8, %c0_13], %28 {strides = array<i32>} : memref<72x256xf32, #tpu.memory_space<vmem>>, vector<8x256xf32>,
    %c14_i32 = arith.constant 14 : i32
    %30 = vector.broadcast %c14_i32 : i32 to vector<1x256xi32>
    %31 = arith.cmpi sle, %8, %30 : vector<1x256xi32>
    %c0_14 = arith.constant 0 : index
    %c113 = arith.constant 113 : index
    %32 = vector.load %arg6[%c0_14, %c113] : memref<8x512xf32, #tpu.memory_space<vmem>>, vector<8x256xf32>
    %33 = arith.andi %14, %31 : vector<1x256xi1>
    %cst_15 = arith.constant 0.000000e+00 : f32
    %34 = vector.shape_cast %33 : vector<1x256xi1> to vector<1x256xi1>
    %35 = vector.broadcast %34 : vector<1x256xi1> to vector<8x256xi1>
    %36 = vector.broadcast %cst_15 : f32 to vector<8x256xf32>
    %37 = arith.select %35, %32, %36 : vector<8x256xi1>, vector<8x256xf32>
    %c16 = arith.constant 16 : index
    %c0_16 = arith.constant 0 : index
    %38 = vector.load %arg5[%c16, %c0_16] : memref<72x256xf32, #tpu.memory_space<vmem>>, vector<8x256xf32>
    tpu.vector_store %arg5[%c16, %c0_16], %37 {strides = array<i32>} : memref<72x256xf32, #tpu.memory_space<vmem>>, vector<8x256xf32>,
    %c1_i32_17 = arith.constant 1 : i32
    %39 = vector.broadcast %c1_i32_17 : i32 to vector<1x256xi32>
    %40 = arith.cmpi sge, %8, %39 : vector<1x256xi32>
    %c0_18 = arith.constant 0 : index
    %c127 = arith.constant 127 : index
    %41 = vector.load %arg6[%c0_18, %c127] : memref<8x512xf32, #tpu.memory_space<vmem>>, vector<8x256xf32>
    %cst_19 = arith.constant 0.000000e+00 : f32
    %42 = vector.shape_cast %40 : vector<1x256xi1> to vector<1x256xi1>
    %43 = vector.broadcast %42 : vector<1x256xi1> to vector<8x256xi1>
    %44 = vector.broadcast %cst_19 : f32 to vector<8x256xf32>
    %45 = arith.select %43, %41, %44 : vector<8x256xi1>, vector<8x256xf32>
    %c24 = arith.constant 24 : index
    %c0_20 = arith.constant 0 : index
    %46 = vector.load %arg5[%c24, %c0_20] : memref<72x256xf32, #tpu.memory_space<vmem>>, vector<8x256xf32>
    tpu.vector_store %arg5[%c24, %c0_20], %45 {strides = array<i32>} : memref<72x256xf32, #tpu.memory_space<vmem>>, vector<8x256xf32>,
    %c32 = arith.constant 32 : index
    %c0_21 = arith.constant 0 : index
    %47 = vector.load %arg5[%c32, %c0_21] : memref<72x256xf32, #tpu.memory_space<vmem>>, vector<8x256xf32>
    tpu.vector_store %arg5[%c32, %c0_21], %4 {strides = array<i32>} : memref<72x256xf32, #tpu.memory_space<vmem>>, vector<8x256xf32>,
    %c14_i32_22 = arith.constant 14 : i32
    %48 = vector.broadcast %c14_i32_22 : i32 to vector<1x256xi32>
    %49 = arith.cmpi sle, %8, %48 : vector<1x256xi32>
    %c0_23 = arith.constant 0 : index
    %c129 = arith.constant 129 : index
    %50 = vector.load %arg6[%c0_23, %c129] : memref<8x512xf32, #tpu.memory_space<vmem>>, vector<8x256xf32>
    %cst_24 = arith.constant 0.000000e+00 : f32
    %51 = vector.shape_cast %49 : vector<1x256xi1> to vector<1x256xi1>
    %52 = vector.broadcast %51 : vector<1x256xi1> to vector<8x256xi1>
    %53 = vector.broadcast %cst_24 : f32 to vector<8x256xf32>
    %54 = arith.select %52, %50, %53 : vector<8x256xi1>, vector<8x256xf32>
    %c40 = arith.constant 40 : index
    %c0_25 = arith.constant 0 : index
    %55 = vector.load %arg5[%c40, %c0_25] : memref<72x256xf32, #tpu.memory_space<vmem>>, vector<8x256xf32>
    tpu.vector_store %arg5[%c40, %c0_25], %54 {strides = array<i32>} : memref<72x256xf32, #tpu.memory_space<vmem>>, vector<8x256xf32>,
    %c14_i32_26 = arith.constant 14 : i32
    %56 = vector.broadcast %c14_i32_26 : i32 to vector<1x256xi32>
    %57 = arith.cmpi sle, %12, %56 : vector<1x256xi32>
    %c1_i32_27 = arith.constant 1 : i32
    %58 = vector.broadcast %c1_i32_27 : i32 to vector<1x256xi32>
    %59 = arith.cmpi sge, %8, %58 : vector<1x256xi32>
    %c0_28 = arith.constant 0 : index
    %c143 = arith.constant 143 : index
    %60 = vector.load %arg6[%c0_28, %c143] : memref<8x512xf32, #tpu.memory_space<vmem>>, vector<8x256xf32>
    %61 = arith.andi %57, %59 : vector<1x256xi1>
    %cst_29 = arith.constant 0.000000e+00 : f32
    %62 = vector.shape_cast %61 : vector<1x256xi1> to vector<1x256xi1>
    %63 = vector.broadcast %62 : vector<1x256xi1> to vector<8x256xi1>
    %64 = vector.broadcast %cst_29 : f32 to vector<8x256xf32>
    %65 = arith.select %63, %60, %64 : vector<8x256xi1>, vector<8x256xf32>
    %c48 = arith.constant 48 : index
    %c0_30 = arith.constant 0 : index
    %66 = vector.load %arg5[%c48, %c0_30] : memref<72x256xf32, #tpu.memory_space<vmem>>, vector<8x256xf32>
    tpu.vector_store %arg5[%c48, %c0_30], %65 {strides = array<i32>} : memref<72x256xf32, #tpu.memory_space<vmem>>, vector<8x256xf32>,
    %c0_31 = arith.constant 0 : index
    %c144 = arith.constant 144 : index
    %67 = vector.load %arg6[%c0_31, %c144] : memref<8x512xf32, #tpu.memory_space<vmem>>, vector<8x256xf32>
    %cst_32 = arith.constant 0.000000e+00 : f32
    %68 = vector.shape_cast %57 : vector<1x256xi1> to vector<1x256xi1>
    %69 = vector.broadcast %68 : vector<1x256xi1> to vector<8x256xi1>
    %70 = vector.broadcast %cst_32 : f32 to vector<8x256xf32>
    %71 = arith.select %69, %67, %70 : vector<8x256xi1>, vector<8x256xf32>
    %c56 = arith.constant 56 : index
    %c0_33 = arith.constant 0 : index
    %72 = vector.load %arg5[%c56, %c0_33] : memref<72x256xf32, #tpu.memory_space<vmem>>, vector<8x256xf32>
    tpu.vector_store %arg5[%c56, %c0_33], %71 {strides = array<i32>} : memref<72x256xf32, #tpu.memory_space<vmem>>, vector<8x256xf32>,
    %c14_i32_34 = arith.constant 14 : i32
    %73 = vector.broadcast %c14_i32_34 : i32 to vector<1x256xi32>
    %74 = arith.cmpi sle, %8, %73 : vector<1x256xi32>
    %c0_35 = arith.constant 0 : index
    %c145 = arith.constant 145 : index
    %75 = vector.load %arg6[%c0_35, %c145] : memref<8x512xf32, #tpu.memory_space<vmem>>, vector<8x256xf32>
    %76 = arith.andi %57, %74 : vector<1x256xi1>
    %cst_36 = arith.constant 0.000000e+00 : f32
    %77 = vector.shape_cast %76 : vector<1x256xi1> to vector<1x256xi1>
    %78 = vector.broadcast %77 : vector<1x256xi1> to vector<8x256xi1>
    %79 = vector.broadcast %cst_36 : f32 to vector<8x256xf32>
    %80 = arith.select %78, %75, %79 : vector<8x256xi1>, vector<8x256xf32>
    %c64 = arith.constant 64 : index
    %c0_37 = arith.constant 0 : index
    %81 = vector.load %arg5[%c64, %c0_37] : memref<72x256xf32, #tpu.memory_space<vmem>>, vector<8x256xf32>
    tpu.vector_store %arg5[%c64, %c0_37], %80 {strides = array<i32>} : memref<72x256xf32, #tpu.memory_space<vmem>>, vector<8x256xf32>,
    %c0_38 = arith.constant 0 : index
    %c0_39 = arith.constant 0 : index
    %82 = vector.load %arg2[%c0_38, %c0_39] : memref<16x72xf32, #tpu.memory_space<vmem>>, vector<16x72xf32>
    %c0_40 = arith.constant 0 : index
    %c0_41 = arith.constant 0 : index
    %83 = vector.load %arg5[%c0_40, %c0_41] : memref<72x256xf32, #tpu.memory_space<vmem>>, vector<72x256xf32>
    %cst_42 = arith.constant dense<0.000000e+00> : vector<16x256xf32>
    %84 = tpu.matmul %82, %83, %cst_42 {dimension_numbers = #tpu.dot_dimension_numbers<[1], [0], [0], [1], [0, 0, 1, 1], [], []>} : vector<16x72xf32>, vector<72x256xf32>, vector<16x256xf32> -> vector<16x256xf32>
    %c0_43 = arith.constant 0 : index
    %c0_44 = arith.constant 0 : index
    %85 = vector.load %arg3[%c0_43, %c0_44] : memref<16x1xf32, #tpu.memory_space<vmem>>, vector<16x1xf32>
    %86 = vector.broadcast %85 : vector<16x1xf32> to vector<16x256xf32>
    %87 = arith.addf %84, %86 : vector<16x256xf32>
    %cst_45 = arith.constant 0.000000e+00 : f32
    %88 = vector.broadcast %cst_45 : f32 to vector<16x256xf32>
    %89 = arith.maximumf %87, %88 : vector<16x256xf32>
    %90 = arith.truncf %89 : vector<16x256xf32> to vector<16x256xbf16>
    %c0_46 = arith.constant 0 : index
    %c0_47 = arith.constant 0 : index
    %c0_48 = arith.constant 0 : index
    %91 = vector.load %arg4[%c0_46, %c0_47, %c0_48] : memref<1x16x256xbf16, #tpu.memory_space<vmem>>, vector<1x16x256xbf16>
    %92 = vector.shape_cast %91 : vector<1x16x256xbf16> to vector<16x256xbf16>
    %93 = vector.shape_cast %90 : vector<16x256xbf16> to vector<1x16x256xbf16>
    tpu.vector_store %arg4[%c0_46, %c0_47, %c0_48], %93 {strides = array<i32>} : memref<1x16x256xbf16, #tpu.memory_space<vmem>>, vector<1x16x256xbf16>,
    return
  }
  func.func @transform_0(%arg0: i32) -> (i32, i32, i32) {
    %c0_i32 = arith.constant 0 : i32
    %c0_i32_0 = arith.constant 0 : i32
    %c0_i32_1 = arith.constant 0 : i32
    return %arg0, %c0_i32, %c0_i32_0 : i32, i32, i32
  }
  func.func @transform_1(%arg0: i32) -> (i32, i32) {
    %c0_i32 = arith.constant 0 : i32
    %c0_i32_0 = arith.constant 0 : i32
    %c0_i32_1 = arith.constant 0 : i32
    return %c0_i32, %c0_i32_0 : i32, i32
  }
  func.func @transform_2(%arg0: i32) -> (i32, i32) {
    %c0_i32 = arith.constant 0 : i32
    %c0_i32_0 = arith.constant 0 : i32
    %c0_i32_1 = arith.constant 0 : i32
    return %c0_i32, %c0_i32_0 : i32, i32
  }
  func.func @transform_3(%arg0: i32) -> (i32, i32, i32) {
    %c0_i32 = arith.constant 0 : i32
    %c0_i32_0 = arith.constant 0 : i32
    %c0_i32_1 = arith.constant 0 : i32
    return %arg0, %c0_i32, %c0_i32_0 : i32, i32, i32
  }
}

module attributes {stable_mosaic.version = 11 : i64} {
  func.func @kernel(%arg0: i32, %arg1: memref<1x16x64xbf16, #tpu.memory_space<vmem>>, %arg2: memref<32x144xf32, #tpu.memory_space<vmem>>, %arg3: memref<32x1xf32, #tpu.memory_space<vmem>>, %arg4: memref<16x32xf32, #tpu.memory_space<vmem>>, %arg5: memref<16x1xf32, #tpu.memory_space<vmem>>, %arg6: memref<1x16x64xbf16, #tpu.memory_space<vmem>>, %arg7: memref<144x64xf32, #tpu.memory_space<vmem>>, %arg8: memref<16x320xf32, #tpu.memory_space<vmem>>) attributes {dimension_semantics = [#tpu.dimension_semantics<parallel>], iteration_bounds = array<i64: 2>, scalar_prefetch = 0 : i64, scratch_operands = 2 : i64, tpu.core_type = #tpu.core_type<tc>, window_params = [{transform_indices = @transform_0, window_bounds = array<i64: 1, 16, 64>}, {pipeline_mode = #tpu.pipeline_mode<synchronous>, transform_indices = @transform_1, window_bounds = array<i64: 32, 144>}, {pipeline_mode = #tpu.pipeline_mode<synchronous>, transform_indices = @transform_2, window_bounds = array<i64: 32, 1>}, {pipeline_mode = #tpu.pipeline_mode<synchronous>, transform_indices = @transform_3, window_bounds = array<i64: 16, 32>}, {pipeline_mode = #tpu.pipeline_mode<synchronous>, transform_indices = @transform_4, window_bounds = array<i64: 16, 1>}, {transform_indices = @transform_5, window_bounds = array<i64: 1, 16, 64>}]} {
    %cst = arith.constant 0.000000e+00 : f32
    %0 = vector.broadcast %cst : f32 to vector<16x320xf32>
    %c0 = arith.constant 0 : index
    %c0_0 = arith.constant 0 : index
    %1 = vector.load %arg8[%c0, %c0_0] : memref<16x320xf32, #tpu.memory_space<vmem>>, vector<16x320xf32>
    tpu.vector_store %arg8[%c0, %c0_0], %0 {strides = array<i32>} : memref<16x320xf32, #tpu.memory_space<vmem>>, vector<16x320xf32>,
    %c0_1 = arith.constant 0 : index
    %c0_2 = arith.constant 0 : index
    %c0_3 = arith.constant 0 : index
    %2 = vector.load %arg1[%c0_1, %c0_2, %c0_3] : memref<1x16x64xbf16, #tpu.memory_space<vmem>>, vector<1x16x64xbf16>
    %3 = vector.shape_cast %2 : vector<1x16x64xbf16> to vector<16x64xbf16>
    %4 = arith.extf %3 : vector<16x64xbf16> to vector<16x64xf32>
    %c0_4 = arith.constant 0 : index
    %c128 = arith.constant 128 : index
    %5 = vector.load %arg8[%c0_4, %c128] : memref<16x320xf32, #tpu.memory_space<vmem>>, vector<16x64xf32>
    tpu.vector_store %arg8[%c0_4, %c128], %4 {strides = array<i32>} : memref<16x320xf32, #tpu.memory_space<vmem>>, vector<16x64xf32>,
    %6 = tpu.iota {dimensions = array<i32: 1>} : vector<1x64xi32>
    %c7_i32 = arith.constant 7 : i32
    %7 = vector.broadcast %c7_i32 : i32 to vector<1x64xi32>
    %8 = arith.andi %6, %7 : vector<1x64xi32>
    %c3_i32 = arith.constant 3 : i32
    %9 = vector.broadcast %c3_i32 : i32 to vector<1x64xi32>
    %10 = arith.shrsi %6, %9 : vector<1x64xi32>
    %c7_i32_5 = arith.constant 7 : i32
    %11 = vector.broadcast %c7_i32_5 : i32 to vector<1x64xi32>
    %12 = arith.andi %10, %11 : vector<1x64xi32>
    %c1_i32 = arith.constant 1 : i32
    %13 = vector.broadcast %c1_i32 : i32 to vector<1x64xi32>
    %14 = arith.cmpi sge, %12, %13 : vector<1x64xi32>
    %c1_i32_6 = arith.constant 1 : i32
    %15 = vector.broadcast %c1_i32_6 : i32 to vector<1x64xi32>
    %16 = arith.cmpi sge, %8, %15 : vector<1x64xi32>
    %c0_7 = arith.constant 0 : index
    %c119 = arith.constant 119 : index
    %17 = vector.load %arg8[%c0_7, %c119] : memref<16x320xf32, #tpu.memory_space<vmem>>, vector<16x64xf32>
    %18 = arith.andi %14, %16 : vector<1x64xi1>
    %cst_8 = arith.constant 0.000000e+00 : f32
    %19 = vector.shape_cast %18 : vector<1x64xi1> to vector<1x64xi1>
    %20 = vector.broadcast %19 : vector<1x64xi1> to vector<16x64xi1>
    %21 = vector.broadcast %cst_8 : f32 to vector<16x64xf32>
    %22 = arith.select %20, %17, %21 : vector<16x64xi1>, vector<16x64xf32>
    %c0_9 = arith.constant 0 : index
    %c0_10 = arith.constant 0 : index
    %23 = vector.load %arg7[%c0_9, %c0_10] : memref<144x64xf32, #tpu.memory_space<vmem>>, vector<16x64xf32>
    tpu.vector_store %arg7[%c0_9, %c0_10], %22 {strides = array<i32>} : memref<144x64xf32, #tpu.memory_space<vmem>>, vector<16x64xf32>,
    %c0_11 = arith.constant 0 : index
    %c120 = arith.constant 120 : index
    %24 = vector.load %arg8[%c0_11, %c120] : memref<16x320xf32, #tpu.memory_space<vmem>>, vector<16x64xf32>
    %cst_12 = arith.constant 0.000000e+00 : f32
    %25 = vector.shape_cast %14 : vector<1x64xi1> to vector<1x64xi1>
    %26 = vector.broadcast %25 : vector<1x64xi1> to vector<16x64xi1>
    %27 = vector.broadcast %cst_12 : f32 to vector<16x64xf32>
    %28 = arith.select %26, %24, %27 : vector<16x64xi1>, vector<16x64xf32>
    %c16 = arith.constant 16 : index
    %c0_13 = arith.constant 0 : index
    %29 = vector.load %arg7[%c16, %c0_13] : memref<144x64xf32, #tpu.memory_space<vmem>>, vector<16x64xf32>
    tpu.vector_store %arg7[%c16, %c0_13], %28 {strides = array<i32>} : memref<144x64xf32, #tpu.memory_space<vmem>>, vector<16x64xf32>,
    %c6_i32 = arith.constant 6 : i32
    %30 = vector.broadcast %c6_i32 : i32 to vector<1x64xi32>
    %31 = arith.cmpi sle, %8, %30 : vector<1x64xi32>
    %c0_14 = arith.constant 0 : index
    %c121 = arith.constant 121 : index
    %32 = vector.load %arg8[%c0_14, %c121] : memref<16x320xf32, #tpu.memory_space<vmem>>, vector<16x64xf32>
    %33 = arith.andi %14, %31 : vector<1x64xi1>
    %cst_15 = arith.constant 0.000000e+00 : f32
    %34 = vector.shape_cast %33 : vector<1x64xi1> to vector<1x64xi1>
    %35 = vector.broadcast %34 : vector<1x64xi1> to vector<16x64xi1>
    %36 = vector.broadcast %cst_15 : f32 to vector<16x64xf32>
    %37 = arith.select %35, %32, %36 : vector<16x64xi1>, vector<16x64xf32>
    %c32 = arith.constant 32 : index
    %c0_16 = arith.constant 0 : index
    %38 = vector.load %arg7[%c32, %c0_16] : memref<144x64xf32, #tpu.memory_space<vmem>>, vector<16x64xf32>
    tpu.vector_store %arg7[%c32, %c0_16], %37 {strides = array<i32>} : memref<144x64xf32, #tpu.memory_space<vmem>>, vector<16x64xf32>,
    %c1_i32_17 = arith.constant 1 : i32
    %39 = vector.broadcast %c1_i32_17 : i32 to vector<1x64xi32>
    %40 = arith.cmpi sge, %8, %39 : vector<1x64xi32>
    %c0_18 = arith.constant 0 : index
    %c127 = arith.constant 127 : index
    %41 = vector.load %arg8[%c0_18, %c127] : memref<16x320xf32, #tpu.memory_space<vmem>>, vector<16x64xf32>
    %cst_19 = arith.constant 0.000000e+00 : f32
    %42 = vector.shape_cast %40 : vector<1x64xi1> to vector<1x64xi1>
    %43 = vector.broadcast %42 : vector<1x64xi1> to vector<16x64xi1>
    %44 = vector.broadcast %cst_19 : f32 to vector<16x64xf32>
    %45 = arith.select %43, %41, %44 : vector<16x64xi1>, vector<16x64xf32>
    %c48 = arith.constant 48 : index
    %c0_20 = arith.constant 0 : index
    %46 = vector.load %arg7[%c48, %c0_20] : memref<144x64xf32, #tpu.memory_space<vmem>>, vector<16x64xf32>
    tpu.vector_store %arg7[%c48, %c0_20], %45 {strides = array<i32>} : memref<144x64xf32, #tpu.memory_space<vmem>>, vector<16x64xf32>,
    %c64 = arith.constant 64 : index
    %c0_21 = arith.constant 0 : index
    %47 = vector.load %arg7[%c64, %c0_21] : memref<144x64xf32, #tpu.memory_space<vmem>>, vector<16x64xf32>
    tpu.vector_store %arg7[%c64, %c0_21], %4 {strides = array<i32>} : memref<144x64xf32, #tpu.memory_space<vmem>>, vector<16x64xf32>,
    %c6_i32_22 = arith.constant 6 : i32
    %48 = vector.broadcast %c6_i32_22 : i32 to vector<1x64xi32>
    %49 = arith.cmpi sle, %8, %48 : vector<1x64xi32>
    %c0_23 = arith.constant 0 : index
    %c129 = arith.constant 129 : index
    %50 = vector.load %arg8[%c0_23, %c129] : memref<16x320xf32, #tpu.memory_space<vmem>>, vector<16x64xf32>
    %cst_24 = arith.constant 0.000000e+00 : f32
    %51 = vector.shape_cast %49 : vector<1x64xi1> to vector<1x64xi1>
    %52 = vector.broadcast %51 : vector<1x64xi1> to vector<16x64xi1>
    %53 = vector.broadcast %cst_24 : f32 to vector<16x64xf32>
    %54 = arith.select %52, %50, %53 : vector<16x64xi1>, vector<16x64xf32>
    %c80 = arith.constant 80 : index
    %c0_25 = arith.constant 0 : index
    %55 = vector.load %arg7[%c80, %c0_25] : memref<144x64xf32, #tpu.memory_space<vmem>>, vector<16x64xf32>
    tpu.vector_store %arg7[%c80, %c0_25], %54 {strides = array<i32>} : memref<144x64xf32, #tpu.memory_space<vmem>>, vector<16x64xf32>,
    %c6_i32_26 = arith.constant 6 : i32
    %56 = vector.broadcast %c6_i32_26 : i32 to vector<1x64xi32>
    %57 = arith.cmpi sle, %12, %56 : vector<1x64xi32>
    %c1_i32_27 = arith.constant 1 : i32
    %58 = vector.broadcast %c1_i32_27 : i32 to vector<1x64xi32>
    %59 = arith.cmpi sge, %8, %58 : vector<1x64xi32>
    %c0_28 = arith.constant 0 : index
    %c135 = arith.constant 135 : index
    %60 = vector.load %arg8[%c0_28, %c135] : memref<16x320xf32, #tpu.memory_space<vmem>>, vector<16x64xf32>
    %61 = arith.andi %57, %59 : vector<1x64xi1>
    %cst_29 = arith.constant 0.000000e+00 : f32
    %62 = vector.shape_cast %61 : vector<1x64xi1> to vector<1x64xi1>
    %63 = vector.broadcast %62 : vector<1x64xi1> to vector<16x64xi1>
    %64 = vector.broadcast %cst_29 : f32 to vector<16x64xf32>
    %65 = arith.select %63, %60, %64 : vector<16x64xi1>, vector<16x64xf32>
    %c96 = arith.constant 96 : index
    %c0_30 = arith.constant 0 : index
    %66 = vector.load %arg7[%c96, %c0_30] : memref<144x64xf32, #tpu.memory_space<vmem>>, vector<16x64xf32>
    tpu.vector_store %arg7[%c96, %c0_30], %65 {strides = array<i32>} : memref<144x64xf32, #tpu.memory_space<vmem>>, vector<16x64xf32>,
    %c0_31 = arith.constant 0 : index
    %c136 = arith.constant 136 : index
    %67 = vector.load %arg8[%c0_31, %c136] : memref<16x320xf32, #tpu.memory_space<vmem>>, vector<16x64xf32>
    %cst_32 = arith.constant 0.000000e+00 : f32
    %68 = vector.shape_cast %57 : vector<1x64xi1> to vector<1x64xi1>
    %69 = vector.broadcast %68 : vector<1x64xi1> to vector<16x64xi1>
    %70 = vector.broadcast %cst_32 : f32 to vector<16x64xf32>
    %71 = arith.select %69, %67, %70 : vector<16x64xi1>, vector<16x64xf32>
    %c112 = arith.constant 112 : index
    %c0_33 = arith.constant 0 : index
    %72 = vector.load %arg7[%c112, %c0_33] : memref<144x64xf32, #tpu.memory_space<vmem>>, vector<16x64xf32>
    tpu.vector_store %arg7[%c112, %c0_33], %71 {strides = array<i32>} : memref<144x64xf32, #tpu.memory_space<vmem>>, vector<16x64xf32>,
    %c6_i32_34 = arith.constant 6 : i32
    %73 = vector.broadcast %c6_i32_34 : i32 to vector<1x64xi32>
    %74 = arith.cmpi sle, %8, %73 : vector<1x64xi32>
    %c0_35 = arith.constant 0 : index
    %c137 = arith.constant 137 : index
    %75 = vector.load %arg8[%c0_35, %c137] : memref<16x320xf32, #tpu.memory_space<vmem>>, vector<16x64xf32>
    %76 = arith.andi %57, %74 : vector<1x64xi1>
    %cst_36 = arith.constant 0.000000e+00 : f32
    %77 = vector.shape_cast %76 : vector<1x64xi1> to vector<1x64xi1>
    %78 = vector.broadcast %77 : vector<1x64xi1> to vector<16x64xi1>
    %79 = vector.broadcast %cst_36 : f32 to vector<16x64xf32>
    %80 = arith.select %78, %75, %79 : vector<16x64xi1>, vector<16x64xf32>
    %c128_37 = arith.constant 128 : index
    %c0_38 = arith.constant 0 : index
    %81 = vector.load %arg7[%c128_37, %c0_38] : memref<144x64xf32, #tpu.memory_space<vmem>>, vector<16x64xf32>
    tpu.vector_store %arg7[%c128_37, %c0_38], %80 {strides = array<i32>} : memref<144x64xf32, #tpu.memory_space<vmem>>, vector<16x64xf32>,
    %c0_39 = arith.constant 0 : index
    %c0_40 = arith.constant 0 : index
    %82 = vector.load %arg2[%c0_39, %c0_40] : memref<32x144xf32, #tpu.memory_space<vmem>>, vector<32x144xf32>
    %c0_41 = arith.constant 0 : index
    %c0_42 = arith.constant 0 : index
    %83 = vector.load %arg7[%c0_41, %c0_42] : memref<144x64xf32, #tpu.memory_space<vmem>>, vector<144x64xf32>
    %cst_43 = arith.constant dense<0.000000e+00> : vector<32x64xf32>
    %84 = tpu.matmul %82, %83, %cst_43 {dimension_numbers = #tpu.dot_dimension_numbers<[1], [0], [0], [1], [0, 0, 1, 1], [], []>} : vector<32x144xf32>, vector<144x64xf32>, vector<32x64xf32> -> vector<32x64xf32>
    %c0_44 = arith.constant 0 : index
    %c0_45 = arith.constant 0 : index
    %85 = vector.load %arg3[%c0_44, %c0_45] : memref<32x1xf32, #tpu.memory_space<vmem>>, vector<32x1xf32>
    %86 = vector.broadcast %85 : vector<32x1xf32> to vector<32x64xf32>
    %87 = arith.addf %84, %86 : vector<32x64xf32>
    %cst_46 = arith.constant 0.000000e+00 : f32
    %88 = vector.broadcast %cst_46 : f32 to vector<32x64xf32>
    %89 = arith.maximumf %87, %88 : vector<32x64xf32>
    %c0_47 = arith.constant 0 : index
    %c0_48 = arith.constant 0 : index
    %90 = vector.load %arg4[%c0_47, %c0_48] : memref<16x32xf32, #tpu.memory_space<vmem>>, vector<16x32xf32>
    %cst_49 = arith.constant dense<0.000000e+00> : vector<16x64xf32>
    %91 = tpu.matmul %90, %89, %cst_49 {dimension_numbers = #tpu.dot_dimension_numbers<[1], [0], [0], [1], [0, 0, 1, 1], [], []>} : vector<16x32xf32>, vector<32x64xf32>, vector<16x64xf32> -> vector<16x64xf32>
    %c0_50 = arith.constant 0 : index
    %c0_51 = arith.constant 0 : index
    %92 = vector.load %arg5[%c0_50, %c0_51] : memref<16x1xf32, #tpu.memory_space<vmem>>, vector<16x1xf32>
    %93 = vector.broadcast %92 : vector<16x1xf32> to vector<16x64xf32>
    %94 = arith.addf %91, %93 : vector<16x64xf32>
    %95 = arith.truncf %94 : vector<16x64xf32> to vector<16x64xbf16>
    %c0_52 = arith.constant 0 : index
    %c0_53 = arith.constant 0 : index
    %c0_54 = arith.constant 0 : index
    %96 = vector.load %arg6[%c0_52, %c0_53, %c0_54] : memref<1x16x64xbf16, #tpu.memory_space<vmem>>, vector<1x16x64xbf16>
    %97 = vector.shape_cast %96 : vector<1x16x64xbf16> to vector<16x64xbf16>
    %98 = vector.shape_cast %95 : vector<16x64xbf16> to vector<1x16x64xbf16>
    tpu.vector_store %arg6[%c0_52, %c0_53, %c0_54], %98 {strides = array<i32>} : memref<1x16x64xbf16, #tpu.memory_space<vmem>>, vector<1x16x64xbf16>,
    return
  }
  func.func @transform_0(%arg0: i32) -> (i32, i32, i32) {
    %c0_i32 = arith.constant 0 : i32
    %c0_i32_0 = arith.constant 0 : i32
    %c0_i32_1 = arith.constant 0 : i32
    return %arg0, %c0_i32, %c0_i32_0 : i32, i32, i32
  }
  func.func @transform_1(%arg0: i32) -> (i32, i32) {
    %c0_i32 = arith.constant 0 : i32
    %c0_i32_0 = arith.constant 0 : i32
    %c0_i32_1 = arith.constant 0 : i32
    return %c0_i32, %c0_i32_0 : i32, i32
  }
  func.func @transform_2(%arg0: i32) -> (i32, i32) {
    %c0_i32 = arith.constant 0 : i32
    %c0_i32_0 = arith.constant 0 : i32
    %c0_i32_1 = arith.constant 0 : i32
    return %c0_i32, %c0_i32_0 : i32, i32
  }
  func.func @transform_3(%arg0: i32) -> (i32, i32) {
    %c0_i32 = arith.constant 0 : i32
    %c0_i32_0 = arith.constant 0 : i32
    %c0_i32_1 = arith.constant 0 : i32
    return %c0_i32, %c0_i32_0 : i32, i32
  }
  func.func @transform_4(%arg0: i32) -> (i32, i32) {
    %c0_i32 = arith.constant 0 : i32
    %c0_i32_0 = arith.constant 0 : i32
    %c0_i32_1 = arith.constant 0 : i32
    return %c0_i32, %c0_i32_0 : i32, i32
  }
  func.func @transform_5(%arg0: i32) -> (i32, i32, i32) {
    %c0_i32 = arith.constant 0 : i32
    %c0_i32_0 = arith.constant 0 : i32
    %c0_i32_1 = arith.constant 0 : i32
    return %arg0, %c0_i32, %c0_i32_0 : i32, i32, i32
  }
}

module attributes {stable_mosaic.version = 11 : i64} {
  func.func @kernel(%arg0: i32, %arg1: memref<1x16x64xbf16, #tpu.memory_space<vmem>>, %arg2: memref<1x16x64xbf16, #tpu.memory_space<vmem>>, %arg3: memref<16x16xf32, #tpu.memory_space<vmem>>, %arg4: memref<16x16xf32, #tpu.memory_space<vmem>>, %arg5: memref<16x1xf32, #tpu.memory_space<vmem>>, %arg6: memref<16x144xf32, #tpu.memory_space<vmem>>, %arg7: memref<16x1xf32, #tpu.memory_space<vmem>>, %arg8: memref<16x144xf32, #tpu.memory_space<vmem>>, %arg9: memref<16x1xf32, #tpu.memory_space<vmem>>, %arg10: memref<8x16xf32, #tpu.memory_space<vmem>>, %arg11: memref<8x1xf32, #tpu.memory_space<vmem>>, %arg12: memref<1x8x64xbf16, #tpu.memory_space<vmem>>, %arg13: memref<144x64xf32, #tpu.memory_space<vmem>>, %arg14: memref<16x320xf32, #tpu.memory_space<vmem>>) attributes {dimension_semantics = [#tpu.dimension_semantics<parallel>], iteration_bounds = array<i64: 2>, scalar_prefetch = 0 : i64, scratch_operands = 2 : i64, tpu.core_type = #tpu.core_type<tc>, window_params = [{transform_indices = @transform_0, window_bounds = array<i64: 1, 16, 64>}, {transform_indices = @transform_1, window_bounds = array<i64: 1, 16, 64>}, {pipeline_mode = #tpu.pipeline_mode<synchronous>, transform_indices = @transform_2, window_bounds = array<i64: 16, 16>}, {pipeline_mode = #tpu.pipeline_mode<synchronous>, transform_indices = @transform_3, window_bounds = array<i64: 16, 16>}, {pipeline_mode = #tpu.pipeline_mode<synchronous>, transform_indices = @transform_4, window_bounds = array<i64: 16, 1>}, {pipeline_mode = #tpu.pipeline_mode<synchronous>, transform_indices = @transform_5, window_bounds = array<i64: 16, 144>}, {pipeline_mode = #tpu.pipeline_mode<synchronous>, transform_indices = @transform_6, window_bounds = array<i64: 16, 1>}, {pipeline_mode = #tpu.pipeline_mode<synchronous>, transform_indices = @transform_7, window_bounds = array<i64: 16, 144>}, {pipeline_mode = #tpu.pipeline_mode<synchronous>, transform_indices = @transform_8, window_bounds = array<i64: 16, 1>}, {pipeline_mode = #tpu.pipeline_mode<synchronous>, transform_indices = @transform_9, window_bounds = array<i64: 8, 16>}, {pipeline_mode = #tpu.pipeline_mode<synchronous>, transform_indices = @transform_10, window_bounds = array<i64: 8, 1>}, {transform_indices = @transform_11, window_bounds = array<i64: 1, 8, 64>}]} {
    %cst = arith.constant 0.000000e+00 : f32
    %0 = vector.broadcast %cst : f32 to vector<16x320xf32>
    %c0 = arith.constant 0 : index
    %c0_0 = arith.constant 0 : index
    %1 = vector.load %arg14[%c0, %c0_0] : memref<16x320xf32, #tpu.memory_space<vmem>>, vector<16x320xf32>
    tpu.vector_store %arg14[%c0, %c0_0], %0 {strides = array<i32>} : memref<16x320xf32, #tpu.memory_space<vmem>>, vector<16x320xf32>,
    %c0_1 = arith.constant 0 : index
    %c0_2 = arith.constant 0 : index
    %c0_3 = arith.constant 0 : index
    %2 = vector.load %arg1[%c0_1, %c0_2, %c0_3] : memref<1x16x64xbf16, #tpu.memory_space<vmem>>, vector<1x16x64xbf16>
    %3 = vector.shape_cast %2 : vector<1x16x64xbf16> to vector<16x64xbf16>
    %4 = arith.extf %3 : vector<16x64xbf16> to vector<16x64xf32>
    %cst_4 = arith.constant 0.000000e+00 : f32
    %5 = vector.broadcast %cst_4 : f32 to vector<16x64xf32>
    %6 = arith.maximumf %4, %5 : vector<16x64xf32>
    %c0_5 = arith.constant 0 : index
    %c0_6 = arith.constant 0 : index
    %c0_7 = arith.constant 0 : index
    %7 = vector.load %arg2[%c0_5, %c0_6, %c0_7] : memref<1x16x64xbf16, #tpu.memory_space<vmem>>, vector<1x16x64xbf16>
    %8 = vector.shape_cast %7 : vector<1x16x64xbf16> to vector<16x64xbf16>
    %9 = arith.extf %8 : vector<16x64xbf16> to vector<16x64xf32>
    %c0_8 = arith.constant 0 : index
    %c0_9 = arith.constant 0 : index
    %10 = vector.load %arg3[%c0_8, %c0_9] : memref<16x16xf32, #tpu.memory_space<vmem>>, vector<16x16xf32>
    %cst_10 = arith.constant dense<0.000000e+00> : vector<16x64xf32>
    %11 = tpu.matmul %10, %6, %cst_10 {dimension_numbers = #tpu.dot_dimension_numbers<[1], [0], [0], [1], [0, 0, 1, 1], [], []>} : vector<16x16xf32>, vector<16x64xf32>, vector<16x64xf32> -> vector<16x64xf32>
    %c0_11 = arith.constant 0 : index
    %c0_12 = arith.constant 0 : index
    %12 = vector.load %arg4[%c0_11, %c0_12] : memref<16x16xf32, #tpu.memory_space<vmem>>, vector<16x16xf32>
    %cst_13 = arith.constant dense<0.000000e+00> : vector<16x64xf32>
    %13 = tpu.matmul %12, %9, %cst_13 {dimension_numbers = #tpu.dot_dimension_numbers<[1], [0], [0], [1], [0, 0, 1, 1], [], []>} : vector<16x16xf32>, vector<16x64xf32>, vector<16x64xf32> -> vector<16x64xf32>
    %14 = arith.addf %11, %13 : vector<16x64xf32>
    %c0_14 = arith.constant 0 : index
    %c0_15 = arith.constant 0 : index
    %15 = vector.load %arg5[%c0_14, %c0_15] : memref<16x1xf32, #tpu.memory_space<vmem>>, vector<16x1xf32>
    %16 = vector.broadcast %15 : vector<16x1xf32> to vector<16x64xf32>
    %17 = arith.addf %14, %16 : vector<16x64xf32>
    %cst_16 = arith.constant 0.000000e+00 : f32
    %18 = vector.broadcast %cst_16 : f32 to vector<16x64xf32>
    %19 = arith.maximumf %17, %18 : vector<16x64xf32>
    %c0_17 = arith.constant 0 : index
    %c128 = arith.constant 128 : index
    %20 = vector.load %arg14[%c0_17, %c128] : memref<16x320xf32, #tpu.memory_space<vmem>>, vector<16x64xf32>
    tpu.vector_store %arg14[%c0_17, %c128], %19 {strides = array<i32>} : memref<16x320xf32, #tpu.memory_space<vmem>>, vector<16x64xf32>,
    %21 = tpu.iota {dimensions = array<i32: 1>} : vector<1x64xi32>
    %c7_i32 = arith.constant 7 : i32
    %22 = vector.broadcast %c7_i32 : i32 to vector<1x64xi32>
    %23 = arith.andi %21, %22 : vector<1x64xi32>
    %c3_i32 = arith.constant 3 : i32
    %24 = vector.broadcast %c3_i32 : i32 to vector<1x64xi32>
    %25 = arith.shrsi %21, %24 : vector<1x64xi32>
    %c7_i32_18 = arith.constant 7 : i32
    %26 = vector.broadcast %c7_i32_18 : i32 to vector<1x64xi32>
    %27 = arith.andi %25, %26 : vector<1x64xi32>
    %c1_i32 = arith.constant 1 : i32
    %28 = vector.broadcast %c1_i32 : i32 to vector<1x64xi32>
    %29 = arith.cmpi sge, %27, %28 : vector<1x64xi32>
    %c1_i32_19 = arith.constant 1 : i32
    %30 = vector.broadcast %c1_i32_19 : i32 to vector<1x64xi32>
    %31 = arith.cmpi sge, %23, %30 : vector<1x64xi32>
    %c0_20 = arith.constant 0 : index
    %c119 = arith.constant 119 : index
    %32 = vector.load %arg14[%c0_20, %c119] : memref<16x320xf32, #tpu.memory_space<vmem>>, vector<16x64xf32>
    %33 = arith.andi %29, %31 : vector<1x64xi1>
    %cst_21 = arith.constant 0.000000e+00 : f32
    %34 = vector.shape_cast %33 : vector<1x64xi1> to vector<1x64xi1>
    %35 = vector.broadcast %34 : vector<1x64xi1> to vector<16x64xi1>
    %36 = vector.broadcast %cst_21 : f32 to vector<16x64xf32>
    %37 = arith.select %35, %32, %36 : vector<16x64xi1>, vector<16x64xf32>
    %c0_22 = arith.constant 0 : index
    %c0_23 = arith.constant 0 : index
    %38 = vector.load %arg13[%c0_22, %c0_23] : memref<144x64xf32, #tpu.memory_space<vmem>>, vector<16x64xf32>
    tpu.vector_store %arg13[%c0_22, %c0_23], %37 {strides = array<i32>} : memref<144x64xf32, #tpu.memory_space<vmem>>, vector<16x64xf32>,
    %c0_24 = arith.constant 0 : index
    %c120 = arith.constant 120 : index
    %39 = vector.load %arg14[%c0_24, %c120] : memref<16x320xf32, #tpu.memory_space<vmem>>, vector<16x64xf32>
    %cst_25 = arith.constant 0.000000e+00 : f32
    %40 = vector.shape_cast %29 : vector<1x64xi1> to vector<1x64xi1>
    %41 = vector.broadcast %40 : vector<1x64xi1> to vector<16x64xi1>
    %42 = vector.broadcast %cst_25 : f32 to vector<16x64xf32>
    %43 = arith.select %41, %39, %42 : vector<16x64xi1>, vector<16x64xf32>
    %c16 = arith.constant 16 : index
    %c0_26 = arith.constant 0 : index
    %44 = vector.load %arg13[%c16, %c0_26] : memref<144x64xf32, #tpu.memory_space<vmem>>, vector<16x64xf32>
    tpu.vector_store %arg13[%c16, %c0_26], %43 {strides = array<i32>} : memref<144x64xf32, #tpu.memory_space<vmem>>, vector<16x64xf32>,
    %c6_i32 = arith.constant 6 : i32
    %45 = vector.broadcast %c6_i32 : i32 to vector<1x64xi32>
    %46 = arith.cmpi sle, %23, %45 : vector<1x64xi32>
    %c0_27 = arith.constant 0 : index
    %c121 = arith.constant 121 : index
    %47 = vector.load %arg14[%c0_27, %c121] : memref<16x320xf32, #tpu.memory_space<vmem>>, vector<16x64xf32>
    %48 = arith.andi %29, %46 : vector<1x64xi1>
    %cst_28 = arith.constant 0.000000e+00 : f32
    %49 = vector.shape_cast %48 : vector<1x64xi1> to vector<1x64xi1>
    %50 = vector.broadcast %49 : vector<1x64xi1> to vector<16x64xi1>
    %51 = vector.broadcast %cst_28 : f32 to vector<16x64xf32>
    %52 = arith.select %50, %47, %51 : vector<16x64xi1>, vector<16x64xf32>
    %c32 = arith.constant 32 : index
    %c0_29 = arith.constant 0 : index
    %53 = vector.load %arg13[%c32, %c0_29] : memref<144x64xf32, #tpu.memory_space<vmem>>, vector<16x64xf32>
    tpu.vector_store %arg13[%c32, %c0_29], %52 {strides = array<i32>} : memref<144x64xf32, #tpu.memory_space<vmem>>, vector<16x64xf32>,
    %c1_i32_30 = arith.constant 1 : i32
    %54 = vector.broadcast %c1_i32_30 : i32 to vector<1x64xi32>
    %55 = arith.cmpi sge, %23, %54 : vector<1x64xi32>
    %c0_31 = arith.constant 0 : index
    %c127 = arith.constant 127 : index
    %56 = vector.load %arg14[%c0_31, %c127] : memref<16x320xf32, #tpu.memory_space<vmem>>, vector<16x64xf32>
    %cst_32 = arith.constant 0.000000e+00 : f32
    %57 = vector.shape_cast %55 : vector<1x64xi1> to vector<1x64xi1>
    %58 = vector.broadcast %57 : vector<1x64xi1> to vector<16x64xi1>
    %59 = vector.broadcast %cst_32 : f32 to vector<16x64xf32>
    %60 = arith.select %58, %56, %59 : vector<16x64xi1>, vector<16x64xf32>
    %c48 = arith.constant 48 : index
    %c0_33 = arith.constant 0 : index
    %61 = vector.load %arg13[%c48, %c0_33] : memref<144x64xf32, #tpu.memory_space<vmem>>, vector<16x64xf32>
    tpu.vector_store %arg13[%c48, %c0_33], %60 {strides = array<i32>} : memref<144x64xf32, #tpu.memory_space<vmem>>, vector<16x64xf32>,
    %c64 = arith.constant 64 : index
    %c0_34 = arith.constant 0 : index
    %62 = vector.load %arg13[%c64, %c0_34] : memref<144x64xf32, #tpu.memory_space<vmem>>, vector<16x64xf32>
    tpu.vector_store %arg13[%c64, %c0_34], %19 {strides = array<i32>} : memref<144x64xf32, #tpu.memory_space<vmem>>, vector<16x64xf32>,
    %c6_i32_35 = arith.constant 6 : i32
    %63 = vector.broadcast %c6_i32_35 : i32 to vector<1x64xi32>
    %64 = arith.cmpi sle, %23, %63 : vector<1x64xi32>
    %c0_36 = arith.constant 0 : index
    %c129 = arith.constant 129 : index
    %65 = vector.load %arg14[%c0_36, %c129] : memref<16x320xf32, #tpu.memory_space<vmem>>, vector<16x64xf32>
    %cst_37 = arith.constant 0.000000e+00 : f32
    %66 = vector.shape_cast %64 : vector<1x64xi1> to vector<1x64xi1>
    %67 = vector.broadcast %66 : vector<1x64xi1> to vector<16x64xi1>
    %68 = vector.broadcast %cst_37 : f32 to vector<16x64xf32>
    %69 = arith.select %67, %65, %68 : vector<16x64xi1>, vector<16x64xf32>
    %c80 = arith.constant 80 : index
    %c0_38 = arith.constant 0 : index
    %70 = vector.load %arg13[%c80, %c0_38] : memref<144x64xf32, #tpu.memory_space<vmem>>, vector<16x64xf32>
    tpu.vector_store %arg13[%c80, %c0_38], %69 {strides = array<i32>} : memref<144x64xf32, #tpu.memory_space<vmem>>, vector<16x64xf32>,
    %c6_i32_39 = arith.constant 6 : i32
    %71 = vector.broadcast %c6_i32_39 : i32 to vector<1x64xi32>
    %72 = arith.cmpi sle, %27, %71 : vector<1x64xi32>
    %c1_i32_40 = arith.constant 1 : i32
    %73 = vector.broadcast %c1_i32_40 : i32 to vector<1x64xi32>
    %74 = arith.cmpi sge, %23, %73 : vector<1x64xi32>
    %c0_41 = arith.constant 0 : index
    %c135 = arith.constant 135 : index
    %75 = vector.load %arg14[%c0_41, %c135] : memref<16x320xf32, #tpu.memory_space<vmem>>, vector<16x64xf32>
    %76 = arith.andi %72, %74 : vector<1x64xi1>
    %cst_42 = arith.constant 0.000000e+00 : f32
    %77 = vector.shape_cast %76 : vector<1x64xi1> to vector<1x64xi1>
    %78 = vector.broadcast %77 : vector<1x64xi1> to vector<16x64xi1>
    %79 = vector.broadcast %cst_42 : f32 to vector<16x64xf32>
    %80 = arith.select %78, %75, %79 : vector<16x64xi1>, vector<16x64xf32>
    %c96 = arith.constant 96 : index
    %c0_43 = arith.constant 0 : index
    %81 = vector.load %arg13[%c96, %c0_43] : memref<144x64xf32, #tpu.memory_space<vmem>>, vector<16x64xf32>
    tpu.vector_store %arg13[%c96, %c0_43], %80 {strides = array<i32>} : memref<144x64xf32, #tpu.memory_space<vmem>>, vector<16x64xf32>,
    %c0_44 = arith.constant 0 : index
    %c136 = arith.constant 136 : index
    %82 = vector.load %arg14[%c0_44, %c136] : memref<16x320xf32, #tpu.memory_space<vmem>>, vector<16x64xf32>
    %cst_45 = arith.constant 0.000000e+00 : f32
    %83 = vector.shape_cast %72 : vector<1x64xi1> to vector<1x64xi1>
    %84 = vector.broadcast %83 : vector<1x64xi1> to vector<16x64xi1>
    %85 = vector.broadcast %cst_45 : f32 to vector<16x64xf32>
    %86 = arith.select %84, %82, %85 : vector<16x64xi1>, vector<16x64xf32>
    %c112 = arith.constant 112 : index
    %c0_46 = arith.constant 0 : index
    %87 = vector.load %arg13[%c112, %c0_46] : memref<144x64xf32, #tpu.memory_space<vmem>>, vector<16x64xf32>
    tpu.vector_store %arg13[%c112, %c0_46], %86 {strides = array<i32>} : memref<144x64xf32, #tpu.memory_space<vmem>>, vector<16x64xf32>,
    %c6_i32_47 = arith.constant 6 : i32
    %88 = vector.broadcast %c6_i32_47 : i32 to vector<1x64xi32>
    %89 = arith.cmpi sle, %23, %88 : vector<1x64xi32>
    %c0_48 = arith.constant 0 : index
    %c137 = arith.constant 137 : index
    %90 = vector.load %arg14[%c0_48, %c137] : memref<16x320xf32, #tpu.memory_space<vmem>>, vector<16x64xf32>
    %91 = arith.andi %72, %89 : vector<1x64xi1>
    %cst_49 = arith.constant 0.000000e+00 : f32
    %92 = vector.shape_cast %91 : vector<1x64xi1> to vector<1x64xi1>
    %93 = vector.broadcast %92 : vector<1x64xi1> to vector<16x64xi1>
    %94 = vector.broadcast %cst_49 : f32 to vector<16x64xf32>
    %95 = arith.select %93, %90, %94 : vector<16x64xi1>, vector<16x64xf32>
    %c128_50 = arith.constant 128 : index
    %c0_51 = arith.constant 0 : index
    %96 = vector.load %arg13[%c128_50, %c0_51] : memref<144x64xf32, #tpu.memory_space<vmem>>, vector<16x64xf32>
    tpu.vector_store %arg13[%c128_50, %c0_51], %95 {strides = array<i32>} : memref<144x64xf32, #tpu.memory_space<vmem>>, vector<16x64xf32>,
    %c0_52 = arith.constant 0 : index
    %c0_53 = arith.constant 0 : index
    %97 = vector.load %arg6[%c0_52, %c0_53] : memref<16x144xf32, #tpu.memory_space<vmem>>, vector<16x144xf32>
    %c0_54 = arith.constant 0 : index
    %c0_55 = arith.constant 0 : index
    %98 = vector.load %arg13[%c0_54, %c0_55] : memref<144x64xf32, #tpu.memory_space<vmem>>, vector<144x64xf32>
    %cst_56 = arith.constant dense<0.000000e+00> : vector<16x64xf32>
    %99 = tpu.matmul %97, %98, %cst_56 {dimension_numbers = #tpu.dot_dimension_numbers<[1], [0], [0], [1], [0, 0, 1, 1], [], []>} : vector<16x144xf32>, vector<144x64xf32>, vector<16x64xf32> -> vector<16x64xf32>
    %c0_57 = arith.constant 0 : index
    %c0_58 = arith.constant 0 : index
    %100 = vector.load %arg7[%c0_57, %c0_58] : memref<16x1xf32, #tpu.memory_space<vmem>>, vector<16x1xf32>
    %101 = vector.broadcast %100 : vector<16x1xf32> to vector<16x64xf32>
    %102 = arith.addf %99, %101 : vector<16x64xf32>
    %cst_59 = arith.constant 0.000000e+00 : f32
    %103 = vector.broadcast %cst_59 : f32 to vector<16x64xf32>
    %104 = arith.maximumf %102, %103 : vector<16x64xf32>
    %c0_60 = arith.constant 0 : index
    %c128_61 = arith.constant 128 : index
    %105 = vector.load %arg14[%c0_60, %c128_61] : memref<16x320xf32, #tpu.memory_space<vmem>>, vector<16x64xf32>
    tpu.vector_store %arg14[%c0_60, %c128_61], %104 {strides = array<i32>} : memref<16x320xf32, #tpu.memory_space<vmem>>, vector<16x64xf32>,
    %106 = tpu.iota {dimensions = array<i32: 1>} : vector<1x64xi32>
    %c7_i32_62 = arith.constant 7 : i32
    %107 = vector.broadcast %c7_i32_62 : i32 to vector<1x64xi32>
    %108 = arith.andi %106, %107 : vector<1x64xi32>
    %c3_i32_63 = arith.constant 3 : i32
    %109 = vector.broadcast %c3_i32_63 : i32 to vector<1x64xi32>
    %110 = arith.shrsi %106, %109 : vector<1x64xi32>
    %c7_i32_64 = arith.constant 7 : i32
    %111 = vector.broadcast %c7_i32_64 : i32 to vector<1x64xi32>
    %112 = arith.andi %110, %111 : vector<1x64xi32>
    %c1_i32_65 = arith.constant 1 : i32
    %113 = vector.broadcast %c1_i32_65 : i32 to vector<1x64xi32>
    %114 = arith.cmpi sge, %112, %113 : vector<1x64xi32>
    %c1_i32_66 = arith.constant 1 : i32
    %115 = vector.broadcast %c1_i32_66 : i32 to vector<1x64xi32>
    %116 = arith.cmpi sge, %108, %115 : vector<1x64xi32>
    %c0_67 = arith.constant 0 : index
    %c119_68 = arith.constant 119 : index
    %117 = vector.load %arg14[%c0_67, %c119_68] : memref<16x320xf32, #tpu.memory_space<vmem>>, vector<16x64xf32>
    %118 = arith.andi %114, %116 : vector<1x64xi1>
    %cst_69 = arith.constant 0.000000e+00 : f32
    %119 = vector.shape_cast %118 : vector<1x64xi1> to vector<1x64xi1>
    %120 = vector.broadcast %119 : vector<1x64xi1> to vector<16x64xi1>
    %121 = vector.broadcast %cst_69 : f32 to vector<16x64xf32>
    %122 = arith.select %120, %117, %121 : vector<16x64xi1>, vector<16x64xf32>
    %c0_70 = arith.constant 0 : index
    %c0_71 = arith.constant 0 : index
    %123 = vector.load %arg13[%c0_70, %c0_71] : memref<144x64xf32, #tpu.memory_space<vmem>>, vector<16x64xf32>
    tpu.vector_store %arg13[%c0_70, %c0_71], %122 {strides = array<i32>} : memref<144x64xf32, #tpu.memory_space<vmem>>, vector<16x64xf32>,
    %c0_72 = arith.constant 0 : index
    %c120_73 = arith.constant 120 : index
    %124 = vector.load %arg14[%c0_72, %c120_73] : memref<16x320xf32, #tpu.memory_space<vmem>>, vector<16x64xf32>
    %cst_74 = arith.constant 0.000000e+00 : f32
    %125 = vector.shape_cast %114 : vector<1x64xi1> to vector<1x64xi1>
    %126 = vector.broadcast %125 : vector<1x64xi1> to vector<16x64xi1>
    %127 = vector.broadcast %cst_74 : f32 to vector<16x64xf32>
    %128 = arith.select %126, %124, %127 : vector<16x64xi1>, vector<16x64xf32>
    %c16_75 = arith.constant 16 : index
    %c0_76 = arith.constant 0 : index
    %129 = vector.load %arg13[%c16_75, %c0_76] : memref<144x64xf32, #tpu.memory_space<vmem>>, vector<16x64xf32>
    tpu.vector_store %arg13[%c16_75, %c0_76], %128 {strides = array<i32>} : memref<144x64xf32, #tpu.memory_space<vmem>>, vector<16x64xf32>,
    %c6_i32_77 = arith.constant 6 : i32
    %130 = vector.broadcast %c6_i32_77 : i32 to vector<1x64xi32>
    %131 = arith.cmpi sle, %108, %130 : vector<1x64xi32>
    %c0_78 = arith.constant 0 : index
    %c121_79 = arith.constant 121 : index
    %132 = vector.load %arg14[%c0_78, %c121_79] : memref<16x320xf32, #tpu.memory_space<vmem>>, vector<16x64xf32>
    %133 = arith.andi %114, %131 : vector<1x64xi1>
    %cst_80 = arith.constant 0.000000e+00 : f32
    %134 = vector.shape_cast %133 : vector<1x64xi1> to vector<1x64xi1>
    %135 = vector.broadcast %134 : vector<1x64xi1> to vector<16x64xi1>
    %136 = vector.broadcast %cst_80 : f32 to vector<16x64xf32>
    %137 = arith.select %135, %132, %136 : vector<16x64xi1>, vector<16x64xf32>
    %c32_81 = arith.constant 32 : index
    %c0_82 = arith.constant 0 : index
    %138 = vector.load %arg13[%c32_81, %c0_82] : memref<144x64xf32, #tpu.memory_space<vmem>>, vector<16x64xf32>
    tpu.vector_store %arg13[%c32_81, %c0_82], %137 {strides = array<i32>} : memref<144x64xf32, #tpu.memory_space<vmem>>, vector<16x64xf32>,
    %c1_i32_83 = arith.constant 1 : i32
    %139 = vector.broadcast %c1_i32_83 : i32 to vector<1x64xi32>
    %140 = arith.cmpi sge, %108, %139 : vector<1x64xi32>
    %c0_84 = arith.constant 0 : index
    %c127_85 = arith.constant 127 : index
    %141 = vector.load %arg14[%c0_84, %c127_85] : memref<16x320xf32, #tpu.memory_space<vmem>>, vector<16x64xf32>
    %cst_86 = arith.constant 0.000000e+00 : f32
    %142 = vector.shape_cast %140 : vector<1x64xi1> to vector<1x64xi1>
    %143 = vector.broadcast %142 : vector<1x64xi1> to vector<16x64xi1>
    %144 = vector.broadcast %cst_86 : f32 to vector<16x64xf32>
    %145 = arith.select %143, %141, %144 : vector<16x64xi1>, vector<16x64xf32>
    %c48_87 = arith.constant 48 : index
    %c0_88 = arith.constant 0 : index
    %146 = vector.load %arg13[%c48_87, %c0_88] : memref<144x64xf32, #tpu.memory_space<vmem>>, vector<16x64xf32>
    tpu.vector_store %arg13[%c48_87, %c0_88], %145 {strides = array<i32>} : memref<144x64xf32, #tpu.memory_space<vmem>>, vector<16x64xf32>,
    %c64_89 = arith.constant 64 : index
    %c0_90 = arith.constant 0 : index
    %147 = vector.load %arg13[%c64_89, %c0_90] : memref<144x64xf32, #tpu.memory_space<vmem>>, vector<16x64xf32>
    tpu.vector_store %arg13[%c64_89, %c0_90], %104 {strides = array<i32>} : memref<144x64xf32, #tpu.memory_space<vmem>>, vector<16x64xf32>,
    %c6_i32_91 = arith.constant 6 : i32
    %148 = vector.broadcast %c6_i32_91 : i32 to vector<1x64xi32>
    %149 = arith.cmpi sle, %108, %148 : vector<1x64xi32>
    %c0_92 = arith.constant 0 : index
    %c129_93 = arith.constant 129 : index
    %150 = vector.load %arg14[%c0_92, %c129_93] : memref<16x320xf32, #tpu.memory_space<vmem>>, vector<16x64xf32>
    %cst_94 = arith.constant 0.000000e+00 : f32
    %151 = vector.shape_cast %149 : vector<1x64xi1> to vector<1x64xi1>
    %152 = vector.broadcast %151 : vector<1x64xi1> to vector<16x64xi1>
    %153 = vector.broadcast %cst_94 : f32 to vector<16x64xf32>
    %154 = arith.select %152, %150, %153 : vector<16x64xi1>, vector<16x64xf32>
    %c80_95 = arith.constant 80 : index
    %c0_96 = arith.constant 0 : index
    %155 = vector.load %arg13[%c80_95, %c0_96] : memref<144x64xf32, #tpu.memory_space<vmem>>, vector<16x64xf32>
    tpu.vector_store %arg13[%c80_95, %c0_96], %154 {strides = array<i32>} : memref<144x64xf32, #tpu.memory_space<vmem>>, vector<16x64xf32>,
    %c6_i32_97 = arith.constant 6 : i32
    %156 = vector.broadcast %c6_i32_97 : i32 to vector<1x64xi32>
    %157 = arith.cmpi sle, %112, %156 : vector<1x64xi32>
    %c1_i32_98 = arith.constant 1 : i32
    %158 = vector.broadcast %c1_i32_98 : i32 to vector<1x64xi32>
    %159 = arith.cmpi sge, %108, %158 : vector<1x64xi32>
    %c0_99 = arith.constant 0 : index
    %c135_100 = arith.constant 135 : index
    %160 = vector.load %arg14[%c0_99, %c135_100] : memref<16x320xf32, #tpu.memory_space<vmem>>, vector<16x64xf32>
    %161 = arith.andi %157, %159 : vector<1x64xi1>
    %cst_101 = arith.constant 0.000000e+00 : f32
    %162 = vector.shape_cast %161 : vector<1x64xi1> to vector<1x64xi1>
    %163 = vector.broadcast %162 : vector<1x64xi1> to vector<16x64xi1>
    %164 = vector.broadcast %cst_101 : f32 to vector<16x64xf32>
    %165 = arith.select %163, %160, %164 : vector<16x64xi1>, vector<16x64xf32>
    %c96_102 = arith.constant 96 : index
    %c0_103 = arith.constant 0 : index
    %166 = vector.load %arg13[%c96_102, %c0_103] : memref<144x64xf32, #tpu.memory_space<vmem>>, vector<16x64xf32>
    tpu.vector_store %arg13[%c96_102, %c0_103], %165 {strides = array<i32>} : memref<144x64xf32, #tpu.memory_space<vmem>>, vector<16x64xf32>,
    %c0_104 = arith.constant 0 : index
    %c136_105 = arith.constant 136 : index
    %167 = vector.load %arg14[%c0_104, %c136_105] : memref<16x320xf32, #tpu.memory_space<vmem>>, vector<16x64xf32>
    %cst_106 = arith.constant 0.000000e+00 : f32
    %168 = vector.shape_cast %157 : vector<1x64xi1> to vector<1x64xi1>
    %169 = vector.broadcast %168 : vector<1x64xi1> to vector<16x64xi1>
    %170 = vector.broadcast %cst_106 : f32 to vector<16x64xf32>
    %171 = arith.select %169, %167, %170 : vector<16x64xi1>, vector<16x64xf32>
    %c112_107 = arith.constant 112 : index
    %c0_108 = arith.constant 0 : index
    %172 = vector.load %arg13[%c112_107, %c0_108] : memref<144x64xf32, #tpu.memory_space<vmem>>, vector<16x64xf32>
    tpu.vector_store %arg13[%c112_107, %c0_108], %171 {strides = array<i32>} : memref<144x64xf32, #tpu.memory_space<vmem>>, vector<16x64xf32>,
    %c6_i32_109 = arith.constant 6 : i32
    %173 = vector.broadcast %c6_i32_109 : i32 to vector<1x64xi32>
    %174 = arith.cmpi sle, %108, %173 : vector<1x64xi32>
    %c0_110 = arith.constant 0 : index
    %c137_111 = arith.constant 137 : index
    %175 = vector.load %arg14[%c0_110, %c137_111] : memref<16x320xf32, #tpu.memory_space<vmem>>, vector<16x64xf32>
    %176 = arith.andi %157, %174 : vector<1x64xi1>
    %cst_112 = arith.constant 0.000000e+00 : f32
    %177 = vector.shape_cast %176 : vector<1x64xi1> to vector<1x64xi1>
    %178 = vector.broadcast %177 : vector<1x64xi1> to vector<16x64xi1>
    %179 = vector.broadcast %cst_112 : f32 to vector<16x64xf32>
    %180 = arith.select %178, %175, %179 : vector<16x64xi1>, vector<16x64xf32>
    %c128_113 = arith.constant 128 : index
    %c0_114 = arith.constant 0 : index
    %181 = vector.load %arg13[%c128_113, %c0_114] : memref<144x64xf32, #tpu.memory_space<vmem>>, vector<16x64xf32>
    tpu.vector_store %arg13[%c128_113, %c0_114], %180 {strides = array<i32>} : memref<144x64xf32, #tpu.memory_space<vmem>>, vector<16x64xf32>,
    %c0_115 = arith.constant 0 : index
    %c0_116 = arith.constant 0 : index
    %182 = vector.load %arg8[%c0_115, %c0_116] : memref<16x144xf32, #tpu.memory_space<vmem>>, vector<16x144xf32>
    %c0_117 = arith.constant 0 : index
    %c0_118 = arith.constant 0 : index
    %183 = vector.load %arg13[%c0_117, %c0_118] : memref<144x64xf32, #tpu.memory_space<vmem>>, vector<144x64xf32>
    %cst_119 = arith.constant dense<0.000000e+00> : vector<16x64xf32>
    %184 = tpu.matmul %182, %183, %cst_119 {dimension_numbers = #tpu.dot_dimension_numbers<[1], [0], [0], [1], [0, 0, 1, 1], [], []>} : vector<16x144xf32>, vector<144x64xf32>, vector<16x64xf32> -> vector<16x64xf32>
    %c0_120 = arith.constant 0 : index
    %c0_121 = arith.constant 0 : index
    %185 = vector.load %arg9[%c0_120, %c0_121] : memref<16x1xf32, #tpu.memory_space<vmem>>, vector<16x1xf32>
    %186 = vector.broadcast %185 : vector<16x1xf32> to vector<16x64xf32>
    %187 = arith.addf %184, %186 : vector<16x64xf32>
    %188 = arith.addf %187, %19 : vector<16x64xf32>
    %cst_122 = arith.constant 0.000000e+00 : f32
    %189 = vector.broadcast %cst_122 : f32 to vector<16x64xf32>
    %190 = arith.maximumf %188, %189 : vector<16x64xf32>
    %c0_123 = arith.constant 0 : index
    %c0_124 = arith.constant 0 : index
    %191 = vector.load %arg10[%c0_123, %c0_124] : memref<8x16xf32, #tpu.memory_space<vmem>>, vector<8x16xf32>
    %cst_125 = arith.constant dense<0.000000e+00> : vector<8x64xf32>
    %192 = tpu.matmul %191, %190, %cst_125 {dimension_numbers = #tpu.dot_dimension_numbers<[1], [0], [0], [1], [0, 0, 1, 1], [], []>} : vector<8x16xf32>, vector<16x64xf32>, vector<8x64xf32> -> vector<8x64xf32>
    %c0_126 = arith.constant 0 : index
    %c0_127 = arith.constant 0 : index
    %193 = vector.load %arg11[%c0_126, %c0_127] : memref<8x1xf32, #tpu.memory_space<vmem>>, vector<8x1xf32>
    %194 = vector.broadcast %193 : vector<8x1xf32> to vector<8x64xf32>
    %195 = arith.addf %192, %194 : vector<8x64xf32>
    %196 = arith.truncf %195 : vector<8x64xf32> to vector<8x64xbf16>
    %c0_128 = arith.constant 0 : index
    %c0_129 = arith.constant 0 : index
    %c0_130 = arith.constant 0 : index
    %197 = vector.load %arg12[%c0_128, %c0_129, %c0_130] : memref<1x8x64xbf16, #tpu.memory_space<vmem>>, vector<1x8x64xbf16>
    %198 = vector.shape_cast %197 : vector<1x8x64xbf16> to vector<8x64xbf16>
    %199 = vector.shape_cast %196 : vector<8x64xbf16> to vector<1x8x64xbf16>
    tpu.vector_store %arg12[%c0_128, %c0_129, %c0_130], %199 {strides = array<i32>} : memref<1x8x64xbf16, #tpu.memory_space<vmem>>, vector<1x8x64xbf16>,
    return
  }
  func.func @transform_0(%arg0: i32) -> (i32, i32, i32) {
    %c0_i32 = arith.constant 0 : i32
    %c0_i32_0 = arith.constant 0 : i32
    %c0_i32_1 = arith.constant 0 : i32
    return %arg0, %c0_i32, %c0_i32_0 : i32, i32, i32
  }
  func.func @transform_1(%arg0: i32) -> (i32, i32, i32) {
    %c0_i32 = arith.constant 0 : i32
    %c0_i32_0 = arith.constant 0 : i32
    %c0_i32_1 = arith.constant 0 : i32
    return %arg0, %c0_i32, %c0_i32_0 : i32, i32, i32
  }
  func.func @transform_2(%arg0: i32) -> (i32, i32) {
    %c0_i32 = arith.constant 0 : i32
    %c0_i32_0 = arith.constant 0 : i32
    %c0_i32_1 = arith.constant 0 : i32
    return %c0_i32, %c0_i32_0 : i32, i32
  }
  func.func @transform_3(%arg0: i32) -> (i32, i32) {
    %c0_i32 = arith.constant 0 : i32
    %c0_i32_0 = arith.constant 0 : i32
    %c0_i32_1 = arith.constant 0 : i32
    return %c0_i32, %c0_i32_0 : i32, i32
  }
  func.func @transform_4(%arg0: i32) -> (i32, i32) {
    %c0_i32 = arith.constant 0 : i32
    %c0_i32_0 = arith.constant 0 : i32
    %c0_i32_1 = arith.constant 0 : i32
    return %c0_i32, %c0_i32_0 : i32, i32
  }
  func.func @transform_5(%arg0: i32) -> (i32, i32) {
    %c0_i32 = arith.constant 0 : i32
    %c0_i32_0 = arith.constant 0 : i32
    %c0_i32_1 = arith.constant 0 : i32
    return %c0_i32, %c0_i32_0 : i32, i32
  }
  func.func @transform_6(%arg0: i32) -> (i32, i32) {
    %c0_i32 = arith.constant 0 : i32
    %c0_i32_0 = arith.constant 0 : i32
    %c0_i32_1 = arith.constant 0 : i32
    return %c0_i32, %c0_i32_0 : i32, i32
  }
  func.func @transform_7(%arg0: i32) -> (i32, i32) {
    %c0_i32 = arith.constant 0 : i32
    %c0_i32_0 = arith.constant 0 : i32
    %c0_i32_1 = arith.constant 0 : i32
    return %c0_i32, %c0_i32_0 : i32, i32
  }
  func.func @transform_8(%arg0: i32) -> (i32, i32) {
    %c0_i32 = arith.constant 0 : i32
    %c0_i32_0 = arith.constant 0 : i32
    %c0_i32_1 = arith.constant 0 : i32
    return %c0_i32, %c0_i32_0 : i32, i32
  }
  func.func @transform_9(%arg0: i32) -> (i32, i32) {
    %c0_i32 = arith.constant 0 : i32
    %c0_i32_0 = arith.constant 0 : i32
    %c0_i32_1 = arith.constant 0 : i32
    return %c0_i32, %c0_i32_0 : i32, i32
  }
  func.func @transform_10(%arg0: i32) -> (i32, i32) {
    %c0_i32 = arith.constant 0 : i32
    %c0_i32_0 = arith.constant 0 : i32
    %c0_i32_1 = arith.constant 0 : i32
    return %c0_i32, %c0_i32_0 : i32, i32
  }
  func.func @transform_11(%arg0: i32) -> (i32, i32, i32) {
    %c0_i32 = arith.constant 0 : i32
    %c0_i32_0 = arith.constant 0 : i32
    %c0_i32_1 = arith.constant 0 : i32
    return %arg0, %c0_i32, %c0_i32_0 : i32, i32, i32
  }
}

module attributes {stable_mosaic.version = 11 : i64} {
  func.func @kernel(%arg0: i32, %arg1: memref<1x8x256xbf16, #tpu.memory_space<vmem>>, %arg2: memref<1x8x256xbf16, #tpu.memory_space<vmem>>, %arg3: memref<8x8xf32, #tpu.memory_space<vmem>>, %arg4: memref<8x8xf32, #tpu.memory_space<vmem>>, %arg5: memref<8x1xf32, #tpu.memory_space<vmem>>, %arg6: memref<8x72xf32, #tpu.memory_space<vmem>>, %arg7: memref<8x1xf32, #tpu.memory_space<vmem>>, %arg8: memref<8x72xf32, #tpu.memory_space<vmem>>, %arg9: memref<8x1xf32, #tpu.memory_space<vmem>>, %arg10: memref<8x8xf32, #tpu.memory_space<vmem>>, %arg11: memref<8x1xf32, #tpu.memory_space<vmem>>, %arg12: memref<1x8x256xbf16, #tpu.memory_space<vmem>>, %arg13: memref<72x256xf32, #tpu.memory_space<vmem>>, %arg14: memref<8x512xf32, #tpu.memory_space<vmem>>) attributes {dimension_semantics = [#tpu.dimension_semantics<parallel>], iteration_bounds = array<i64: 2>, scalar_prefetch = 0 : i64, scratch_operands = 2 : i64, tpu.core_type = #tpu.core_type<tc>, window_params = [{transform_indices = @transform_0, window_bounds = array<i64: 1, 8, 256>}, {transform_indices = @transform_1, window_bounds = array<i64: 1, 8, 256>}, {pipeline_mode = #tpu.pipeline_mode<synchronous>, transform_indices = @transform_2, window_bounds = array<i64: 8, 8>}, {pipeline_mode = #tpu.pipeline_mode<synchronous>, transform_indices = @transform_3, window_bounds = array<i64: 8, 8>}, {pipeline_mode = #tpu.pipeline_mode<synchronous>, transform_indices = @transform_4, window_bounds = array<i64: 8, 1>}, {pipeline_mode = #tpu.pipeline_mode<synchronous>, transform_indices = @transform_5, window_bounds = array<i64: 8, 72>}, {pipeline_mode = #tpu.pipeline_mode<synchronous>, transform_indices = @transform_6, window_bounds = array<i64: 8, 1>}, {pipeline_mode = #tpu.pipeline_mode<synchronous>, transform_indices = @transform_7, window_bounds = array<i64: 8, 72>}, {pipeline_mode = #tpu.pipeline_mode<synchronous>, transform_indices = @transform_8, window_bounds = array<i64: 8, 1>}, {pipeline_mode = #tpu.pipeline_mode<synchronous>, transform_indices = @transform_9, window_bounds = array<i64: 8, 8>}, {pipeline_mode = #tpu.pipeline_mode<synchronous>, transform_indices = @transform_10, window_bounds = array<i64: 8, 1>}, {transform_indices = @transform_11, window_bounds = array<i64: 1, 8, 256>}]} {
    %cst = arith.constant 0.000000e+00 : f32
    %0 = vector.broadcast %cst : f32 to vector<8x512xf32>
    %c0 = arith.constant 0 : index
    %c0_0 = arith.constant 0 : index
    %1 = vector.load %arg14[%c0, %c0_0] : memref<8x512xf32, #tpu.memory_space<vmem>>, vector<8x512xf32>
    tpu.vector_store %arg14[%c0, %c0_0], %0 {strides = array<i32>} : memref<8x512xf32, #tpu.memory_space<vmem>>, vector<8x512xf32>,
    %c0_1 = arith.constant 0 : index
    %c0_2 = arith.constant 0 : index
    %c0_3 = arith.constant 0 : index
    %2 = vector.load %arg1[%c0_1, %c0_2, %c0_3] : memref<1x8x256xbf16, #tpu.memory_space<vmem>>, vector<1x8x256xbf16>
    %3 = vector.shape_cast %2 : vector<1x8x256xbf16> to vector<8x256xbf16>
    %4 = arith.extf %3 : vector<8x256xbf16> to vector<8x256xf32>
    %cst_4 = arith.constant 0.000000e+00 : f32
    %5 = vector.broadcast %cst_4 : f32 to vector<8x256xf32>
    %6 = arith.maximumf %4, %5 : vector<8x256xf32>
    %c0_5 = arith.constant 0 : index
    %c0_6 = arith.constant 0 : index
    %c0_7 = arith.constant 0 : index
    %7 = vector.load %arg2[%c0_5, %c0_6, %c0_7] : memref<1x8x256xbf16, #tpu.memory_space<vmem>>, vector<1x8x256xbf16>
    %8 = vector.shape_cast %7 : vector<1x8x256xbf16> to vector<8x256xbf16>
    %9 = arith.extf %8 : vector<8x256xbf16> to vector<8x256xf32>
    %c0_8 = arith.constant 0 : index
    %c0_9 = arith.constant 0 : index
    %10 = vector.load %arg3[%c0_8, %c0_9] : memref<8x8xf32, #tpu.memory_space<vmem>>, vector<8x8xf32>
    %cst_10 = arith.constant dense<0.000000e+00> : vector<8x256xf32>
    %11 = tpu.matmul %10, %6, %cst_10 {dimension_numbers = #tpu.dot_dimension_numbers<[1], [0], [0], [1], [0, 0, 1, 1], [], []>} : vector<8x8xf32>, vector<8x256xf32>, vector<8x256xf32> -> vector<8x256xf32>
    %c0_11 = arith.constant 0 : index
    %c0_12 = arith.constant 0 : index
    %12 = vector.load %arg4[%c0_11, %c0_12] : memref<8x8xf32, #tpu.memory_space<vmem>>, vector<8x8xf32>
    %cst_13 = arith.constant dense<0.000000e+00> : vector<8x256xf32>
    %13 = tpu.matmul %12, %9, %cst_13 {dimension_numbers = #tpu.dot_dimension_numbers<[1], [0], [0], [1], [0, 0, 1, 1], [], []>} : vector<8x8xf32>, vector<8x256xf32>, vector<8x256xf32> -> vector<8x256xf32>
    %14 = arith.addf %11, %13 : vector<8x256xf32>
    %c0_14 = arith.constant 0 : index
    %c0_15 = arith.constant 0 : index
    %15 = vector.load %arg5[%c0_14, %c0_15] : memref<8x1xf32, #tpu.memory_space<vmem>>, vector<8x1xf32>
    %16 = vector.broadcast %15 : vector<8x1xf32> to vector<8x256xf32>
    %17 = arith.addf %14, %16 : vector<8x256xf32>
    %cst_16 = arith.constant 0.000000e+00 : f32
    %18 = vector.broadcast %cst_16 : f32 to vector<8x256xf32>
    %19 = arith.maximumf %17, %18 : vector<8x256xf32>
    %c0_17 = arith.constant 0 : index
    %c128 = arith.constant 128 : index
    %20 = vector.load %arg14[%c0_17, %c128] : memref<8x512xf32, #tpu.memory_space<vmem>>, vector<8x256xf32>
    tpu.vector_store %arg14[%c0_17, %c128], %19 {strides = array<i32>} : memref<8x512xf32, #tpu.memory_space<vmem>>, vector<8x256xf32>,
    %21 = tpu.iota {dimensions = array<i32: 1>} : vector<1x256xi32>
    %c15_i32 = arith.constant 15 : i32
    %22 = vector.broadcast %c15_i32 : i32 to vector<1x256xi32>
    %23 = arith.andi %21, %22 : vector<1x256xi32>
    %c4_i32 = arith.constant 4 : i32
    %24 = vector.broadcast %c4_i32 : i32 to vector<1x256xi32>
    %25 = arith.shrsi %21, %24 : vector<1x256xi32>
    %c15_i32_18 = arith.constant 15 : i32
    %26 = vector.broadcast %c15_i32_18 : i32 to vector<1x256xi32>
    %27 = arith.andi %25, %26 : vector<1x256xi32>
    %c1_i32 = arith.constant 1 : i32
    %28 = vector.broadcast %c1_i32 : i32 to vector<1x256xi32>
    %29 = arith.cmpi sge, %27, %28 : vector<1x256xi32>
    %c1_i32_19 = arith.constant 1 : i32
    %30 = vector.broadcast %c1_i32_19 : i32 to vector<1x256xi32>
    %31 = arith.cmpi sge, %23, %30 : vector<1x256xi32>
    %c0_20 = arith.constant 0 : index
    %c111 = arith.constant 111 : index
    %32 = vector.load %arg14[%c0_20, %c111] : memref<8x512xf32, #tpu.memory_space<vmem>>, vector<8x256xf32>
    %33 = arith.andi %29, %31 : vector<1x256xi1>
    %cst_21 = arith.constant 0.000000e+00 : f32
    %34 = vector.shape_cast %33 : vector<1x256xi1> to vector<1x256xi1>
    %35 = vector.broadcast %34 : vector<1x256xi1> to vector<8x256xi1>
    %36 = vector.broadcast %cst_21 : f32 to vector<8x256xf32>
    %37 = arith.select %35, %32, %36 : vector<8x256xi1>, vector<8x256xf32>
    %c0_22 = arith.constant 0 : index
    %c0_23 = arith.constant 0 : index
    %38 = vector.load %arg13[%c0_22, %c0_23] : memref<72x256xf32, #tpu.memory_space<vmem>>, vector<8x256xf32>
    tpu.vector_store %arg13[%c0_22, %c0_23], %37 {strides = array<i32>} : memref<72x256xf32, #tpu.memory_space<vmem>>, vector<8x256xf32>,
    %c0_24 = arith.constant 0 : index
    %c112 = arith.constant 112 : index
    %39 = vector.load %arg14[%c0_24, %c112] : memref<8x512xf32, #tpu.memory_space<vmem>>, vector<8x256xf32>
    %cst_25 = arith.constant 0.000000e+00 : f32
    %40 = vector.shape_cast %29 : vector<1x256xi1> to vector<1x256xi1>
    %41 = vector.broadcast %40 : vector<1x256xi1> to vector<8x256xi1>
    %42 = vector.broadcast %cst_25 : f32 to vector<8x256xf32>
    %43 = arith.select %41, %39, %42 : vector<8x256xi1>, vector<8x256xf32>
    %c8 = arith.constant 8 : index
    %c0_26 = arith.constant 0 : index
    %44 = vector.load %arg13[%c8, %c0_26] : memref<72x256xf32, #tpu.memory_space<vmem>>, vector<8x256xf32>
    tpu.vector_store %arg13[%c8, %c0_26], %43 {strides = array<i32>} : memref<72x256xf32, #tpu.memory_space<vmem>>, vector<8x256xf32>,
    %c14_i32 = arith.constant 14 : i32
    %45 = vector.broadcast %c14_i32 : i32 to vector<1x256xi32>
    %46 = arith.cmpi sle, %23, %45 : vector<1x256xi32>
    %c0_27 = arith.constant 0 : index
    %c113 = arith.constant 113 : index
    %47 = vector.load %arg14[%c0_27, %c113] : memref<8x512xf32, #tpu.memory_space<vmem>>, vector<8x256xf32>
    %48 = arith.andi %29, %46 : vector<1x256xi1>
    %cst_28 = arith.constant 0.000000e+00 : f32
    %49 = vector.shape_cast %48 : vector<1x256xi1> to vector<1x256xi1>
    %50 = vector.broadcast %49 : vector<1x256xi1> to vector<8x256xi1>
    %51 = vector.broadcast %cst_28 : f32 to vector<8x256xf32>
    %52 = arith.select %50, %47, %51 : vector<8x256xi1>, vector<8x256xf32>
    %c16 = arith.constant 16 : index
    %c0_29 = arith.constant 0 : index
    %53 = vector.load %arg13[%c16, %c0_29] : memref<72x256xf32, #tpu.memory_space<vmem>>, vector<8x256xf32>
    tpu.vector_store %arg13[%c16, %c0_29], %52 {strides = array<i32>} : memref<72x256xf32, #tpu.memory_space<vmem>>, vector<8x256xf32>,
    %c1_i32_30 = arith.constant 1 : i32
    %54 = vector.broadcast %c1_i32_30 : i32 to vector<1x256xi32>
    %55 = arith.cmpi sge, %23, %54 : vector<1x256xi32>
    %c0_31 = arith.constant 0 : index
    %c127 = arith.constant 127 : index
    %56 = vector.load %arg14[%c0_31, %c127] : memref<8x512xf32, #tpu.memory_space<vmem>>, vector<8x256xf32>
    %cst_32 = arith.constant 0.000000e+00 : f32
    %57 = vector.shape_cast %55 : vector<1x256xi1> to vector<1x256xi1>
    %58 = vector.broadcast %57 : vector<1x256xi1> to vector<8x256xi1>
    %59 = vector.broadcast %cst_32 : f32 to vector<8x256xf32>
    %60 = arith.select %58, %56, %59 : vector<8x256xi1>, vector<8x256xf32>
    %c24 = arith.constant 24 : index
    %c0_33 = arith.constant 0 : index
    %61 = vector.load %arg13[%c24, %c0_33] : memref<72x256xf32, #tpu.memory_space<vmem>>, vector<8x256xf32>
    tpu.vector_store %arg13[%c24, %c0_33], %60 {strides = array<i32>} : memref<72x256xf32, #tpu.memory_space<vmem>>, vector<8x256xf32>,
    %c32 = arith.constant 32 : index
    %c0_34 = arith.constant 0 : index
    %62 = vector.load %arg13[%c32, %c0_34] : memref<72x256xf32, #tpu.memory_space<vmem>>, vector<8x256xf32>
    tpu.vector_store %arg13[%c32, %c0_34], %19 {strides = array<i32>} : memref<72x256xf32, #tpu.memory_space<vmem>>, vector<8x256xf32>,
    %c14_i32_35 = arith.constant 14 : i32
    %63 = vector.broadcast %c14_i32_35 : i32 to vector<1x256xi32>
    %64 = arith.cmpi sle, %23, %63 : vector<1x256xi32>
    %c0_36 = arith.constant 0 : index
    %c129 = arith.constant 129 : index
    %65 = vector.load %arg14[%c0_36, %c129] : memref<8x512xf32, #tpu.memory_space<vmem>>, vector<8x256xf32>
    %cst_37 = arith.constant 0.000000e+00 : f32
    %66 = vector.shape_cast %64 : vector<1x256xi1> to vector<1x256xi1>
    %67 = vector.broadcast %66 : vector<1x256xi1> to vector<8x256xi1>
    %68 = vector.broadcast %cst_37 : f32 to vector<8x256xf32>
    %69 = arith.select %67, %65, %68 : vector<8x256xi1>, vector<8x256xf32>
    %c40 = arith.constant 40 : index
    %c0_38 = arith.constant 0 : index
    %70 = vector.load %arg13[%c40, %c0_38] : memref<72x256xf32, #tpu.memory_space<vmem>>, vector<8x256xf32>
    tpu.vector_store %arg13[%c40, %c0_38], %69 {strides = array<i32>} : memref<72x256xf32, #tpu.memory_space<vmem>>, vector<8x256xf32>,
    %c14_i32_39 = arith.constant 14 : i32
    %71 = vector.broadcast %c14_i32_39 : i32 to vector<1x256xi32>
    %72 = arith.cmpi sle, %27, %71 : vector<1x256xi32>
    %c1_i32_40 = arith.constant 1 : i32
    %73 = vector.broadcast %c1_i32_40 : i32 to vector<1x256xi32>
    %74 = arith.cmpi sge, %23, %73 : vector<1x256xi32>
    %c0_41 = arith.constant 0 : index
    %c143 = arith.constant 143 : index
    %75 = vector.load %arg14[%c0_41, %c143] : memref<8x512xf32, #tpu.memory_space<vmem>>, vector<8x256xf32>
    %76 = arith.andi %72, %74 : vector<1x256xi1>
    %cst_42 = arith.constant 0.000000e+00 : f32
    %77 = vector.shape_cast %76 : vector<1x256xi1> to vector<1x256xi1>
    %78 = vector.broadcast %77 : vector<1x256xi1> to vector<8x256xi1>
    %79 = vector.broadcast %cst_42 : f32 to vector<8x256xf32>
    %80 = arith.select %78, %75, %79 : vector<8x256xi1>, vector<8x256xf32>
    %c48 = arith.constant 48 : index
    %c0_43 = arith.constant 0 : index
    %81 = vector.load %arg13[%c48, %c0_43] : memref<72x256xf32, #tpu.memory_space<vmem>>, vector<8x256xf32>
    tpu.vector_store %arg13[%c48, %c0_43], %80 {strides = array<i32>} : memref<72x256xf32, #tpu.memory_space<vmem>>, vector<8x256xf32>,
    %c0_44 = arith.constant 0 : index
    %c144 = arith.constant 144 : index
    %82 = vector.load %arg14[%c0_44, %c144] : memref<8x512xf32, #tpu.memory_space<vmem>>, vector<8x256xf32>
    %cst_45 = arith.constant 0.000000e+00 : f32
    %83 = vector.shape_cast %72 : vector<1x256xi1> to vector<1x256xi1>
    %84 = vector.broadcast %83 : vector<1x256xi1> to vector<8x256xi1>
    %85 = vector.broadcast %cst_45 : f32 to vector<8x256xf32>
    %86 = arith.select %84, %82, %85 : vector<8x256xi1>, vector<8x256xf32>
    %c56 = arith.constant 56 : index
    %c0_46 = arith.constant 0 : index
    %87 = vector.load %arg13[%c56, %c0_46] : memref<72x256xf32, #tpu.memory_space<vmem>>, vector<8x256xf32>
    tpu.vector_store %arg13[%c56, %c0_46], %86 {strides = array<i32>} : memref<72x256xf32, #tpu.memory_space<vmem>>, vector<8x256xf32>,
    %c14_i32_47 = arith.constant 14 : i32
    %88 = vector.broadcast %c14_i32_47 : i32 to vector<1x256xi32>
    %89 = arith.cmpi sle, %23, %88 : vector<1x256xi32>
    %c0_48 = arith.constant 0 : index
    %c145 = arith.constant 145 : index
    %90 = vector.load %arg14[%c0_48, %c145] : memref<8x512xf32, #tpu.memory_space<vmem>>, vector<8x256xf32>
    %91 = arith.andi %72, %89 : vector<1x256xi1>
    %cst_49 = arith.constant 0.000000e+00 : f32
    %92 = vector.shape_cast %91 : vector<1x256xi1> to vector<1x256xi1>
    %93 = vector.broadcast %92 : vector<1x256xi1> to vector<8x256xi1>
    %94 = vector.broadcast %cst_49 : f32 to vector<8x256xf32>
    %95 = arith.select %93, %90, %94 : vector<8x256xi1>, vector<8x256xf32>
    %c64 = arith.constant 64 : index
    %c0_50 = arith.constant 0 : index
    %96 = vector.load %arg13[%c64, %c0_50] : memref<72x256xf32, #tpu.memory_space<vmem>>, vector<8x256xf32>
    tpu.vector_store %arg13[%c64, %c0_50], %95 {strides = array<i32>} : memref<72x256xf32, #tpu.memory_space<vmem>>, vector<8x256xf32>,
    %c0_51 = arith.constant 0 : index
    %c0_52 = arith.constant 0 : index
    %97 = vector.load %arg6[%c0_51, %c0_52] : memref<8x72xf32, #tpu.memory_space<vmem>>, vector<8x72xf32>
    %c0_53 = arith.constant 0 : index
    %c0_54 = arith.constant 0 : index
    %98 = vector.load %arg13[%c0_53, %c0_54] : memref<72x256xf32, #tpu.memory_space<vmem>>, vector<72x256xf32>
    %cst_55 = arith.constant dense<0.000000e+00> : vector<8x256xf32>
    %99 = tpu.matmul %97, %98, %cst_55 {dimension_numbers = #tpu.dot_dimension_numbers<[1], [0], [0], [1], [0, 0, 1, 1], [], []>} : vector<8x72xf32>, vector<72x256xf32>, vector<8x256xf32> -> vector<8x256xf32>
    %c0_56 = arith.constant 0 : index
    %c0_57 = arith.constant 0 : index
    %100 = vector.load %arg7[%c0_56, %c0_57] : memref<8x1xf32, #tpu.memory_space<vmem>>, vector<8x1xf32>
    %101 = vector.broadcast %100 : vector<8x1xf32> to vector<8x256xf32>
    %102 = arith.addf %99, %101 : vector<8x256xf32>
    %cst_58 = arith.constant 0.000000e+00 : f32
    %103 = vector.broadcast %cst_58 : f32 to vector<8x256xf32>
    %104 = arith.maximumf %102, %103 : vector<8x256xf32>
    %c0_59 = arith.constant 0 : index
    %c128_60 = arith.constant 128 : index
    %105 = vector.load %arg14[%c0_59, %c128_60] : memref<8x512xf32, #tpu.memory_space<vmem>>, vector<8x256xf32>
    tpu.vector_store %arg14[%c0_59, %c128_60], %104 {strides = array<i32>} : memref<8x512xf32, #tpu.memory_space<vmem>>, vector<8x256xf32>,
    %106 = tpu.iota {dimensions = array<i32: 1>} : vector<1x256xi32>
    %c15_i32_61 = arith.constant 15 : i32
    %107 = vector.broadcast %c15_i32_61 : i32 to vector<1x256xi32>
    %108 = arith.andi %106, %107 : vector<1x256xi32>
    %c4_i32_62 = arith.constant 4 : i32
    %109 = vector.broadcast %c4_i32_62 : i32 to vector<1x256xi32>
    %110 = arith.shrsi %106, %109 : vector<1x256xi32>
    %c15_i32_63 = arith.constant 15 : i32
    %111 = vector.broadcast %c15_i32_63 : i32 to vector<1x256xi32>
    %112 = arith.andi %110, %111 : vector<1x256xi32>
    %c1_i32_64 = arith.constant 1 : i32
    %113 = vector.broadcast %c1_i32_64 : i32 to vector<1x256xi32>
    %114 = arith.cmpi sge, %112, %113 : vector<1x256xi32>
    %c1_i32_65 = arith.constant 1 : i32
    %115 = vector.broadcast %c1_i32_65 : i32 to vector<1x256xi32>
    %116 = arith.cmpi sge, %108, %115 : vector<1x256xi32>
    %c0_66 = arith.constant 0 : index
    %c111_67 = arith.constant 111 : index
    %117 = vector.load %arg14[%c0_66, %c111_67] : memref<8x512xf32, #tpu.memory_space<vmem>>, vector<8x256xf32>
    %118 = arith.andi %114, %116 : vector<1x256xi1>
    %cst_68 = arith.constant 0.000000e+00 : f32
    %119 = vector.shape_cast %118 : vector<1x256xi1> to vector<1x256xi1>
    %120 = vector.broadcast %119 : vector<1x256xi1> to vector<8x256xi1>
    %121 = vector.broadcast %cst_68 : f32 to vector<8x256xf32>
    %122 = arith.select %120, %117, %121 : vector<8x256xi1>, vector<8x256xf32>
    %c0_69 = arith.constant 0 : index
    %c0_70 = arith.constant 0 : index
    %123 = vector.load %arg13[%c0_69, %c0_70] : memref<72x256xf32, #tpu.memory_space<vmem>>, vector<8x256xf32>
    tpu.vector_store %arg13[%c0_69, %c0_70], %122 {strides = array<i32>} : memref<72x256xf32, #tpu.memory_space<vmem>>, vector<8x256xf32>,
    %c0_71 = arith.constant 0 : index
    %c112_72 = arith.constant 112 : index
    %124 = vector.load %arg14[%c0_71, %c112_72] : memref<8x512xf32, #tpu.memory_space<vmem>>, vector<8x256xf32>
    %cst_73 = arith.constant 0.000000e+00 : f32
    %125 = vector.shape_cast %114 : vector<1x256xi1> to vector<1x256xi1>
    %126 = vector.broadcast %125 : vector<1x256xi1> to vector<8x256xi1>
    %127 = vector.broadcast %cst_73 : f32 to vector<8x256xf32>
    %128 = arith.select %126, %124, %127 : vector<8x256xi1>, vector<8x256xf32>
    %c8_74 = arith.constant 8 : index
    %c0_75 = arith.constant 0 : index
    %129 = vector.load %arg13[%c8_74, %c0_75] : memref<72x256xf32, #tpu.memory_space<vmem>>, vector<8x256xf32>
    tpu.vector_store %arg13[%c8_74, %c0_75], %128 {strides = array<i32>} : memref<72x256xf32, #tpu.memory_space<vmem>>, vector<8x256xf32>,
    %c14_i32_76 = arith.constant 14 : i32
    %130 = vector.broadcast %c14_i32_76 : i32 to vector<1x256xi32>
    %131 = arith.cmpi sle, %108, %130 : vector<1x256xi32>
    %c0_77 = arith.constant 0 : index
    %c113_78 = arith.constant 113 : index
    %132 = vector.load %arg14[%c0_77, %c113_78] : memref<8x512xf32, #tpu.memory_space<vmem>>, vector<8x256xf32>
    %133 = arith.andi %114, %131 : vector<1x256xi1>
    %cst_79 = arith.constant 0.000000e+00 : f32
    %134 = vector.shape_cast %133 : vector<1x256xi1> to vector<1x256xi1>
    %135 = vector.broadcast %134 : vector<1x256xi1> to vector<8x256xi1>
    %136 = vector.broadcast %cst_79 : f32 to vector<8x256xf32>
    %137 = arith.select %135, %132, %136 : vector<8x256xi1>, vector<8x256xf32>
    %c16_80 = arith.constant 16 : index
    %c0_81 = arith.constant 0 : index
    %138 = vector.load %arg13[%c16_80, %c0_81] : memref<72x256xf32, #tpu.memory_space<vmem>>, vector<8x256xf32>
    tpu.vector_store %arg13[%c16_80, %c0_81], %137 {strides = array<i32>} : memref<72x256xf32, #tpu.memory_space<vmem>>, vector<8x256xf32>,
    %c1_i32_82 = arith.constant 1 : i32
    %139 = vector.broadcast %c1_i32_82 : i32 to vector<1x256xi32>
    %140 = arith.cmpi sge, %108, %139 : vector<1x256xi32>
    %c0_83 = arith.constant 0 : index
    %c127_84 = arith.constant 127 : index
    %141 = vector.load %arg14[%c0_83, %c127_84] : memref<8x512xf32, #tpu.memory_space<vmem>>, vector<8x256xf32>
    %cst_85 = arith.constant 0.000000e+00 : f32
    %142 = vector.shape_cast %140 : vector<1x256xi1> to vector<1x256xi1>
    %143 = vector.broadcast %142 : vector<1x256xi1> to vector<8x256xi1>
    %144 = vector.broadcast %cst_85 : f32 to vector<8x256xf32>
    %145 = arith.select %143, %141, %144 : vector<8x256xi1>, vector<8x256xf32>
    %c24_86 = arith.constant 24 : index
    %c0_87 = arith.constant 0 : index
    %146 = vector.load %arg13[%c24_86, %c0_87] : memref<72x256xf32, #tpu.memory_space<vmem>>, vector<8x256xf32>
    tpu.vector_store %arg13[%c24_86, %c0_87], %145 {strides = array<i32>} : memref<72x256xf32, #tpu.memory_space<vmem>>, vector<8x256xf32>,
    %c32_88 = arith.constant 32 : index
    %c0_89 = arith.constant 0 : index
    %147 = vector.load %arg13[%c32_88, %c0_89] : memref<72x256xf32, #tpu.memory_space<vmem>>, vector<8x256xf32>
    tpu.vector_store %arg13[%c32_88, %c0_89], %104 {strides = array<i32>} : memref<72x256xf32, #tpu.memory_space<vmem>>, vector<8x256xf32>,
    %c14_i32_90 = arith.constant 14 : i32
    %148 = vector.broadcast %c14_i32_90 : i32 to vector<1x256xi32>
    %149 = arith.cmpi sle, %108, %148 : vector<1x256xi32>
    %c0_91 = arith.constant 0 : index
    %c129_92 = arith.constant 129 : index
    %150 = vector.load %arg14[%c0_91, %c129_92] : memref<8x512xf32, #tpu.memory_space<vmem>>, vector<8x256xf32>
    %cst_93 = arith.constant 0.000000e+00 : f32
    %151 = vector.shape_cast %149 : vector<1x256xi1> to vector<1x256xi1>
    %152 = vector.broadcast %151 : vector<1x256xi1> to vector<8x256xi1>
    %153 = vector.broadcast %cst_93 : f32 to vector<8x256xf32>
    %154 = arith.select %152, %150, %153 : vector<8x256xi1>, vector<8x256xf32>
    %c40_94 = arith.constant 40 : index
    %c0_95 = arith.constant 0 : index
    %155 = vector.load %arg13[%c40_94, %c0_95] : memref<72x256xf32, #tpu.memory_space<vmem>>, vector<8x256xf32>
    tpu.vector_store %arg13[%c40_94, %c0_95], %154 {strides = array<i32>} : memref<72x256xf32, #tpu.memory_space<vmem>>, vector<8x256xf32>,
    %c14_i32_96 = arith.constant 14 : i32
    %156 = vector.broadcast %c14_i32_96 : i32 to vector<1x256xi32>
    %157 = arith.cmpi sle, %112, %156 : vector<1x256xi32>
    %c1_i32_97 = arith.constant 1 : i32
    %158 = vector.broadcast %c1_i32_97 : i32 to vector<1x256xi32>
    %159 = arith.cmpi sge, %108, %158 : vector<1x256xi32>
    %c0_98 = arith.constant 0 : index
    %c143_99 = arith.constant 143 : index
    %160 = vector.load %arg14[%c0_98, %c143_99] : memref<8x512xf32, #tpu.memory_space<vmem>>, vector<8x256xf32>
    %161 = arith.andi %157, %159 : vector<1x256xi1>
    %cst_100 = arith.constant 0.000000e+00 : f32
    %162 = vector.shape_cast %161 : vector<1x256xi1> to vector<1x256xi1>
    %163 = vector.broadcast %162 : vector<1x256xi1> to vector<8x256xi1>
    %164 = vector.broadcast %cst_100 : f32 to vector<8x256xf32>
    %165 = arith.select %163, %160, %164 : vector<8x256xi1>, vector<8x256xf32>
    %c48_101 = arith.constant 48 : index
    %c0_102 = arith.constant 0 : index
    %166 = vector.load %arg13[%c48_101, %c0_102] : memref<72x256xf32, #tpu.memory_space<vmem>>, vector<8x256xf32>
    tpu.vector_store %arg13[%c48_101, %c0_102], %165 {strides = array<i32>} : memref<72x256xf32, #tpu.memory_space<vmem>>, vector<8x256xf32>,
    %c0_103 = arith.constant 0 : index
    %c144_104 = arith.constant 144 : index
    %167 = vector.load %arg14[%c0_103, %c144_104] : memref<8x512xf32, #tpu.memory_space<vmem>>, vector<8x256xf32>
    %cst_105 = arith.constant 0.000000e+00 : f32
    %168 = vector.shape_cast %157 : vector<1x256xi1> to vector<1x256xi1>
    %169 = vector.broadcast %168 : vector<1x256xi1> to vector<8x256xi1>
    %170 = vector.broadcast %cst_105 : f32 to vector<8x256xf32>
    %171 = arith.select %169, %167, %170 : vector<8x256xi1>, vector<8x256xf32>
    %c56_106 = arith.constant 56 : index
    %c0_107 = arith.constant 0 : index
    %172 = vector.load %arg13[%c56_106, %c0_107] : memref<72x256xf32, #tpu.memory_space<vmem>>, vector<8x256xf32>
    tpu.vector_store %arg13[%c56_106, %c0_107], %171 {strides = array<i32>} : memref<72x256xf32, #tpu.memory_space<vmem>>, vector<8x256xf32>,
    %c14_i32_108 = arith.constant 14 : i32
    %173 = vector.broadcast %c14_i32_108 : i32 to vector<1x256xi32>
    %174 = arith.cmpi sle, %108, %173 : vector<1x256xi32>
    %c0_109 = arith.constant 0 : index
    %c145_110 = arith.constant 145 : index
    %175 = vector.load %arg14[%c0_109, %c145_110] : memref<8x512xf32, #tpu.memory_space<vmem>>, vector<8x256xf32>
    %176 = arith.andi %157, %174 : vector<1x256xi1>
    %cst_111 = arith.constant 0.000000e+00 : f32
    %177 = vector.shape_cast %176 : vector<1x256xi1> to vector<1x256xi1>
    %178 = vector.broadcast %177 : vector<1x256xi1> to vector<8x256xi1>
    %179 = vector.broadcast %cst_111 : f32 to vector<8x256xf32>
    %180 = arith.select %178, %175, %179 : vector<8x256xi1>, vector<8x256xf32>
    %c64_112 = arith.constant 64 : index
    %c0_113 = arith.constant 0 : index
    %181 = vector.load %arg13[%c64_112, %c0_113] : memref<72x256xf32, #tpu.memory_space<vmem>>, vector<8x256xf32>
    tpu.vector_store %arg13[%c64_112, %c0_113], %180 {strides = array<i32>} : memref<72x256xf32, #tpu.memory_space<vmem>>, vector<8x256xf32>,
    %c0_114 = arith.constant 0 : index
    %c0_115 = arith.constant 0 : index
    %182 = vector.load %arg8[%c0_114, %c0_115] : memref<8x72xf32, #tpu.memory_space<vmem>>, vector<8x72xf32>
    %c0_116 = arith.constant 0 : index
    %c0_117 = arith.constant 0 : index
    %183 = vector.load %arg13[%c0_116, %c0_117] : memref<72x256xf32, #tpu.memory_space<vmem>>, vector<72x256xf32>
    %cst_118 = arith.constant dense<0.000000e+00> : vector<8x256xf32>
    %184 = tpu.matmul %182, %183, %cst_118 {dimension_numbers = #tpu.dot_dimension_numbers<[1], [0], [0], [1], [0, 0, 1, 1], [], []>} : vector<8x72xf32>, vector<72x256xf32>, vector<8x256xf32> -> vector<8x256xf32>
    %c0_119 = arith.constant 0 : index
    %c0_120 = arith.constant 0 : index
    %185 = vector.load %arg9[%c0_119, %c0_120] : memref<8x1xf32, #tpu.memory_space<vmem>>, vector<8x1xf32>
    %186 = vector.broadcast %185 : vector<8x1xf32> to vector<8x256xf32>
    %187 = arith.addf %184, %186 : vector<8x256xf32>
    %188 = arith.addf %187, %19 : vector<8x256xf32>
    %cst_121 = arith.constant 0.000000e+00 : f32
    %189 = vector.broadcast %cst_121 : f32 to vector<8x256xf32>
    %190 = arith.maximumf %188, %189 : vector<8x256xf32>
    %c0_122 = arith.constant 0 : index
    %c0_123 = arith.constant 0 : index
    %191 = vector.load %arg10[%c0_122, %c0_123] : memref<8x8xf32, #tpu.memory_space<vmem>>, vector<8x8xf32>
    %cst_124 = arith.constant dense<0.000000e+00> : vector<8x256xf32>
    %192 = tpu.matmul %191, %190, %cst_124 {dimension_numbers = #tpu.dot_dimension_numbers<[1], [0], [0], [1], [0, 0, 1, 1], [], []>} : vector<8x8xf32>, vector<8x256xf32>, vector<8x256xf32> -> vector<8x256xf32>
    %c0_125 = arith.constant 0 : index
    %c0_126 = arith.constant 0 : index
    %193 = vector.load %arg11[%c0_125, %c0_126] : memref<8x1xf32, #tpu.memory_space<vmem>>, vector<8x1xf32>
    %194 = vector.broadcast %193 : vector<8x1xf32> to vector<8x256xf32>
    %195 = arith.addf %192, %194 : vector<8x256xf32>
    %196 = arith.truncf %195 : vector<8x256xf32> to vector<8x256xbf16>
    %c0_127 = arith.constant 0 : index
    %c0_128 = arith.constant 0 : index
    %c0_129 = arith.constant 0 : index
    %197 = vector.load %arg12[%c0_127, %c0_128, %c0_129] : memref<1x8x256xbf16, #tpu.memory_space<vmem>>, vector<1x8x256xbf16>
    %198 = vector.shape_cast %197 : vector<1x8x256xbf16> to vector<8x256xbf16>
    %199 = vector.shape_cast %196 : vector<8x256xbf16> to vector<1x8x256xbf16>
    tpu.vector_store %arg12[%c0_127, %c0_128, %c0_129], %199 {strides = array<i32>} : memref<1x8x256xbf16, #tpu.memory_space<vmem>>, vector<1x8x256xbf16>,
    return
  }
  func.func @transform_0(%arg0: i32) -> (i32, i32, i32) {
    %c0_i32 = arith.constant 0 : i32
    %c0_i32_0 = arith.constant 0 : i32
    %c0_i32_1 = arith.constant 0 : i32
    return %arg0, %c0_i32, %c0_i32_0 : i32, i32, i32
  }
  func.func @transform_1(%arg0: i32) -> (i32, i32, i32) {
    %c0_i32 = arith.constant 0 : i32
    %c0_i32_0 = arith.constant 0 : i32
    %c0_i32_1 = arith.constant 0 : i32
    return %arg0, %c0_i32, %c0_i32_0 : i32, i32, i32
  }
  func.func @transform_2(%arg0: i32) -> (i32, i32) {
    %c0_i32 = arith.constant 0 : i32
    %c0_i32_0 = arith.constant 0 : i32
    %c0_i32_1 = arith.constant 0 : i32
    return %c0_i32, %c0_i32_0 : i32, i32
  }
  func.func @transform_3(%arg0: i32) -> (i32, i32) {
    %c0_i32 = arith.constant 0 : i32
    %c0_i32_0 = arith.constant 0 : i32
    %c0_i32_1 = arith.constant 0 : i32
    return %c0_i32, %c0_i32_0 : i32, i32
  }
  func.func @transform_4(%arg0: i32) -> (i32, i32) {
    %c0_i32 = arith.constant 0 : i32
    %c0_i32_0 = arith.constant 0 : i32
    %c0_i32_1 = arith.constant 0 : i32
    return %c0_i32, %c0_i32_0 : i32, i32
  }
  func.func @transform_5(%arg0: i32) -> (i32, i32) {
    %c0_i32 = arith.constant 0 : i32
    %c0_i32_0 = arith.constant 0 : i32
    %c0_i32_1 = arith.constant 0 : i32
    return %c0_i32, %c0_i32_0 : i32, i32
  }
  func.func @transform_6(%arg0: i32) -> (i32, i32) {
    %c0_i32 = arith.constant 0 : i32
    %c0_i32_0 = arith.constant 0 : i32
    %c0_i32_1 = arith.constant 0 : i32
    return %c0_i32, %c0_i32_0 : i32, i32
  }
  func.func @transform_7(%arg0: i32) -> (i32, i32) {
    %c0_i32 = arith.constant 0 : i32
    %c0_i32_0 = arith.constant 0 : i32
    %c0_i32_1 = arith.constant 0 : i32
    return %c0_i32, %c0_i32_0 : i32, i32
  }
  func.func @transform_8(%arg0: i32) -> (i32, i32) {
    %c0_i32 = arith.constant 0 : i32
    %c0_i32_0 = arith.constant 0 : i32
    %c0_i32_1 = arith.constant 0 : i32
    return %c0_i32, %c0_i32_0 : i32, i32
  }
  func.func @transform_9(%arg0: i32) -> (i32, i32) {
    %c0_i32 = arith.constant 0 : i32
    %c0_i32_0 = arith.constant 0 : i32
    %c0_i32_1 = arith.constant 0 : i32
    return %c0_i32, %c0_i32_0 : i32, i32
  }
  func.func @transform_10(%arg0: i32) -> (i32, i32) {
    %c0_i32 = arith.constant 0 : i32
    %c0_i32_0 = arith.constant 0 : i32
    %c0_i32_1 = arith.constant 0 : i32
    return %c0_i32, %c0_i32_0 : i32, i32
  }
  func.func @transform_11(%arg0: i32) -> (i32, i32, i32) {
    %c0_i32 = arith.constant 0 : i32
    %c0_i32_0 = arith.constant 0 : i32
    %c0_i32_1 = arith.constant 0 : i32
    return %arg0, %c0_i32, %c0_i32_0 : i32, i32, i32
  }
}

module attributes {stable_mosaic.version = 11 : i64} {
  func.func @kernel(%arg0: i32, %arg1: memref<1x8x1024xbf16, #tpu.memory_space<vmem>>, %arg2: memref<8x72xf32, #tpu.memory_space<vmem>>, %arg3: memref<8x1xf32, #tpu.memory_space<vmem>>, %arg4: memref<8x72xf32, #tpu.memory_space<vmem>>, %arg5: memref<8x1xf32, #tpu.memory_space<vmem>>, %arg6: memref<2x8xf32, #tpu.memory_space<vmem>>, %arg7: memref<2x1xf32, #tpu.memory_space<vmem>>, %arg8: memref<1x2x1024xf32, #tpu.memory_space<vmem>>, %arg9: memref<72x1024xf32, #tpu.memory_space<vmem>>, %arg10: memref<8x1280xf32, #tpu.memory_space<vmem>>) attributes {dimension_semantics = [#tpu.dimension_semantics<parallel>], iteration_bounds = array<i64: 2>, scalar_prefetch = 0 : i64, scratch_operands = 2 : i64, tpu.core_type = #tpu.core_type<tc>, window_params = [{transform_indices = @transform_0, window_bounds = array<i64: 1, 8, 1024>}, {pipeline_mode = #tpu.pipeline_mode<synchronous>, transform_indices = @transform_1, window_bounds = array<i64: 8, 72>}, {pipeline_mode = #tpu.pipeline_mode<synchronous>, transform_indices = @transform_2, window_bounds = array<i64: 8, 1>}, {pipeline_mode = #tpu.pipeline_mode<synchronous>, transform_indices = @transform_3, window_bounds = array<i64: 8, 72>}, {pipeline_mode = #tpu.pipeline_mode<synchronous>, transform_indices = @transform_4, window_bounds = array<i64: 8, 1>}, {pipeline_mode = #tpu.pipeline_mode<synchronous>, transform_indices = @transform_5, window_bounds = array<i64: 2, 8>}, {pipeline_mode = #tpu.pipeline_mode<synchronous>, transform_indices = @transform_6, window_bounds = array<i64: 2, 1>}, {transform_indices = @transform_7, window_bounds = array<i64: 1, 2, 1024>}]} {
    %cst = arith.constant 0.000000e+00 : f32
    %0 = vector.broadcast %cst : f32 to vector<8x1280xf32>
    %c0 = arith.constant 0 : index
    %c0_0 = arith.constant 0 : index
    %1 = vector.load %arg10[%c0, %c0_0] : memref<8x1280xf32, #tpu.memory_space<vmem>>, vector<8x1280xf32>
    tpu.vector_store %arg10[%c0, %c0_0], %0 {strides = array<i32>} : memref<8x1280xf32, #tpu.memory_space<vmem>>, vector<8x1280xf32>,
    %c0_1 = arith.constant 0 : index
    %c0_2 = arith.constant 0 : index
    %c0_3 = arith.constant 0 : index
    %2 = vector.load %arg1[%c0_1, %c0_2, %c0_3] : memref<1x8x1024xbf16, #tpu.memory_space<vmem>>, vector<1x8x1024xbf16>
    %3 = vector.shape_cast %2 : vector<1x8x1024xbf16> to vector<8x1024xbf16>
    %4 = arith.extf %3 : vector<8x1024xbf16> to vector<8x1024xf32>
    %cst_4 = arith.constant 0.000000e+00 : f32
    %5 = vector.broadcast %cst_4 : f32 to vector<8x1024xf32>
    %6 = arith.maximumf %4, %5 : vector<8x1024xf32>
    %c0_5 = arith.constant 0 : index
    %c128 = arith.constant 128 : index
    %7 = vector.load %arg10[%c0_5, %c128] : memref<8x1280xf32, #tpu.memory_space<vmem>>, vector<8x1024xf32>
    tpu.vector_store %arg10[%c0_5, %c128], %6 {strides = array<i32>} : memref<8x1280xf32, #tpu.memory_space<vmem>>, vector<8x1024xf32>,
    %8 = tpu.iota {dimensions = array<i32: 1>} : vector<1x1024xi32>
    %c31_i32 = arith.constant 31 : i32
    %9 = vector.broadcast %c31_i32 : i32 to vector<1x1024xi32>
    %10 = arith.andi %8, %9 : vector<1x1024xi32>
    %c5_i32 = arith.constant 5 : i32
    %11 = vector.broadcast %c5_i32 : i32 to vector<1x1024xi32>
    %12 = arith.shrsi %8, %11 : vector<1x1024xi32>
    %c31_i32_6 = arith.constant 31 : i32
    %13 = vector.broadcast %c31_i32_6 : i32 to vector<1x1024xi32>
    %14 = arith.andi %12, %13 : vector<1x1024xi32>
    %c1_i32 = arith.constant 1 : i32
    %15 = vector.broadcast %c1_i32 : i32 to vector<1x1024xi32>
    %16 = arith.cmpi sge, %14, %15 : vector<1x1024xi32>
    %c1_i32_7 = arith.constant 1 : i32
    %17 = vector.broadcast %c1_i32_7 : i32 to vector<1x1024xi32>
    %18 = arith.cmpi sge, %10, %17 : vector<1x1024xi32>
    %c0_8 = arith.constant 0 : index
    %c95 = arith.constant 95 : index
    %19 = vector.load %arg10[%c0_8, %c95] : memref<8x1280xf32, #tpu.memory_space<vmem>>, vector<8x1024xf32>
    %20 = arith.andi %16, %18 : vector<1x1024xi1>
    %cst_9 = arith.constant 0.000000e+00 : f32
    %21 = vector.shape_cast %20 : vector<1x1024xi1> to vector<1x1024xi1>
    %22 = vector.broadcast %21 : vector<1x1024xi1> to vector<8x1024xi1>
    %23 = vector.broadcast %cst_9 : f32 to vector<8x1024xf32>
    %24 = arith.select %22, %19, %23 : vector<8x1024xi1>, vector<8x1024xf32>
    %c0_10 = arith.constant 0 : index
    %c0_11 = arith.constant 0 : index
    %25 = vector.load %arg9[%c0_10, %c0_11] : memref<72x1024xf32, #tpu.memory_space<vmem>>, vector<8x1024xf32>
    tpu.vector_store %arg9[%c0_10, %c0_11], %24 {strides = array<i32>} : memref<72x1024xf32, #tpu.memory_space<vmem>>, vector<8x1024xf32>,
    %c0_12 = arith.constant 0 : index
    %c96 = arith.constant 96 : index
    %26 = vector.load %arg10[%c0_12, %c96] : memref<8x1280xf32, #tpu.memory_space<vmem>>, vector<8x1024xf32>
    %cst_13 = arith.constant 0.000000e+00 : f32
    %27 = vector.shape_cast %16 : vector<1x1024xi1> to vector<1x1024xi1>
    %28 = vector.broadcast %27 : vector<1x1024xi1> to vector<8x1024xi1>
    %29 = vector.broadcast %cst_13 : f32 to vector<8x1024xf32>
    %30 = arith.select %28, %26, %29 : vector<8x1024xi1>, vector<8x1024xf32>
    %c8 = arith.constant 8 : index
    %c0_14 = arith.constant 0 : index
    %31 = vector.load %arg9[%c8, %c0_14] : memref<72x1024xf32, #tpu.memory_space<vmem>>, vector<8x1024xf32>
    tpu.vector_store %arg9[%c8, %c0_14], %30 {strides = array<i32>} : memref<72x1024xf32, #tpu.memory_space<vmem>>, vector<8x1024xf32>,
    %c30_i32 = arith.constant 30 : i32
    %32 = vector.broadcast %c30_i32 : i32 to vector<1x1024xi32>
    %33 = arith.cmpi sle, %10, %32 : vector<1x1024xi32>
    %c0_15 = arith.constant 0 : index
    %c97 = arith.constant 97 : index
    %34 = vector.load %arg10[%c0_15, %c97] : memref<8x1280xf32, #tpu.memory_space<vmem>>, vector<8x1024xf32>
    %35 = arith.andi %16, %33 : vector<1x1024xi1>
    %cst_16 = arith.constant 0.000000e+00 : f32
    %36 = vector.shape_cast %35 : vector<1x1024xi1> to vector<1x1024xi1>
    %37 = vector.broadcast %36 : vector<1x1024xi1> to vector<8x1024xi1>
    %38 = vector.broadcast %cst_16 : f32 to vector<8x1024xf32>
    %39 = arith.select %37, %34, %38 : vector<8x1024xi1>, vector<8x1024xf32>
    %c16 = arith.constant 16 : index
    %c0_17 = arith.constant 0 : index
    %40 = vector.load %arg9[%c16, %c0_17] : memref<72x1024xf32, #tpu.memory_space<vmem>>, vector<8x1024xf32>
    tpu.vector_store %arg9[%c16, %c0_17], %39 {strides = array<i32>} : memref<72x1024xf32, #tpu.memory_space<vmem>>, vector<8x1024xf32>,
    %c1_i32_18 = arith.constant 1 : i32
    %41 = vector.broadcast %c1_i32_18 : i32 to vector<1x1024xi32>
    %42 = arith.cmpi sge, %10, %41 : vector<1x1024xi32>
    %c0_19 = arith.constant 0 : index
    %c127 = arith.constant 127 : index
    %43 = vector.load %arg10[%c0_19, %c127] : memref<8x1280xf32, #tpu.memory_space<vmem>>, vector<8x1024xf32>
    %cst_20 = arith.constant 0.000000e+00 : f32
    %44 = vector.shape_cast %42 : vector<1x1024xi1> to vector<1x1024xi1>
    %45 = vector.broadcast %44 : vector<1x1024xi1> to vector<8x1024xi1>
    %46 = vector.broadcast %cst_20 : f32 to vector<8x1024xf32>
    %47 = arith.select %45, %43, %46 : vector<8x1024xi1>, vector<8x1024xf32>
    %c24 = arith.constant 24 : index
    %c0_21 = arith.constant 0 : index
    %48 = vector.load %arg9[%c24, %c0_21] : memref<72x1024xf32, #tpu.memory_space<vmem>>, vector<8x1024xf32>
    tpu.vector_store %arg9[%c24, %c0_21], %47 {strides = array<i32>} : memref<72x1024xf32, #tpu.memory_space<vmem>>, vector<8x1024xf32>,
    %c32 = arith.constant 32 : index
    %c0_22 = arith.constant 0 : index
    %49 = vector.load %arg9[%c32, %c0_22] : memref<72x1024xf32, #tpu.memory_space<vmem>>, vector<8x1024xf32>
    tpu.vector_store %arg9[%c32, %c0_22], %6 {strides = array<i32>} : memref<72x1024xf32, #tpu.memory_space<vmem>>, vector<8x1024xf32>,
    %c30_i32_23 = arith.constant 30 : i32
    %50 = vector.broadcast %c30_i32_23 : i32 to vector<1x1024xi32>
    %51 = arith.cmpi sle, %10, %50 : vector<1x1024xi32>
    %c0_24 = arith.constant 0 : index
    %c129 = arith.constant 129 : index
    %52 = vector.load %arg10[%c0_24, %c129] : memref<8x1280xf32, #tpu.memory_space<vmem>>, vector<8x1024xf32>
    %cst_25 = arith.constant 0.000000e+00 : f32
    %53 = vector.shape_cast %51 : vector<1x1024xi1> to vector<1x1024xi1>
    %54 = vector.broadcast %53 : vector<1x1024xi1> to vector<8x1024xi1>
    %55 = vector.broadcast %cst_25 : f32 to vector<8x1024xf32>
    %56 = arith.select %54, %52, %55 : vector<8x1024xi1>, vector<8x1024xf32>
    %c40 = arith.constant 40 : index
    %c0_26 = arith.constant 0 : index
    %57 = vector.load %arg9[%c40, %c0_26] : memref<72x1024xf32, #tpu.memory_space<vmem>>, vector<8x1024xf32>
    tpu.vector_store %arg9[%c40, %c0_26], %56 {strides = array<i32>} : memref<72x1024xf32, #tpu.memory_space<vmem>>, vector<8x1024xf32>,
    %c30_i32_27 = arith.constant 30 : i32
    %58 = vector.broadcast %c30_i32_27 : i32 to vector<1x1024xi32>
    %59 = arith.cmpi sle, %14, %58 : vector<1x1024xi32>
    %c1_i32_28 = arith.constant 1 : i32
    %60 = vector.broadcast %c1_i32_28 : i32 to vector<1x1024xi32>
    %61 = arith.cmpi sge, %10, %60 : vector<1x1024xi32>
    %c0_29 = arith.constant 0 : index
    %c159 = arith.constant 159 : index
    %62 = vector.load %arg10[%c0_29, %c159] : memref<8x1280xf32, #tpu.memory_space<vmem>>, vector<8x1024xf32>
    %63 = arith.andi %59, %61 : vector<1x1024xi1>
    %cst_30 = arith.constant 0.000000e+00 : f32
    %64 = vector.shape_cast %63 : vector<1x1024xi1> to vector<1x1024xi1>
    %65 = vector.broadcast %64 : vector<1x1024xi1> to vector<8x1024xi1>
    %66 = vector.broadcast %cst_30 : f32 to vector<8x1024xf32>
    %67 = arith.select %65, %62, %66 : vector<8x1024xi1>, vector<8x1024xf32>
    %c48 = arith.constant 48 : index
    %c0_31 = arith.constant 0 : index
    %68 = vector.load %arg9[%c48, %c0_31] : memref<72x1024xf32, #tpu.memory_space<vmem>>, vector<8x1024xf32>
    tpu.vector_store %arg9[%c48, %c0_31], %67 {strides = array<i32>} : memref<72x1024xf32, #tpu.memory_space<vmem>>, vector<8x1024xf32>,
    %c0_32 = arith.constant 0 : index
    %c160 = arith.constant 160 : index
    %69 = vector.load %arg10[%c0_32, %c160] : memref<8x1280xf32, #tpu.memory_space<vmem>>, vector<8x1024xf32>
    %cst_33 = arith.constant 0.000000e+00 : f32
    %70 = vector.shape_cast %59 : vector<1x1024xi1> to vector<1x1024xi1>
    %71 = vector.broadcast %70 : vector<1x1024xi1> to vector<8x1024xi1>
    %72 = vector.broadcast %cst_33 : f32 to vector<8x1024xf32>
    %73 = arith.select %71, %69, %72 : vector<8x1024xi1>, vector<8x1024xf32>
    %c56 = arith.constant 56 : index
    %c0_34 = arith.constant 0 : index
    %74 = vector.load %arg9[%c56, %c0_34] : memref<72x1024xf32, #tpu.memory_space<vmem>>, vector<8x1024xf32>
    tpu.vector_store %arg9[%c56, %c0_34], %73 {strides = array<i32>} : memref<72x1024xf32, #tpu.memory_space<vmem>>, vector<8x1024xf32>,
    %c30_i32_35 = arith.constant 30 : i32
    %75 = vector.broadcast %c30_i32_35 : i32 to vector<1x1024xi32>
    %76 = arith.cmpi sle, %10, %75 : vector<1x1024xi32>
    %c0_36 = arith.constant 0 : index
    %c161 = arith.constant 161 : index
    %77 = vector.load %arg10[%c0_36, %c161] : memref<8x1280xf32, #tpu.memory_space<vmem>>, vector<8x1024xf32>
    %78 = arith.andi %59, %76 : vector<1x1024xi1>
    %cst_37 = arith.constant 0.000000e+00 : f32
    %79 = vector.shape_cast %78 : vector<1x1024xi1> to vector<1x1024xi1>
    %80 = vector.broadcast %79 : vector<1x1024xi1> to vector<8x1024xi1>
    %81 = vector.broadcast %cst_37 : f32 to vector<8x1024xf32>
    %82 = arith.select %80, %77, %81 : vector<8x1024xi1>, vector<8x1024xf32>
    %c64 = arith.constant 64 : index
    %c0_38 = arith.constant 0 : index
    %83 = vector.load %arg9[%c64, %c0_38] : memref<72x1024xf32, #tpu.memory_space<vmem>>, vector<8x1024xf32>
    tpu.vector_store %arg9[%c64, %c0_38], %82 {strides = array<i32>} : memref<72x1024xf32, #tpu.memory_space<vmem>>, vector<8x1024xf32>,
    %c0_39 = arith.constant 0 : index
    %c0_40 = arith.constant 0 : index
    %84 = vector.load %arg2[%c0_39, %c0_40] : memref<8x72xf32, #tpu.memory_space<vmem>>, vector<8x72xf32>
    %c0_41 = arith.constant 0 : index
    %c0_42 = arith.constant 0 : index
    %85 = vector.load %arg9[%c0_41, %c0_42] : memref<72x1024xf32, #tpu.memory_space<vmem>>, vector<72x1024xf32>
    %cst_43 = arith.constant dense<0.000000e+00> : vector<8x1024xf32>
    %86 = tpu.matmul %84, %85, %cst_43 {dimension_numbers = #tpu.dot_dimension_numbers<[1], [0], [0], [1], [0, 0, 1, 1], [], []>} : vector<8x72xf32>, vector<72x1024xf32>, vector<8x1024xf32> -> vector<8x1024xf32>
    %c0_44 = arith.constant 0 : index
    %c0_45 = arith.constant 0 : index
    %87 = vector.load %arg3[%c0_44, %c0_45] : memref<8x1xf32, #tpu.memory_space<vmem>>, vector<8x1xf32>
    %88 = vector.broadcast %87 : vector<8x1xf32> to vector<8x1024xf32>
    %89 = arith.addf %86, %88 : vector<8x1024xf32>
    %cst_46 = arith.constant 0.000000e+00 : f32
    %90 = vector.broadcast %cst_46 : f32 to vector<8x1024xf32>
    %91 = arith.maximumf %89, %90 : vector<8x1024xf32>
    %c0_47 = arith.constant 0 : index
    %c128_48 = arith.constant 128 : index
    %92 = vector.load %arg10[%c0_47, %c128_48] : memref<8x1280xf32, #tpu.memory_space<vmem>>, vector<8x1024xf32>
    tpu.vector_store %arg10[%c0_47, %c128_48], %91 {strides = array<i32>} : memref<8x1280xf32, #tpu.memory_space<vmem>>, vector<8x1024xf32>,
    %93 = tpu.iota {dimensions = array<i32: 1>} : vector<1x1024xi32>
    %c31_i32_49 = arith.constant 31 : i32
    %94 = vector.broadcast %c31_i32_49 : i32 to vector<1x1024xi32>
    %95 = arith.andi %93, %94 : vector<1x1024xi32>
    %c5_i32_50 = arith.constant 5 : i32
    %96 = vector.broadcast %c5_i32_50 : i32 to vector<1x1024xi32>
    %97 = arith.shrsi %93, %96 : vector<1x1024xi32>
    %c31_i32_51 = arith.constant 31 : i32
    %98 = vector.broadcast %c31_i32_51 : i32 to vector<1x1024xi32>
    %99 = arith.andi %97, %98 : vector<1x1024xi32>
    %c1_i32_52 = arith.constant 1 : i32
    %100 = vector.broadcast %c1_i32_52 : i32 to vector<1x1024xi32>
    %101 = arith.cmpi sge, %99, %100 : vector<1x1024xi32>
    %c1_i32_53 = arith.constant 1 : i32
    %102 = vector.broadcast %c1_i32_53 : i32 to vector<1x1024xi32>
    %103 = arith.cmpi sge, %95, %102 : vector<1x1024xi32>
    %c0_54 = arith.constant 0 : index
    %c95_55 = arith.constant 95 : index
    %104 = vector.load %arg10[%c0_54, %c95_55] : memref<8x1280xf32, #tpu.memory_space<vmem>>, vector<8x1024xf32>
    %105 = arith.andi %101, %103 : vector<1x1024xi1>
    %cst_56 = arith.constant 0.000000e+00 : f32
    %106 = vector.shape_cast %105 : vector<1x1024xi1> to vector<1x1024xi1>
    %107 = vector.broadcast %106 : vector<1x1024xi1> to vector<8x1024xi1>
    %108 = vector.broadcast %cst_56 : f32 to vector<8x1024xf32>
    %109 = arith.select %107, %104, %108 : vector<8x1024xi1>, vector<8x1024xf32>
    %c0_57 = arith.constant 0 : index
    %c0_58 = arith.constant 0 : index
    %110 = vector.load %arg9[%c0_57, %c0_58] : memref<72x1024xf32, #tpu.memory_space<vmem>>, vector<8x1024xf32>
    tpu.vector_store %arg9[%c0_57, %c0_58], %109 {strides = array<i32>} : memref<72x1024xf32, #tpu.memory_space<vmem>>, vector<8x1024xf32>,
    %c0_59 = arith.constant 0 : index
    %c96_60 = arith.constant 96 : index
    %111 = vector.load %arg10[%c0_59, %c96_60] : memref<8x1280xf32, #tpu.memory_space<vmem>>, vector<8x1024xf32>
    %cst_61 = arith.constant 0.000000e+00 : f32
    %112 = vector.shape_cast %101 : vector<1x1024xi1> to vector<1x1024xi1>
    %113 = vector.broadcast %112 : vector<1x1024xi1> to vector<8x1024xi1>
    %114 = vector.broadcast %cst_61 : f32 to vector<8x1024xf32>
    %115 = arith.select %113, %111, %114 : vector<8x1024xi1>, vector<8x1024xf32>
    %c8_62 = arith.constant 8 : index
    %c0_63 = arith.constant 0 : index
    %116 = vector.load %arg9[%c8_62, %c0_63] : memref<72x1024xf32, #tpu.memory_space<vmem>>, vector<8x1024xf32>
    tpu.vector_store %arg9[%c8_62, %c0_63], %115 {strides = array<i32>} : memref<72x1024xf32, #tpu.memory_space<vmem>>, vector<8x1024xf32>,
    %c30_i32_64 = arith.constant 30 : i32
    %117 = vector.broadcast %c30_i32_64 : i32 to vector<1x1024xi32>
    %118 = arith.cmpi sle, %95, %117 : vector<1x1024xi32>
    %c0_65 = arith.constant 0 : index
    %c97_66 = arith.constant 97 : index
    %119 = vector.load %arg10[%c0_65, %c97_66] : memref<8x1280xf32, #tpu.memory_space<vmem>>, vector<8x1024xf32>
    %120 = arith.andi %101, %118 : vector<1x1024xi1>
    %cst_67 = arith.constant 0.000000e+00 : f32
    %121 = vector.shape_cast %120 : vector<1x1024xi1> to vector<1x1024xi1>
    %122 = vector.broadcast %121 : vector<1x1024xi1> to vector<8x1024xi1>
    %123 = vector.broadcast %cst_67 : f32 to vector<8x1024xf32>
    %124 = arith.select %122, %119, %123 : vector<8x1024xi1>, vector<8x1024xf32>
    %c16_68 = arith.constant 16 : index
    %c0_69 = arith.constant 0 : index
    %125 = vector.load %arg9[%c16_68, %c0_69] : memref<72x1024xf32, #tpu.memory_space<vmem>>, vector<8x1024xf32>
    tpu.vector_store %arg9[%c16_68, %c0_69], %124 {strides = array<i32>} : memref<72x1024xf32, #tpu.memory_space<vmem>>, vector<8x1024xf32>,
    %c1_i32_70 = arith.constant 1 : i32
    %126 = vector.broadcast %c1_i32_70 : i32 to vector<1x1024xi32>
    %127 = arith.cmpi sge, %95, %126 : vector<1x1024xi32>
    %c0_71 = arith.constant 0 : index
    %c127_72 = arith.constant 127 : index
    %128 = vector.load %arg10[%c0_71, %c127_72] : memref<8x1280xf32, #tpu.memory_space<vmem>>, vector<8x1024xf32>
    %cst_73 = arith.constant 0.000000e+00 : f32
    %129 = vector.shape_cast %127 : vector<1x1024xi1> to vector<1x1024xi1>
    %130 = vector.broadcast %129 : vector<1x1024xi1> to vector<8x1024xi1>
    %131 = vector.broadcast %cst_73 : f32 to vector<8x1024xf32>
    %132 = arith.select %130, %128, %131 : vector<8x1024xi1>, vector<8x1024xf32>
    %c24_74 = arith.constant 24 : index
    %c0_75 = arith.constant 0 : index
    %133 = vector.load %arg9[%c24_74, %c0_75] : memref<72x1024xf32, #tpu.memory_space<vmem>>, vector<8x1024xf32>
    tpu.vector_store %arg9[%c24_74, %c0_75], %132 {strides = array<i32>} : memref<72x1024xf32, #tpu.memory_space<vmem>>, vector<8x1024xf32>,
    %c32_76 = arith.constant 32 : index
    %c0_77 = arith.constant 0 : index
    %134 = vector.load %arg9[%c32_76, %c0_77] : memref<72x1024xf32, #tpu.memory_space<vmem>>, vector<8x1024xf32>
    tpu.vector_store %arg9[%c32_76, %c0_77], %91 {strides = array<i32>} : memref<72x1024xf32, #tpu.memory_space<vmem>>, vector<8x1024xf32>,
    %c30_i32_78 = arith.constant 30 : i32
    %135 = vector.broadcast %c30_i32_78 : i32 to vector<1x1024xi32>
    %136 = arith.cmpi sle, %95, %135 : vector<1x1024xi32>
    %c0_79 = arith.constant 0 : index
    %c129_80 = arith.constant 129 : index
    %137 = vector.load %arg10[%c0_79, %c129_80] : memref<8x1280xf32, #tpu.memory_space<vmem>>, vector<8x1024xf32>
    %cst_81 = arith.constant 0.000000e+00 : f32
    %138 = vector.shape_cast %136 : vector<1x1024xi1> to vector<1x1024xi1>
    %139 = vector.broadcast %138 : vector<1x1024xi1> to vector<8x1024xi1>
    %140 = vector.broadcast %cst_81 : f32 to vector<8x1024xf32>
    %141 = arith.select %139, %137, %140 : vector<8x1024xi1>, vector<8x1024xf32>
    %c40_82 = arith.constant 40 : index
    %c0_83 = arith.constant 0 : index
    %142 = vector.load %arg9[%c40_82, %c0_83] : memref<72x1024xf32, #tpu.memory_space<vmem>>, vector<8x1024xf32>
    tpu.vector_store %arg9[%c40_82, %c0_83], %141 {strides = array<i32>} : memref<72x1024xf32, #tpu.memory_space<vmem>>, vector<8x1024xf32>,
    %c30_i32_84 = arith.constant 30 : i32
    %143 = vector.broadcast %c30_i32_84 : i32 to vector<1x1024xi32>
    %144 = arith.cmpi sle, %99, %143 : vector<1x1024xi32>
    %c1_i32_85 = arith.constant 1 : i32
    %145 = vector.broadcast %c1_i32_85 : i32 to vector<1x1024xi32>
    %146 = arith.cmpi sge, %95, %145 : vector<1x1024xi32>
    %c0_86 = arith.constant 0 : index
    %c159_87 = arith.constant 159 : index
    %147 = vector.load %arg10[%c0_86, %c159_87] : memref<8x1280xf32, #tpu.memory_space<vmem>>, vector<8x1024xf32>
    %148 = arith.andi %144, %146 : vector<1x1024xi1>
    %cst_88 = arith.constant 0.000000e+00 : f32
    %149 = vector.shape_cast %148 : vector<1x1024xi1> to vector<1x1024xi1>
    %150 = vector.broadcast %149 : vector<1x1024xi1> to vector<8x1024xi1>
    %151 = vector.broadcast %cst_88 : f32 to vector<8x1024xf32>
    %152 = arith.select %150, %147, %151 : vector<8x1024xi1>, vector<8x1024xf32>
    %c48_89 = arith.constant 48 : index
    %c0_90 = arith.constant 0 : index
    %153 = vector.load %arg9[%c48_89, %c0_90] : memref<72x1024xf32, #tpu.memory_space<vmem>>, vector<8x1024xf32>
    tpu.vector_store %arg9[%c48_89, %c0_90], %152 {strides = array<i32>} : memref<72x1024xf32, #tpu.memory_space<vmem>>, vector<8x1024xf32>,
    %c0_91 = arith.constant 0 : index
    %c160_92 = arith.constant 160 : index
    %154 = vector.load %arg10[%c0_91, %c160_92] : memref<8x1280xf32, #tpu.memory_space<vmem>>, vector<8x1024xf32>
    %cst_93 = arith.constant 0.000000e+00 : f32
    %155 = vector.shape_cast %144 : vector<1x1024xi1> to vector<1x1024xi1>
    %156 = vector.broadcast %155 : vector<1x1024xi1> to vector<8x1024xi1>
    %157 = vector.broadcast %cst_93 : f32 to vector<8x1024xf32>
    %158 = arith.select %156, %154, %157 : vector<8x1024xi1>, vector<8x1024xf32>
    %c56_94 = arith.constant 56 : index
    %c0_95 = arith.constant 0 : index
    %159 = vector.load %arg9[%c56_94, %c0_95] : memref<72x1024xf32, #tpu.memory_space<vmem>>, vector<8x1024xf32>
    tpu.vector_store %arg9[%c56_94, %c0_95], %158 {strides = array<i32>} : memref<72x1024xf32, #tpu.memory_space<vmem>>, vector<8x1024xf32>,
    %c30_i32_96 = arith.constant 30 : i32
    %160 = vector.broadcast %c30_i32_96 : i32 to vector<1x1024xi32>
    %161 = arith.cmpi sle, %95, %160 : vector<1x1024xi32>
    %c0_97 = arith.constant 0 : index
    %c161_98 = arith.constant 161 : index
    %162 = vector.load %arg10[%c0_97, %c161_98] : memref<8x1280xf32, #tpu.memory_space<vmem>>, vector<8x1024xf32>
    %163 = arith.andi %144, %161 : vector<1x1024xi1>
    %cst_99 = arith.constant 0.000000e+00 : f32
    %164 = vector.shape_cast %163 : vector<1x1024xi1> to vector<1x1024xi1>
    %165 = vector.broadcast %164 : vector<1x1024xi1> to vector<8x1024xi1>
    %166 = vector.broadcast %cst_99 : f32 to vector<8x1024xf32>
    %167 = arith.select %165, %162, %166 : vector<8x1024xi1>, vector<8x1024xf32>
    %c64_100 = arith.constant 64 : index
    %c0_101 = arith.constant 0 : index
    %168 = vector.load %arg9[%c64_100, %c0_101] : memref<72x1024xf32, #tpu.memory_space<vmem>>, vector<8x1024xf32>
    tpu.vector_store %arg9[%c64_100, %c0_101], %167 {strides = array<i32>} : memref<72x1024xf32, #tpu.memory_space<vmem>>, vector<8x1024xf32>,
    %c0_102 = arith.constant 0 : index
    %c0_103 = arith.constant 0 : index
    %169 = vector.load %arg4[%c0_102, %c0_103] : memref<8x72xf32, #tpu.memory_space<vmem>>, vector<8x72xf32>
    %c0_104 = arith.constant 0 : index
    %c0_105 = arith.constant 0 : index
    %170 = vector.load %arg9[%c0_104, %c0_105] : memref<72x1024xf32, #tpu.memory_space<vmem>>, vector<72x1024xf32>
    %cst_106 = arith.constant dense<0.000000e+00> : vector<8x1024xf32>
    %171 = tpu.matmul %169, %170, %cst_106 {dimension_numbers = #tpu.dot_dimension_numbers<[1], [0], [0], [1], [0, 0, 1, 1], [], []>} : vector<8x72xf32>, vector<72x1024xf32>, vector<8x1024xf32> -> vector<8x1024xf32>
    %c0_107 = arith.constant 0 : index
    %c0_108 = arith.constant 0 : index
    %172 = vector.load %arg5[%c0_107, %c0_108] : memref<8x1xf32, #tpu.memory_space<vmem>>, vector<8x1xf32>
    %173 = vector.broadcast %172 : vector<8x1xf32> to vector<8x1024xf32>
    %174 = arith.addf %171, %173 : vector<8x1024xf32>
    %175 = arith.addf %174, %6 : vector<8x1024xf32>
    %cst_109 = arith.constant 0.000000e+00 : f32
    %176 = vector.broadcast %cst_109 : f32 to vector<8x1024xf32>
    %177 = arith.maximumf %175, %176 : vector<8x1024xf32>
    %c0_110 = arith.constant 0 : index
    %c0_111 = arith.constant 0 : index
    %178 = vector.load %arg6[%c0_110, %c0_111] : memref<2x8xf32, #tpu.memory_space<vmem>>, vector<2x8xf32>
    %cst_112 = arith.constant dense<0.000000e+00> : vector<2x1024xf32>
    %179 = tpu.matmul %178, %177, %cst_112 {dimension_numbers = #tpu.dot_dimension_numbers<[1], [0], [0], [1], [0, 0, 1, 1], [], []>} : vector<2x8xf32>, vector<8x1024xf32>, vector<2x1024xf32> -> vector<2x1024xf32>
    %c0_113 = arith.constant 0 : index
    %c0_114 = arith.constant 0 : index
    %180 = vector.load %arg7[%c0_113, %c0_114] : memref<2x1xf32, #tpu.memory_space<vmem>>, vector<2x1xf32>
    %181 = vector.broadcast %180 : vector<2x1xf32> to vector<2x1024xf32>
    %182 = arith.addf %179, %181 : vector<2x1024xf32>
    %183 = arith.negf %182 : vector<2x1024xf32>
    %184 = math.exp %183 : vector<2x1024xf32>
    %cst_115 = arith.constant 1.000000e+00 : f32
    %185 = vector.broadcast %cst_115 : f32 to vector<2x1024xf32>
    %186 = arith.addf %185, %184 : vector<2x1024xf32>
    %187 = arith.divf %185, %186 : vector<2x1024xf32>
    %c0_116 = arith.constant 0 : index
    %c0_117 = arith.constant 0 : index
    %c0_118 = arith.constant 0 : index
    %188 = vector.load %arg8[%c0_116, %c0_117, %c0_118] : memref<1x2x1024xf32, #tpu.memory_space<vmem>>, vector<1x2x1024xf32>
    %189 = vector.shape_cast %188 : vector<1x2x1024xf32> to vector<2x1024xf32>
    %190 = vector.shape_cast %187 : vector<2x1024xf32> to vector<1x2x1024xf32>
    tpu.vector_store %arg8[%c0_116, %c0_117, %c0_118], %190 {strides = array<i32>} : memref<1x2x1024xf32, #tpu.memory_space<vmem>>, vector<1x2x1024xf32>,
    return
  }
  func.func @transform_0(%arg0: i32) -> (i32, i32, i32) {
    %c0_i32 = arith.constant 0 : i32
    %c0_i32_0 = arith.constant 0 : i32
    %c0_i32_1 = arith.constant 0 : i32
    return %arg0, %c0_i32, %c0_i32_0 : i32, i32, i32
  }
  func.func @transform_1(%arg0: i32) -> (i32, i32) {
    %c0_i32 = arith.constant 0 : i32
    %c0_i32_0 = arith.constant 0 : i32
    %c0_i32_1 = arith.constant 0 : i32
    return %c0_i32, %c0_i32_0 : i32, i32
  }
  func.func @transform_2(%arg0: i32) -> (i32, i32) {
    %c0_i32 = arith.constant 0 : i32
    %c0_i32_0 = arith.constant 0 : i32
    %c0_i32_1 = arith.constant 0 : i32
    return %c0_i32, %c0_i32_0 : i32, i32
  }
  func.func @transform_3(%arg0: i32) -> (i32, i32) {
    %c0_i32 = arith.constant 0 : i32
    %c0_i32_0 = arith.constant 0 : i32
    %c0_i32_1 = arith.constant 0 : i32
    return %c0_i32, %c0_i32_0 : i32, i32
  }
  func.func @transform_4(%arg0: i32) -> (i32, i32) {
    %c0_i32 = arith.constant 0 : i32
    %c0_i32_0 = arith.constant 0 : i32
    %c0_i32_1 = arith.constant 0 : i32
    return %c0_i32, %c0_i32_0 : i32, i32
  }
  func.func @transform_5(%arg0: i32) -> (i32, i32) {
    %c0_i32 = arith.constant 0 : i32
    %c0_i32_0 = arith.constant 0 : i32
    %c0_i32_1 = arith.constant 0 : i32
    return %c0_i32, %c0_i32_0 : i32, i32
  }
  func.func @transform_6(%arg0: i32) -> (i32, i32) {
    %c0_i32 = arith.constant 0 : i32
    %c0_i32_0 = arith.constant 0 : i32
    %c0_i32_1 = arith.constant 0 : i32
    return %c0_i32, %c0_i32_0 : i32, i32
  }
  func.func @transform_7(%arg0: i32) -> (i32, i32, i32) {
    %c0_i32 = arith.constant 0 : i32
    %c0_i32_0 = arith.constant 0 : i32
    %c0_i32_1 = arith.constant 0 : i32
    return %arg0, %c0_i32, %c0_i32_0 : i32, i32, i32
  }
}

</mosaic_0001>

<llo_original>
// kernel: unet_with_backbone.7
$region0: #{unet_with_backbone.7}
  #allocation0 [shape = 'u32[]', space=smem, size = 0x4, offset = 0x4, fixed_abs, tag = 'smem constant byte address 0x4 - core index']
  #allocation1 [shape = 'u32[144,128]{1,0:T(1,128)}', space=vmem, size = 0x12000, scoped, tag = 'internal scratch']
  #allocation2 [shape = 'f32[72,256]{1,0:T(8,128)}', space=vmem, size = 0x12000, scoped, tag = 'scratch operand']
  #allocation3 [shape = 'f32[8,512]{1,0:T(8,128)}', space=vmem, size = 0x4000, scoped, tag = 'scratch operand']
  %s0 = inlined_call_operand.vmem [shape: bf16[2,8,256], index: 0, kind: input, shape index: {}]
  %s1 = inlined_call_operand.vmem [shape: f32[16,72], index: 1, kind: input, shape index: {}]
  %s2 = inlined_call_operand.vmem [shape: f32[16,1], index: 2, kind: input, shape index: {}]
  %s3 = inlined_call_operand.vmem [shape: bf16[2,16,256], index: 3, kind: output, shape index: {}]
  %s4 = sld [smem:[#allocation0]]
  $region45: #{unet_with_backbone.7} parent=0
    _
  %s6 = ssub.s32 1, %s4
  %s7 = scalar_select 0, %s6, %s4
  loop: start=0, step=1, limit=4
  $region2: #{unet_with_backbone.7} parent=0 // loop_pre_header
    _
  $region3: #{unet_with_backbone.7} parent=0 // loop_header
    %s9 = sphi 0, %s13
    %p10 = scmp.ge.s32.totalorder %s9, 4
    %s19 = sphi 0, %s21
    %s22 = sphi 0, %s19
    %s23 = sphi 0, %s22
    %s39 = sphi 0, %s23
    %s43 = sphi 0, %s43
    %s45 = sphi 0, %s43
    %s46 = sphi 0, %s45
    %s60 = sphi 0, %s46
    %s64 = sphi 0, %s64
    %s66 = sphi 0, %s64
    %s67 = sphi 0, %s66
    %s81 = sphi 0, %s67
    %s87 = sphi 0, %s89
    %s90 = sphi 0, %s87
    %s91 = sphi 0, %s90
    %s107 = sphi 0, %s91
  $region4: #{unet_with_backbone.7} parent=0 // loop_header_branch
    %12 = sbr.rel (%p10) target = $region8
  $region5: #{unet_with_backbone.7} parent=0 // loop_body
    %s14 = ssub.s32 %s9, 1
    %s15 = ssub.s32 %s9, 2
    %s16 = sadd.s32 %s9, 1
    %s17 = ssub.s32 %s9, %s16
    %p18 = scmp.eq.s32.totalorder %s17, 0
    %s20 = sadd.s32 %s19, 1
    %s21 = scalar_select %p18, %s19, %s20
    %p24 = pneg %p18
    %p25 = scmp.eq.s32.totalorder %s9, 1
    %p26 = por %p24, %p25
    %p27 = scmp.ne.s32.totalorder %s19, %s22
    %p28 = scmp.eq.s32.totalorder %s9, 0
    %p29 = por %p27, %p28
    %p30 = scmp.ne.s32.totalorder %s19, %s22
    %p31 = scmp.eq.s32.totalorder %s14, 1
    %p32 = por %p30, %p31
    %p33 = scmp.ne.s32.totalorder %s22, %s23
    %p34 = scmp.eq.s32.totalorder %s14, 0
    %p35 = por %p33, %p34
    %p36 = scmp.ne.s32.totalorder %s22, %s23
    %p37 = scmp.eq.s32.totalorder %s15, 1
    %p38 = por %p36, %p37
    %p40 = scmp.ne.s32.totalorder %s23, %s39
    %p41 = scmp.eq.s32.totalorder %s15, 0
    %p42 = por %p40, %p41
    %s44 = sadd.s32 %s43, 1
    %p47 = scmp.eq.s32.totalorder %s9, 1
    %p48 = scmp.ne.s32.totalorder %s43, %s45
    %p49 = scmp.eq.s32.totalorder %s9, 0
    %p50 = por %p48, %p49
    %p51 = scmp.ne.s32.totalorder %s43, %s45
    %p52 = scmp.eq.s32.totalorder %s14, 1
    %p53 = por %p51, %p52
    %p54 = scmp.ne.s32.totalorder %s45, %s46
    %p55 = scmp.eq.s32.totalorder %s14, 0
    %p56 = por %p54, %p55
    %p57 = scmp.ne.s32.totalorder %s45, %s46
    %p58 = scmp.eq.s32.totalorder %s15, 1
    %p59 = por %p57, %p58
    %p61 = scmp.ne.s32.totalorder %s46, %s60
    %p62 = scmp.eq.s32.totalorder %s15, 0
    %p63 = por %p61, %p62
    %s65 = sadd.s32 %s64, 1
    %p68 = scmp.eq.s32.totalorder %s9, 1
    %p69 = scmp.ne.s32.totalorder %s64, %s66
    %p70 = scmp.eq.s32.totalorder %s9, 0
    %p71 = por %p69, %p70
    %p72 = scmp.ne.s32.totalorder %s64, %s66
    %p73 = scmp.eq.s32.totalorder %s14, 1
    %p74 = por %p72, %p73
    %p75 = scmp.ne.s32.totalorder %s66, %s67
    %p76 = scmp.eq.s32.totalorder %s14, 0
    %p77 = por %p75, %p76
    %p78 = scmp.ne.s32.totalorder %s66, %s67
    %p79 = scmp.eq.s32.totalorder %s15, 1
    %p80 = por %p78, %p79
    %p82 = scmp.ne.s32.totalorder %s67, %s81
    %p83 = scmp.eq.s32.totalorder %s15, 0
    %p84 = por %p82, %p83
    %s85 = ssub.s32 %s9, %s16
    %p86 = scmp.eq.s32.totalorder %s85, 0
    %s88 = sadd.s32 %s87, 1
    %s89 = scalar_select %p86, %s87, %s88
    %p92 = pneg %p86
    %p93 = scmp.eq.s32.totalorder %s9, 1
    %p94 = por %p92, %p93
    %p95 = scmp.ne.s32.totalorder %s87, %s90
    %p96 = scmp.eq.s32.totalorder %s9, 0
    %p97 = por %p95, %p96
    %p98 = scmp.ne.s32.totalorder %s87, %s90
    %p99 = scmp.eq.s32.totalorder %s14, 1
    %p100 = por %p98, %p99
    %p101 = scmp.ne.s32.totalorder %s90, %s91
    %p102 = scmp.eq.s32.totalorder %s14, 0
    %p103 = por %p101, %p102
    %p104 = scmp.ne.s32.totalorder %s90, %s91
    %p105 = scmp.eq.s32.totalorder %s15, 1
    %p106 = por %p104, %p105
    %p108 = scmp.ne.s32.totalorder %s91, %s107
    %p109 = scmp.eq.s32.totalorder %s15, 0
    %p110 = por %p108, %p109
    %p111 = scmp.le.s32.totalorder 1, %s9
    %p112 = scmp.lt.s32.totalorder %s9, 3
    %p113 = pnand %p111, %p112
    %p114 = pneg %p113
    // Predicated region
    $region9: #{unet_with_backbone.7} parent=5 // pred_check
      _
    $region10: #{unet_with_backbone.7} parent=5 // pred_check_branch
      %116 = sbr.rel (%p113) target = $region12
    $region11: #{unet_with_backbone.7} parent=5 // pred_region
      %s117 = ssub.s32 %s9, 1
      // Predicated region
      $region13: #{unet_with_backbone.7} parent=11 // pred_check
        %p118 = pneg %p56
      $region14: #{unet_with_backbone.7} parent=11 // pred_check_branch
        %120 = sbr.rel (%p118) target = $region16
      $region15: #{unet_with_backbone.7} parent=11 // pred_region
        _
      $region16: #{unet_with_backbone.7} parent=11 // pred_fallthru
        _
      // Predicated region
      $region17: #{unet_with_backbone.7} parent=11 // pred_check
        %p121 = pneg %p77
      $region18: #{unet_with_backbone.7} parent=11 // pred_check_branch
        %123 = sbr.rel (%p121) target = $region20
      $region19: #{unet_with_backbone.7} parent=11 // pred_region
        _
      $region20: #{unet_with_backbone.7} parent=11 // pred_fallthru
        _
    $region12: #{unet_with_backbone.7} parent=5 // pred_fallthru
      _
    %p124 = scmp.lt.s32.totalorder %s9, 2
    // Predicated region
    $region21: #{unet_with_backbone.7} parent=5 // pred_check
      %p125 = pneg %p124
    $region22: #{unet_with_backbone.7} parent=5 // pred_check_branch
      %127 = sbr.rel (%p125) target = $region24
    $region23: #{unet_with_backbone.7} parent=5 // pred_region
      // Predicated region
      $region25: #{unet_with_backbone.7} parent=23 // pred_check
        %p128 = pneg %p29
      $region26: #{unet_with_backbone.7} parent=23 // pred_check_branch
        %130 = sbr.rel (%p128) target = $region28
      $region27: #{unet_with_backbone.7} parent=23 // pred_region
        %p131 = scmp.lt.s32.totalorder %s9, 1
        %s132 = scalar_select %p131, %s9, 1
        %s133 = smul.addr %s132, 2
        %s134 = smul.addr %s133, 4
        %s135 = scalar_lea.vmem %s0, %s134
      $region28: #{unet_with_backbone.7} parent=23 // pred_fallthru
        _
    $region24: #{unet_with_backbone.7} parent=5 // pred_fallthru
      _
    %p136 = scmp.le.s32.totalorder 1, %s9
    %p137 = scmp.lt.s32.totalorder %s9, 3
    %p138 = pnand %p136, %p137
    %p139 = pneg %p138
    // Predicated region
    $region29: #{unet_with_backbone.7} parent=5 // pred_check
      _
    $region30: #{unet_with_backbone.7} parent=5 // pred_check_branch
      %141 = sbr.rel (%p138) target = $region32
    $region31: #{unet_with_backbone.7} parent=5 // pred_region
      %s142 = ssub.s32 %s9, 1
      %p143 = scmp.lt.s32.totalorder %s14, 1
      %s144 = scalar_select %p143, %s14, 1
      %s145 = smul.addr %s144, 2
      %s146 = smul.addr %s145, 4
      %s147 = scalar_lea.vmem %s0, %s146
      %p148 = pneg %p35
      %p149 = pneg %p32
      %p150 = pneg %p56
      %p151 = pneg %p53
      %p152 = pneg %p77
      %p153 = pneg %p74
      %p154 = pneg %p103
      %p155 = pneg %p100
      %p156 = scmp.lt.s32.totalorder %s14, 1
      %s157 = scalar_select %p156, %s14, 1
      %s158 = smul.addr %s157, 4
      %s159 = smul.addr %s158, 4
      %s160 = scalar_lea.vmem %s3, %s159
      %p161 = scmp.lt.s32.totalorder %s14, 1
      %s162 = scalar_select %p161, %s14, 1
      %s163 = smul.addr %s162, 2
      %s164 = smul.addr %s163, 4
      %s165 = scalar_lea.vmem %s0, %s164
      %p166 = scmp.lt.s32.totalorder %s14, 1
      %s167 = scalar_select %p166, %s14, 1
      %s168 = smul.addr %s167, 4
      %s169 = smul.addr %s168, 4
      %s170 = scalar_lea.vmem %s3, %s169
      %171 = vst [vmem:[#allocation3] sm:$0xff] 0.0
      %172 = vst [vmem:[#allocation3 + $0x8] sm:$0xff] 0.0
      %173 = vst [vmem:[#allocation3 + $0x10] sm:$0xff] 0.0
      %174 = vst [vmem:[#allocation3 + $0x18] sm:$0xff] 0.0
      %v175 = vld [vmem:[%s165] sm:$0xff]
      %v176 = vunpack.c.l.bf16 %v175
      %v177 = vunpack.c.h.bf16 %v175
      %178 = vst [vmem:[#allocation3 + $0x8] sm:$0xff] %v176
      %179 = vst [vmem:[#allocation3 + $0x10] sm:$0xff] %v177
      %v180 = vlaneseq
      %v181 = vand.u32 %v180, 127
      %v182 = vadd.s32 %v181, 128
      %v183 = vand.u32 %v181, 15
      %v184 = vand.u32 %v182, 15
      %v185 = vshra.s32 %v181, 4
      %v186 = vshra.s32 %v182, 4
      %v187 = vand.u32 %v185, 15
      %v188 = vand.u32 %v186, 15
      %vm189 = vcmp.ge.s32.totalorder %v187, 1
      %vm190 = vcmp.ge.s32.totalorder %v188, 1
      %vm191 = vcmp.ge.s32.totalorder %v183, 1
      %vm192 = vcmp.ge.s32.totalorder %v184, 1
      %v193 = vld [vmem:[#allocation3] sm:$0xff]
      %v194 = vld [vmem:[#allocation3 + $0x8] sm:$0xff]
      %v195 = vld [vmem:[#allocation3 + $0x10] sm:$0xff]
      %vm196 = vmand %vm189, %vm191
      %vm197 = vmand %vm190, %vm192
      %v198 = vsel %vm196, 1, 0
      %v199 = vsel %vm197, 1, 0
      %vm200 = vcmp.eq.s32.totalorder %v198, 1
      %vm201 = vcmp.eq.s32.totalorder %v199, 1
      %205 = vrot.lane.b32.xlu0 %v193, 17
      %v206 = vpop.permute.xlu0 %205
      %207 = vrot.lane.b32.xlu0 %v194, 17
      %v208 = vpop.permute.xlu0 %207
      %209 = vrot.lane.b32.xlu0 %v195, 17
      %v210 = vpop.permute.xlu0 %209
      %vm211 = vcmask 138240
      %v212 = vsel %vm211, %v206, %v208
      %v213 = vsel %vm211, %v208, %v210
      %v216 = vsel %vm200, %v212, 0.0
      %v217 = vsel %vm201, %v213, 0.0
      %218 = vst [vmem:[#allocation2] sm:$0xff] %v216
      %219 = vst [vmem:[#allocation2 + $0x8] sm:$0xff] %v217
      %v220 = vld [vmem:[#allocation3] sm:$0xff]
      %v221 = vld [vmem:[#allocation3 + $0x8] sm:$0xff]
      %v222 = vld [vmem:[#allocation3 + $0x10] sm:$0xff]
      %v223 = vsel %vm189, 1, 0
      %v224 = vsel %vm190, 1, 0
      %vm225 = vcmp.eq.s32.totalorder %v223, 1
      %vm226 = vcmp.eq.s32.totalorder %v224, 1
      %230 = vrot.lane.b32.xlu0 %v220, 16
      %v231 = vpop.permute.xlu0 %230
      %232 = vrot.lane.b32.xlu0 %v221, 16
      %v233 = vpop.permute.xlu0 %232
      %234 = vrot.lane.b32.xlu0 %v222, 16
      %v235 = vpop.permute.xlu0 %234
      %vm236 = vcmask 130048
      %v237 = vsel %vm236, %v231, %v233
      %v238 = vsel %vm236, %v233, %v235
      %v241 = vsel %vm225, %v237, 0.0
      %v242 = vsel %vm226, %v238, 0.0
      %243 = vst [vmem:[#allocation2 + $0x10] sm:$0xff] %v241
      %244 = vst [vmem:[#allocation2 + $0x18] sm:$0xff] %v242
      %vm245 = vcmp.le.s32.totalorder %v183, 14
      %vm246 = vcmp.le.s32.totalorder %v184, 14
      %v247 = vld [vmem:[#allocation3] sm:$0xff]
      %v248 = vld [vmem:[#allocation3 + $0x8] sm:$0xff]
      %v249 = vld [vmem:[#allocation3 + $0x10] sm:$0xff]
      %vm250 = vmand %vm189, %vm245
      %vm251 = vmand %vm190, %vm246
      %v252 = vsel %vm250, 1, 0
      %v253 = vsel %vm251, 1, 0
      %vm254 = vcmp.eq.s32.totalorder %v252, 1
      %vm255 = vcmp.eq.s32.totalorder %v253, 1
      %259 = vrot.lane.b32.xlu0 %v247, 15
      %v260 = vpop.permute.xlu0 %259
      %261 = vrot.lane.b32.xlu0 %v248, 15
      %v262 = vpop.permute.xlu0 %261
      %263 = vrot.lane.b32.xlu0 %v249, 15
      %v264 = vpop.permute.xlu0 %263
      %vm265 = vcmask 121856
      %v266 = vsel %vm265, %v260, %v262
      %v267 = vsel %vm265, %v262, %v264
      %v270 = vsel %vm254, %v266, 0.0
      %v271 = vsel %vm255, %v267, 0.0
      %272 = vst [vmem:[#allocation2 + $0x20] sm:$0xff] %v270
      %273 = vst [vmem:[#allocation2 + $0x28] sm:$0xff] %v271
      %v274 = vld [vmem:[#allocation3] sm:$0xff]
      %v275 = vld [vmem:[#allocation3 + $0x8] sm:$0xff]
      %v276 = vld [vmem:[#allocation3 + $0x10] sm:$0xff]
      %v277 = vsel %vm191, 1, 0
      %v278 = vsel %vm192, 1, 0
      %vm279 = vcmp.eq.s32.totalorder %v277, 1
      %vm280 = vcmp.eq.s32.totalorder %v278, 1
      %284 = vrot.lane.b32.xlu0 %v274, 1
      %v285 = vpop.permute.xlu0 %284
      %286 = vrot.lane.b32.xlu0 %v275, 1
      %v287 = vpop.permute.xlu0 %286
      %288 = vrot.lane.b32.xlu0 %v276, 1
      %v289 = vpop.permute.xlu0 %288
      %vm290 = vcmask 7168
      %v291 = vsel %vm290, %v285, %v287
      %v292 = vsel %vm290, %v287, %v289
      %v295 = vsel %vm279, %v291, 0.0
      %v296 = vsel %vm280, %v292, 0.0
      %297 = vst [vmem:[#allocation2 + $0x30] sm:$0xff] %v295
      %298 = vst [vmem:[#allocation2 + $0x38] sm:$0xff] %v296
      %299 = vst [vmem:[#allocation2 + $0x40] sm:$0xff] %v176
      %300 = vst [vmem:[#allocation2 + $0x48] sm:$0xff] %v177
      %v301 = vld [vmem:[#allocation3 + $0x8] sm:$0xff]
      %v302 = vld [vmem:[#allocation3 + $0x10] sm:$0xff]
      %v303 = vld [vmem:[#allocation3 + $0x18] sm:$0xff]
      %v304 = vsel %vm245, 1, 0
      %v305 = vsel %vm246, 1, 0
      %vm306 = vcmp.eq.s32.totalorder %v304, 1
      %vm307 = vcmp.eq.s32.totalorder %v305, 1
      %311 = vrot.lane.b32.xlu0 %v301, 127
      %v312 = vpop.permute.xlu0 %311
      %313 = vrot.lane.b32.xlu0 %v302, 127
      %v314 = vpop.permute.xlu0 %313
      %315 = vrot.lane.b32.xlu0 %v303, 127
      %v316 = vpop.permute.xlu0 %315
      %vm317 = vcmask 1039360
      %v318 = vsel %vm317, %v312, %v314
      %v319 = vsel %vm317, %v314, %v316
      %v322 = vsel %vm306, %v318, 0.0
      %v323 = vsel %vm307, %v319, 0.0
      %324 = vst [vmem:[#allocation2 + $0x50] sm:$0xff] %v322
      %325 = vst [vmem:[#allocation2 + $0x58] sm:$0xff] %v323
      %vm326 = vcmp.le.s32.totalorder %v187, 14
      %vm327 = vcmp.le.s32.totalorder %v188, 14
      %v328 = vld [vmem:[#allocation3 + $0x8] sm:$0xff]
      %v329 = vld [vmem:[#allocation3 + $0x10] sm:$0xff]
      %v330 = vld [vmem:[#allocation3 + $0x18] sm:$0xff]
      %vm331 = vmand %vm326, %vm191
      %vm332 = vmand %vm327, %vm192
      %v333 = vsel %vm331, 1, 0
      %v334 = vsel %vm332, 1, 0
      %vm335 = vcmp.eq.s32.totalorder %v333, 1
      %vm336 = vcmp.eq.s32.totalorder %v334, 1
      %340 = vrot.lane.b32.xlu0 %v328, 113
      %v341 = vpop.permute.xlu0 %340
      %342 = vrot.lane.b32.xlu0 %v329, 113
      %v343 = vpop.permute.xlu0 %342
      %344 = vrot.lane.b32.xlu0 %v330, 113
      %v345 = vpop.permute.xlu0 %344
      %vm346 = vcmask 924672
      %v347 = vsel %vm346, %v341, %v343
      %v348 = vsel %vm346, %v343, %v345
      %v351 = vsel %vm335, %v347, 0.0
      %v352 = vsel %vm336, %v348, 0.0
      %353 = vst [vmem:[#allocation2 + $0x60] sm:$0xff] %v351
      %354 = vst [vmem:[#allocation2 + $0x68] sm:$0xff] %v352
      %v355 = vld [vmem:[#allocation3 + $0x8] sm:$0xff]
      %v356 = vld [vmem:[#allocation3 + $0x10] sm:$0xff]
      %v357 = vld [vmem:[#allocation3 + $0x18] sm:$0xff]
      %v358 = vsel %vm326, 1, 0
      %v359 = vsel %vm327, 1, 0
      %vm360 = vcmp.eq.s32.totalorder %v358, 1
      %vm361 = vcmp.eq.s32.totalorder %v359, 1
      %365 = vrot.lane.b32.xlu0 %v355, 112
      %v366 = vpop.permute.xlu0 %365
      %367 = vrot.lane.b32.xlu0 %v356, 112
      %v368 = vpop.permute.xlu0 %367
      %369 = vrot.lane.b32.xlu0 %v357, 112
      %v370 = vpop.permute.xlu0 %369
      %vm371 = vcmask 916480
      %v372 = vsel %vm371, %v366, %v368
      %v373 = vsel %vm371, %v368, %v370
      %v376 = vsel %vm360, %v372, 0.0
      %v377 = vsel %vm361, %v373, 0.0
      %378 = vst [vmem:[#allocation2 + $0x70] sm:$0xff] %v376
      %379 = vst [vmem:[#allocation2 + $0x78] sm:$0xff] %v377
      %v380 = vld [vmem:[#allocation3 + $0x8] sm:$0xff]
      %v381 = vld [vmem:[#allocation3 + $0x10] sm:$0xff]
      %v382 = vld [vmem:[#allocation3 + $0x18] sm:$0xff]
      %vm383 = vmand %vm326, %vm245
      %vm384 = vmand %vm327, %vm246
      %v385 = vsel %vm383, 1, 0
      %v386 = vsel %vm384, 1, 0
      %vm387 = vcmp.eq.s32.totalorder %v385, 1
      %vm388 = vcmp.eq.s32.totalorder %v386, 1
      %392 = vrot.lane.b32.xlu0 %v380, 111
      %v393 = vpop.permute.xlu0 %392
      %394 = vrot.lane.b32.xlu0 %v381, 111
      %v395 = vpop.permute.xlu0 %394
      %396 = vrot.lane.b32.xlu0 %v382, 111
      %v397 = vpop.permute.xlu0 %396
      %vm398 = vcmask 908288
      %v399 = vsel %vm398, %v393, %v395
      %v400 = vsel %vm398, %v395, %v397
      %v403 = vsel %vm387, %v399, 0.0
      %v404 = vsel %vm388, %v400, 0.0
      %405 = vst [vmem:[#allocation2 + $0x80] sm:$0xff] %v403
      %406 = vst [vmem:[#allocation2 + $0x88] sm:$0xff] %v404
      %v407 = vld [vmem:[%s1] sm:$0xff]
      %v408 = vld [vmem:[%s1 + $0x8] sm:$0xff]
      %v409 = vld [vmem:[#allocation2] sm:$0xff]
      %v410 = vld [vmem:[#allocation2 + $0x8] sm:$0xff]
      %v411 = vld [vmem:[#allocation2 + $0x10] sm:$0xff]
      %v412 = vld [vmem:[#allocation2 + $0x18] sm:$0xff]
      %v413 = vld [vmem:[#allocation2 + $0x20] sm:$0xff]
      %v414 = vld [vmem:[#allocation2 + $0x28] sm:$0xff]
      %v415 = vld [vmem:[#allocation2 + $0x30] sm:$0xff]
      %v416 = vld [vmem:[#allocation2 + $0x38] sm:$0xff]
      %v417 = vld [vmem:[#allocation2 + $0x40] sm:$0xff]
      %v418 = vld [vmem:[#allocation2 + $0x48] sm:$0xff]
      %v419 = vld [vmem:[#allocation2 + $0x50] sm:$0xff]
      %v420 = vld [vmem:[#allocation2 + $0x58] sm:$0xff]
      %v421 = vld [vmem:[#allocation2 + $0x60] sm:$0xff]
      %v422 = vld [vmem:[#allocation2 + $0x68] sm:$0xff]
      %v423 = vld [vmem:[#allocation2 + $0x70] sm:$0xff]
      %v424 = vld [vmem:[#allocation2 + $0x78] sm:$0xff]
      %v425 = vld [vmem:[#allocation2 + $0x80] sm:$0xff]
      %v426 = vld [vmem:[#allocation2 + $0x88] sm:$0xff]
      %v427 = vld [vmem:[%s2] sm:$0xff]
      %v428 = vld [vmem:[%s2 + $0x8] sm:$0xff]
      %430 = vset.pattern.permute.xlu0 0
      %431 = vperm.xlu0 %430, %v427
      %v432 = vpop.permute.xlu0 %431
      %435 = vset.pattern.permute.xlu0 0
      %436 = vperm.xlu0 %435, %v428
      %v437 = vpop.permute.xlu0 %436
      %vm439 = vcmask 588800
      %v441 = vsel %vm439, %v407, 0
      %v444 = vsel %vm439, %v408, 0
      %446 = vmatprep.subr.mxu0 %v410
      %447 = vmatpush1.msra.mxu0 %v409
      %448 = vmatprep.subr.mxu0 %v412
      %449 = vmatpush1.msra.mxu0 %v411
      %450 = vmatprep.subr.mxu0 %v414
      %451 = vmatpush1.msra.mxu0 %v413
      %452 = vmatprep.subr.mxu0 %v416
      %453 = vmatpush1.msra.mxu0 %v415
      %454 = vmatprep.subr.mxu0 %v418
      %455 = vmatpush1.msra.mxu0 %v417
      %456 = vmatprep.subr.mxu0 %v420
      %457 = vmatpush1.msra.mxu0 %v419
      %458 = vmatprep.subr.mxu0 %v422
      %459 = vmatpush1.msra.mxu0 %v421
      %460 = vmatprep.subr.mxu0 %v424
      %461 = vmatpush1.msra.mxu0 %v423
      %462 = vmatprep.subr.mxu0 %v426
      %463 = vmatpush1.msra.mxu0 %v425
      %464 = vmatprep.subr.mxu0 0.0
      %465 = vmatpush1.msra.mxu0 0.0
      %466 = vmatprep.subr.mxu0 0.0
      %467 = vmatpush1.msra.mxu0 0.0
      %468 = vmatprep.subr.mxu0 0.0
      %469 = vmatpush1.msra.mxu0 0.0
      %470 = vmatprep.subr.mxu0 0.0
      %471 = vmatpush1.msra.mxu0 0.0
      %472 = vmatprep.subr.mxu0 0.0
      %473 = vmatpush1.msra.mxu0 0.0
      %474 = vmatprep.subr.mxu0 0.0
      %475 = vmatpush1.msra.mxu0 0.0
      %476 = vmatprep.subr.mxu0 0.0
      %477 = vmatpush1.msra.mxu0 0.0
      %478 = vmatprep.subr.mxu0 0.0
      %479 = vmatpush1.msra.mxu0 0.0
      %480 = vmatprep.subr.mxu0 0.0
      %481 = vmatpush1.msra.mxu0 0.0
      %482 = vmatprep.subr.mxu0 0.0
      %483 = vmatpush1.msra.mxu0 0.0
      %484 = vmatprep.subr.mxu0 0.0
      %485 = vmatpush1.msra.mxu0 0.0
      %486 = vmatprep.subr.mxu0 0.0
      %487 = vmatpush1.msra.mxu0 0.0
      %488 = vmatprep.subr.mxu0 0.0
      %489 = vmatpush1.msra.mxu0 0.0
      %490 = vmatprep.subr.mxu0 0.0
      %491 = vmatpush1.msra.mxu0 0.0
      %492 = vmatprep.subr.mxu0 0.0
      %493 = vmatpush1.msra.mxu0 0.0
      %494 = vmatprep.subr.mxu0 0.0
      %495 = vmatpush1.msra.mxu0 0.0
      %496 = vmatprep.subr.mxu0 0.0
      %497 = vmatpush1.msra.mxu0 0.0
      %498 = vmatprep.subr.mxu0 0.0
      %499 = vmatpush1.msra.mxu0 0.0
      %500 = vmatprep.subr.mxu0 0.0
      %501 = vmatpush1.msra.mxu0 0.0
      %502 = vmatprep.subr.mxu0 0.0
      %503 = vmatpush1.msra.mxu0 0.0
      %504 = vmatprep.subr.mxu0 0.0
      %505 = vmatpush1.msra.mxu0 0.0
      %506 = vmatprep.subr.mxu0 0.0
      %507 = vmatpush1.msra.mxu0 0.0
      %508 = vmatprep.subr.mxu0 0.0
      %509 = vmatpush1.msra.mxu0 0.0
      %510 = vmatprep.mubr.f32.mxu0 0.0
      %511 = vmatmul.mubr.f32.gmra.mrb[0].mxu0 %v441
      %v512 = vpop.f32.mrb[0].mxu0
      %v513 = vadd.f32 %v432, %v512
      %v514 = vpop.f32.mrb[0].mxu0
      %v515 = vadd.f32 %v432, %v514
      %516 = vmatprep.mubr.f32.mxu0 0.0
      %517 = vmatmul.mubr.f32.gmra.mrb[0].mxu0 %v444
      %v518 = vpop.f32.mrb[0].mxu0
      %v519 = vadd.f32 %v437, %v518
      %v520 = vpop.f32.mrb[0].mxu0
      %v521 = vadd.f32 %v437, %v520
      %522 = vdwg.mxu0
      %v523 = vmax.f32 %v513, 0.0
      %v524 = vmax.f32 %v515, 0.0
      %v525 = vmax.f32 %v519, 0.0
      %v526 = vmax.f32 %v521, 0.0
      %v527 = vpack.c.bf16 %v525, %v523
      %v528 = vpack.c.bf16 %v526, %v524
      %v531 = vunpack.c.l.b16 %v527
      %v532 = vunpack.c.l.b16 %v528
      %v533 = vunpack.c.h.b16 %v527
      %v534 = vunpack.c.h.b16 %v528
      %v535 = vpack.c.b16 %v532, %v531
      %v536 = vpack.c.b16 %v534, %v533
      %539 = vst [vmem:[%s170] sm:$0xff] %v535
      %540 = vst [vmem:[%s170 + $0x8] sm:$0xff] %v536
      %p541 = scmp.lt.s32.totalorder %s14, 1
      %s542 = scalar_select %p541, %s14, 1
      %s543 = smul.addr %s542, 4
      %s544 = smul.addr %s543, 4
      %s545 = scalar_lea.vmem %s3, %s544
      // Predicated region
      $region33: #{unet_with_backbone.7} parent=31 // pred_check
        %p546 = pneg %p100
      $region34: #{unet_with_backbone.7} parent=31 // pred_check_branch
        %548 = sbr.rel (%p546) target = $region36
      $region35: #{unet_with_backbone.7} parent=31 // pred_region
        _
      $region36: #{unet_with_backbone.7} parent=31 // pred_fallthru
        _
    $region32: #{unet_with_backbone.7} parent=5 // pred_fallthru
      _
    %p549 = scmp.le.s32.totalorder 2, %s9
    // Predicated region
    $region37: #{unet_with_backbone.7} parent=5 // pred_check
      %p550 = pneg %p549
    $region38: #{unet_with_backbone.7} parent=5 // pred_check_branch
      %552 = sbr.rel (%p550) target = $region40
    $region39: #{unet_with_backbone.7} parent=5 // pred_region
      %s553 = ssub.s32 %s9, 2
      // Predicated region
      $region41: #{unet_with_backbone.7} parent=39 // pred_check
        %p554 = pneg %p106
      $region42: #{unet_with_backbone.7} parent=39 // pred_check_branch
        %556 = sbr.rel (%p554) target = $region44
      $region43: #{unet_with_backbone.7} parent=39 // pred_region
        %p557 = scmp.lt.s32.totalorder %s15, 1
        %s558 = scalar_select %p557, %s15, 1
        %s559 = smul.addr %s558, 4
        %s560 = smul.addr %s559, 4
        %s561 = scalar_lea.vmem %s3, %s560
      $region44: #{unet_with_backbone.7} parent=39 // pred_fallthru
        _
    $region40: #{unet_with_backbone.7} parent=5 // pred_fallthru
      _
  $region6: #{unet_with_backbone.7} parent=0 // loop_footer
    %s13 = sadd.s32 1, %s9
  $region7: #{unet_with_backbone.7} parent=0 // loop_footer_branch
    %8 = sbr.rel target = $region3
  $region8: #{unet_with_backbone.7} parent=0 // loop_exit
    _

// kernel: unet_with_backbone.6
$region0: #{unet_with_backbone.6}
  #allocation0 [shape = 'u32[]', space=smem, size = 0x4, offset = 0x4, fixed_abs, tag = 'smem constant byte address 0x4 - core index']
  #allocation1 [shape = 'u32[144,128]{1,0:T(1,128)}', space=vmem, size = 0x12000, scoped, tag = 'internal scratch']
  #allocation2 [shape = 'f32[72,1024]{1,0:T(8,128)}', space=vmem, size = 0x48000, scoped, tag = 'scratch operand']
  #allocation3 [shape = 'f32[8,1280]{1,0:T(8,128)}', space=vmem, size = 0xa000, scoped, tag = 'scratch operand']
  %s0 = inlined_call_operand.vmem [shape: bf16[2,8,1024], index: 0, kind: input, shape index: {}]
  %s1 = inlined_call_operand.vmem [shape: f32[8,72], index: 1, kind: input, shape index: {}]
  %s2 = inlined_call_operand.vmem [shape: f32[8,1], index: 2, kind: input, shape index: {}]
  %s3 = inlined_call_operand.vmem [shape: bf16[2,8,1024], index: 3, kind: output, shape index: {}]
  %s4 = sld [smem:[#allocation0]]
  $region45: #{unet_with_backbone.6} parent=0
    _
  %s6 = ssub.s32 1, %s4
  %s7 = scalar_select 0, %s6, %s4
  loop: start=0, step=1, limit=4
  $region2: #{unet_with_backbone.6} parent=0 // loop_pre_header
    _
  $region3: #{unet_with_backbone.6} parent=0 // loop_header
    %s9 = sphi 0, %s13
    %p10 = scmp.ge.s32.totalorder %s9, 4
    %s19 = sphi 0, %s21
    %s22 = sphi 0, %s19
    %s23 = sphi 0, %s22
    %s39 = sphi 0, %s23
    %s43 = sphi 0, %s43
    %s45 = sphi 0, %s43
    %s46 = sphi 0, %s45
    %s60 = sphi 0, %s46
    %s64 = sphi 0, %s64
    %s66 = sphi 0, %s64
    %s67 = sphi 0, %s66
    %s81 = sphi 0, %s67
    %s87 = sphi 0, %s89
    %s90 = sphi 0, %s87
    %s91 = sphi 0, %s90
    %s107 = sphi 0, %s91
  $region4: #{unet_with_backbone.6} parent=0 // loop_header_branch
    %12 = sbr.rel (%p10) target = $region8
  $region5: #{unet_with_backbone.6} parent=0 // loop_body
    %s14 = ssub.s32 %s9, 1
    %s15 = ssub.s32 %s9, 2
    %s16 = sadd.s32 %s9, 1
    %s17 = ssub.s32 %s9, %s16
    %p18 = scmp.eq.s32.totalorder %s17, 0
    %s20 = sadd.s32 %s19, 1
    %s21 = scalar_select %p18, %s19, %s20
    %p24 = pneg %p18
    %p25 = scmp.eq.s32.totalorder %s9, 1
    %p26 = por %p24, %p25
    %p27 = scmp.ne.s32.totalorder %s19, %s22
    %p28 = scmp.eq.s32.totalorder %s9, 0
    %p29 = por %p27, %p28
    %p30 = scmp.ne.s32.totalorder %s19, %s22
    %p31 = scmp.eq.s32.totalorder %s14, 1
    %p32 = por %p30, %p31
    %p33 = scmp.ne.s32.totalorder %s22, %s23
    %p34 = scmp.eq.s32.totalorder %s14, 0
    %p35 = por %p33, %p34
    %p36 = scmp.ne.s32.totalorder %s22, %s23
    %p37 = scmp.eq.s32.totalorder %s15, 1
    %p38 = por %p36, %p37
    %p40 = scmp.ne.s32.totalorder %s23, %s39
    %p41 = scmp.eq.s32.totalorder %s15, 0
    %p42 = por %p40, %p41
    %s44 = sadd.s32 %s43, 1
    %p47 = scmp.eq.s32.totalorder %s9, 1
    %p48 = scmp.ne.s32.totalorder %s43, %s45
    %p49 = scmp.eq.s32.totalorder %s9, 0
    %p50 = por %p48, %p49
    %p51 = scmp.ne.s32.totalorder %s43, %s45
    %p52 = scmp.eq.s32.totalorder %s14, 1
    %p53 = por %p51, %p52
    %p54 = scmp.ne.s32.totalorder %s45, %s46
    %p55 = scmp.eq.s32.totalorder %s14, 0
    %p56 = por %p54, %p55
    %p57 = scmp.ne.s32.totalorder %s45, %s46
    %p58 = scmp.eq.s32.totalorder %s15, 1
    %p59 = por %p57, %p58
    %p61 = scmp.ne.s32.totalorder %s46, %s60
    %p62 = scmp.eq.s32.totalorder %s15, 0
    %p63 = por %p61, %p62
    %s65 = sadd.s32 %s64, 1
    %p68 = scmp.eq.s32.totalorder %s9, 1
    %p69 = scmp.ne.s32.totalorder %s64, %s66
    %p70 = scmp.eq.s32.totalorder %s9, 0
    %p71 = por %p69, %p70
    %p72 = scmp.ne.s32.totalorder %s64, %s66
    %p73 = scmp.eq.s32.totalorder %s14, 1
    %p74 = por %p72, %p73
    %p75 = scmp.ne.s32.totalorder %s66, %s67
    %p76 = scmp.eq.s32.totalorder %s14, 0
    %p77 = por %p75, %p76
    %p78 = scmp.ne.s32.totalorder %s66, %s67
    %p79 = scmp.eq.s32.totalorder %s15, 1
    %p80 = por %p78, %p79
    %p82 = scmp.ne.s32.totalorder %s67, %s81
    %p83 = scmp.eq.s32.totalorder %s15, 0
    %p84 = por %p82, %p83
    %s85 = ssub.s32 %s9, %s16
    %p86 = scmp.eq.s32.totalorder %s85, 0
    %s88 = sadd.s32 %s87, 1
    %s89 = scalar_select %p86, %s87, %s88
    %p92 = pneg %p86
    %p93 = scmp.eq.s32.totalorder %s9, 1
    %p94 = por %p92, %p93
    %p95 = scmp.ne.s32.totalorder %s87, %s90
    %p96 = scmp.eq.s32.totalorder %s9, 0
    %p97 = por %p95, %p96
    %p98 = scmp.ne.s32.totalorder %s87, %s90
    %p99 = scmp.eq.s32.totalorder %s14, 1
    %p100 = por %p98, %p99
    %p101 = scmp.ne.s32.totalorder %s90, %s91
    %p102 = scmp.eq.s32.totalorder %s14, 0
    %p103 = por %p101, %p102
    %p104 = scmp.ne.s32.totalorder %s90, %s91
    %p105 = scmp.eq.s32.totalorder %s15, 1
    %p106 = por %p104, %p105
    %p108 = scmp.ne.s32.totalorder %s91, %s107
    %p109 = scmp.eq.s32.totalorder %s15, 0
    %p110 = por %p108, %p109
    %p111 = scmp.le.s32.totalorder 1, %s9
    %p112 = scmp.lt.s32.totalorder %s9, 3
    %p113 = pnand %p111, %p112
    %p114 = pneg %p113
    // Predicated region
    $region9: #{unet_with_backbone.6} parent=5 // pred_check
      _
    $region10: #{unet_with_backbone.6} parent=5 // pred_check_branch
      %116 = sbr.rel (%p113) target = $region12
    $region11: #{unet_with_backbone.6} parent=5 // pred_region
      %s117 = ssub.s32 %s9, 1
      // Predicated region
      $region13: #{unet_with_backbone.6} parent=11 // pred_check
        %p118 = pneg %p56
      $region14: #{unet_with_backbone.6} parent=11 // pred_check_branch
        %120 = sbr.rel (%p118) target = $region16
      $region15: #{unet_with_backbone.6} parent=11 // pred_region
        _
      $region16: #{unet_with_backbone.6} parent=11 // pred_fallthru
        _
      // Predicated region
      $region17: #{unet_with_backbone.6} parent=11 // pred_check
        %p121 = pneg %p77
      $region18: #{unet_with_backbone.6} parent=11 // pred_check_branch
        %123 = sbr.rel (%p121) target = $region20
      $region19: #{unet_with_backbone.6} parent=11 // pred_region
        _
      $region20: #{unet_with_backbone.6} parent=11 // pred_fallthru
        _
    $region12: #{unet_with_backbone.6} parent=5 // pred_fallthru
      _
    %p124 = scmp.lt.s32.totalorder %s9, 2
    // Predicated region
    $region21: #{unet_with_backbone.6} parent=5 // pred_check
      %p125 = pneg %p124
    $region22: #{unet_with_backbone.6} parent=5 // pred_check_branch
      %127 = sbr.rel (%p125) target = $region24
    $region23: #{unet_with_backbone.6} parent=5 // pred_region
      // Predicated region
      $region25: #{unet_with_backbone.6} parent=23 // pred_check
        %p128 = pneg %p29
      $region26: #{unet_with_backbone.6} parent=23 // pred_check_branch
        %130 = sbr.rel (%p128) target = $region28
      $region27: #{unet_with_backbone.6} parent=23 // pred_region
        %p131 = scmp.lt.s32.totalorder %s9, 1
        %s132 = scalar_select %p131, %s9, 1
        %s133 = smul.addr %s132, 8
        %s134 = smul.addr %s133, 4
        %s135 = scalar_lea.vmem %s0, %s134
      $region28: #{unet_with_backbone.6} parent=23 // pred_fallthru
        _
    $region24: #{unet_with_backbone.6} parent=5 // pred_fallthru
      _
    %p136 = scmp.le.s32.totalorder 1, %s9
    %p137 = scmp.lt.s32.totalorder %s9, 3
    %p138 = pnand %p136, %p137
    %p139 = pneg %p138
    // Predicated region
    $region29: #{unet_with_backbone.6} parent=5 // pred_check
      _
    $region30: #{unet_with_backbone.6} parent=5 // pred_check_branch
      %141 = sbr.rel (%p138) target = $region32
    $region31: #{unet_with_backbone.6} parent=5 // pred_region
      %s142 = ssub.s32 %s9, 1
      %p143 = scmp.lt.s32.totalorder %s14, 1
      %s144 = scalar_select %p143, %s14, 1
      %s145 = smul.addr %s144, 8
      %s146 = smul.addr %s145, 4
      %s147 = scalar_lea.vmem %s0, %s146
      %p148 = pneg %p35
      %p149 = pneg %p32
      %p150 = pneg %p56
      %p151 = pneg %p53
      %p152 = pneg %p77
      %p153 = pneg %p74
      %p154 = pneg %p103
      %p155 = pneg %p100
      %p156 = scmp.lt.s32.totalorder %s14, 1
      %s157 = scalar_select %p156, %s14, 1
      %s158 = smul.addr %s157, 8
      %s159 = smul.addr %s158, 4
      %s160 = scalar_lea.vmem %s3, %s159
      %p161 = scmp.lt.s32.totalorder %s14, 1
      %s162 = scalar_select %p161, %s14, 1
      %s163 = smul.addr %s162, 8
      %s164 = smul.addr %s163, 4
      %s165 = scalar_lea.vmem %s0, %s164
      %p166 = scmp.lt.s32.totalorder %s14, 1
      %s167 = scalar_select %p166, %s14, 1
      %s168 = smul.addr %s167, 8
      %s169 = smul.addr %s168, 4
      %s170 = scalar_lea.vmem %s3, %s169
      %171 = vst [vmem:[#allocation3] sm:$0xff] 0.0
      %172 = vst [vmem:[#allocation3 + $0x8] sm:$0xff] 0.0
      %173 = vst [vmem:[#allocation3 + $0x10] sm:$0xff] 0.0
      %174 = vst [vmem:[#allocation3 + $0x18] sm:$0xff] 0.0
      %175 = vst [vmem:[#allocation3 + $0x20] sm:$0xff] 0.0
      %176 = vst [vmem:[#allocation3 + $0x28] sm:$0xff] 0.0
      %177 = vst [vmem:[#allocation3 + $0x30] sm:$0xff] 0.0
      %178 = vst [vmem:[#allocation3 + $0x38] sm:$0xff] 0.0
      %179 = vst [vmem:[#allocation3 + $0x40] sm:$0xff] 0.0
      %180 = vst [vmem:[#allocation3 + $0x48] sm:$0xff] 0.0
      %v181 = vld [vmem:[%s165] sm:$0xff]
      %v182 = vld [vmem:[%s165 + $0x8] sm:$0xff]
      %v183 = vld [vmem:[%s165 + $0x10] sm:$0xff]
      %v184 = vld [vmem:[%s165 + $0x18] sm:$0xff]
      %v185 = vunpack.c.l.bf16 %v181
      %v186 = vunpack.c.h.bf16 %v181
      %v187 = vunpack.c.l.bf16 %v182
      %v188 = vunpack.c.h.bf16 %v182
      %v189 = vunpack.c.l.bf16 %v183
      %v190 = vunpack.c.h.bf16 %v183
      %v191 = vunpack.c.l.bf16 %v184
      %v192 = vunpack.c.h.bf16 %v184
      %193 = vst [vmem:[#allocation3 + $0x8] sm:$0xff] %v185
      %194 = vst [vmem:[#allocation3 + $0x10] sm:$0xff] %v186
      %195 = vst [vmem:[#allocation3 + $0x18] sm:$0xff] %v187
      %196 = vst [vmem:[#allocation3 + $0x20] sm:$0xff] %v188
      %197 = vst [vmem:[#allocation3 + $0x28] sm:$0xff] %v189
      %198 = vst [vmem:[#allocation3 + $0x30] sm:$0xff] %v190
      %199 = vst [vmem:[#allocation3 + $0x38] sm:$0xff] %v191
      %200 = vst [vmem:[#allocation3 + $0x40] sm:$0xff] %v192
      %v201 = vlaneseq
      %v202 = vand.u32 %v201, 127
      %v203 = vadd.s32 %v202, 128
      %v204 = vadd.s32 %v202, 256
      %v205 = vadd.s32 %v202, 384
      %v206 = vadd.s32 %v202, 512
      %v207 = vadd.s32 %v202, 640
      %v208 = vadd.s32 %v202, 768
      %v209 = vadd.s32 %v202, 896
      %v210 = vand.u32 %v202, 31
      %v211 = vand.u32 %v203, 31
      %v212 = vand.u32 %v204, 31
      %v213 = vand.u32 %v205, 31
      %v214 = vand.u32 %v206, 31
      %v215 = vand.u32 %v207, 31
      %v216 = vand.u32 %v208, 31
      %v217 = vand.u32 %v209, 31
      %v218 = vshra.s32 %v202, 5
      %v219 = vshra.s32 %v203, 5
      %v220 = vshra.s32 %v204, 5
      %v221 = vshra.s32 %v205, 5
      %v222 = vshra.s32 %v206, 5
      %v223 = vshra.s32 %v207, 5
      %v224 = vshra.s32 %v208, 5
      %v225 = vshra.s32 %v209, 5
      %v226 = vand.u32 %v218, 31
      %v227 = vand.u32 %v219, 31
      %v228 = vand.u32 %v220, 31
      %v229 = vand.u32 %v221, 31
      %v230 = vand.u32 %v222, 31
      %v231 = vand.u32 %v223, 31
      %v232 = vand.u32 %v224, 31
      %v233 = vand.u32 %v225, 31
      %vm234 = vcmp.ge.s32.totalorder %v226, 1
      %vm235 = vcmp.ge.s32.totalorder %v227, 1
      %vm236 = vcmp.ge.s32.totalorder %v228, 1
      %vm237 = vcmp.ge.s32.totalorder %v229, 1
      %vm238 = vcmp.ge.s32.totalorder %v230, 1
      %vm239 = vcmp.ge.s32.totalorder %v231, 1
      %vm240 = vcmp.ge.s32.totalorder %v232, 1
      %vm241 = vcmp.ge.s32.totalorder %v233, 1
      %vm242 = vcmp.ge.s32.totalorder %v210, 1
      %vm243 = vcmp.ge.s32.totalorder %v211, 1
      %vm244 = vcmp.ge.s32.totalorder %v212, 1
      %vm245 = vcmp.ge.s32.totalorder %v213, 1
      %vm246 = vcmp.ge.s32.totalorder %v214, 1
      %vm247 = vcmp.ge.s32.totalorder %v215, 1
      %vm248 = vcmp.ge.s32.totalorder %v216, 1
      %vm249 = vcmp.ge.s32.totalorder %v217, 1
      %v250 = vld [vmem:[#allocation3] sm:$0xff]
      %v251 = vld [vmem:[#allocation3 + $0x8] sm:$0xff]
      %v252 = vld [vmem:[#allocation3 + $0x10] sm:$0xff]
      %v253 = vld [vmem:[#allocation3 + $0x18] sm:$0xff]
      %v254 = vld [vmem:[#allocation3 + $0x20] sm:$0xff]
      %v255 = vld [vmem:[#allocation3 + $0x28] sm:$0xff]
      %v256 = vld [vmem:[#allocation3 + $0x30] sm:$0xff]
      %v257 = vld [vmem:[#allocation3 + $0x38] sm:$0xff]
      %v258 = vld [vmem:[#allocation3 + $0x40] sm:$0xff]
      %vm259 = vmand %vm234, %vm242
      %vm260 = vmand %vm235, %vm243
      %vm261 = vmand %vm236, %vm244
      %vm262 = vmand %vm237, %vm245
      %vm263 = vmand %vm238, %vm246
      %vm264 = vmand %vm239, %vm247
      %vm265 = vmand %vm240, %vm248
      %vm266 = vmand %vm241, %vm249
      %v267 = vsel %vm259, 1, 0
      %v268 = vsel %vm260, 1, 0
      %v269 = vsel %vm261, 1, 0
      %v270 = vsel %vm262, 1, 0
      %v271 = vsel %vm263, 1, 0
      %v272 = vsel %vm264, 1, 0
      %v273 = vsel %vm265, 1, 0
      %v274 = vsel %vm266, 1, 0
      %vm275 = vcmp.eq.s32.totalorder %v267, 1
      %vm276 = vcmp.eq.s32.totalorder %v268, 1
      %vm277 = vcmp.eq.s32.totalorder %v269, 1
      %vm278 = vcmp.eq.s32.totalorder %v270, 1
      %vm279 = vcmp.eq.s32.totalorder %v271, 1
      %vm280 = vcmp.eq.s32.totalorder %v272, 1
      %vm281 = vcmp.eq.s32.totalorder %v273, 1
      %vm282 = vcmp.eq.s32.totalorder %v274, 1
      %292 = vrot.lane.b32.xlu0 %v250, 33
      %v293 = vpop.permute.xlu0 %292
      %294 = vrot.lane.b32.xlu0 %v251, 33
      %v295 = vpop.permute.xlu0 %294
      %296 = vrot.lane.b32.xlu0 %v252, 33
      %v297 = vpop.permute.xlu0 %296
      %298 = vrot.lane.b32.xlu0 %v253, 33
      %v299 = vpop.permute.xlu0 %298
      %300 = vrot.lane.b32.xlu0 %v254, 33
      %v301 = vpop.permute.xlu0 %300
      %302 = vrot.lane.b32.xlu0 %v255, 33
      %v303 = vpop.permute.xlu0 %302
      %304 = vrot.lane.b32.xlu0 %v256, 33
      %v305 = vpop.permute.xlu0 %304
      %306 = vrot.lane.b32.xlu0 %v257, 33
      %v307 = vpop.permute.xlu0 %306
      %308 = vrot.lane.b32.xlu0 %v258, 33
      %v309 = vpop.permute.xlu0 %308
      %vm310 = vcmask 269312
      %v311 = vsel %vm310, %v293, %v295
      %v312 = vsel %vm310, %v295, %v297
      %v313 = vsel %vm310, %v297, %v299
      %v314 = vsel %vm310, %v299, %v301
      %v315 = vsel %vm310, %v301, %v303
      %v316 = vsel %vm310, %v303, %v305
      %v317 = vsel %vm310, %v305, %v307
      %v318 = vsel %vm310, %v307, %v309
      %v327 = vsel %vm275, %v311, 0.0
      %v328 = vsel %vm276, %v312, 0.0
      %v329 = vsel %vm277, %v313, 0.0
      %v330 = vsel %vm278, %v314, 0.0
      %v331 = vsel %vm279, %v315, 0.0
      %v332 = vsel %vm280, %v316, 0.0
      %v333 = vsel %vm281, %v317, 0.0
      %v334 = vsel %vm282, %v318, 0.0
      %335 = vst [vmem:[#allocation2] sm:$0xff] %v327
      %336 = vst [vmem:[#allocation2 + $0x8] sm:$0xff] %v328
      %337 = vst [vmem:[#allocation2 + $0x10] sm:$0xff] %v329
      %338 = vst [vmem:[#allocation2 + $0x18] sm:$0xff] %v330
      %339 = vst [vmem:[#allocation2 + $0x20] sm:$0xff] %v331
      %340 = vst [vmem:[#allocation2 + $0x28] sm:$0xff] %v332
      %341 = vst [vmem:[#allocation2 + $0x30] sm:$0xff] %v333
      %342 = vst [vmem:[#allocation2 + $0x38] sm:$0xff] %v334
      %v343 = vld [vmem:[#allocation3] sm:$0xff]
      %v344 = vld [vmem:[#allocation3 + $0x8] sm:$0xff]
      %v345 = vld [vmem:[#allocation3 + $0x10] sm:$0xff]
      %v346 = vld [vmem:[#allocation3 + $0x18] sm:$0xff]
      %v347 = vld [vmem:[#allocation3 + $0x20] sm:$0xff]
      %v348 = vld [vmem:[#allocation3 + $0x28] sm:$0xff]
      %v349 = vld [vmem:[#allocation3 + $0x30] sm:$0xff]
      %v350 = vld [vmem:[#allocation3 + $0x38] sm:$0xff]
      %v351 = vld [vmem:[#allocation3 + $0x40] sm:$0xff]
      %v352 = vsel %vm234, 1, 0
      %v353 = vsel %vm235, 1, 0
      %v354 = vsel %vm236, 1, 0
      %v355 = vsel %vm237, 1, 0
      %v356 = vsel %vm238, 1, 0
      %v357 = vsel %vm239, 1, 0
      %v358 = vsel %vm240, 1, 0
      %v359 = vsel %vm241, 1, 0
      %vm360 = vcmp.eq.s32.totalorder %v352, 1
      %vm361 = vcmp.eq.s32.totalorder %v353, 1
      %vm362 = vcmp.eq.s32.totalorder %v354, 1
      %vm363 = vcmp.eq.s32.totalorder %v355, 1
      %vm364 = vcmp.eq.s32.totalorder %v356, 1
      %vm365 = vcmp.eq.s32.totalorder %v357, 1
      %vm366 = vcmp.eq.s32.totalorder %v358, 1
      %vm367 = vcmp.eq.s32.totalorder %v359, 1
      %377 = vrot.lane.b32.xlu0 %v343, 32
      %v378 = vpop.permute.xlu0 %377
      %379 = vrot.lane.b32.xlu0 %v344, 32
      %v380 = vpop.permute.xlu0 %379
      %381 = vrot.lane.b32.xlu0 %v345, 32
      %v382 = vpop.permute.xlu0 %381
      %383 = vrot.lane.b32.xlu0 %v346, 32
      %v384 = vpop.permute.xlu0 %383
      %385 = vrot.lane.b32.xlu0 %v347, 32
      %v386 = vpop.permute.xlu0 %385
      %387 = vrot.lane.b32.xlu0 %v348, 32
      %v388 = vpop.permute.xlu0 %387
      %389 = vrot.lane.b32.xlu0 %v349, 32
      %v390 = vpop.permute.xlu0 %389
      %391 = vrot.lane.b32.xlu0 %v350, 32
      %v392 = vpop.permute.xlu0 %391
      %393 = vrot.lane.b32.xlu0 %v351, 32
      %v394 = vpop.permute.xlu0 %393
      %vm395 = vcmask 261120
      %v396 = vsel %vm395, %v378, %v380
      %v397 = vsel %vm395, %v380, %v382
      %v398 = vsel %vm395, %v382, %v384
      %v399 = vsel %vm395, %v384, %v386
      %v400 = vsel %vm395, %v386, %v388
      %v401 = vsel %vm395, %v388, %v390
      %v402 = vsel %vm395, %v390, %v392
      %v403 = vsel %vm395, %v392, %v394
      %v412 = vsel %vm360, %v396, 0.0
      %v413 = vsel %vm361, %v397, 0.0
      %v414 = vsel %vm362, %v398, 0.0
      %v415 = vsel %vm363, %v399, 0.0
      %v416 = vsel %vm364, %v400, 0.0
      %v417 = vsel %vm365, %v401, 0.0
      %v418 = vsel %vm366, %v402, 0.0
      %v419 = vsel %vm367, %v403, 0.0
      %420 = vst [vmem:[#allocation2 + $0x40] sm:$0xff] %v412
      %421 = vst [vmem:[#allocation2 + $0x48] sm:$0xff] %v413
      %422 = vst [vmem:[#allocation2 + $0x50] sm:$0xff] %v414
      %423 = vst [vmem:[#allocation2 + $0x58] sm:$0xff] %v415
      %424 = vst [vmem:[#allocation2 + $0x60] sm:$0xff] %v416
      %425 = vst [vmem:[#allocation2 + $0x68] sm:$0xff] %v417
      %426 = vst [vmem:[#allocation2 + $0x70] sm:$0xff] %v418
      %427 = vst [vmem:[#allocation2 + $0x78] sm:$0xff] %v419
      %vm428 = vcmp.le.s32.totalorder %v210, 30
      %vm429 = vcmp.le.s32.totalorder %v211, 30
      %vm430 = vcmp.le.s32.totalorder %v212, 30
      %vm431 = vcmp.le.s32.totalorder %v213, 30
      %vm432 = vcmp.le.s32.totalorder %v214, 30
      %vm433 = vcmp.le.s32.totalorder %v215, 30
      %vm434 = vcmp.le.s32.totalorder %v216, 30
      %vm435 = vcmp.le.s32.totalorder %v217, 30
      %v436 = vld [vmem:[#allocation3] sm:$0xff]
      %v437 = vld [vmem:[#allocation3 + $0x8] sm:$0xff]
      %v438 = vld [vmem:[#allocation3 + $0x10] sm:$0xff]
      %v439 = vld [vmem:[#allocation3 + $0x18] sm:$0xff]
      %v440 = vld [vmem:[#allocation3 + $0x20] sm:$0xff]
      %v441 = vld [vmem:[#allocation3 + $0x28] sm:$0xff]
      %v442 = vld [vmem:[#allocation3 + $0x30] sm:$0xff]
      %v443 = vld [vmem:[#allocation3 + $0x38] sm:$0xff]
      %v444 = vld [vmem:[#allocation3 + $0x40] sm:$0xff]
      %vm445 = vmand %vm234, %vm428
      %vm446 = vmand %vm235, %vm429
      %vm447 = vmand %vm236, %vm430
      %vm448 = vmand %vm237, %vm431
      %vm449 = vmand %vm238, %vm432
      %vm450 = vmand %vm239, %vm433
      %vm451 = vmand %vm240, %vm434
      %vm452 = vmand %vm241, %vm435
      %v453 = vsel %vm445, 1, 0
      %v454 = vsel %vm446, 1, 0
      %v455 = vsel %vm447, 1, 0
      %v456 = vsel %vm448, 1, 0
      %v457 = vsel %vm449, 1, 0
      %v458 = vsel %vm450, 1, 0
      %v459 = vsel %vm451, 1, 0
      %v460 = vsel %vm452, 1, 0
      %vm461 = vcmp.eq.s32.totalorder %v453, 1
      %vm462 = vcmp.eq.s32.totalorder %v454, 1
      %vm463 = vcmp.eq.s32.totalorder %v455, 1
      %vm464 = vcmp.eq.s32.totalorder %v456, 1
      %vm465 = vcmp.eq.s32.totalorder %v457, 1
      %vm466 = vcmp.eq.s32.totalorder %v458, 1
      %vm467 = vcmp.eq.s32.totalorder %v459, 1
      %vm468 = vcmp.eq.s32.totalorder %v460, 1
      %478 = vrot.lane.b32.xlu0 %v436, 31
      %v479 = vpop.permute.xlu0 %478
      %480 = vrot.lane.b32.xlu0 %v437, 31
      %v481 = vpop.permute.xlu0 %480
      %482 = vrot.lane.b32.xlu0 %v438, 31
      %v483 = vpop.permute.xlu0 %482
      %484 = vrot.lane.b32.xlu0 %v439, 31
      %v485 = vpop.permute.xlu0 %484
      %486 = vrot.lane.b32.xlu0 %v440, 31
      %v487 = vpop.permute.xlu0 %486
      %488 = vrot.lane.b32.xlu0 %v441, 31
      %v489 = vpop.permute.xlu0 %488
      %490 = vrot.lane.b32.xlu0 %v442, 31
      %v491 = vpop.permute.xlu0 %490
      %492 = vrot.lane.b32.xlu0 %v443, 31
      %v493 = vpop.permute.xlu0 %492
      %494 = vrot.lane.b32.xlu0 %v444, 31
      %v495 = vpop.permute.xlu0 %494
      %vm496 = vcmask 252928
      %v497 = vsel %vm496, %v479, %v481
      %v498 = vsel %vm496, %v481, %v483
      %v499 = vsel %vm496, %v483, %v485
      %v500 = vsel %vm496, %v485, %v487
      %v501 = vsel %vm496, %v487, %v489
      %v502 = vsel %vm496, %v489, %v491
      %v503 = vsel %vm496, %v491, %v493
      %v504 = vsel %vm496, %v493, %v495
      %v513 = vsel %vm461, %v497, 0.0
      %v514 = vsel %vm462, %v498, 0.0
      %v515 = vsel %vm463, %v499, 0.0
      %v516 = vsel %vm464, %v500, 0.0
      %v517 = vsel %vm465, %v501, 0.0
      %v518 = vsel %vm466, %v502, 0.0
      %v519 = vsel %vm467, %v503, 0.0
      %v520 = vsel %vm468, %v504, 0.0
      %521 = vst [vmem:[#allocation2 + $0x80] sm:$0xff] %v513
      %522 = vst [vmem:[#allocation2 + $0x88] sm:$0xff] %v514
      %523 = vst [vmem:[#allocation2 + $0x90] sm:$0xff] %v515
      %524 = vst [vmem:[#allocation2 + $0x98] sm:$0xff] %v516
      %525 = vst [vmem:[#allocation2 + $0xa0] sm:$0xff] %v517
      %526 = vst [vmem:[#allocation2 + $0xa8] sm:$0xff] %v518
      %527 = vst [vmem:[#allocation2 + $0xb0] sm:$0xff] %v519
      %528 = vst [vmem:[#allocation2 + $0xb8] sm:$0xff] %v520
      %v529 = vld [vmem:[#allocation3] sm:$0xff]
      %v530 = vld [vmem:[#allocation3 + $0x8] sm:$0xff]
      %v531 = vld [vmem:[#allocation3 + $0x10] sm:$0xff]
      %v532 = vld [vmem:[#allocation3 + $0x18] sm:$0xff]
      %v533 = vld [vmem:[#allocation3 + $0x20] sm:$0xff]
      %v534 = vld [vmem:[#allocation3 + $0x28] sm:$0xff]
      %v535 = vld [vmem:[#allocation3 + $0x30] sm:$0xff]
      %v536 = vld [vmem:[#allocation3 + $0x38] sm:$0xff]
      %v537 = vld [vmem:[#allocation3 + $0x40] sm:$0xff]
      %v538 = vsel %vm242, 1, 0
      %v539 = vsel %vm243, 1, 0
      %v540 = vsel %vm244, 1, 0
      %v541 = vsel %vm245, 1, 0
      %v542 = vsel %vm246, 1, 0
      %v543 = vsel %vm247, 1, 0
      %v544 = vsel %vm248, 1, 0
      %v545 = vsel %vm249, 1, 0
      %vm546 = vcmp.eq.s32.totalorder %v538, 1
      %vm547 = vcmp.eq.s32.totalorder %v539, 1
      %vm548 = vcmp.eq.s32.totalorder %v540, 1
      %vm549 = vcmp.eq.s32.totalorder %v541, 1
      %vm550 = vcmp.eq.s32.totalorder %v542, 1
      %vm551 = vcmp.eq.s32.totalorder %v543, 1
      %vm552 = vcmp.eq.s32.totalorder %v544, 1
      %vm553 = vcmp.eq.s32.totalorder %v545, 1
      %563 = vrot.lane.b32.xlu0 %v529, 1
      %v564 = vpop.permute.xlu0 %563
      %565 = vrot.lane.b32.xlu0 %v530, 1
      %v566 = vpop.permute.xlu0 %565
      %567 = vrot.lane.b32.xlu0 %v531, 1
      %v568 = vpop.permute.xlu0 %567
      %569 = vrot.lane.b32.xlu0 %v532, 1
      %v570 = vpop.permute.xlu0 %569
      %571 = vrot.lane.b32.xlu0 %v533, 1
      %v572 = vpop.permute.xlu0 %571
      %573 = vrot.lane.b32.xlu0 %v534, 1
      %v574 = vpop.permute.xlu0 %573
      %575 = vrot.lane.b32.xlu0 %v535, 1
      %v576 = vpop.permute.xlu0 %575
      %577 = vrot.lane.b32.xlu0 %v536, 1
      %v578 = vpop.permute.xlu0 %577
      %579 = vrot.lane.b32.xlu0 %v537, 1
      %v580 = vpop.permute.xlu0 %579
      %vm581 = vcmask 7168
      %v582 = vsel %vm581, %v564, %v566
      %v583 = vsel %vm581, %v566, %v568
      %v584 = vsel %vm581, %v568, %v570
      %v585 = vsel %vm581, %v570, %v572
      %v586 = vsel %vm581, %v572, %v574
      %v587 = vsel %vm581, %v574, %v576
      %v588 = vsel %vm581, %v576, %v578
      %v589 = vsel %vm581, %v578, %v580
      %v598 = vsel %vm546, %v582, 0.0
      %v599 = vsel %vm547, %v583, 0.0
      %v600 = vsel %vm548, %v584, 0.0
      %v601 = vsel %vm549, %v585, 0.0
      %v602 = vsel %vm550, %v586, 0.0
      %v603 = vsel %vm551, %v587, 0.0
      %v604 = vsel %vm552, %v588, 0.0
      %v605 = vsel %vm553, %v589, 0.0
      %606 = vst [vmem:[#allocation2 + $0xc0] sm:$0xff] %v598
      %607 = vst [vmem:[#allocation2 + $0xc8] sm:$0xff] %v599
      %608 = vst [vmem:[#allocation2 + $0xd0] sm:$0xff] %v600
      %609 = vst [vmem:[#allocation2 + $0xd8] sm:$0xff] %v601
      %610 = vst [vmem:[#allocation2 + $0xe0] sm:$0xff] %v602
      %611 = vst [vmem:[#allocation2 + $0xe8] sm:$0xff] %v603
      %612 = vst [vmem:[#allocation2 + $0xf0] sm:$0xff] %v604
      %613 = vst [vmem:[#allocation2 + $0xf8] sm:$0xff] %v605
      %614 = vst [vmem:[#allocation2 + $0x100] sm:$0xff] %v185
      %615 = vst [vmem:[#allocation2 + $0x108] sm:$0xff] %v186
      %616 = vst [vmem:[#allocation2 + $0x110] sm:$0xff] %v187
      %617 = vst [vmem:[#allocation2 + $0x118] sm:$0xff] %v188
      %618 = vst [vmem:[#allocation2 + $0x120] sm:$0xff] %v189
      %619 = vst [vmem:[#allocation2 + $0x128] sm:$0xff] %v190
      %620 = vst [vmem:[#allocation2 + $0x130] sm:$0xff] %v191
      %621 = vst [vmem:[#allocation2 + $0x138] sm:$0xff] %v192
      %v622 = vld [vmem:[#allocation3 + $0x8] sm:$0xff]
      %v623 = vld [vmem:[#allocation3 + $0x10] sm:$0xff]
      %v624 = vld [vmem:[#allocation3 + $0x18] sm:$0xff]
      %v625 = vld [vmem:[#allocation3 + $0x20] sm:$0xff]
      %v626 = vld [vmem:[#allocation3 + $0x28] sm:$0xff]
      %v627 = vld [vmem:[#allocation3 + $0x30] sm:$0xff]
      %v628 = vld [vmem:[#allocation3 + $0x38] sm:$0xff]
      %v629 = vld [vmem:[#allocation3 + $0x40] sm:$0xff]
      %v630 = vld [vmem:[#allocation3 + $0x48] sm:$0xff]
      %v631 = vsel %vm428, 1, 0
      %v632 = vsel %vm429, 1, 0
      %v633 = vsel %vm430, 1, 0
      %v634 = vsel %vm431, 1, 0
      %v635 = vsel %vm432, 1, 0
      %v636 = vsel %vm433, 1, 0
      %v637 = vsel %vm434, 1, 0
      %v638 = vsel %vm435, 1, 0
      %vm639 = vcmp.eq.s32.totalorder %v631, 1
      %vm640 = vcmp.eq.s32.totalorder %v632, 1
      %vm641 = vcmp.eq.s32.totalorder %v633, 1
      %vm642 = vcmp.eq.s32.totalorder %v634, 1
      %vm643 = vcmp.eq.s32.totalorder %v635, 1
      %vm644 = vcmp.eq.s32.totalorder %v636, 1
      %vm645 = vcmp.eq.s32.totalorder %v637, 1
      %vm646 = vcmp.eq.s32.totalorder %v638, 1
      %656 = vrot.lane.b32.xlu0 %v622, 127
      %v657 = vpop.permute.xlu0 %656
      %658 = vrot.lane.b32.xlu0 %v623, 127
      %v659 = vpop.permute.xlu0 %658
      %660 = vrot.lane.b32.xlu0 %v624, 127
      %v661 = vpop.permute.xlu0 %660
      %662 = vrot.lane.b32.xlu0 %v625, 127
      %v663 = vpop.permute.xlu0 %662
      %664 = vrot.lane.b32.xlu0 %v626, 127
      %v665 = vpop.permute.xlu0 %664
      %666 = vrot.lane.b32.xlu0 %v627, 127
      %v667 = vpop.permute.xlu0 %666
      %668 = vrot.lane.b32.xlu0 %v628, 127
      %v669 = vpop.permute.xlu0 %668
      %670 = vrot.lane.b32.xlu0 %v629, 127
      %v671 = vpop.permute.xlu0 %670
      %672 = vrot.lane.b32.xlu0 %v630, 127
      %v673 = vpop.permute.xlu0 %672
      %vm674 = vcmask 1039360
      %v675 = vsel %vm674, %v657, %v659
      %v676 = vsel %vm674, %v659, %v661
      %v677 = vsel %vm674, %v661, %v663
      %v678 = vsel %vm674, %v663, %v665
      %v679 = vsel %vm674, %v665, %v667
      %v680 = vsel %vm674, %v667, %v669
      %v681 = vsel %vm674, %v669, %v671
      %v682 = vsel %vm674, %v671, %v673
      %v691 = vsel %vm639, %v675, 0.0
      %v692 = vsel %vm640, %v676, 0.0
      %v693 = vsel %vm641, %v677, 0.0
      %v694 = vsel %vm642, %v678, 0.0
      %v695 = vsel %vm643, %v679, 0.0
      %v696 = vsel %vm644, %v680, 0.0
      %v697 = vsel %vm645, %v681, 0.0
      %v698 = vsel %vm646, %v682, 0.0
      %699 = vst [vmem:[#allocation2 + $0x140] sm:$0xff] %v691
      %700 = vst [vmem:[#allocation2 + $0x148] sm:$0xff] %v692
      %701 = vst [vmem:[#allocation2 + $0x150] sm:$0xff] %v693
      %702 = vst [vmem:[#allocation2 + $0x158] sm:$0xff] %v694
      %703 = vst [vmem:[#allocation2 + $0x160] sm:$0xff] %v695
      %704 = vst [vmem:[#allocation2 + $0x168] sm:$0xff] %v696
      %705 = vst [vmem:[#allocation2 + $0x170] sm:$0xff] %v697
      %706 = vst [vmem:[#allocation2 + $0x178] sm:$0xff] %v698
      %vm707 = vcmp.le.s32.totalorder %v226, 30
      %vm708 = vcmp.le.s32.totalorder %v227, 30
      %vm709 = vcmp.le.s32.totalorder %v228, 30
      %vm710 = vcmp.le.s32.totalorder %v229, 30
      %vm711 = vcmp.le.s32.totalorder %v230, 30
      %vm712 = vcmp.le.s32.totalorder %v231, 30
      %vm713 = vcmp.le.s32.totalorder %v232, 30
      %vm714 = vcmp.le.s32.totalorder %v233, 30
      %v715 = vld [vmem:[#allocation3 + $0x8] sm:$0xff]
      %v716 = vld [vmem:[#allocation3 + $0x10] sm:$0xff]
      %v717 = vld [vmem:[#allocation3 + $0x18] sm:$0xff]
      %v718 = vld [vmem:[#allocation3 + $0x20] sm:$0xff]
      %v719 = vld [vmem:[#allocation3 + $0x28] sm:$0xff]
      %v720 = vld [vmem:[#allocation3 + $0x30] sm:$0xff]
      %v721 = vld [vmem:[#allocation3 + $0x38] sm:$0xff]
      %v722 = vld [vmem:[#allocation3 + $0x40] sm:$0xff]
      %v723 = vld [vmem:[#allocation3 + $0x48] sm:$0xff]
      %vm724 = vmand %vm707, %vm242
      %vm725 = vmand %vm708, %vm243
      %vm726 = vmand %vm709, %vm244
      %vm727 = vmand %vm710, %vm245
      %vm728 = vmand %vm711, %vm246
      %vm729 = vmand %vm712, %vm247
      %vm730 = vmand %vm713, %vm248
      %vm731 = vmand %vm714, %vm249
      %v732 = vsel %vm724, 1, 0
      %v733 = vsel %vm725, 1, 0
      %v734 = vsel %vm726, 1, 0
      %v735 = vsel %vm727, 1, 0
      %v736 = vsel %vm728, 1, 0
      %v737 = vsel %vm729, 1, 0
      %v738 = vsel %vm730, 1, 0
      %v739 = vsel %vm731, 1, 0
      %vm740 = vcmp.eq.s32.totalorder %v732, 1
      %vm741 = vcmp.eq.s32.totalorder %v733, 1
      %vm742 = vcmp.eq.s32.totalorder %v734, 1
      %vm743 = vcmp.eq.s32.totalorder %v735, 1
      %vm744 = vcmp.eq.s32.totalorder %v736, 1
      %vm745 = vcmp.eq.s32.totalorder %v737, 1
      %vm746 = vcmp.eq.s32.totalorder %v738, 1
      %vm747 = vcmp.eq.s32.totalorder %v739, 1
      %757 = vrot.lane.b32.xlu0 %v715, 97
      %v758 = vpop.permute.xlu0 %757
      %759 = vrot.lane.b32.xlu0 %v716, 97
      %v760 = vpop.permute.xlu0 %759
      %761 = vrot.lane.b32.xlu0 %v717, 97
      %v762 = vpop.permute.xlu0 %761
      %763 = vrot.lane.b32.xlu0 %v718, 97
      %v764 = vpop.permute.xlu0 %763
      %765 = vrot.lane.b32.xlu0 %v719, 97
      %v766 = vpop.permute.xlu0 %765
      %767 = vrot.lane.b32.xlu0 %v720, 97
      %v768 = vpop.permute.xlu0 %767
      %769 = vrot.lane.b32.xlu0 %v721, 97
      %v770 = vpop.permute.xlu0 %769
      %771 = vrot.lane.b32.xlu0 %v722, 97
      %v772 = vpop.permute.xlu0 %771
      %773 = vrot.lane.b32.xlu0 %v723, 97
      %v774 = vpop.permute.xlu0 %773
      %vm775 = vcmask 793600
      %v776 = vsel %vm775, %v758, %v760
      %v777 = vsel %vm775, %v760, %v762
      %v778 = vsel %vm775, %v762, %v764
      %v779 = vsel %vm775, %v764, %v766
      %v780 = vsel %vm775, %v766, %v768
      %v781 = vsel %vm775, %v768, %v770
      %v782 = vsel %vm775, %v770, %v772
      %v783 = vsel %vm775, %v772, %v774
      %v792 = vsel %vm740, %v776, 0.0
      %v793 = vsel %vm741, %v777, 0.0
      %v794 = vsel %vm742, %v778, 0.0
      %v795 = vsel %vm743, %v779, 0.0
      %v796 = vsel %vm744, %v780, 0.0
      %v797 = vsel %vm745, %v781, 0.0
      %v798 = vsel %vm746, %v782, 0.0
      %v799 = vsel %vm747, %v783, 0.0
      %800 = vst [vmem:[#allocation2 + $0x180] sm:$0xff] %v792
      %801 = vst [vmem:[#allocation2 + $0x188] sm:$0xff] %v793
      %802 = vst [vmem:[#allocation2 + $0x190] sm:$0xff] %v794
      %803 = vst [vmem:[#allocation2 + $0x198] sm:$0xff] %v795
      %804 = vst [vmem:[#allocation2 + $0x1a0] sm:$0xff] %v796
      %805 = vst [vmem:[#allocation2 + $0x1a8] sm:$0xff] %v797
      %806 = vst [vmem:[#allocation2 + $0x1b0] sm:$0xff] %v798
      %807 = vst [vmem:[#allocation2 + $0x1b8] sm:$0xff] %v799
      %v808 = vld [vmem:[#allocation3 + $0x8] sm:$0xff]
      %v809 = vld [vmem:[#allocation3 + $0x10] sm:$0xff]
      %v810 = vld [vmem:[#allocation3 + $0x18] sm:$0xff]
      %v811 = vld [vmem:[#allocation3 + $0x20] sm:$0xff]
      %v812 = vld [vmem:[#allocation3 + $0x28] sm:$0xff]
      %v813 = vld [vmem:[#allocation3 + $0x30] sm:$0xff]
      %v814 = vld [vmem:[#allocation3 + $0x38] sm:$0xff]
      %v815 = vld [vmem:[#allocation3 + $0x40] sm:$0xff]
      %v816 = vld [vmem:[#allocation3 + $0x48] sm:$0xff]
      %v817 = vsel %vm707, 1, 0
      %v818 = vsel %vm708, 1, 0
      %v819 = vsel %vm709, 1, 0
      %v820 = vsel %vm710, 1, 0
      %v821 = vsel %vm711, 1, 0
      %v822 = vsel %vm712, 1, 0
      %v823 = vsel %vm713, 1, 0
      %v824 = vsel %vm714, 1, 0
      %vm825 = vcmp.eq.s32.totalorder %v817, 1
      %vm826 = vcmp.eq.s32.totalorder %v818, 1
      %vm827 = vcmp.eq.s32.totalorder %v819, 1
      %vm828 = vcmp.eq.s32.totalorder %v820, 1
      %vm829 = vcmp.eq.s32.totalorder %v821, 1
      %vm830 = vcmp.eq.s32.totalorder %v822, 1
      %vm831 = vcmp.eq.s32.totalorder %v823, 1
      %vm832 = vcmp.eq.s32.totalorder %v824, 1
      %842 = vrot.lane.b32.xlu0 %v808, 96
      %v843 = vpop.permute.xlu0 %842
      %844 = vrot.lane.b32.xlu0 %v809, 96
      %v845 = vpop.permute.xlu0 %844
      %846 = vrot.lane.b32.xlu0 %v810, 96
      %v847 = vpop.permute.xlu0 %846
      %848 = vrot.lane.b32.xlu0 %v811, 96
      %v849 = vpop.permute.xlu0 %848
      %850 = vrot.lane.b32.xlu0 %v812, 96
      %v851 = vpop.permute.xlu0 %850
      %852 = vrot.lane.b32.xlu0 %v813, 96
      %v853 = vpop.permute.xlu0 %852
      %854 = vrot.lane.b32.xlu0 %v814, 96
      %v855 = vpop.permute.xlu0 %854
      %856 = vrot.lane.b32.xlu0 %v815, 96
      %v857 = vpop.permute.xlu0 %856
      %858 = vrot.lane.b32.xlu0 %v816, 96
      %v859 = vpop.permute.xlu0 %858
      %vm860 = vcmask 785408
      %v861 = vsel %vm860, %v843, %v845
      %v862 = vsel %vm860, %v845, %v847
      %v863 = vsel %vm860, %v847, %v849
      %v864 = vsel %vm860, %v849, %v851
      %v865 = vsel %vm860, %v851, %v853
      %v866 = vsel %vm860, %v853, %v855
      %v867 = vsel %vm860, %v855, %v857
      %v868 = vsel %vm860, %v857, %v859
      %v877 = vsel %vm825, %v861, 0.0
      %v878 = vsel %vm826, %v862, 0.0
      %v879 = vsel %vm827, %v863, 0.0
      %v880 = vsel %vm828, %v864, 0.0
      %v881 = vsel %vm829, %v865, 0.0
      %v882 = vsel %vm830, %v866, 0.0
      %v883 = vsel %vm831, %v867, 0.0
      %v884 = vsel %vm832, %v868, 0.0
      %885 = vst [vmem:[#allocation2 + $0x1c0] sm:$0xff] %v877
      %886 = vst [vmem:[#allocation2 + $0x1c8] sm:$0xff] %v878
      %887 = vst [vmem:[#allocation2 + $0x1d0] sm:$0xff] %v879
      %888 = vst [vmem:[#allocation2 + $0x1d8] sm:$0xff] %v880
      %889 = vst [vmem:[#allocation2 + $0x1e0] sm:$0xff] %v881
      %890 = vst [vmem:[#allocation2 + $0x1e8] sm:$0xff] %v882
      %891 = vst [vmem:[#allocation2 + $0x1f0] sm:$0xff] %v883
      %892 = vst [vmem:[#allocation2 + $0x1f8] sm:$0xff] %v884
      %v893 = vld [vmem:[#allocation3 + $0x8] sm:$0xff]
      %v894 = vld [vmem:[#allocation3 + $0x10] sm:$0xff]
      %v895 = vld [vmem:[#allocation3 + $0x18] sm:$0xff]
      %v896 = vld [vmem:[#allocation3 + $0x20] sm:$0xff]
      %v897 = vld [vmem:[#allocation3 + $0x28] sm:$0xff]
      %v898 = vld [vmem:[#allocation3 + $0x30] sm:$0xff]
      %v899 = vld [vmem:[#allocation3 + $0x38] sm:$0xff]
      %v900 = vld [vmem:[#allocation3 + $0x40] sm:$0xff]
      %v901 = vld [vmem:[#allocation3 + $0x48] sm:$0xff]
      %vm902 = vmand %vm707, %vm428
      %vm903 = vmand %vm708, %vm429
      %vm904 = vmand %vm709, %vm430
      %vm905 = vmand %vm710, %vm431
      %vm906 = vmand %vm711, %vm432
      %vm907 = vmand %vm712, %vm433
      %vm908 = vmand %vm713, %vm434
      %vm909 = vmand %vm714, %vm435
      %v910 = vsel %vm902, 1, 0
      %v911 = vsel %vm903, 1, 0
      %v912 = vsel %vm904, 1, 0
      %v913 = vsel %vm905, 1, 0
      %v914 = vsel %vm906, 1, 0
      %v915 = vsel %vm907, 1, 0
      %v916 = vsel %vm908, 1, 0
      %v917 = vsel %vm909, 1, 0
      %vm918 = vcmp.eq.s32.totalorder %v910, 1
      %vm919 = vcmp.eq.s32.totalorder %v911, 1
      %vm920 = vcmp.eq.s32.totalorder %v912, 1
      %vm921 = vcmp.eq.s32.totalorder %v913, 1
      %vm922 = vcmp.eq.s32.totalorder %v914, 1
      %vm923 = vcmp.eq.s32.totalorder %v915, 1
      %vm924 = vcmp.eq.s32.totalorder %v916, 1
      %vm925 = vcmp.eq.s32.totalorder %v917, 1
      %935 = vrot.lane.b32.xlu0 %v893, 95
      %v936 = vpop.permute.xlu0 %935
      %937 = vrot.lane.b32.xlu0 %v894, 95
      %v938 = vpop.permute.xlu0 %937
      %939 = vrot.lane.b32.xlu0 %v895, 95
      %v940 = vpop.permute.xlu0 %939
      %941 = vrot.lane.b32.xlu0 %v896, 95
      %v942 = vpop.permute.xlu0 %941
      %943 = vrot.lane.b32.xlu0 %v897, 95
      %v944 = vpop.permute.xlu0 %943
      %945 = vrot.lane.b32.xlu0 %v898, 95
      %v946 = vpop.permute.xlu0 %945
      %947 = vrot.lane.b32.xlu0 %v899, 95
      %v948 = vpop.permute.xlu0 %947
      %949 = vrot.lane.b32.xlu0 %v900, 95
      %v950 = vpop.permute.xlu0 %949
      %951 = vrot.lane.b32.xlu0 %v901, 95
      %v952 = vpop.permute.xlu0 %951
      %vm953 = vcmask 777216
      %v954 = vsel %vm953, %v936, %v938
      %v955 = vsel %vm953, %v938, %v940
      %v956 = vsel %vm953, %v940, %v942
      %v957 = vsel %vm953, %v942, %v944
      %v958 = vsel %vm953, %v944, %v946
      %v959 = vsel %vm953, %v946, %v948
      %v960 = vsel %vm953, %v948, %v950
      %v961 = vsel %vm953, %v950, %v952
      %v970 = vsel %vm918, %v954, 0.0
      %v971 = vsel %vm919, %v955, 0.0
      %v972 = vsel %vm920, %v956, 0.0
      %v973 = vsel %vm921, %v957, 0.0
      %v974 = vsel %vm922, %v958, 0.0
      %v975 = vsel %vm923, %v959, 0.0
      %v976 = vsel %vm924, %v960, 0.0
      %v977 = vsel %vm925, %v961, 0.0
      %978 = vst [vmem:[#allocation2 + $0x200] sm:$0xff] %v970
      %979 = vst [vmem:[#allocation2 + $0x208] sm:$0xff] %v971
      %980 = vst [vmem:[#allocation2 + $0x210] sm:$0xff] %v972
      %981 = vst [vmem:[#allocation2 + $0x218] sm:$0xff] %v973
      %982 = vst [vmem:[#allocation2 + $0x220] sm:$0xff] %v974
      %983 = vst [vmem:[#allocation2 + $0x228] sm:$0xff] %v975
      %984 = vst [vmem:[#allocation2 + $0x230] sm:$0xff] %v976
      %985 = vst [vmem:[#allocation2 + $0x238] sm:$0xff] %v977
      %v986 = vld [vmem:[%s1] sm:$0xff]
      %v987 = vld [vmem:[#allocation2] sm:$0xff]
      %v988 = vld [vmem:[#allocation2 + $0x8] sm:$0xff]
      %v989 = vld [vmem:[#allocation2 + $0x10] sm:$0xff]
      %v990 = vld [vmem:[#allocation2 + $0x18] sm:$0xff]
      %v991 = vld [vmem:[#allocation2 + $0x20] sm:$0xff]
      %v992 = vld [vmem:[#allocation2 + $0x28] sm:$0xff]
      %v993 = vld [vmem:[#allocation2 + $0x30] sm:$0xff]
      %v994 = vld [vmem:[#allocation2 + $0x38] sm:$0xff]
      %v995 = vld [vmem:[#allocation2 + $0x40] sm:$0xff]
      %v996 = vld [vmem:[#allocation2 + $0x48] sm:$0xff]
      %v997 = vld [vmem:[#allocation2 + $0x50] sm:$0xff]
      %v998 = vld [vmem:[#allocation2 + $0x58] sm:$0xff]
      %v999 = vld [vmem:[#allocation2 + $0x60] sm:$0xff]
      %v1000 = vld [vmem:[#allocation2 + $0x68] sm:$0xff]
      %v1001 = vld [vmem:[#allocation2 + $0x70] sm:$0xff]
      %v1002 = vld [vmem:[#allocation2 + $0x78] sm:$0xff]
      %v1003 = vld [vmem:[#allocation2 + $0x80] sm:$0xff]
      %v1004 = vld [vmem:[#allocation2 + $0x88] sm:$0xff]
      %v1005 = vld [vmem:[#allocation2 + $0x90] sm:$0xff]
      %v1006 = vld [vmem:[#allocation2 + $0x98] sm:$0xff]
      %v1007 = vld [vmem:[#allocation2 + $0xa0] sm:$0xff]
      %v1008 = vld [vmem:[#allocation2 + $0xa8] sm:$0xff]
      %v1009 = vld [vmem:[#allocation2 + $0xb0] sm:$0xff]
      %v1010 = vld [vmem:[#allocation2 + $0xb8] sm:$0xff]
      %v1011 = vld [vmem:[#allocation2 + $0xc0] sm:$0xff]
      %v1012 = vld [vmem:[#allocation2 + $0xc8] sm:$0xff]
      %v1013 = vld [vmem:[#allocation2 + $0xd0] sm:$0xff]
      %v1014 = vld [vmem:[#allocation2 + $0xd8] sm:$0xff]
      %v1015 = vld [vmem:[#allocation2 + $0xe0] sm:$0xff]
      %v1016 = vld [vmem:[#allocation2 + $0xe8] sm:$0xff]
      %v1017 = vld [vmem:[#allocation2 + $0xf0] sm:$0xff]
      %v1018 = vld [vmem:[#allocation2 + $0xf8] sm:$0xff]
      %v1019 = vld [vmem:[#allocation2 + $0x100] sm:$0xff]
      %v1020 = vld [vmem:[#allocation2 + $0x108] sm:$0xff]
      %v1021 = vld [vmem:[#allocation2 + $0x110] sm:$0xff]
      %v1022 = vld [vmem:[#allocation2 + $0x118] sm:$0xff]
      %v1023 = vld [vmem:[#allocation2 + $0x120] sm:$0xff]
      %v1024 = vld [vmem:[#allocation2 + $0x128] sm:$0xff]
      %v1025 = vld [vmem:[#allocation2 + $0x130] sm:$0xff]
      %v1026 = vld [vmem:[#allocation2 + $0x138] sm:$0xff]
      %v1027 = vld [vmem:[#allocation2 + $0x140] sm:$0xff]
      %v1028 = vld [vmem:[#allocation2 + $0x148] sm:$0xff]
      %v1029 = vld [vmem:[#allocation2 + $0x150] sm:$0xff]
      %v1030 = vld [vmem:[#allocation2 + $0x158] sm:$0xff]
      %v1031 = vld [vmem:[#allocation2 + $0x160] sm:$0xff]
      %v1032 = vld [vmem:[#allocation2 + $0x168] sm:$0xff]
      %v1033 = vld [vmem:[#allocation2 + $0x170] sm:$0xff]
      %v1034 = vld [vmem:[#allocation2 + $0x178] sm:$0xff]
      %v1035 = vld [vmem:[#allocation2 + $0x180] sm:$0xff]
      %v1036 = vld [vmem:[#allocation2 + $0x188] sm:$0xff]
      %v1037 = vld [vmem:[#allocation2 + $0x190] sm:$0xff]
      %v1038 = vld [vmem:[#allocation2 + $0x198] sm:$0xff]
      %v1039 = vld [vmem:[#allocation2 + $0x1a0] sm:$0xff]
      %v1040 = vld [vmem:[#allocation2 + $0x1a8] sm:$0xff]
      %v1041 = vld [vmem:[#allocation2 + $0x1b0] sm:$0xff]
      %v1042 = vld [vmem:[#allocation2 + $0x1b8] sm:$0xff]
      %v1043 = vld [vmem:[#allocation2 + $0x1c0] sm:$0xff]
      %v1044 = vld [vmem:[#allocation2 + $0x1c8] sm:$0xff]
      %v1045 = vld [vmem:[#allocation2 + $0x1d0] sm:$0xff]
      %v1046 = vld [vmem:[#allocation2 + $0x1d8] sm:$0xff]
      %v1047 = vld [vmem:[#allocation2 + $0x1e0] sm:$0xff]
      %v1048 = vld [vmem:[#allocation2 + $0x1e8] sm:$0xff]
      %v1049 = vld [vmem:[#allocation2 + $0x1f0] sm:$0xff]
      %v1050 = vld [vmem:[#allocation2 + $0x1f8] sm:$0xff]
      %v1051 = vld [vmem:[#allocation2 + $0x200] sm:$0xff]
      %v1052 = vld [vmem:[#allocation2 + $0x208] sm:$0xff]
      %v1053 = vld [vmem:[#allocation2 + $0x210] sm:$0xff]
      %v1054 = vld [vmem:[#allocation2 + $0x218] sm:$0xff]
      %v1055 = vld [vmem:[#allocation2 + $0x220] sm:$0xff]
      %v1056 = vld [vmem:[#allocation2 + $0x228] sm:$0xff]
      %v1057 = vld [vmem:[#allocation2 + $0x230] sm:$0xff]
      %v1058 = vld [vmem:[#allocation2 + $0x238] sm:$0xff]
      %v1059 = vld [vmem:[%s2] sm:$0xff]
      %1061 = vset.pattern.permute.xlu0 0
      %1062 = vperm.xlu0 %1061, %v1059
      %v1063 = vpop.permute.xlu0 %1062
      %vm1065 = vcmask 588800
      %v1067 = vsel %vm1065, %v986, 0
      %1069 = vmatprep.subr.mxu0 %v988
      %1070 = vmatpush1.msra.mxu0 %v987
      %1071 = vmatprep.subr.mxu0 %v996
      %1072 = vmatpush1.msra.mxu0 %v995
      %1073 = vmatprep.subr.mxu0 %v1004
      %1074 = vmatpush1.msra.mxu0 %v1003
      %1075 = vmatprep.subr.mxu0 %v1012
      %1076 = vmatpush1.msra.mxu0 %v1011
      %1077 = vmatprep.subr.mxu0 %v1020
      %1078 = vmatpush1.msra.mxu0 %v1019
      %1079 = vmatprep.subr.mxu0 %v1028
      %1080 = vmatpush1.msra.mxu0 %v1027
      %1081 = vmatprep.subr.mxu0 %v1036
      %1082 = vmatpush1.msra.mxu0 %v1035
      %1083 = vmatprep.subr.mxu0 %v1044
      %1084 = vmatpush1.msra.mxu0 %v1043
      %1085 = vmatprep.subr.mxu0 %v1052
      %1086 = vmatpush1.msra.mxu0 %v1051
      %1087 = vmatprep.subr.mxu0 0.0
      %1088 = vmatpush1.msra.mxu0 0.0
      %1089 = vmatprep.subr.mxu0 0.0
      %1090 = vmatpush1.msra.mxu0 0.0
      %1091 = vmatprep.subr.mxu0 0.0
      %1092 = vmatpush1.msra.mxu0 0.0
      %1093 = vmatprep.subr.mxu0 0.0
      %1094 = vmatpush1.msra.mxu0 0.0
      %1095 = vmatprep.subr.mxu0 0.0
      %1096 = vmatpush1.msra.mxu0 0.0
      %1097 = vmatprep.subr.mxu0 0.0
      %1098 = vmatpush1.msra.mxu0 0.0
      %1099 = vmatprep.subr.mxu0 0.0
      %1100 = vmatpush1.msra.mxu0 0.0
      %1101 = vmatprep.subr.mxu0 0.0
      %1102 = vmatpush1.msra.mxu0 0.0
      %1103 = vmatprep.subr.mxu0 0.0
      %1104 = vmatpush1.msra.mxu0 0.0
      %1105 = vmatprep.subr.mxu0 0.0
      %1106 = vmatpush1.msra.mxu0 0.0
      %1107 = vmatprep.subr.mxu0 0.0
      %1108 = vmatpush1.msra.mxu0 0.0
      %1109 = vmatprep.subr.mxu0 0.0
      %1110 = vmatpush1.msra.mxu0 0.0
      %1111 = vmatprep.subr.mxu0 0.0
      %1112 = vmatpush1.msra.mxu0 0.0
      %1113 = vmatprep.subr.mxu0 0.0
      %1114 = vmatpush1.msra.mxu0 0.0
      %1115 = vmatprep.subr.mxu0 0.0
      %1116 = vmatpush1.msra.mxu0 0.0
      %1117 = vmatprep.subr.mxu0 0.0
      %1118 = vmatpush1.msra.mxu0 0.0
      %1119 = vmatprep.subr.mxu0 0.0
      %1120 = vmatpush1.msra.mxu0 0.0
      %1121 = vmatprep.subr.mxu0 0.0
      %1122 = vmatpush1.msra.mxu0 0.0
      %1123 = vmatprep.subr.mxu0 0.0
      %1124 = vmatpush1.msra.mxu0 0.0
      %1125 = vmatprep.subr.mxu0 0.0
      %1126 = vmatpush1.msra.mxu0 0.0
      %1127 = vmatprep.subr.mxu0 0.0
      %1128 = vmatpush1.msra.mxu0 0.0
      %1129 = vmatprep.subr.mxu0 0.0
      %1130 = vmatpush1.msra.mxu0 0.0
      %1131 = vmatprep.subr.mxu0 0.0
      %1132 = vmatpush1.msra.mxu0 0.0
      %1133 = vmatprep.mubr.f32.mxu0 0.0
      %1134 = vmatmul.mubr.f32.gmra.mrb[0].mxu0 %v1067
      %v1135 = vpop.f32.mrb[0].mxu0
      %v1136 = vadd.f32 %v1063, %v1135
      %v1137 = vpop.f32.mrb[0].mxu0
      %v1138 = vadd.f32 %v1063, %v1137
      %1139 = vdwg.mxu0
      %1140 = vmatprep.subr.mxu0 %v990
      %1141 = vmatpush1.msra.mxu0 %v989
      %1142 = vmatprep.subr.mxu0 %v998
      %1143 = vmatpush1.msra.mxu0 %v997
      %1144 = vmatprep.subr.mxu0 %v1006
      %1145 = vmatpush1.msra.mxu0 %v1005
      %1146 = vmatprep.subr.mxu0 %v1014
      %1147 = vmatpush1.msra.mxu0 %v1013
      %1148 = vmatprep.subr.mxu0 %v1022
      %1149 = vmatpush1.msra.mxu0 %v1021
      %1150 = vmatprep.subr.mxu0 %v1030
      %1151 = vmatpush1.msra.mxu0 %v1029
      %1152 = vmatprep.subr.mxu0 %v1038
      %1153 = vmatpush1.msra.mxu0 %v1037
      %1154 = vmatprep.subr.mxu0 %v1046
      %1155 = vmatpush1.msra.mxu0 %v1045
      %1156 = vmatprep.subr.mxu0 %v1054
      %1157 = vmatpush1.msra.mxu0 %v1053
      %1158 = vmatprep.subr.mxu0 0.0
      %1159 = vmatpush1.msra.mxu0 0.0
      %1160 = vmatprep.subr.mxu0 0.0
      %1161 = vmatpush1.msra.mxu0 0.0
      %1162 = vmatprep.subr.mxu0 0.0
      %1163 = vmatpush1.msra.mxu0 0.0
      %1164 = vmatprep.subr.mxu0 0.0
      %1165 = vmatpush1.msra.mxu0 0.0
      %1166 = vmatprep.subr.mxu0 0.0
      %1167 = vmatpush1.msra.mxu0 0.0
      %1168 = vmatprep.subr.mxu0 0.0
      %1169 = vmatpush1.msra.mxu0 0.0
      %1170 = vmatprep.subr.mxu0 0.0
      %1171 = vmatpush1.msra.mxu0 0.0
      %1172 = vmatprep.subr.mxu0 0.0
      %1173 = vmatpush1.msra.mxu0 0.0
      %1174 = vmatprep.subr.mxu0 0.0
      %1175 = vmatpush1.msra.mxu0 0.0
      %1176 = vmatprep.subr.mxu0 0.0
      %1177 = vmatpush1.msra.mxu0 0.0
      %1178 = vmatprep.subr.mxu0 0.0
      %1179 = vmatpush1.msra.mxu0 0.0
      %1180 = vmatprep.subr.mxu0 0.0
      %1181 = vmatpush1.msra.mxu0 0.0
      %1182 = vmatprep.subr.mxu0 0.0
      %1183 = vmatpush1.msra.mxu0 0.0
      %1184 = vmatprep.subr.mxu0 0.0
      %1185 = vmatpush1.msra.mxu0 0.0
      %1186 = vmatprep.subr.mxu0 0.0
      %1187 = vmatpush1.msra.mxu0 0.0
      %1188 = vmatprep.subr.mxu0 0.0
      %1189 = vmatpush1.msra.mxu0 0.0
      %1190 = vmatprep.subr.mxu0 0.0
      %1191 = vmatpush1.msra.mxu0 0.0
      %1192 = vmatprep.subr.mxu0 0.0
      %1193 = vmatpush1.msra.mxu0 0.0
      %1194 = vmatprep.subr.mxu0 0.0
      %1195 = vmatpush1.msra.mxu0 0.0
      %1196 = vmatprep.subr.mxu0 0.0
      %1197 = vmatpush1.msra.mxu0 0.0
      %1198 = vmatprep.subr.mxu0 0.0
      %1199 = vmatpush1.msra.mxu0 0.0
      %1200 = vmatprep.subr.mxu0 0.0
      %1201 = vmatpush1.msra.mxu0 0.0
      %1202 = vmatprep.subr.mxu0 0.0
      %1203 = vmatpush1.msra.mxu0 0.0
      %1204 = vmatprep.mubr.f32.mxu0 0.0
      %1205 = vmatmul.mubr.f32.gmra.mrb[0].mxu0 %v1067
      %v1206 = vpop.f32.mrb[0].mxu0
      %v1207 = vadd.f32 %v1063, %v1206
      %v1208 = vpop.f32.mrb[0].mxu0
      %v1209 = vadd.f32 %v1063, %v1208
      %1210 = vdwg.mxu0
      %1211 = vmatprep.subr.mxu0 %v992
      %1212 = vmatpush1.msra.mxu0 %v991
      %1213 = vmatprep.subr.mxu0 %v1000
      %1214 = vmatpush1.msra.mxu0 %v999
      %1215 = vmatprep.subr.mxu0 %v1008
      %1216 = vmatpush1.msra.mxu0 %v1007
      %1217 = vmatprep.subr.mxu0 %v1016
      %1218 = vmatpush1.msra.mxu0 %v1015
      %1219 = vmatprep.subr.mxu0 %v1024
      %1220 = vmatpush1.msra.mxu0 %v1023
      %1221 = vmatprep.subr.mxu0 %v1032
      %1222 = vmatpush1.msra.mxu0 %v1031
      %1223 = vmatprep.subr.mxu0 %v1040
      %1224 = vmatpush1.msra.mxu0 %v1039
      %1225 = vmatprep.subr.mxu0 %v1048
      %1226 = vmatpush1.msra.mxu0 %v1047
      %1227 = vmatprep.subr.mxu0 %v1056
      %1228 = vmatpush1.msra.mxu0 %v1055
      %1229 = vmatprep.subr.mxu0 0.0
      %1230 = vmatpush1.msra.mxu0 0.0
      %1231 = vmatprep.subr.mxu0 0.0
      %1232 = vmatpush1.msra.mxu0 0.0
      %1233 = vmatprep.subr.mxu0 0.0
      %1234 = vmatpush1.msra.mxu0 0.0
      %1235 = vmatprep.subr.mxu0 0.0
      %1236 = vmatpush1.msra.mxu0 0.0
      %1237 = vmatprep.subr.mxu0 0.0
      %1238 = vmatpush1.msra.mxu0 0.0
      %1239 = vmatprep.subr.mxu0 0.0
      %1240 = vmatpush1.msra.mxu0 0.0
      %1241 = vmatprep.subr.mxu0 0.0
      %1242 = vmatpush1.msra.mxu0 0.0
      %1243 = vmatprep.subr.mxu0 0.0
      %1244 = vmatpush1.msra.mxu0 0.0
      %1245 = vmatprep.subr.mxu0 0.0
      %1246 = vmatpush1.msra.mxu0 0.0
      %1247 = vmatprep.subr.mxu0 0.0
      %1248 = vmatpush1.msra.mxu0 0.0
      %1249 = vmatprep.subr.mxu0 0.0
      %1250 = vmatpush1.msra.mxu0 0.0
      %1251 = vmatprep.subr.mxu0 0.0
      %1252 = vmatpush1.msra.mxu0 0.0
      %1253 = vmatprep.subr.mxu0 0.0
      %1254 = vmatpush1.msra.mxu0 0.0
      %1255 = vmatprep.subr.mxu0 0.0
      %1256 = vmatpush1.msra.mxu0 0.0
      %1257 = vmatprep.subr.mxu0 0.0
      %1258 = vmatpush1.msra.mxu0 0.0
      %1259 = vmatprep.subr.mxu0 0.0
      %1260 = vmatpush1.msra.mxu0 0.0
      %1261 = vmatprep.subr.mxu0 0.0
      %1262 = vmatpush1.msra.mxu0 0.0
      %1263 = vmatprep.subr.mxu0 0.0
      %1264 = vmatpush1.msra.mxu0 0.0
      %1265 = vmatprep.subr.mxu0 0.0
      %1266 = vmatpush1.msra.mxu0 0.0
      %1267 = vmatprep.subr.mxu0 0.0
      %1268 = vmatpush1.msra.mxu0 0.0
      %1269 = vmatprep.subr.mxu0 0.0
      %1270 = vmatpush1.msra.mxu0 0.0
      %1271 = vmatprep.subr.mxu0 0.0
      %1272 = vmatpush1.msra.mxu0 0.0
      %1273 = vmatprep.subr.mxu0 0.0
      %1274 = vmatpush1.msra.mxu0 0.0
      %1275 = vmatprep.mubr.f32.mxu0 0.0
      %1276 = vmatmul.mubr.f32.gmra.mrb[0].mxu0 %v1067
      %v1277 = vpop.f32.mrb[0].mxu0
      %v1278 = vadd.f32 %v1063, %v1277
      %v1279 = vpop.f32.mrb[0].mxu0
      %v1280 = vadd.f32 %v1063, %v1279
      %1281 = vdwg.mxu0
      %1282 = vmatprep.subr.mxu0 %v994
      %1283 = vmatpush1.msra.mxu0 %v993
      %1284 = vmatprep.subr.mxu0 %v1002
      %1285 = vmatpush1.msra.mxu0 %v1001
      %1286 = vmatprep.subr.mxu0 %v1010
      %1287 = vmatpush1.msra.mxu0 %v1009
      %1288 = vmatprep.subr.mxu0 %v1018
      %1289 = vmatpush1.msra.mxu0 %v1017
      %1290 = vmatprep.subr.mxu0 %v1026
      %1291 = vmatpush1.msra.mxu0 %v1025
      %1292 = vmatprep.subr.mxu0 %v1034
      %1293 = vmatpush1.msra.mxu0 %v1033
      %1294 = vmatprep.subr.mxu0 %v1042
      %1295 = vmatpush1.msra.mxu0 %v1041
      %1296 = vmatprep.subr.mxu0 %v1050
      %1297 = vmatpush1.msra.mxu0 %v1049
      %1298 = vmatprep.subr.mxu0 %v1058
      %1299 = vmatpush1.msra.mxu0 %v1057
      %1300 = vmatprep.subr.mxu0 0.0
      %1301 = vmatpush1.msra.mxu0 0.0
      %1302 = vmatprep.subr.mxu0 0.0
      %1303 = vmatpush1.msra.mxu0 0.0
      %1304 = vmatprep.subr.mxu0 0.0
      %1305 = vmatpush1.msra.mxu0 0.0
      %1306 = vmatprep.subr.mxu0 0.0
      %1307 = vmatpush1.msra.mxu0 0.0
      %1308 = vmatprep.subr.mxu0 0.0
      %1309 = vmatpush1.msra.mxu0 0.0
      %1310 = vmatprep.subr.mxu0 0.0
      %1311 = vmatpush1.msra.mxu0 0.0
      %1312 = vmatprep.subr.mxu0 0.0
      %1313 = vmatpush1.msra.mxu0 0.0
      %1314 = vmatprep.subr.mxu0 0.0
      %1315 = vmatpush1.msra.mxu0 0.0
      %1316 = vmatprep.subr.mxu0 0.0
      %1317 = vmatpush1.msra.mxu0 0.0
      %1318 = vmatprep.subr.mxu0 0.0
      %1319 = vmatpush1.msra.mxu0 0.0
      %1320 = vmatprep.subr.mxu0 0.0
      %1321 = vmatpush1.msra.mxu0 0.0
      %1322 = vmatprep.subr.mxu0 0.0
      %1323 = vmatpush1.msra.mxu0 0.0
      %1324 = vmatprep.subr.mxu0 0.0
      %1325 = vmatpush1.msra.mxu0 0.0
      %1326 = vmatprep.subr.mxu0 0.0
      %1327 = vmatpush1.msra.mxu0 0.0
      %1328 = vmatprep.subr.mxu0 0.0
      %1329 = vmatpush1.msra.mxu0 0.0
      %1330 = vmatprep.subr.mxu0 0.0
      %1331 = vmatpush1.msra.mxu0 0.0
      %1332 = vmatprep.subr.mxu0 0.0
      %1333 = vmatpush1.msra.mxu0 0.0
      %1334 = vmatprep.subr.mxu0 0.0
      %1335 = vmatpush1.msra.mxu0 0.0
      %1336 = vmatprep.subr.mxu0 0.0
      %1337 = vmatpush1.msra.mxu0 0.0
      %1338 = vmatprep.subr.mxu0 0.0
      %1339 = vmatpush1.msra.mxu0 0.0
      %1340 = vmatprep.subr.mxu0 0.0
      %1341 = vmatpush1.msra.mxu0 0.0
      %1342 = vmatprep.subr.mxu0 0.0
      %1343 = vmatpush1.msra.mxu0 0.0
      %1344 = vmatprep.subr.mxu0 0.0
      %1345 = vmatpush1.msra.mxu0 0.0
      %1346 = vmatprep.mubr.f32.mxu0 0.0
      %1347 = vmatmul.mubr.f32.gmra.mrb[0].mxu0 %v1067
      %v1348 = vpop.f32.mrb[0].mxu0
      %v1349 = vadd.f32 %v1063, %v1348
      %v1350 = vpop.f32.mrb[0].mxu0
      %v1351 = vadd.f32 %v1063, %v1350
      %1352 = vdwg.mxu0
      %v1353 = vmax.f32 %v1136, 0.0
      %v1354 = vmax.f32 %v1138, 0.0
      %v1355 = vmax.f32 %v1207, 0.0
      %v1356 = vmax.f32 %v1209, 0.0
      %v1357 = vmax.f32 %v1278, 0.0
      %v1358 = vmax.f32 %v1280, 0.0
      %v1359 = vmax.f32 %v1349, 0.0
      %v1360 = vmax.f32 %v1351, 0.0
      %v1361 = vpack.c.bf16 %v1353, %v1353
      %v1362 = vpack.c.bf16 %v1354, %v1354
      %v1363 = vpack.c.bf16 %v1355, %v1355
      %v1364 = vpack.c.bf16 %v1356, %v1356
      %v1365 = vpack.c.bf16 %v1357, %v1357
      %v1366 = vpack.c.bf16 %v1358, %v1358
      %v1367 = vpack.c.bf16 %v1359, %v1359
      %v1368 = vpack.c.bf16 %v1360, %v1360
      %v1377 = vunpack.c.l.b16 %v1361
      %v1378 = vunpack.c.l.b16 %v1362
      %v1379 = vunpack.c.l.b16 %v1363
      %v1380 = vunpack.c.l.b16 %v1364
      %v1381 = vunpack.c.l.b16 %v1365
      %v1382 = vunpack.c.l.b16 %v1366
      %v1383 = vunpack.c.l.b16 %v1367
      %v1384 = vunpack.c.l.b16 %v1368
      %v1385 = vpack.c.b16 %v1378, %v1377
      %v1386 = vpack.c.b16 %v1380, %v1379
      %v1387 = vpack.c.b16 %v1382, %v1381
      %v1388 = vpack.c.b16 %v1384, %v1383
      %1393 = vst [vmem:[%s170] sm:$0xff] %v1385
      %1394 = vst [vmem:[%s170 + $0x8] sm:$0xff] %v1386
      %1395 = vst [vmem:[%s170 + $0x10] sm:$0xff] %v1387
      %1396 = vst [vmem:[%s170 + $0x18] sm:$0xff] %v1388
      %p1397 = scmp.lt.s32.totalorder %s14, 1
      %s1398 = scalar_select %p1397, %s14, 1
      %s1399 = smul.addr %s1398, 8
      %s1400 = smul.addr %s1399, 4
      %s1401 = scalar_lea.vmem %s3, %s1400
      // Predicated region
      $region33: #{unet_with_backbone.6} parent=31 // pred_check
        %p1402 = pneg %p100
      $region34: #{unet_with_backbone.6} parent=31 // pred_check_branch
        %1404 = sbr.rel (%p1402) target = $region36
      $region35: #{unet_with_backbone.6} parent=31 // pred_region
        _
      $region36: #{unet_with_backbone.6} parent=31 // pred_fallthru
        _
    $region32: #{unet_with_backbone.6} parent=5 // pred_fallthru
      _
    %p1405 = scmp.le.s32.totalorder 2, %s9
    // Predicated region
    $region37: #{unet_with_backbone.6} parent=5 // pred_check
      %p1406 = pneg %p1405
    $region38: #{unet_with_backbone.6} parent=5 // pred_check_branch
      %1408 = sbr.rel (%p1406) target = $region40
    $region39: #{unet_with_backbone.6} parent=5 // pred_region
      %s1409 = ssub.s32 %s9, 2
      // Predicated region
      $region41: #{unet_with_backbone.6} parent=39 // pred_check
        %p1410 = pneg %p106
      $region42: #{unet_with_backbone.6} parent=39 // pred_check_branch
        %1412 = sbr.rel (%p1410) target = $region44
      $region43: #{unet_with_backbone.6} parent=39 // pred_region
        %p1413 = scmp.lt.s32.totalorder %s15, 1
        %s1414 = scalar_select %p1413, %s15, 1
        %s1415 = smul.addr %s1414, 8
        %s1416 = smul.addr %s1415, 4
        %s1417 = scalar_lea.vmem %s3, %s1416
      $region44: #{unet_with_backbone.6} parent=39 // pred_fallthru
        _
    $region40: #{unet_with_backbone.6} parent=5 // pred_fallthru
      _
  $region6: #{unet_with_backbone.6} parent=0 // loop_footer
    %s13 = sadd.s32 1, %s9
  $region7: #{unet_with_backbone.6} parent=0 // loop_footer_branch
    %8 = sbr.rel target = $region3
  $region8: #{unet_with_backbone.6} parent=0 // loop_exit
    _

// kernel: unet_with_backbone.8
$region0: #{unet_with_backbone.8}
  #allocation0 [shape = 'u32[]', space=smem, size = 0x4, offset = 0x4, fixed_abs, tag = 'smem constant byte address 0x4 - core index']
  #allocation1 [shape = 'u32[144,128]{1,0:T(1,128)}', space=vmem, size = 0x12000, scoped, tag = 'internal scratch']
  #allocation2 [shape = 'f32[144,64]{1,0:T(8,128)}', space=vmem, size = 0x12000, scoped, tag = 'scratch operand']
  #allocation3 [shape = 'f32[16,320]{1,0:T(8,128)}', space=vmem, size = 0x6000, scoped, tag = 'scratch operand']
  %s0 = inlined_call_operand.vmem [shape: bf16[2,16,64], index: 0, kind: input, shape index: {}]
  %s1 = inlined_call_operand.vmem [shape: f32[32,144], index: 1, kind: input, shape index: {}]
  %s2 = inlined_call_operand.vmem [shape: f32[32,1], index: 2, kind: input, shape index: {}]
  %s3 = inlined_call_operand.vmem [shape: f32[16,32], index: 3, kind: input, shape index: {}]
  %s4 = inlined_call_operand.vmem [shape: f32[16,1], index: 4, kind: input, shape index: {}]
  %s5 = inlined_call_operand.vmem [shape: bf16[2,16,64], index: 5, kind: output, shape index: {}]
  %s6 = sld [smem:[#allocation0]]
  $region53: #{unet_with_backbone.8} parent=0
    _
  %s8 = ssub.s32 1, %s6
  %s9 = scalar_select 0, %s8, %s6
  loop: start=0, step=1, limit=4
  $region2: #{unet_with_backbone.8} parent=0 // loop_pre_header
    _
  $region3: #{unet_with_backbone.8} parent=0 // loop_header
    %s11 = sphi 0, %s15
    %p12 = scmp.ge.s32.totalorder %s11, 4
    %s21 = sphi 0, %s23
    %s24 = sphi 0, %s21
    %s25 = sphi 0, %s24
    %s41 = sphi 0, %s25
    %s45 = sphi 0, %s45
    %s47 = sphi 0, %s45
    %s48 = sphi 0, %s47
    %s62 = sphi 0, %s48
    %s66 = sphi 0, %s66
    %s68 = sphi 0, %s66
    %s69 = sphi 0, %s68
    %s83 = sphi 0, %s69
    %s87 = sphi 0, %s87
    %s89 = sphi 0, %s87
    %s90 = sphi 0, %s89
    %s104 = sphi 0, %s90
    %s108 = sphi 0, %s108
    %s110 = sphi 0, %s108
    %s111 = sphi 0, %s110
    %s125 = sphi 0, %s111
    %s131 = sphi 0, %s133
    %s134 = sphi 0, %s131
    %s135 = sphi 0, %s134
    %s151 = sphi 0, %s135
  $region4: #{unet_with_backbone.8} parent=0 // loop_header_branch
    %14 = sbr.rel (%p12) target = $region8
  $region5: #{unet_with_backbone.8} parent=0 // loop_body
    %s16 = ssub.s32 %s11, 1
    %s17 = ssub.s32 %s11, 2
    %s18 = sadd.s32 %s11, 1
    %s19 = ssub.s32 %s11, %s18
    %p20 = scmp.eq.s32.totalorder %s19, 0
    %s22 = sadd.s32 %s21, 1
    %s23 = scalar_select %p20, %s21, %s22
    %p26 = pneg %p20
    %p27 = scmp.eq.s32.totalorder %s11, 1
    %p28 = por %p26, %p27
    %p29 = scmp.ne.s32.totalorder %s21, %s24
    %p30 = scmp.eq.s32.totalorder %s11, 0
    %p31 = por %p29, %p30
    %p32 = scmp.ne.s32.totalorder %s21, %s24
    %p33 = scmp.eq.s32.totalorder %s16, 1
    %p34 = por %p32, %p33
    %p35 = scmp.ne.s32.totalorder %s24, %s25
    %p36 = scmp.eq.s32.totalorder %s16, 0
    %p37 = por %p35, %p36
    %p38 = scmp.ne.s32.totalorder %s24, %s25
    %p39 = scmp.eq.s32.totalorder %s17, 1
    %p40 = por %p38, %p39
    %p42 = scmp.ne.s32.totalorder %s25, %s41
    %p43 = scmp.eq.s32.totalorder %s17, 0
    %p44 = por %p42, %p43
    %s46 = sadd.s32 %s45, 1
    %p49 = scmp.eq.s32.totalorder %s11, 1
    %p50 = scmp.ne.s32.totalorder %s45, %s47
    %p51 = scmp.eq.s32.totalorder %s11, 0
    %p52 = por %p50, %p51
    %p53 = scmp.ne.s32.totalorder %s45, %s47
    %p54 = scmp.eq.s32.totalorder %s16, 1
    %p55 = por %p53, %p54
    %p56 = scmp.ne.s32.totalorder %s47, %s48
    %p57 = scmp.eq.s32.totalorder %s16, 0
    %p58 = por %p56, %p57
    %p59 = scmp.ne.s32.totalorder %s47, %s48
    %p60 = scmp.eq.s32.totalorder %s17, 1
    %p61 = por %p59, %p60
    %p63 = scmp.ne.s32.totalorder %s48, %s62
    %p64 = scmp.eq.s32.totalorder %s17, 0
    %p65 = por %p63, %p64
    %s67 = sadd.s32 %s66, 1
    %p70 = scmp.eq.s32.totalorder %s11, 1
    %p71 = scmp.ne.s32.totalorder %s66, %s68
    %p72 = scmp.eq.s32.totalorder %s11, 0
    %p73 = por %p71, %p72
    %p74 = scmp.ne.s32.totalorder %s66, %s68
    %p75 = scmp.eq.s32.totalorder %s16, 1
    %p76 = por %p74, %p75
    %p77 = scmp.ne.s32.totalorder %s68, %s69
    %p78 = scmp.eq.s32.totalorder %s16, 0
    %p79 = por %p77, %p78
    %p80 = scmp.ne.s32.totalorder %s68, %s69
    %p81 = scmp.eq.s32.totalorder %s17, 1
    %p82 = por %p80, %p81
    %p84 = scmp.ne.s32.totalorder %s69, %s83
    %p85 = scmp.eq.s32.totalorder %s17, 0
    %p86 = por %p84, %p85
    %s88 = sadd.s32 %s87, 1
    %p91 = scmp.eq.s32.totalorder %s11, 1
    %p92 = scmp.ne.s32.totalorder %s87, %s89
    %p93 = scmp.eq.s32.totalorder %s11, 0
    %p94 = por %p92, %p93
    %p95 = scmp.ne.s32.totalorder %s87, %s89
    %p96 = scmp.eq.s32.totalorder %s16, 1
    %p97 = por %p95, %p96
    %p98 = scmp.ne.s32.totalorder %s89, %s90
    %p99 = scmp.eq.s32.totalorder %s16, 0
    %p100 = por %p98, %p99
    %p101 = scmp.ne.s32.totalorder %s89, %s90
    %p102 = scmp.eq.s32.totalorder %s17, 1
    %p103 = por %p101, %p102
    %p105 = scmp.ne.s32.totalorder %s90, %s104
    %p106 = scmp.eq.s32.totalorder %s17, 0
    %p107 = por %p105, %p106
    %s109 = sadd.s32 %s108, 1
    %p112 = scmp.eq.s32.totalorder %s11, 1
    %p113 = scmp.ne.s32.totalorder %s108, %s110
    %p114 = scmp.eq.s32.totalorder %s11, 0
    %p115 = por %p113, %p114
    %p116 = scmp.ne.s32.totalorder %s108, %s110
    %p117 = scmp.eq.s32.totalorder %s16, 1
    %p118 = por %p116, %p117
    %p119 = scmp.ne.s32.totalorder %s110, %s111
    %p120 = scmp.eq.s32.totalorder %s16, 0
    %p121 = por %p119, %p120
    %p122 = scmp.ne.s32.totalorder %s110, %s111
    %p123 = scmp.eq.s32.totalorder %s17, 1
    %p124 = por %p122, %p123
    %p126 = scmp.ne.s32.totalorder %s111, %s125
    %p127 = scmp.eq.s32.totalorder %s17, 0
    %p128 = por %p126, %p127
    %s129 = ssub.s32 %s11, %s18
    %p130 = scmp.eq.s32.totalorder %s129, 0
    %s132 = sadd.s32 %s131, 1
    %s133 = scalar_select %p130, %s131, %s132
    %p136 = pneg %p130
    %p137 = scmp.eq.s32.totalorder %s11, 1
    %p138 = por %p136, %p137
    %p139 = scmp.ne.s32.totalorder %s131, %s134
    %p140 = scmp.eq.s32.totalorder %s11, 0
    %p141 = por %p139, %p140
    %p142 = scmp.ne.s32.totalorder %s131, %s134
    %p143 = scmp.eq.s32.totalorder %s16, 1
    %p144 = por %p142, %p143
    %p145 = scmp.ne.s32.totalorder %s134, %s135
    %p146 = scmp.eq.s32.totalorder %s16, 0
    %p147 = por %p145, %p146
    %p148 = scmp.ne.s32.totalorder %s134, %s135
    %p149 = scmp.eq.s32.totalorder %s17, 1
    %p150 = por %p148, %p149
    %p152 = scmp.ne.s32.totalorder %s135, %s151
    %p153 = scmp.eq.s32.totalorder %s17, 0
    %p154 = por %p152, %p153
    %p155 = scmp.le.s32.totalorder 1, %s11
    %p156 = scmp.lt.s32.totalorder %s11, 3
    %p157 = pnand %p155, %p156
    %p158 = pneg %p157
    // Predicated region
    $region9: #{unet_with_backbone.8} parent=5 // pred_check
      _
    $region10: #{unet_with_backbone.8} parent=5 // pred_check_branch
      %160 = sbr.rel (%p157) target = $region12
    $region11: #{unet_with_backbone.8} parent=5 // pred_region
      %s161 = ssub.s32 %s11, 1
      // Predicated region
      $region13: #{unet_with_backbone.8} parent=11 // pred_check
        %p162 = pneg %p58
      $region14: #{unet_with_backbone.8} parent=11 // pred_check_branch
        %164 = sbr.rel (%p162) target = $region16
      $region15: #{unet_with_backbone.8} parent=11 // pred_region
        _
      $region16: #{unet_with_backbone.8} parent=11 // pred_fallthru
        _
      // Predicated region
      $region17: #{unet_with_backbone.8} parent=11 // pred_check
        %p165 = pneg %p79
      $region18: #{unet_with_backbone.8} parent=11 // pred_check_branch
        %167 = sbr.rel (%p165) target = $region20
      $region19: #{unet_with_backbone.8} parent=11 // pred_region
        _
      $region20: #{unet_with_backbone.8} parent=11 // pred_fallthru
        _
      // Predicated region
      $region21: #{unet_with_backbone.8} parent=11 // pred_check
        %p168 = pneg %p100
      $region22: #{unet_with_backbone.8} parent=11 // pred_check_branch
        %170 = sbr.rel (%p168) target = $region24
      $region23: #{unet_with_backbone.8} parent=11 // pred_region
        _
      $region24: #{unet_with_backbone.8} parent=11 // pred_fallthru
        _
      // Predicated region
      $region25: #{unet_with_backbone.8} parent=11 // pred_check
        %p171 = pneg %p121
      $region26: #{unet_with_backbone.8} parent=11 // pred_check_branch
        %173 = sbr.rel (%p171) target = $region28
      $region27: #{unet_with_backbone.8} parent=11 // pred_region
        _
      $region28: #{unet_with_backbone.8} parent=11 // pred_fallthru
        _
    $region12: #{unet_with_backbone.8} parent=5 // pred_fallthru
      _
    %p174 = scmp.lt.s32.totalorder %s11, 2
    // Predicated region
    $region29: #{unet_with_backbone.8} parent=5 // pred_check
      %p175 = pneg %p174
    $region30: #{unet_with_backbone.8} parent=5 // pred_check_branch
      %177 = sbr.rel (%p175) target = $region32
    $region31: #{unet_with_backbone.8} parent=5 // pred_region
      // Predicated region
      $region33: #{unet_with_backbone.8} parent=31 // pred_check
        %p178 = pneg %p31
      $region34: #{unet_with_backbone.8} parent=31 // pred_check_branch
        %180 = sbr.rel (%p178) target = $region36
      $region35: #{unet_with_backbone.8} parent=31 // pred_region
        %p181 = scmp.lt.s32.totalorder %s11, 1
        %s182 = scalar_select %p181, %s11, 1
        %s183 = smul.addr %s182, 2
        %s184 = smul.addr %s183, 4
        %s185 = scalar_lea.vmem %s0, %s184
      $region36: #{unet_with_backbone.8} parent=31 // pred_fallthru
        _
    $region32: #{unet_with_backbone.8} parent=5 // pred_fallthru
      _
    %p186 = scmp.le.s32.totalorder 1, %s11
    %p187 = scmp.lt.s32.totalorder %s11, 3
    %p188 = pnand %p186, %p187
    %p189 = pneg %p188
    // Predicated region
    $region37: #{unet_with_backbone.8} parent=5 // pred_check
      _
    $region38: #{unet_with_backbone.8} parent=5 // pred_check_branch
      %191 = sbr.rel (%p188) target = $region40
    $region39: #{unet_with_backbone.8} parent=5 // pred_region
      %s192 = ssub.s32 %s11, 1
      %p193 = scmp.lt.s32.totalorder %s16, 1
      %s194 = scalar_select %p193, %s16, 1
      %s195 = smul.addr %s194, 2
      %s196 = smul.addr %s195, 4
      %s197 = scalar_lea.vmem %s0, %s196
      %p198 = pneg %p37
      %p199 = pneg %p34
      %p200 = pneg %p58
      %p201 = pneg %p55
      %p202 = pneg %p79
      %p203 = pneg %p76
      %p204 = pneg %p100
      %p205 = pneg %p97
      %p206 = pneg %p121
      %p207 = pneg %p118
      %p208 = pneg %p147
      %p209 = pneg %p144
      %p210 = scmp.lt.s32.totalorder %s16, 1
      %s211 = scalar_select %p210, %s16, 1
      %s212 = smul.addr %s211, 2
      %s213 = smul.addr %s212, 4
      %s214 = scalar_lea.vmem %s5, %s213
      %p215 = scmp.lt.s32.totalorder %s16, 1
      %s216 = scalar_select %p215, %s16, 1
      %s217 = smul.addr %s216, 2
      %s218 = smul.addr %s217, 4
      %s219 = scalar_lea.vmem %s0, %s218
      %p220 = scmp.lt.s32.totalorder %s16, 1
      %s221 = scalar_select %p220, %s16, 1
      %s222 = smul.addr %s221, 2
      %s223 = smul.addr %s222, 4
      %s224 = scalar_lea.vmem %s5, %s223
      %225 = vst [vmem:[#allocation3] sm:$0xff] 0.0
      %226 = vst [vmem:[#allocation3 + $0x8] sm:$0xff] 0.0
      %vm227 = vcmask 523264
      %228 = vst.msk [vmem:[#allocation3 + $0x10] sm:$0xff] %vm227, 0.0
      %229 = vst [vmem:[#allocation3 + $0x18] sm:$0xff] 0.0
      %230 = vst [vmem:[#allocation3 + $0x20] sm:$0xff] 0.0
      %231 = vst.msk [vmem:[#allocation3 + $0x28] sm:$0xff] %vm227, 0.0
      %v232 = vld [vmem:[%s219] sm:$0xf]
      %v233 = vld [vmem:[%s219 + $0x4] sm:$0xf]
      %v234 = vunpack.c.l.bf16 %v232
      %v235 = vunpack.c.l.bf16 %v233
      %236 = vst.msk [vmem:[#allocation3 + $0x8] sm:$0xff] %vm227, %v234
      %237 = vst.msk [vmem:[#allocation3 + $0x20] sm:$0xff] %vm227, %v235
      %v238 = vlaneseq
      %v239 = vand.u32 %v238, 127
      %v240 = vand.u32 %v239, 7
      %v241 = vshra.s32 %v239, 3
      %v242 = vand.u32 %v241, 7
      %vm243 = vcmp.ge.s32.totalorder %v242, 1
      %vm244 = vcmp.ge.s32.totalorder %v240, 1
      %v245 = vld [vmem:[#allocation3] sm:$0xff]
      %v246 = vld [vmem:[#allocation3 + $0x8] sm:$0xff]
      %v247 = vld [vmem:[#allocation3 + $0x18] sm:$0xff]
      %v248 = vld [vmem:[#allocation3 + $0x20] sm:$0xff]
      %vm249 = vmand %vm243, %vm244
      %v250 = vsel %vm249, 1, 0
      %vm251 = vcmp.eq.s32.totalorder %v250, 1
      %256 = vrot.lane.b32.xlu0 %v245, 9
      %v257 = vpop.permute.xlu0 %256
      %258 = vrot.lane.b32.xlu0 %v246, 9
      %v259 = vpop.permute.xlu0 %258
      %260 = vrot.lane.b32.xlu0 %v247, 9
      %v261 = vpop.permute.xlu0 %260
      %262 = vrot.lane.b32.xlu0 %v248, 9
      %v263 = vpop.permute.xlu0 %262
      %vm264 = vcmask 72704
      %v265 = vsel %vm264, %v257, %v259
      %v266 = vsel %vm264, %v261, %v263
      %v269 = vsel %vm251, %v265, 0.0
      %v270 = vsel %vm251, %v266, 0.0
      %271 = vst.msk [vmem:[#allocation2] sm:$0xff] %vm227, %v269
      %272 = vst.msk [vmem:[#allocation2 + $0x8] sm:$0xff] %vm227, %v270
      %v273 = vld [vmem:[#allocation3] sm:$0xff]
      %v274 = vld [vmem:[#allocation3 + $0x8] sm:$0xff]
      %v275 = vld [vmem:[#allocation3 + $0x18] sm:$0xff]
      %v276 = vld [vmem:[#allocation3 + $0x20] sm:$0xff]
      %v277 = vsel %vm243, 1, 0
      %vm278 = vcmp.eq.s32.totalorder %v277, 1
      %283 = vrot.lane.b32.xlu0 %v273, 8
      %v284 = vpop.permute.xlu0 %283
      %285 = vrot.lane.b32.xlu0 %v274, 8
      %v286 = vpop.permute.xlu0 %285
      %287 = vrot.lane.b32.xlu0 %v275, 8
      %v288 = vpop.permute.xlu0 %287
      %289 = vrot.lane.b32.xlu0 %v276, 8
      %v290 = vpop.permute.xlu0 %289
      %vm291 = vcmask 64512
      %v292 = vsel %vm291, %v284, %v286
      %v293 = vsel %vm291, %v288, %v290
      %v296 = vsel %vm278, %v292, 0.0
      %v297 = vsel %vm278, %v293, 0.0
      %298 = vst.msk [vmem:[#allocation2 + $0x10] sm:$0xff] %vm227, %v296
      %299 = vst.msk [vmem:[#allocation2 + $0x18] sm:$0xff] %vm227, %v297
      %vm300 = vcmp.le.s32.totalorder %v240, 6
      %v301 = vld [vmem:[#allocation3] sm:$0xff]
      %v302 = vld [vmem:[#allocation3 + $0x8] sm:$0xff]
      %v303 = vld [vmem:[#allocation3 + $0x18] sm:$0xff]
      %v304 = vld [vmem:[#allocation3 + $0x20] sm:$0xff]
      %vm305 = vmand %vm243, %vm300
      %v306 = vsel %vm305, 1, 0
      %vm307 = vcmp.eq.s32.totalorder %v306, 1
      %312 = vrot.lane.b32.xlu0 %v301, 7
      %v313 = vpop.permute.xlu0 %312
      %314 = vrot.lane.b32.xlu0 %v302, 7
      %v315 = vpop.permute.xlu0 %314
      %316 = vrot.lane.b32.xlu0 %v303, 7
      %v317 = vpop.permute.xlu0 %316
      %318 = vrot.lane.b32.xlu0 %v304, 7
      %v319 = vpop.permute.xlu0 %318
      %vm320 = vcmask 56320
      %v321 = vsel %vm320, %v313, %v315
      %v322 = vsel %vm320, %v317, %v319
      %v325 = vsel %vm307, %v321, 0.0
      %v326 = vsel %vm307, %v322, 0.0
      %327 = vst.msk [vmem:[#allocation2 + $0x20] sm:$0xff] %vm227, %v325
      %328 = vst.msk [vmem:[#allocation2 + $0x28] sm:$0xff] %vm227, %v326
      %v329 = vld [vmem:[#allocation3] sm:$0xff]
      %v330 = vld [vmem:[#allocation3 + $0x8] sm:$0xff]
      %v331 = vld [vmem:[#allocation3 + $0x18] sm:$0xff]
      %v332 = vld [vmem:[#allocation3 + $0x20] sm:$0xff]
      %v333 = vsel %vm244, 1, 0
      %vm334 = vcmp.eq.s32.totalorder %v333, 1
      %339 = vrot.lane.b32.xlu0 %v329, 1
      %v340 = vpop.permute.xlu0 %339
      %341 = vrot.lane.b32.xlu0 %v330, 1
      %v342 = vpop.permute.xlu0 %341
      %343 = vrot.lane.b32.xlu0 %v331, 1
      %v344 = vpop.permute.xlu0 %343
      %345 = vrot.lane.b32.xlu0 %v332, 1
      %v346 = vpop.permute.xlu0 %345
      %vm347 = vcmask 7168
      %v348 = vsel %vm347, %v340, %v342
      %v349 = vsel %vm347, %v344, %v346
      %v352 = vsel %vm334, %v348, 0.0
      %v353 = vsel %vm334, %v349, 0.0
      %354 = vst.msk [vmem:[#allocation2 + $0x30] sm:$0xff] %vm227, %v352
      %355 = vst.msk [vmem:[#allocation2 + $0x38] sm:$0xff] %vm227, %v353
      %356 = vst.msk [vmem:[#allocation2 + $0x40] sm:$0xff] %vm227, %v234
      %357 = vst.msk [vmem:[#allocation2 + $0x48] sm:$0xff] %vm227, %v235
      %v358 = vld [vmem:[#allocation3 + $0x8] sm:$0xff]
      %v359 = vld [vmem:[#allocation3 + $0x20] sm:$0xff]
      %v360 = vsel %vm300, 1, 0
      %vm361 = vcmp.eq.s32.totalorder %v360, 1
      %364 = vrot.lane.b32.xlu0 %v358, 127
      %v365 = vpop.permute.xlu0 %364
      %366 = vrot.lane.b32.xlu0 %v359, 127
      %v367 = vpop.permute.xlu0 %366
      %v370 = vsel %vm361, %v365, 0.0
      %v371 = vsel %vm361, %v367, 0.0
      %372 = vst.msk [vmem:[#allocation2 + $0x50] sm:$0xff] %vm227, %v370
      %373 = vst.msk [vmem:[#allocation2 + $0x58] sm:$0xff] %vm227, %v371
      %vm374 = vcmp.le.s32.totalorder %v242, 6
      %v375 = vld [vmem:[#allocation3 + $0x8] sm:$0xff]
      %v376 = vld [vmem:[#allocation3 + $0x20] sm:$0xff]
      %vm377 = vmand %vm374, %vm244
      %v378 = vsel %vm377, 1, 0
      %vm379 = vcmp.eq.s32.totalorder %v378, 1
      %382 = vrot.lane.b32.xlu0 %v375, 121
      %v383 = vpop.permute.xlu0 %382
      %384 = vrot.lane.b32.xlu0 %v376, 121
      %v385 = vpop.permute.xlu0 %384
      %v388 = vsel %vm379, %v383, 0.0
      %v389 = vsel %vm379, %v385, 0.0
      %390 = vst.msk [vmem:[#allocation2 + $0x60] sm:$0xff] %vm227, %v388
      %391 = vst.msk [vmem:[#allocation2 + $0x68] sm:$0xff] %vm227, %v389
      %v392 = vld [vmem:[#allocation3 + $0x8] sm:$0xff]
      %v393 = vld [vmem:[#allocation3 + $0x20] sm:$0xff]
      %v394 = vsel %vm374, 1, 0
      %vm395 = vcmp.eq.s32.totalorder %v394, 1
      %398 = vrot.lane.b32.xlu0 %v392, 120
      %v399 = vpop.permute.xlu0 %398
      %400 = vrot.lane.b32.xlu0 %v393, 120
      %v401 = vpop.permute.xlu0 %400
      %v404 = vsel %vm395, %v399, 0.0
      %v405 = vsel %vm395, %v401, 0.0
      %406 = vst.msk [vmem:[#allocation2 + $0x70] sm:$0xff] %vm227, %v404
      %407 = vst.msk [vmem:[#allocation2 + $0x78] sm:$0xff] %vm227, %v405
      %v408 = vld [vmem:[#allocation3 + $0x8] sm:$0xff]
      %v409 = vld [vmem:[#allocation3 + $0x20] sm:$0xff]
      %vm410 = vmand %vm374, %vm300
      %v411 = vsel %vm410, 1, 0
      %vm412 = vcmp.eq.s32.totalorder %v411, 1
      %415 = vrot.lane.b32.xlu0 %v408, 119
      %v416 = vpop.permute.xlu0 %415
      %417 = vrot.lane.b32.xlu0 %v409, 119
      %v418 = vpop.permute.xlu0 %417
      %v421 = vsel %vm412, %v416, 0.0
      %v422 = vsel %vm412, %v418, 0.0
      %423 = vst.msk [vmem:[#allocation2 + $0x80] sm:$0xff] %vm227, %v421
      %424 = vst.msk [vmem:[#allocation2 + $0x88] sm:$0xff] %vm227, %v422
      %v425 = vld [vmem:[%s1] sm:$0xff]
      %v426 = vld [vmem:[%s1 + $0x8] sm:$0xff]
      %v427 = vld [vmem:[%s1 + $0x10] sm:$0xff]
      %v428 = vld [vmem:[%s1 + $0x18] sm:$0xff]
      %v429 = vld [vmem:[%s1 + $0x20] sm:$0xff]
      %v430 = vld [vmem:[%s1 + $0x28] sm:$0xff]
      %v431 = vld [vmem:[%s1 + $0x30] sm:$0xff]
      %v432 = vld [vmem:[%s1 + $0x38] sm:$0xff]
      %v433 = vld [vmem:[#allocation2] sm:$0xff]
      %v434 = vld [vmem:[#allocation2 + $0x8] sm:$0xff]
      %v435 = vld [vmem:[#allocation2 + $0x10] sm:$0xff]
      %v436 = vld [vmem:[#allocation2 + $0x18] sm:$0xff]
      %v437 = vld [vmem:[#allocation2 + $0x20] sm:$0xff]
      %v438 = vld [vmem:[#allocation2 + $0x28] sm:$0xff]
      %v439 = vld [vmem:[#allocation2 + $0x30] sm:$0xff]
      %v440 = vld [vmem:[#allocation2 + $0x38] sm:$0xff]
      %v441 = vld [vmem:[#allocation2 + $0x40] sm:$0xff]
      %v442 = vld [vmem:[#allocation2 + $0x48] sm:$0xff]
      %v443 = vld [vmem:[#allocation2 + $0x50] sm:$0xff]
      %v444 = vld [vmem:[#allocation2 + $0x58] sm:$0xff]
      %v445 = vld [vmem:[#allocation2 + $0x60] sm:$0xff]
      %v446 = vld [vmem:[#allocation2 + $0x68] sm:$0xff]
      %v447 = vld [vmem:[#allocation2 + $0x70] sm:$0xff]
      %v448 = vld [vmem:[#allocation2 + $0x78] sm:$0xff]
      %v449 = vld [vmem:[#allocation2 + $0x80] sm:$0xff]
      %v450 = vld [vmem:[#allocation2 + $0x88] sm:$0xff]
      %v451 = vld [vmem:[%s2] sm:$0xff]
      %v452 = vld [vmem:[%s2 + $0x8] sm:$0xff]
      %v453 = vld [vmem:[%s2 + $0x10] sm:$0xff]
      %v454 = vld [vmem:[%s2 + $0x18] sm:$0xff]
      %456 = vset.pattern.permute.xlu0 0
      %457 = vperm.xlu0 %456, %v451
      %v458 = vpop.permute.xlu0 %457
      %461 = vset.pattern.permute.xlu0 0
      %462 = vperm.xlu0 %461, %v452
      %v463 = vpop.permute.xlu0 %462
      %466 = vset.pattern.permute.xlu0 0
      %467 = vperm.xlu0 %466, %v453
      %v468 = vpop.permute.xlu0 %467
      %471 = vset.pattern.permute.xlu0 0
      %472 = vperm.xlu0 %471, %v454
      %v473 = vpop.permute.xlu0 %472
      %vm475 = vcmask 130048
      %v477 = vsel %vm475, %v426, 0
      %v480 = vsel %vm475, %v428, 0
      %v483 = vsel %vm475, %v430, 0
      %v486 = vsel %vm475, %v432, 0
      %488 = vmatprep.subr.mxu0 0.0
      %489 = vmatpush1.msra.mxu0 %v433
      %490 = vmatprep.subr.mxu0 0.0
      %491 = vmatpush1.msra.mxu0 %v434
      %492 = vmatprep.subr.mxu0 0.0
      %493 = vmatpush1.msra.mxu0 %v435
      %494 = vmatprep.subr.mxu0 0.0
      %495 = vmatpush1.msra.mxu0 %v436
      %496 = vmatprep.subr.mxu0 0.0
      %497 = vmatpush1.msra.mxu0 %v437
      %498 = vmatprep.subr.mxu0 0.0
      %499 = vmatpush1.msra.mxu0 %v438
      %500 = vmatprep.subr.mxu0 0.0
      %501 = vmatpush1.msra.mxu0 %v439
      %502 = vmatprep.subr.mxu0 0.0
      %503 = vmatpush1.msra.mxu0 %v440
      %504 = vmatprep.subr.mxu0 0.0
      %505 = vmatpush1.msra.mxu0 %v441
      %506 = vmatprep.subr.mxu0 0.0
      %507 = vmatpush1.msra.mxu0 %v442
      %508 = vmatprep.subr.mxu0 0.0
      %509 = vmatpush1.msra.mxu0 %v443
      %510 = vmatprep.subr.mxu0 0.0
      %511 = vmatpush1.msra.mxu0 %v444
      %512 = vmatprep.subr.mxu0 0.0
      %513 = vmatpush1.msra.mxu0 %v445
      %514 = vmatprep.subr.mxu0 0.0
      %515 = vmatpush1.msra.mxu0 %v446
      %516 = vmatprep.subr.mxu0 0.0
      %517 = vmatpush1.msra.mxu0 %v447
      %518 = vmatprep.subr.mxu0 0.0
      %519 = vmatpush1.msra.mxu0 %v448
      %520 = vmatprep.subr.mxu0 0.0
      %521 = vmatpush1.msra.mxu0 %v449
      %522 = vmatprep.subr.mxu0 0.0
      %523 = vmatpush1.msra.mxu0 %v450
      %524 = vmatprep.subr.mxu0 0.0
      %525 = vmatpush1.msra.mxu0 0.0
      %526 = vmatprep.subr.mxu0 0.0
      %527 = vmatpush1.msra.mxu0 0.0
      %528 = vmatprep.subr.mxu0 0.0
      %529 = vmatpush1.msra.mxu0 0.0
      %530 = vmatprep.subr.mxu0 0.0
      %531 = vmatpush1.msra.mxu0 0.0
      %532 = vmatprep.subr.mxu0 0.0
      %533 = vmatpush1.msra.mxu0 0.0
      %534 = vmatprep.subr.mxu0 0.0
      %535 = vmatpush1.msra.mxu0 0.0
      %536 = vmatprep.subr.mxu0 0.0
      %537 = vmatpush1.msra.mxu0 0.0
      %538 = vmatprep.subr.mxu0 0.0
      %539 = vmatpush1.msra.mxu0 0.0
      %540 = vmatprep.subr.mxu0 0.0
      %541 = vmatpush1.msra.mxu0 0.0
      %542 = vmatprep.subr.mxu0 0.0
      %543 = vmatpush1.msra.mxu0 0.0
      %544 = vmatprep.subr.mxu0 0.0
      %545 = vmatpush1.msra.mxu0 0.0
      %546 = vmatprep.subr.mxu0 0.0
      %547 = vmatpush1.msra.mxu0 0.0
      %548 = vmatprep.subr.mxu0 0.0
      %549 = vmatpush1.msra.mxu0 0.0
      %550 = vmatprep.subr.mxu0 0.0
      %551 = vmatpush1.msra.mxu0 0.0
      %552 = vmatprep.mubr.f32.mxu0 %v477
      %553 = vmatmul.mubr.f32.gmra.mrb[0].mxu0 %v425
      %v554 = vpop.f32.mrb[0].mxu0
      %v555 = vadd.f32 %v458, %v554
      %v556 = vpop.f32.mrb[0].mxu0
      %557 = vmatprep.mubr.f32.mxu0 %v480
      %558 = vmatmul.mubr.f32.gmra.mrb[0].mxu0 %v427
      %v559 = vpop.f32.mrb[0].mxu0
      %v560 = vadd.f32 %v463, %v559
      %v561 = vpop.f32.mrb[0].mxu0
      %562 = vmatprep.mubr.f32.mxu0 %v483
      %563 = vmatmul.mubr.f32.gmra.mrb[0].mxu0 %v429
      %v564 = vpop.f32.mrb[0].mxu0
      %v565 = vadd.f32 %v468, %v564
      %v566 = vpop.f32.mrb[0].mxu0
      %567 = vmatprep.mubr.f32.mxu0 %v486
      %568 = vmatmul.mubr.f32.gmra.mrb[0].mxu0 %v431
      %v569 = vpop.f32.mrb[0].mxu0
      %v570 = vadd.f32 %v473, %v569
      %v571 = vpop.f32.mrb[0].mxu0
      %572 = vdwg.mxu0
      %v573 = vmax.f32 %v555, 0.0
      %v574 = vmax.f32 %v560, 0.0
      %v575 = vmax.f32 %v565, 0.0
      %v576 = vmax.f32 %v570, 0.0
      %v577 = vld [vmem:[%s3] sm:$0xff]
      %v578 = vld [vmem:[%s3 + $0x8] sm:$0xff]
      %v579 = vld [vmem:[%s4] sm:$0xff]
      %v580 = vld [vmem:[%s4 + $0x8] sm:$0xff]
      %582 = vset.pattern.permute.xlu0 0
      %583 = vperm.xlu0 %582, %v579
      %v584 = vpop.permute.xlu0 %583
      %587 = vset.pattern.permute.xlu0 0
      %588 = vperm.xlu0 %587, %v580
      %v589 = vpop.permute.xlu0 %588
      %vm591 = vcmask 261120
      %v593 = vsel %vm591, %v577, 0
      %v596 = vsel %vm591, %v578, 0
      %598 = vmatprep.subr.mxu0 0.0
      %599 = vmatpush1.msra.mxu0 %v573
      %600 = vmatprep.subr.mxu0 0.0
      %601 = vmatpush1.msra.mxu0 %v574
      %602 = vmatprep.subr.mxu0 0.0
      %603 = vmatpush1.msra.mxu0 %v575
      %604 = vmatprep.subr.mxu0 0.0
      %605 = vmatpush1.msra.mxu0 %v576
      %606 = vmatprep.subr.mxu0 0.0
      %607 = vmatpush1.msra.mxu0 0.0
      %608 = vmatprep.subr.mxu0 0.0
      %609 = vmatpush1.msra.mxu0 0.0
      %610 = vmatprep.subr.mxu0 0.0
      %611 = vmatpush1.msra.mxu0 0.0
      %612 = vmatprep.subr.mxu0 0.0
      %613 = vmatpush1.msra.mxu0 0.0
      %614 = vmatprep.subr.mxu0 0.0
      %615 = vmatpush1.msra.mxu0 0.0
      %616 = vmatprep.subr.mxu0 0.0
      %617 = vmatpush1.msra.mxu0 0.0
      %618 = vmatprep.subr.mxu0 0.0
      %619 = vmatpush1.msra.mxu0 0.0
      %620 = vmatprep.subr.mxu0 0.0
      %621 = vmatpush1.msra.mxu0 0.0
      %622 = vmatprep.subr.mxu0 0.0
      %623 = vmatpush1.msra.mxu0 0.0
      %624 = vmatprep.subr.mxu0 0.0
      %625 = vmatpush1.msra.mxu0 0.0
      %626 = vmatprep.subr.mxu0 0.0
      %627 = vmatpush1.msra.mxu0 0.0
      %628 = vmatprep.subr.mxu0 0.0
      %629 = vmatpush1.msra.mxu0 0.0
      %630 = vmatprep.subr.mxu0 0.0
      %631 = vmatpush1.msra.mxu0 0.0
      %632 = vmatprep.subr.mxu0 0.0
      %633 = vmatpush1.msra.mxu0 0.0
      %634 = vmatprep.subr.mxu0 0.0
      %635 = vmatpush1.msra.mxu0 0.0
      %636 = vmatprep.subr.mxu0 0.0
      %637 = vmatpush1.msra.mxu0 0.0
      %638 = vmatprep.subr.mxu0 0.0
      %639 = vmatpush1.msra.mxu0 0.0
      %640 = vmatprep.subr.mxu0 0.0
      %641 = vmatpush1.msra.mxu0 0.0
      %642 = vmatprep.subr.mxu0 0.0
      %643 = vmatpush1.msra.mxu0 0.0
      %644 = vmatprep.subr.mxu0 0.0
      %645 = vmatpush1.msra.mxu0 0.0
      %646 = vmatprep.subr.mxu0 0.0
      %647 = vmatpush1.msra.mxu0 0.0
      %648 = vmatprep.subr.mxu0 0.0
      %649 = vmatpush1.msra.mxu0 0.0
      %650 = vmatprep.subr.mxu0 0.0
      %651 = vmatpush1.msra.mxu0 0.0
      %652 = vmatprep.subr.mxu0 0.0
      %653 = vmatpush1.msra.mxu0 0.0
      %654 = vmatprep.subr.mxu0 0.0
      %655 = vmatpush1.msra.mxu0 0.0
      %656 = vmatprep.subr.mxu0 0.0
      %657 = vmatpush1.msra.mxu0 0.0
      %658 = vmatprep.subr.mxu0 0.0
      %659 = vmatpush1.msra.mxu0 0.0
      %660 = vmatprep.subr.mxu0 0.0
      %661 = vmatpush1.msra.mxu0 0.0
      %662 = vmatprep.mubr.f32.mxu0 0.0
      %663 = vmatmul.mubr.f32.gmra.mrb[0].mxu0 %v593
      %v664 = vpop.f32.mrb[0].mxu0
      %v665 = vadd.f32 %v584, %v664
      %v666 = vpop.f32.mrb[0].mxu0
      %667 = vmatprep.mubr.f32.mxu0 0.0
      %668 = vmatmul.mubr.f32.gmra.mrb[0].mxu0 %v596
      %v669 = vpop.f32.mrb[0].mxu0
      %v670 = vadd.f32 %v589, %v669
      %v671 = vpop.f32.mrb[0].mxu0
      %672 = vdwg.mxu0
      %v673 = vpack.c.bf16 %v670, %v665
      %v675 = vunpack.c.l.b16 %v673
      %v676 = vunpack.c.h.b16 %v673
      %v677 = vpack.c.b16 %v675, %v675
      %v678 = vpack.c.b16 %v676, %v676
      %vm681 = vcmask 519168
      %682 = vst.msk [vmem:[%s224] sm:$0xf] %vm681, %v677
      %683 = vst.msk [vmem:[%s224 + $0x4] sm:$0xf] %vm681, %v678
      %p684 = scmp.lt.s32.totalorder %s16, 1
      %s685 = scalar_select %p684, %s16, 1
      %s686 = smul.addr %s685, 2
      %s687 = smul.addr %s686, 4
      %s688 = scalar_lea.vmem %s5, %s687
      // Predicated region
      $region41: #{unet_with_backbone.8} parent=39 // pred_check
        %p689 = pneg %p144
      $region42: #{unet_with_backbone.8} parent=39 // pred_check_branch
        %691 = sbr.rel (%p689) target = $region44
      $region43: #{unet_with_backbone.8} parent=39 // pred_region
        _
      $region44: #{unet_with_backbone.8} parent=39 // pred_fallthru
        _
    $region40: #{unet_with_backbone.8} parent=5 // pred_fallthru
      _
    %p692 = scmp.le.s32.totalorder 2, %s11
    // Predicated region
    $region45: #{unet_with_backbone.8} parent=5 // pred_check
      %p693 = pneg %p692
    $region46: #{unet_with_backbone.8} parent=5 // pred_check_branch
      %695 = sbr.rel (%p693) target = $region48
    $region47: #{unet_with_backbone.8} parent=5 // pred_region
      %s696 = ssub.s32 %s11, 2
      // Predicated region
      $region49: #{unet_with_backbone.8} parent=47 // pred_check
        %p697 = pneg %p150
      $region50: #{unet_with_backbone.8} parent=47 // pred_check_branch
        %699 = sbr.rel (%p697) target = $region52
      $region51: #{unet_with_backbone.8} parent=47 // pred_region
        %p700 = scmp.lt.s32.totalorder %s17, 1
        %s701 = scalar_select %p700, %s17, 1
        %s702 = smul.addr %s701, 2
        %s703 = smul.addr %s702, 4
        %s704 = scalar_lea.vmem %s5, %s703
      $region52: #{unet_with_backbone.8} parent=47 // pred_fallthru
        _
    $region48: #{unet_with_backbone.8} parent=5 // pred_fallthru
      _
  $region6: #{unet_with_backbone.8} parent=0 // loop_footer
    %s15 = sadd.s32 1, %s11
  $region7: #{unet_with_backbone.8} parent=0 // loop_footer_branch
    %10 = sbr.rel target = $region3
  $region8: #{unet_with_backbone.8} parent=0 // loop_exit
    _

// kernel: unet_with_backbone.9
$region0: #{unet_with_backbone.9}
  #allocation0 [shape = 'u32[]', space=smem, size = 0x4, offset = 0x4, fixed_abs, tag = 'smem constant byte address 0x4 - core index']
  #allocation1 [shape = 'u32[144,128]{1,0:T(1,128)}', space=vmem, size = 0x12000, scoped, tag = 'internal scratch']
  #allocation2 [shape = 'f32[144,64]{1,0:T(8,128)}', space=vmem, size = 0x12000, scoped, tag = 'scratch operand']
  #allocation3 [shape = 'f32[16,320]{1,0:T(8,128)}', space=vmem, size = 0x6000, scoped, tag = 'scratch operand']
  %s0 = inlined_call_operand.vmem [shape: bf16[2,16,64], index: 0, kind: input, shape index: {}]
  %s1 = inlined_call_operand.vmem [shape: bf16[2,16,64], index: 1, kind: input, shape index: {}]
  %s2 = inlined_call_operand.vmem [shape: f32[16,16], index: 2, kind: input, shape index: {}]
  %s3 = inlined_call_operand.vmem [shape: f32[16,16], index: 3, kind: input, shape index: {}]
  %s4 = inlined_call_operand.vmem [shape: f32[16,1], index: 4, kind: input, shape index: {}]
  %s5 = inlined_call_operand.vmem [shape: f32[16,144], index: 5, kind: input, shape index: {}]
  %s6 = inlined_call_operand.vmem [shape: f32[16,1], index: 6, kind: input, shape index: {}]
  %s7 = inlined_call_operand.vmem [shape: f32[16,144], index: 7, kind: input, shape index: {}]
  %s8 = inlined_call_operand.vmem [shape: f32[16,1], index: 8, kind: input, shape index: {}]
  %s9 = inlined_call_operand.vmem [shape: f32[8,16], index: 9, kind: input, shape index: {}]
  %s10 = inlined_call_operand.vmem [shape: f32[8,1], index: 10, kind: input, shape index: {}]
  %s11 = inlined_call_operand.vmem [shape: bf16[2,8,64], index: 11, kind: output, shape index: {}]
  %s12 = sld [smem:[#allocation0]]
  $region77: #{unet_with_backbone.9} parent=0
    _
  %s14 = ssub.s32 1, %s12
  %s15 = scalar_select 0, %s14, %s12
  loop: start=0, step=1, limit=4
  $region2: #{unet_with_backbone.9} parent=0 // loop_pre_header
    _
  $region3: #{unet_with_backbone.9} parent=0 // loop_header
    %s17 = sphi 0, %s21
    %p18 = scmp.ge.s32.totalorder %s17, 4
    %s27 = sphi 0, %s29
    %s30 = sphi 0, %s27
    %s31 = sphi 0, %s30
    %s47 = sphi 0, %s31
    %s53 = sphi 0, %s55
    %s56 = sphi 0, %s53
    %s57 = sphi 0, %s56
    %s73 = sphi 0, %s57
    %s77 = sphi 0, %s77
    %s79 = sphi 0, %s77
    %s80 = sphi 0, %s79
    %s94 = sphi 0, %s80
    %s98 = sphi 0, %s98
    %s100 = sphi 0, %s98
    %s101 = sphi 0, %s100
    %s115 = sphi 0, %s101
    %s119 = sphi 0, %s119
    %s121 = sphi 0, %s119
    %s122 = sphi 0, %s121
    %s136 = sphi 0, %s122
    %s140 = sphi 0, %s140
    %s142 = sphi 0, %s140
    %s143 = sphi 0, %s142
    %s157 = sphi 0, %s143
    %s161 = sphi 0, %s161
    %s163 = sphi 0, %s161
    %s164 = sphi 0, %s163
    %s178 = sphi 0, %s164
    %s182 = sphi 0, %s182
    %s184 = sphi 0, %s182
    %s185 = sphi 0, %s184
    %s199 = sphi 0, %s185
    %s203 = sphi 0, %s203
    %s205 = sphi 0, %s203
    %s206 = sphi 0, %s205
    %s220 = sphi 0, %s206
    %s224 = sphi 0, %s224
    %s226 = sphi 0, %s224
    %s227 = sphi 0, %s226
    %s241 = sphi 0, %s227
    %s245 = sphi 0, %s245
    %s247 = sphi 0, %s245
    %s248 = sphi 0, %s247
    %s262 = sphi 0, %s248
    %s268 = sphi 0, %s270
    %s271 = sphi 0, %s268
    %s272 = sphi 0, %s271
    %s288 = sphi 0, %s272
  $region4: #{unet_with_backbone.9} parent=0 // loop_header_branch
    %20 = sbr.rel (%p18) target = $region8
  $region5: #{unet_with_backbone.9} parent=0 // loop_body
    %s22 = ssub.s32 %s17, 1
    %s23 = ssub.s32 %s17, 2
    %s24 = sadd.s32 %s17, 1
    %s25 = ssub.s32 %s17, %s24
    %p26 = scmp.eq.s32.totalorder %s25, 0
    %s28 = sadd.s32 %s27, 1
    %s29 = scalar_select %p26, %s27, %s28
    %p32 = pneg %p26
    %p33 = scmp.eq.s32.totalorder %s17, 1
    %p34 = por %p32, %p33
    %p35 = scmp.ne.s32.totalorder %s27, %s30
    %p36 = scmp.eq.s32.totalorder %s17, 0
    %p37 = por %p35, %p36
    %p38 = scmp.ne.s32.totalorder %s27, %s30
    %p39 = scmp.eq.s32.totalorder %s22, 1
    %p40 = por %p38, %p39
    %p41 = scmp.ne.s32.totalorder %s30, %s31
    %p42 = scmp.eq.s32.totalorder %s22, 0
    %p43 = por %p41, %p42
    %p44 = scmp.ne.s32.totalorder %s30, %s31
    %p45 = scmp.eq.s32.totalorder %s23, 1
    %p46 = por %p44, %p45
    %p48 = scmp.ne.s32.totalorder %s31, %s47
    %p49 = scmp.eq.s32.totalorder %s23, 0
    %p50 = por %p48, %p49
    %s51 = ssub.s32 %s17, %s24
    %p52 = scmp.eq.s32.totalorder %s51, 0
    %s54 = sadd.s32 %s53, 1
    %s55 = scalar_select %p52, %s53, %s54
    %p58 = pneg %p52
    %p59 = scmp.eq.s32.totalorder %s17, 1
    %p60 = por %p58, %p59
    %p61 = scmp.ne.s32.totalorder %s53, %s56
    %p62 = scmp.eq.s32.totalorder %s17, 0
    %p63 = por %p61, %p62
    %p64 = scmp.ne.s32.totalorder %s53, %s56
    %p65 = scmp.eq.s32.totalorder %s22, 1
    %p66 = por %p64, %p65
    %p67 = scmp.ne.s32.totalorder %s56, %s57
    %p68 = scmp.eq.s32.totalorder %s22, 0
    %p69 = por %p67, %p68
    %p70 = scmp.ne.s32.totalorder %s56, %s57
    %p71 = scmp.eq.s32.totalorder %s23, 1
    %p72 = por %p70, %p71
    %p74 = scmp.ne.s32.totalorder %s57, %s73
    %p75 = scmp.eq.s32.totalorder %s23, 0
    %p76 = por %p74, %p75
    %s78 = sadd.s32 %s77, 1
    %p81 = scmp.eq.s32.totalorder %s17, 1
    %p82 = scmp.ne.s32.totalorder %s77, %s79
    %p83 = scmp.eq.s32.totalorder %s17, 0
    %p84 = por %p82, %p83
    %p85 = scmp.ne.s32.totalorder %s77, %s79
    %p86 = scmp.eq.s32.totalorder %s22, 1
    %p87 = por %p85, %p86
    %p88 = scmp.ne.s32.totalorder %s79, %s80
    %p89 = scmp.eq.s32.totalorder %s22, 0
    %p90 = por %p88, %p89
    %p91 = scmp.ne.s32.totalorder %s79, %s80
    %p92 = scmp.eq.s32.totalorder %s23, 1
    %p93 = por %p91, %p92
    %p95 = scmp.ne.s32.totalorder %s80, %s94
    %p96 = scmp.eq.s32.totalorder %s23, 0
    %p97 = por %p95, %p96
    %s99 = sadd.s32 %s98, 1
    %p102 = scmp.eq.s32.totalorder %s17, 1
    %p103 = scmp.ne.s32.totalorder %s98, %s100
    %p104 = scmp.eq.s32.totalorder %s17, 0
    %p105 = por %p103, %p104
    %p106 = scmp.ne.s32.totalorder %s98, %s100
    %p107 = scmp.eq.s32.totalorder %s22, 1
    %p108 = por %p106, %p107
    %p109 = scmp.ne.s32.totalorder %s100, %s101
    %p110 = scmp.eq.s32.totalorder %s22, 0
    %p111 = por %p109, %p110
    %p112 = scmp.ne.s32.totalorder %s100, %s101
    %p113 = scmp.eq.s32.totalorder %s23, 1
    %p114 = por %p112, %p113
    %p116 = scmp.ne.s32.totalorder %s101, %s115
    %p117 = scmp.eq.s32.totalorder %s23, 0
    %p118 = por %p116, %p117
    %s120 = sadd.s32 %s119, 1
    %p123 = scmp.eq.s32.totalorder %s17, 1
    %p124 = scmp.ne.s32.totalorder %s119, %s121
    %p125 = scmp.eq.s32.totalorder %s17, 0
    %p126 = por %p124, %p125
    %p127 = scmp.ne.s32.totalorder %s119, %s121
    %p128 = scmp.eq.s32.totalorder %s22, 1
    %p129 = por %p127, %p128
    %p130 = scmp.ne.s32.totalorder %s121, %s122
    %p131 = scmp.eq.s32.totalorder %s22, 0
    %p132 = por %p130, %p131
    %p133 = scmp.ne.s32.totalorder %s121, %s122
    %p134 = scmp.eq.s32.totalorder %s23, 1
    %p135 = por %p133, %p134
    %p137 = scmp.ne.s32.totalorder %s122, %s136
    %p138 = scmp.eq.s32.totalorder %s23, 0
    %p139 = por %p137, %p138
    %s141 = sadd.s32 %s140, 1
    %p144 = scmp.eq.s32.totalorder %s17, 1
    %p145 = scmp.ne.s32.totalorder %s140, %s142
    %p146 = scmp.eq.s32.totalorder %s17, 0
    %p147 = por %p145, %p146
    %p148 = scmp.ne.s32.totalorder %s140, %s142
    %p149 = scmp.eq.s32.totalorder %s22, 1
    %p150 = por %p148, %p149
    %p151 = scmp.ne.s32.totalorder %s142, %s143
    %p152 = scmp.eq.s32.totalorder %s22, 0
    %p153 = por %p151, %p152
    %p154 = scmp.ne.s32.totalorder %s142, %s143
    %p155 = scmp.eq.s32.totalorder %s23, 1
    %p156 = por %p154, %p155
    %p158 = scmp.ne.s32.totalorder %s143, %s157
    %p159 = scmp.eq.s32.totalorder %s23, 0
    %p160 = por %p158, %p159
    %s162 = sadd.s32 %s161, 1
    %p165 = scmp.eq.s32.totalorder %s17, 1
    %p166 = scmp.ne.s32.totalorder %s161, %s163
    %p167 = scmp.eq.s32.totalorder %s17, 0
    %p168 = por %p166, %p167
    %p169 = scmp.ne.s32.totalorder %s161, %s163
    %p170 = scmp.eq.s32.totalorder %s22, 1
    %p171 = por %p169, %p170
    %p172 = scmp.ne.s32.totalorder %s163, %s164
    %p173 = scmp.eq.s32.totalorder %s22, 0
    %p174 = por %p172, %p173
    %p175 = scmp.ne.s32.totalorder %s163, %s164
    %p176 = scmp.eq.s32.totalorder %s23, 1
    %p177 = por %p175, %p176
    %p179 = scmp.ne.s32.totalorder %s164, %s178
    %p180 = scmp.eq.s32.totalorder %s23, 0
    %p181 = por %p179, %p180
    %s183 = sadd.s32 %s182, 1
    %p186 = scmp.eq.s32.totalorder %s17, 1
    %p187 = scmp.ne.s32.totalorder %s182, %s184
    %p188 = scmp.eq.s32.totalorder %s17, 0
    %p189 = por %p187, %p188
    %p190 = scmp.ne.s32.totalorder %s182, %s184
    %p191 = scmp.eq.s32.totalorder %s22, 1
    %p192 = por %p190, %p191
    %p193 = scmp.ne.s32.totalorder %s184, %s185
    %p194 = scmp.eq.s32.totalorder %s22, 0
    %p195 = por %p193, %p194
    %p196 = scmp.ne.s32.totalorder %s184, %s185
    %p197 = scmp.eq.s32.totalorder %s23, 1
    %p198 = por %p196, %p197
    %p200 = scmp.ne.s32.totalorder %s185, %s199
    %p201 = scmp.eq.s32.totalorder %s23, 0
    %p202 = por %p200, %p201
    %s204 = sadd.s32 %s203, 1
    %p207 = scmp.eq.s32.totalorder %s17, 1
    %p208 = scmp.ne.s32.totalorder %s203, %s205
    %p209 = scmp.eq.s32.totalorder %s17, 0
    %p210 = por %p208, %p209
    %p211 = scmp.ne.s32.totalorder %s203, %s205
    %p212 = scmp.eq.s32.totalorder %s22, 1
    %p213 = por %p211, %p212
    %p214 = scmp.ne.s32.totalorder %s205, %s206
    %p215 = scmp.eq.s32.totalorder %s22, 0
    %p216 = por %p214, %p215
    %p217 = scmp.ne.s32.totalorder %s205, %s206
    %p218 = scmp.eq.s32.totalorder %s23, 1
    %p219 = por %p217, %p218
    %p221 = scmp.ne.s32.totalorder %s206, %s220
    %p222 = scmp.eq.s32.totalorder %s23, 0
    %p223 = por %p221, %p222
    %s225 = sadd.s32 %s224, 1
    %p228 = scmp.eq.s32.totalorder %s17, 1
    %p229 = scmp.ne.s32.totalorder %s224, %s226
    %p230 = scmp.eq.s32.totalorder %s17, 0
    %p231 = por %p229, %p230
    %p232 = scmp.ne.s32.totalorder %s224, %s226
    %p233 = scmp.eq.s32.totalorder %s22, 1
    %p234 = por %p232, %p233
    %p235 = scmp.ne.s32.totalorder %s226, %s227
    %p236 = scmp.eq.s32.totalorder %s22, 0
    %p237 = por %p235, %p236
    %p238 = scmp.ne.s32.totalorder %s226, %s227
    %p239 = scmp.eq.s32.totalorder %s23, 1
    %p240 = por %p238, %p239
    %p242 = scmp.ne.s32.totalorder %s227, %s241
    %p243 = scmp.eq.s32.totalorder %s23, 0
    %p244 = por %p242, %p243
    %s246 = sadd.s32 %s245, 1
    %p249 = scmp.eq.s32.totalorder %s17, 1
    %p250 = scmp.ne.s32.totalorder %s245, %s247
    %p251 = scmp.eq.s32.totalorder %s17, 0
    %p252 = por %p250, %p251
    %p253 = scmp.ne.s32.totalorder %s245, %s247
    %p254 = scmp.eq.s32.totalorder %s22, 1
    %p255 = por %p253, %p254
    %p256 = scmp.ne.s32.totalorder %s247, %s248
    %p257 = scmp.eq.s32.totalorder %s22, 0
    %p258 = por %p256, %p257
    %p259 = scmp.ne.s32.totalorder %s247, %s248
    %p260 = scmp.eq.s32.totalorder %s23, 1
    %p261 = por %p259, %p260
    %p263 = scmp.ne.s32.totalorder %s248, %s262
    %p264 = scmp.eq.s32.totalorder %s23, 0
    %p265 = por %p263, %p264
    %s266 = ssub.s32 %s17, %s24
    %p267 = scmp.eq.s32.totalorder %s266, 0
    %s269 = sadd.s32 %s268, 1
    %s270 = scalar_select %p267, %s268, %s269
    %p273 = pneg %p267
    %p274 = scmp.eq.s32.totalorder %s17, 1
    %p275 = por %p273, %p274
    %p276 = scmp.ne.s32.totalorder %s268, %s271
    %p277 = scmp.eq.s32.totalorder %s17, 0
    %p278 = por %p276, %p277
    %p279 = scmp.ne.s32.totalorder %s268, %s271
    %p280 = scmp.eq.s32.totalorder %s22, 1
    %p281 = por %p279, %p280
    %p282 = scmp.ne.s32.totalorder %s271, %s272
    %p283 = scmp.eq.s32.totalorder %s22, 0
    %p284 = por %p282, %p283
    %p285 = scmp.ne.s32.totalorder %s271, %s272
    %p286 = scmp.eq.s32.totalorder %s23, 1
    %p287 = por %p285, %p286
    %p289 = scmp.ne.s32.totalorder %s272, %s288
    %p290 = scmp.eq.s32.totalorder %s23, 0
    %p291 = por %p289, %p290
    %p292 = scmp.le.s32.totalorder 1, %s17
    %p293 = scmp.lt.s32.totalorder %s17, 3
    %p294 = pnand %p292, %p293
    %p295 = pneg %p294
    // Predicated region
    $region9: #{unet_with_backbone.9} parent=5 // pred_check
      _
    $region10: #{unet_with_backbone.9} parent=5 // pred_check_branch
      %297 = sbr.rel (%p294) target = $region12
    $region11: #{unet_with_backbone.9} parent=5 // pred_region
      %s298 = ssub.s32 %s17, 1
      // Predicated region
      $region13: #{unet_with_backbone.9} parent=11 // pred_check
        %p299 = pneg %p90
      $region14: #{unet_with_backbone.9} parent=11 // pred_check_branch
        %301 = sbr.rel (%p299) target = $region16
      $region15: #{unet_with_backbone.9} parent=11 // pred_region
        _
      $region16: #{unet_with_backbone.9} parent=11 // pred_fallthru
        _
      // Predicated region
      $region17: #{unet_with_backbone.9} parent=11 // pred_check
        %p302 = pneg %p111
      $region18: #{unet_with_backbone.9} parent=11 // pred_check_branch
        %304 = sbr.rel (%p302) target = $region20
      $region19: #{unet_with_backbone.9} parent=11 // pred_region
        _
      $region20: #{unet_with_backbone.9} parent=11 // pred_fallthru
        _
      // Predicated region
      $region21: #{unet_with_backbone.9} parent=11 // pred_check
        %p305 = pneg %p132
      $region22: #{unet_with_backbone.9} parent=11 // pred_check_branch
        %307 = sbr.rel (%p305) target = $region24
      $region23: #{unet_with_backbone.9} parent=11 // pred_region
        _
      $region24: #{unet_with_backbone.9} parent=11 // pred_fallthru
        _
      // Predicated region
      $region25: #{unet_with_backbone.9} parent=11 // pred_check
        %p308 = pneg %p153
      $region26: #{unet_with_backbone.9} parent=11 // pred_check_branch
        %310 = sbr.rel (%p308) target = $region28
      $region27: #{unet_with_backbone.9} parent=11 // pred_region
        _
      $region28: #{unet_with_backbone.9} parent=11 // pred_fallthru
        _
      // Predicated region
      $region29: #{unet_with_backbone.9} parent=11 // pred_check
        %p311 = pneg %p174
      $region30: #{unet_with_backbone.9} parent=11 // pred_check_branch
        %313 = sbr.rel (%p311) target = $region32
      $region31: #{unet_with_backbone.9} parent=11 // pred_region
        _
      $region32: #{unet_with_backbone.9} parent=11 // pred_fallthru
        _
      // Predicated region
      $region33: #{unet_with_backbone.9} parent=11 // pred_check
        %p314 = pneg %p195
      $region34: #{unet_with_backbone.9} parent=11 // pred_check_branch
        %316 = sbr.rel (%p314) target = $region36
      $region35: #{unet_with_backbone.9} parent=11 // pred_region
        _
      $region36: #{unet_with_backbone.9} parent=11 // pred_fallthru
        _
      // Predicated region
      $region37: #{unet_with_backbone.9} parent=11 // pred_check
        %p317 = pneg %p216
      $region38: #{unet_with_backbone.9} parent=11 // pred_check_branch
        %319 = sbr.rel (%p317) target = $region40
      $region39: #{unet_with_backbone.9} parent=11 // pred_region
        _
      $region40: #{unet_with_backbone.9} parent=11 // pred_fallthru
        _
      // Predicated region
      $region41: #{unet_with_backbone.9} parent=11 // pred_check
        %p320 = pneg %p237
      $region42: #{unet_with_backbone.9} parent=11 // pred_check_branch
        %322 = sbr.rel (%p320) target = $region44
      $region43: #{unet_with_backbone.9} parent=11 // pred_region
        _
      $region44: #{unet_with_backbone.9} parent=11 // pred_fallthru
        _
      // Predicated region
      $region45: #{unet_with_backbone.9} parent=11 // pred_check
        %p323 = pneg %p258
      $region46: #{unet_with_backbone.9} parent=11 // pred_check_branch
        %325 = sbr.rel (%p323) target = $region48
      $region47: #{unet_with_backbone.9} parent=11 // pred_region
        _
      $region48: #{unet_with_backbone.9} parent=11 // pred_fallthru
        _
    $region12: #{unet_with_backbone.9} parent=5 // pred_fallthru
      _
    %p326 = scmp.lt.s32.totalorder %s17, 2
    // Predicated region
    $region49: #{unet_with_backbone.9} parent=5 // pred_check
      %p327 = pneg %p326
    $region50: #{unet_with_backbone.9} parent=5 // pred_check_branch
      %329 = sbr.rel (%p327) target = $region52
    $region51: #{unet_with_backbone.9} parent=5 // pred_region
      // Predicated region
      $region53: #{unet_with_backbone.9} parent=51 // pred_check
        %p330 = pneg %p37
      $region54: #{unet_with_backbone.9} parent=51 // pred_check_branch
        %332 = sbr.rel (%p330) target = $region56
      $region55: #{unet_with_backbone.9} parent=51 // pred_region
        %p333 = scmp.lt.s32.totalorder %s17, 1
        %s334 = scalar_select %p333, %s17, 1
        %s335 = smul.addr %s334, 2
        %s336 = smul.addr %s335, 4
        %s337 = scalar_lea.vmem %s0, %s336
      $region56: #{unet_with_backbone.9} parent=51 // pred_fallthru
        _
      // Predicated region
      $region57: #{unet_with_backbone.9} parent=51 // pred_check
        %p338 = pneg %p63
      $region58: #{unet_with_backbone.9} parent=51 // pred_check_branch
        %340 = sbr.rel (%p338) target = $region60
      $region59: #{unet_with_backbone.9} parent=51 // pred_region
        %p341 = scmp.lt.s32.totalorder %s17, 1
        %s342 = scalar_select %p341, %s17, 1
        %s343 = smul.addr %s342, 2
        %s344 = smul.addr %s343, 4
        %s345 = scalar_lea.vmem %s1, %s344
      $region60: #{unet_with_backbone.9} parent=51 // pred_fallthru
        _
    $region52: #{unet_with_backbone.9} parent=5 // pred_fallthru
      _
    %p346 = scmp.le.s32.totalorder 1, %s17
    %p347 = scmp.lt.s32.totalorder %s17, 3
    %p348 = pnand %p346, %p347
    %p349 = pneg %p348
    // Predicated region
    $region61: #{unet_with_backbone.9} parent=5 // pred_check
      _
    $region62: #{unet_with_backbone.9} parent=5 // pred_check_branch
      %351 = sbr.rel (%p348) target = $region64
    $region63: #{unet_with_backbone.9} parent=5 // pred_region
      %s352 = ssub.s32 %s17, 1
      %p353 = scmp.lt.s32.totalorder %s22, 1
      %s354 = scalar_select %p353, %s22, 1
      %s355 = smul.addr %s354, 2
      %s356 = smul.addr %s355, 4
      %s357 = scalar_lea.vmem %s0, %s356
      %p358 = pneg %p43
      %p359 = pneg %p40
      %p360 = scmp.lt.s32.totalorder %s22, 1
      %s361 = scalar_select %p360, %s22, 1
      %s362 = smul.addr %s361, 2
      %s363 = smul.addr %s362, 4
      %s364 = scalar_lea.vmem %s1, %s363
      %p365 = pneg %p69
      %p366 = pneg %p66
      %p367 = pneg %p90
      %p368 = pneg %p87
      %p369 = pneg %p111
      %p370 = pneg %p108
      %p371 = pneg %p132
      %p372 = pneg %p129
      %p373 = pneg %p153
      %p374 = pneg %p150
      %p375 = pneg %p174
      %p376 = pneg %p171
      %p377 = pneg %p195
      %p378 = pneg %p192
      %p379 = pneg %p216
      %p380 = pneg %p213
      %p381 = pneg %p237
      %p382 = pneg %p234
      %p383 = pneg %p258
      %p384 = pneg %p255
      %p385 = pneg %p284
      %p386 = pneg %p281
      %p387 = scmp.lt.s32.totalorder %s22, 1
      %s388 = scalar_select %p387, %s22, 1
      %s389 = smul.addr %s388, 4
      %s390 = scalar_lea.vmem %s11, %s389
      %p391 = scmp.lt.s32.totalorder %s22, 1
      %s392 = scalar_select %p391, %s22, 1
      %s393 = smul.addr %s392, 2
      %s394 = smul.addr %s393, 4
      %s395 = scalar_lea.vmem %s0, %s394
      %p396 = scmp.lt.s32.totalorder %s22, 1
      %s397 = scalar_select %p396, %s22, 1
      %s398 = smul.addr %s397, 2
      %s399 = smul.addr %s398, 4
      %s400 = scalar_lea.vmem %s1, %s399
      %p401 = scmp.lt.s32.totalorder %s22, 1
      %s402 = scalar_select %p401, %s22, 1
      %s403 = smul.addr %s402, 4
      %s404 = scalar_lea.vmem %s11, %s403
      %405 = vst [vmem:[#allocation3] sm:$0xff] 0.0
      %406 = vst [vmem:[#allocation3 + $0x8] sm:$0xff] 0.0
      %vm407 = vcmask 523264
      %408 = vst.msk [vmem:[#allocation3 + $0x10] sm:$0xff] %vm407, 0.0
      %409 = vst [vmem:[#allocation3 + $0x18] sm:$0xff] 0.0
      %410 = vst [vmem:[#allocation3 + $0x20] sm:$0xff] 0.0
      %411 = vst.msk [vmem:[#allocation3 + $0x28] sm:$0xff] %vm407, 0.0
      %v412 = vld [vmem:[%s395] sm:$0xf]
      %v413 = vld [vmem:[%s395 + $0x4] sm:$0xf]
      %v414 = vunpack.c.l.bf16 %v412
      %v415 = vunpack.c.l.bf16 %v413
      %v416 = vmax.f32 %v414, 0.0
      %v417 = vmax.f32 %v415, 0.0
      %v418 = vld [vmem:[%s400] sm:$0xf]
      %v419 = vld [vmem:[%s400 + $0x4] sm:$0xf]
      %v420 = vunpack.c.l.bf16 %v418
      %v421 = vunpack.c.l.bf16 %v419
      %v422 = vld [vmem:[%s2] sm:$0xff]
      %v423 = vld [vmem:[%s2 + $0x8] sm:$0xff]
      %v424 = vld [vmem:[%s3] sm:$0xff]
      %v425 = vld [vmem:[%s3 + $0x8] sm:$0xff]
      %vm426 = vcmask 130048
      %v428 = vsel %vm426, %v424, 0
      %v431 = vsel %vm426, %v425, 0
      %433 = vmatprep.subr.mxu0 0.0
      %434 = vmatpush1.msra.mxu0 %v420
      %435 = vmatprep.subr.mxu0 0.0
      %436 = vmatpush1.msra.mxu0 %v421
      %437 = vmatprep.subr.mxu0 0.0
      %438 = vmatpush1.msra.mxu0 0.0
      %439 = vmatprep.subr.mxu0 0.0
      %440 = vmatpush1.msra.mxu0 0.0
      %441 = vmatprep.subr.mxu0 0.0
      %442 = vmatpush1.msra.mxu0 0.0
      %443 = vmatprep.subr.mxu0 0.0
      %444 = vmatpush1.msra.mxu0 0.0
      %445 = vmatprep.subr.mxu0 0.0
      %446 = vmatpush1.msra.mxu0 0.0
      %447 = vmatprep.subr.mxu0 0.0
      %448 = vmatpush1.msra.mxu0 0.0
      %449 = vmatprep.subr.mxu0 0.0
      %450 = vmatpush1.msra.mxu0 0.0
      %451 = vmatprep.subr.mxu0 0.0
      %452 = vmatpush1.msra.mxu0 0.0
      %453 = vmatprep.subr.mxu0 0.0
      %454 = vmatpush1.msra.mxu0 0.0
      %455 = vmatprep.subr.mxu0 0.0
      %456 = vmatpush1.msra.mxu0 0.0
      %457 = vmatprep.subr.mxu0 0.0
      %458 = vmatpush1.msra.mxu0 0.0
      %459 = vmatprep.subr.mxu0 0.0
      %460 = vmatpush1.msra.mxu0 0.0
      %461 = vmatprep.subr.mxu0 0.0
      %462 = vmatpush1.msra.mxu0 0.0
      %463 = vmatprep.subr.mxu0 0.0
      %464 = vmatpush1.msra.mxu0 0.0
      %465 = vmatprep.subr.mxu0 0.0
      %466 = vmatpush1.msra.mxu0 0.0
      %467 = vmatprep.subr.mxu0 0.0
      %468 = vmatpush1.msra.mxu0 0.0
      %469 = vmatprep.subr.mxu0 0.0
      %470 = vmatpush1.msra.mxu0 0.0
      %471 = vmatprep.subr.mxu0 0.0
      %472 = vmatpush1.msra.mxu0 0.0
      %473 = vmatprep.subr.mxu0 0.0
      %474 = vmatpush1.msra.mxu0 0.0
      %475 = vmatprep.subr.mxu0 0.0
      %476 = vmatpush1.msra.mxu0 0.0
      %477 = vmatprep.subr.mxu0 0.0
      %478 = vmatpush1.msra.mxu0 0.0
      %479 = vmatprep.subr.mxu0 0.0
      %480 = vmatpush1.msra.mxu0 0.0
      %481 = vmatprep.subr.mxu0 0.0
      %482 = vmatpush1.msra.mxu0 0.0
      %483 = vmatprep.subr.mxu0 0.0
      %484 = vmatpush1.msra.mxu0 0.0
      %485 = vmatprep.subr.mxu0 0.0
      %486 = vmatpush1.msra.mxu0 0.0
      %487 = vmatprep.subr.mxu0 0.0
      %488 = vmatpush1.msra.mxu0 0.0
      %489 = vmatprep.subr.mxu0 0.0
      %490 = vmatpush1.msra.mxu0 0.0
      %491 = vmatprep.subr.mxu0 0.0
      %492 = vmatpush1.msra.mxu0 0.0
      %493 = vmatprep.subr.mxu0 0.0
      %494 = vmatpush1.msra.mxu0 0.0
      %495 = vmatprep.subr.mxu0 0.0
      %496 = vmatpush1.msra.mxu0 0.0
      %497 = vmatprep.mubr.f32.mxu0 0.0
      %498 = vmatmul.mubr.f32.gmra.mrb[0].mxu0 %v428
      %v499 = vpop.f32.mrb[0].mxu0
      %v500 = vadd.f32 0.0, %v499
      %v501 = vpop.f32.mrb[0].mxu0
      %502 = vmatprep.mubr.f32.mxu0 0.0
      %503 = vmatmul.mubr.f32.gmra.mrb[0].mxu0 %v431
      %v504 = vpop.f32.mrb[0].mxu0
      %v505 = vadd.f32 0.0, %v504
      %v506 = vpop.f32.mrb[0].mxu0
      %507 = vdwg.mxu0
      %v509 = vsel %vm426, %v422, 0
      %v512 = vsel %vm426, %v423, 0
      %514 = vmatprep.subr.mxu0 0.0
      %515 = vmatpush1.msra.mxu0 %v416
      %516 = vmatprep.subr.mxu0 0.0
      %517 = vmatpush1.msra.mxu0 %v417
      %518 = vmatprep.subr.mxu0 0.0
      %519 = vmatpush1.msra.mxu0 0.0
      %520 = vmatprep.subr.mxu0 0.0
      %521 = vmatpush1.msra.mxu0 0.0
      %522 = vmatprep.subr.mxu0 0.0
      %523 = vmatpush1.msra.mxu0 0.0
      %524 = vmatprep.subr.mxu0 0.0
      %525 = vmatpush1.msra.mxu0 0.0
      %526 = vmatprep.subr.mxu0 0.0
      %527 = vmatpush1.msra.mxu0 0.0
      %528 = vmatprep.subr.mxu0 0.0
      %529 = vmatpush1.msra.mxu0 0.0
      %530 = vmatprep.subr.mxu0 0.0
      %531 = vmatpush1.msra.mxu0 0.0
      %532 = vmatprep.subr.mxu0 0.0
      %533 = vmatpush1.msra.mxu0 0.0
      %534 = vmatprep.subr.mxu0 0.0
      %535 = vmatpush1.msra.mxu0 0.0
      %536 = vmatprep.subr.mxu0 0.0
      %537 = vmatpush1.msra.mxu0 0.0
      %538 = vmatprep.subr.mxu0 0.0
      %539 = vmatpush1.msra.mxu0 0.0
      %540 = vmatprep.subr.mxu0 0.0
      %541 = vmatpush1.msra.mxu0 0.0
      %542 = vmatprep.subr.mxu0 0.0
      %543 = vmatpush1.msra.mxu0 0.0
      %544 = vmatprep.subr.mxu0 0.0
      %545 = vmatpush1.msra.mxu0 0.0
      %546 = vmatprep.subr.mxu0 0.0
      %547 = vmatpush1.msra.mxu0 0.0
      %548 = vmatprep.subr.mxu0 0.0
      %549 = vmatpush1.msra.mxu0 0.0
      %550 = vmatprep.subr.mxu0 0.0
      %551 = vmatpush1.msra.mxu0 0.0
      %552 = vmatprep.subr.mxu0 0.0
      %553 = vmatpush1.msra.mxu0 0.0
      %554 = vmatprep.subr.mxu0 0.0
      %555 = vmatpush1.msra.mxu0 0.0
      %556 = vmatprep.subr.mxu0 0.0
      %557 = vmatpush1.msra.mxu0 0.0
      %558 = vmatprep.subr.mxu0 0.0
      %559 = vmatpush1.msra.mxu0 0.0
      %560 = vmatprep.subr.mxu0 0.0
      %561 = vmatpush1.msra.mxu0 0.0
      %562 = vmatprep.subr.mxu0 0.0
      %563 = vmatpush1.msra.mxu0 0.0
      %564 = vmatprep.subr.mxu0 0.0
      %565 = vmatpush1.msra.mxu0 0.0
      %566 = vmatprep.subr.mxu0 0.0
      %567 = vmatpush1.msra.mxu0 0.0
      %568 = vmatprep.subr.mxu0 0.0
      %569 = vmatpush1.msra.mxu0 0.0
      %570 = vmatprep.subr.mxu0 0.0
      %571 = vmatpush1.msra.mxu0 0.0
      %572 = vmatprep.subr.mxu0 0.0
      %573 = vmatpush1.msra.mxu0 0.0
      %574 = vmatprep.subr.mxu0 0.0
      %575 = vmatpush1.msra.mxu0 0.0
      %576 = vmatprep.subr.mxu0 0.0
      %577 = vmatpush1.msra.mxu0 0.0
      %578 = vmatprep.mubr.f32.mxu0 0.0
      %579 = vmatmul.mubr.f32.gmra.mrb[0].mxu0 %v509
      %v580 = vpop.f32.mrb[0].mxu0
      %v581 = vadd.f32 %v500, %v580
      %v582 = vpop.f32.mrb[0].mxu0
      %583 = vmatprep.mubr.f32.mxu0 0.0
      %584 = vmatmul.mubr.f32.gmra.mrb[0].mxu0 %v512
      %v585 = vpop.f32.mrb[0].mxu0
      %v586 = vadd.f32 %v505, %v585
      %v587 = vpop.f32.mrb[0].mxu0
      %588 = vdwg.mxu0
      %v589 = vld [vmem:[%s4] sm:$0xff]
      %v590 = vld [vmem:[%s4 + $0x8] sm:$0xff]
      %592 = vset.pattern.permute.xlu0 0
      %593 = vperm.xlu0 %592, %v589
      %v594 = vpop.permute.xlu0 %593
      %597 = vset.pattern.permute.xlu0 0
      %598 = vperm.xlu0 %597, %v590
      %v599 = vpop.permute.xlu0 %598
      %v601 = vadd.f32 %v581, %v594
      %v602 = vadd.f32 %v586, %v599
      %v603 = vmax.f32 %v601, 0.0
      %v604 = vmax.f32 %v602, 0.0
      %605 = vst.msk [vmem:[#allocation3 + $0x8] sm:$0xff] %vm407, %v603
      %606 = vst.msk [vmem:[#allocation3 + $0x20] sm:$0xff] %vm407, %v604
      %v607 = vlaneseq
      %v608 = vand.u32 %v607, 127
      %v609 = vand.u32 %v608, 7
      %v610 = vshra.s32 %v608, 3
      %v611 = vand.u32 %v610, 7
      %vm612 = vcmp.ge.s32.totalorder %v611, 1
      %vm613 = vcmp.ge.s32.totalorder %v609, 1
      %v614 = vld [vmem:[#allocation3] sm:$0xff]
      %v615 = vld [vmem:[#allocation3 + $0x8] sm:$0xff]
      %v616 = vld [vmem:[#allocation3 + $0x18] sm:$0xff]
      %v617 = vld [vmem:[#allocation3 + $0x20] sm:$0xff]
      %vm618 = vmand %vm612, %vm613
      %v619 = vsel %vm618, 1, 0
      %vm620 = vcmp.eq.s32.totalorder %v619, 1
      %625 = vrot.lane.b32.xlu0 %v614, 9
      %v626 = vpop.permute.xlu0 %625
      %627 = vrot.lane.b32.xlu0 %v615, 9
      %v628 = vpop.permute.xlu0 %627
      %629 = vrot.lane.b32.xlu0 %v616, 9
      %v630 = vpop.permute.xlu0 %629
      %631 = vrot.lane.b32.xlu0 %v617, 9
      %v632 = vpop.permute.xlu0 %631
      %vm633 = vcmask 72704
      %v634 = vsel %vm633, %v626, %v628
      %v635 = vsel %vm633, %v630, %v632
      %v638 = vsel %vm620, %v634, 0.0
      %v639 = vsel %vm620, %v635, 0.0
      %640 = vst.msk [vmem:[#allocation2] sm:$0xff] %vm407, %v638
      %641 = vst.msk [vmem:[#allocation2 + $0x8] sm:$0xff] %vm407, %v639
      %v642 = vld [vmem:[#allocation3] sm:$0xff]
      %v643 = vld [vmem:[#allocation3 + $0x8] sm:$0xff]
      %v644 = vld [vmem:[#allocation3 + $0x18] sm:$0xff]
      %v645 = vld [vmem:[#allocation3 + $0x20] sm:$0xff]
      %v646 = vsel %vm612, 1, 0
      %vm647 = vcmp.eq.s32.totalorder %v646, 1
      %652 = vrot.lane.b32.xlu0 %v642, 8
      %v653 = vpop.permute.xlu0 %652
      %654 = vrot.lane.b32.xlu0 %v643, 8
      %v655 = vpop.permute.xlu0 %654
      %656 = vrot.lane.b32.xlu0 %v644, 8
      %v657 = vpop.permute.xlu0 %656
      %658 = vrot.lane.b32.xlu0 %v645, 8
      %v659 = vpop.permute.xlu0 %658
      %vm660 = vcmask 64512
      %v661 = vsel %vm660, %v653, %v655
      %v662 = vsel %vm660, %v657, %v659
      %v665 = vsel %vm647, %v661, 0.0
      %v666 = vsel %vm647, %v662, 0.0
      %667 = vst.msk [vmem:[#allocation2 + $0x10] sm:$0xff] %vm407, %v665
      %668 = vst.msk [vmem:[#allocation2 + $0x18] sm:$0xff] %vm407, %v666
      %vm669 = vcmp.le.s32.totalorder %v609, 6
      %v670 = vld [vmem:[#allocation3] sm:$0xff]
      %v671 = vld [vmem:[#allocation3 + $0x8] sm:$0xff]
      %v672 = vld [vmem:[#allocation3 + $0x18] sm:$0xff]
      %v673 = vld [vmem:[#allocation3 + $0x20] sm:$0xff]
      %vm674 = vmand %vm612, %vm669
      %v675 = vsel %vm674, 1, 0
      %vm676 = vcmp.eq.s32.totalorder %v675, 1
      %681 = vrot.lane.b32.xlu0 %v670, 7
      %v682 = vpop.permute.xlu0 %681
      %683 = vrot.lane.b32.xlu0 %v671, 7
      %v684 = vpop.permute.xlu0 %683
      %685 = vrot.lane.b32.xlu0 %v672, 7
      %v686 = vpop.permute.xlu0 %685
      %687 = vrot.lane.b32.xlu0 %v673, 7
      %v688 = vpop.permute.xlu0 %687
      %vm689 = vcmask 56320
      %v690 = vsel %vm689, %v682, %v684
      %v691 = vsel %vm689, %v686, %v688
      %v694 = vsel %vm676, %v690, 0.0
      %v695 = vsel %vm676, %v691, 0.0
      %696 = vst.msk [vmem:[#allocation2 + $0x20] sm:$0xff] %vm407, %v694
      %697 = vst.msk [vmem:[#allocation2 + $0x28] sm:$0xff] %vm407, %v695
      %v698 = vld [vmem:[#allocation3] sm:$0xff]
      %v699 = vld [vmem:[#allocation3 + $0x8] sm:$0xff]
      %v700 = vld [vmem:[#allocation3 + $0x18] sm:$0xff]
      %v701 = vld [vmem:[#allocation3 + $0x20] sm:$0xff]
      %v702 = vsel %vm613, 1, 0
      %vm703 = vcmp.eq.s32.totalorder %v702, 1
      %708 = vrot.lane.b32.xlu0 %v698, 1
      %v709 = vpop.permute.xlu0 %708
      %710 = vrot.lane.b32.xlu0 %v699, 1
      %v711 = vpop.permute.xlu0 %710
      %712 = vrot.lane.b32.xlu0 %v700, 1
      %v713 = vpop.permute.xlu0 %712
      %714 = vrot.lane.b32.xlu0 %v701, 1
      %v715 = vpop.permute.xlu0 %714
      %vm716 = vcmask 7168
      %v717 = vsel %vm716, %v709, %v711
      %v718 = vsel %vm716, %v713, %v715
      %v721 = vsel %vm703, %v717, 0.0
      %v722 = vsel %vm703, %v718, 0.0
      %723 = vst.msk [vmem:[#allocation2 + $0x30] sm:$0xff] %vm407, %v721
      %724 = vst.msk [vmem:[#allocation2 + $0x38] sm:$0xff] %vm407, %v722
      %725 = vst.msk [vmem:[#allocation2 + $0x40] sm:$0xff] %vm407, %v603
      %726 = vst.msk [vmem:[#allocation2 + $0x48] sm:$0xff] %vm407, %v604
      %v727 = vld [vmem:[#allocation3 + $0x8] sm:$0xff]
      %v728 = vld [vmem:[#allocation3 + $0x20] sm:$0xff]
      %v729 = vsel %vm669, 1, 0
      %vm730 = vcmp.eq.s32.totalorder %v729, 1
      %733 = vrot.lane.b32.xlu0 %v727, 127
      %v734 = vpop.permute.xlu0 %733
      %735 = vrot.lane.b32.xlu0 %v728, 127
      %v736 = vpop.permute.xlu0 %735
      %v739 = vsel %vm730, %v734, 0.0
      %v740 = vsel %vm730, %v736, 0.0
      %741 = vst.msk [vmem:[#allocation2 + $0x50] sm:$0xff] %vm407, %v739
      %742 = vst.msk [vmem:[#allocation2 + $0x58] sm:$0xff] %vm407, %v740
      %vm743 = vcmp.le.s32.totalorder %v611, 6
      %v744 = vld [vmem:[#allocation3 + $0x8] sm:$0xff]
      %v745 = vld [vmem:[#allocation3 + $0x20] sm:$0xff]
      %vm746 = vmand %vm743, %vm613
      %v747 = vsel %vm746, 1, 0
      %vm748 = vcmp.eq.s32.totalorder %v747, 1
      %751 = vrot.lane.b32.xlu0 %v744, 121
      %v752 = vpop.permute.xlu0 %751
      %753 = vrot.lane.b32.xlu0 %v745, 121
      %v754 = vpop.permute.xlu0 %753
      %v757 = vsel %vm748, %v752, 0.0
      %v758 = vsel %vm748, %v754, 0.0
      %759 = vst.msk [vmem:[#allocation2 + $0x60] sm:$0xff] %vm407, %v757
      %760 = vst.msk [vmem:[#allocation2 + $0x68] sm:$0xff] %vm407, %v758
      %v761 = vld [vmem:[#allocation3 + $0x8] sm:$0xff]
      %v762 = vld [vmem:[#allocation3 + $0x20] sm:$0xff]
      %v763 = vsel %vm743, 1, 0
      %vm764 = vcmp.eq.s32.totalorder %v763, 1
      %767 = vrot.lane.b32.xlu0 %v761, 120
      %v768 = vpop.permute.xlu0 %767
      %769 = vrot.lane.b32.xlu0 %v762, 120
      %v770 = vpop.permute.xlu0 %769
      %v773 = vsel %vm764, %v768, 0.0
      %v774 = vsel %vm764, %v770, 0.0
      %775 = vst.msk [vmem:[#allocation2 + $0x70] sm:$0xff] %vm407, %v773
      %776 = vst.msk [vmem:[#allocation2 + $0x78] sm:$0xff] %vm407, %v774
      %v777 = vld [vmem:[#allocation3 + $0x8] sm:$0xff]
      %v778 = vld [vmem:[#allocation3 + $0x20] sm:$0xff]
      %vm779 = vmand %vm743, %vm669
      %v780 = vsel %vm779, 1, 0
      %vm781 = vcmp.eq.s32.totalorder %v780, 1
      %784 = vrot.lane.b32.xlu0 %v777, 119
      %v785 = vpop.permute.xlu0 %784
      %786 = vrot.lane.b32.xlu0 %v778, 119
      %v787 = vpop.permute.xlu0 %786
      %v790 = vsel %vm781, %v785, 0.0
      %v791 = vsel %vm781, %v787, 0.0
      %792 = vst.msk [vmem:[#allocation2 + $0x80] sm:$0xff] %vm407, %v790
      %793 = vst.msk [vmem:[#allocation2 + $0x88] sm:$0xff] %vm407, %v791
      %v794 = vld [vmem:[%s5] sm:$0xff]
      %v795 = vld [vmem:[%s5 + $0x8] sm:$0xff]
      %v796 = vld [vmem:[%s5 + $0x10] sm:$0xff]
      %v797 = vld [vmem:[%s5 + $0x18] sm:$0xff]
      %v798 = vld [vmem:[#allocation2] sm:$0xff]
      %v799 = vld [vmem:[#allocation2 + $0x8] sm:$0xff]
      %v800 = vld [vmem:[#allocation2 + $0x10] sm:$0xff]
      %v801 = vld [vmem:[#allocation2 + $0x18] sm:$0xff]
      %v802 = vld [vmem:[#allocation2 + $0x20] sm:$0xff]
      %v803 = vld [vmem:[#allocation2 + $0x28] sm:$0xff]
      %v804 = vld [vmem:[#allocation2 + $0x30] sm:$0xff]
      %v805 = vld [vmem:[#allocation2 + $0x38] sm:$0xff]
      %v806 = vld [vmem:[#allocation2 + $0x40] sm:$0xff]
      %v807 = vld [vmem:[#allocation2 + $0x48] sm:$0xff]
      %v808 = vld [vmem:[#allocation2 + $0x50] sm:$0xff]
      %v809 = vld [vmem:[#allocation2 + $0x58] sm:$0xff]
      %v810 = vld [vmem:[#allocation2 + $0x60] sm:$0xff]
      %v811 = vld [vmem:[#allocation2 + $0x68] sm:$0xff]
      %v812 = vld [vmem:[#allocation2 + $0x70] sm:$0xff]
      %v813 = vld [vmem:[#allocation2 + $0x78] sm:$0xff]
      %v814 = vld [vmem:[#allocation2 + $0x80] sm:$0xff]
      %v815 = vld [vmem:[#allocation2 + $0x88] sm:$0xff]
      %v816 = vld [vmem:[%s6] sm:$0xff]
      %v817 = vld [vmem:[%s6 + $0x8] sm:$0xff]
      %819 = vset.pattern.permute.xlu0 0
      %820 = vperm.xlu0 %819, %v816
      %v821 = vpop.permute.xlu0 %820
      %824 = vset.pattern.permute.xlu0 0
      %825 = vperm.xlu0 %824, %v817
      %v826 = vpop.permute.xlu0 %825
      %v829 = vsel %vm426, %v795, 0
      %v832 = vsel %vm426, %v797, 0
      %834 = vmatprep.subr.mxu0 0.0
      %835 = vmatpush1.msra.mxu0 %v798
      %836 = vmatprep.subr.mxu0 0.0
      %837 = vmatpush1.msra.mxu0 %v799
      %838 = vmatprep.subr.mxu0 0.0
      %839 = vmatpush1.msra.mxu0 %v800
      %840 = vmatprep.subr.mxu0 0.0
      %841 = vmatpush1.msra.mxu0 %v801
      %842 = vmatprep.subr.mxu0 0.0
      %843 = vmatpush1.msra.mxu0 %v802
      %844 = vmatprep.subr.mxu0 0.0
      %845 = vmatpush1.msra.mxu0 %v803
      %846 = vmatprep.subr.mxu0 0.0
      %847 = vmatpush1.msra.mxu0 %v804
      %848 = vmatprep.subr.mxu0 0.0
      %849 = vmatpush1.msra.mxu0 %v805
      %850 = vmatprep.subr.mxu0 0.0
      %851 = vmatpush1.msra.mxu0 %v806
      %852 = vmatprep.subr.mxu0 0.0
      %853 = vmatpush1.msra.mxu0 %v807
      %854 = vmatprep.subr.mxu0 0.0
      %855 = vmatpush1.msra.mxu0 %v808
      %856 = vmatprep.subr.mxu0 0.0
      %857 = vmatpush1.msra.mxu0 %v809
      %858 = vmatprep.subr.mxu0 0.0
      %859 = vmatpush1.msra.mxu0 %v810
      %860 = vmatprep.subr.mxu0 0.0
      %861 = vmatpush1.msra.mxu0 %v811
      %862 = vmatprep.subr.mxu0 0.0
      %863 = vmatpush1.msra.mxu0 %v812
      %864 = vmatprep.subr.mxu0 0.0
      %865 = vmatpush1.msra.mxu0 %v813
      %866 = vmatprep.subr.mxu0 0.0
      %867 = vmatpush1.msra.mxu0 %v814
      %868 = vmatprep.subr.mxu0 0.0
      %869 = vmatpush1.msra.mxu0 %v815
      %870 = vmatprep.subr.mxu0 0.0
      %871 = vmatpush1.msra.mxu0 0.0
      %872 = vmatprep.subr.mxu0 0.0
      %873 = vmatpush1.msra.mxu0 0.0
      %874 = vmatprep.subr.mxu0 0.0
      %875 = vmatpush1.msra.mxu0 0.0
      %876 = vmatprep.subr.mxu0 0.0
      %877 = vmatpush1.msra.mxu0 0.0
      %878 = vmatprep.subr.mxu0 0.0
      %879 = vmatpush1.msra.mxu0 0.0
      %880 = vmatprep.subr.mxu0 0.0
      %881 = vmatpush1.msra.mxu0 0.0
      %882 = vmatprep.subr.mxu0 0.0
      %883 = vmatpush1.msra.mxu0 0.0
      %884 = vmatprep.subr.mxu0 0.0
      %885 = vmatpush1.msra.mxu0 0.0
      %886 = vmatprep.subr.mxu0 0.0
      %887 = vmatpush1.msra.mxu0 0.0
      %888 = vmatprep.subr.mxu0 0.0
      %889 = vmatpush1.msra.mxu0 0.0
      %890 = vmatprep.subr.mxu0 0.0
      %891 = vmatpush1.msra.mxu0 0.0
      %892 = vmatprep.subr.mxu0 0.0
      %893 = vmatpush1.msra.mxu0 0.0
      %894 = vmatprep.subr.mxu0 0.0
      %895 = vmatpush1.msra.mxu0 0.0
      %896 = vmatprep.subr.mxu0 0.0
      %897 = vmatpush1.msra.mxu0 0.0
      %898 = vmatprep.mubr.f32.mxu0 %v829
      %899 = vmatmul.mubr.f32.gmra.mrb[0].mxu0 %v794
      %v900 = vpop.f32.mrb[0].mxu0
      %v901 = vadd.f32 %v821, %v900
      %v902 = vpop.f32.mrb[0].mxu0
      %903 = vmatprep.mubr.f32.mxu0 %v832
      %904 = vmatmul.mubr.f32.gmra.mrb[0].mxu0 %v796
      %v905 = vpop.f32.mrb[0].mxu0
      %v906 = vadd.f32 %v826, %v905
      %v907 = vpop.f32.mrb[0].mxu0
      %908 = vdwg.mxu0
      %v909 = vmax.f32 %v901, 0.0
      %v910 = vmax.f32 %v906, 0.0
      %911 = vst.msk [vmem:[#allocation3 + $0x8] sm:$0xff] %vm407, %v909
      %912 = vst.msk [vmem:[#allocation3 + $0x20] sm:$0xff] %vm407, %v910
      %v913 = vld [vmem:[#allocation3] sm:$0xff]
      %v914 = vld [vmem:[#allocation3 + $0x8] sm:$0xff]
      %v915 = vld [vmem:[#allocation3 + $0x18] sm:$0xff]
      %v916 = vld [vmem:[#allocation3 + $0x20] sm:$0xff]
      %921 = vrot.lane.b32.xlu0 %v913, 9
      %v922 = vpop.permute.xlu0 %921
      %923 = vrot.lane.b32.xlu0 %v914, 9
      %v924 = vpop.permute.xlu0 %923
      %925 = vrot.lane.b32.xlu0 %v915, 9
      %v926 = vpop.permute.xlu0 %925
      %927 = vrot.lane.b32.xlu0 %v916, 9
      %v928 = vpop.permute.xlu0 %927
      %v929 = vsel %vm633, %v922, %v924
      %v930 = vsel %vm633, %v926, %v928
      %v933 = vsel %vm620, %v929, 0.0
      %v934 = vsel %vm620, %v930, 0.0
      %935 = vst.msk [vmem:[#allocation2] sm:$0xff] %vm407, %v933
      %936 = vst.msk [vmem:[#allocation2 + $0x8] sm:$0xff] %vm407, %v934
      %v937 = vld [vmem:[#allocation3] sm:$0xff]
      %v938 = vld [vmem:[#allocation3 + $0x8] sm:$0xff]
      %v939 = vld [vmem:[#allocation3 + $0x18] sm:$0xff]
      %v940 = vld [vmem:[#allocation3 + $0x20] sm:$0xff]
      %945 = vrot.lane.b32.xlu0 %v937, 8
      %v946 = vpop.permute.xlu0 %945
      %947 = vrot.lane.b32.xlu0 %v938, 8
      %v948 = vpop.permute.xlu0 %947
      %949 = vrot.lane.b32.xlu0 %v939, 8
      %v950 = vpop.permute.xlu0 %949
      %951 = vrot.lane.b32.xlu0 %v940, 8
      %v952 = vpop.permute.xlu0 %951
      %v953 = vsel %vm660, %v946, %v948
      %v954 = vsel %vm660, %v950, %v952
      %v957 = vsel %vm647, %v953, 0.0
      %v958 = vsel %vm647, %v954, 0.0
      %959 = vst.msk [vmem:[#allocation2 + $0x10] sm:$0xff] %vm407, %v957
      %960 = vst.msk [vmem:[#allocation2 + $0x18] sm:$0xff] %vm407, %v958
      %v961 = vld [vmem:[#allocation3] sm:$0xff]
      %v962 = vld [vmem:[#allocation3 + $0x8] sm:$0xff]
      %v963 = vld [vmem:[#allocation3 + $0x18] sm:$0xff]
      %v964 = vld [vmem:[#allocation3 + $0x20] sm:$0xff]
      %969 = vrot.lane.b32.xlu0 %v961, 7
      %v970 = vpop.permute.xlu0 %969
      %971 = vrot.lane.b32.xlu0 %v962, 7
      %v972 = vpop.permute.xlu0 %971
      %973 = vrot.lane.b32.xlu0 %v963, 7
      %v974 = vpop.permute.xlu0 %973
      %975 = vrot.lane.b32.xlu0 %v964, 7
      %v976 = vpop.permute.xlu0 %975
      %v977 = vsel %vm689, %v970, %v972
      %v978 = vsel %vm689, %v974, %v976
      %v981 = vsel %vm676, %v977, 0.0
      %v982 = vsel %vm676, %v978, 0.0
      %983 = vst.msk [vmem:[#allocation2 + $0x20] sm:$0xff] %vm407, %v981
      %984 = vst.msk [vmem:[#allocation2 + $0x28] sm:$0xff] %vm407, %v982
      %v985 = vld [vmem:[#allocation3] sm:$0xff]
      %v986 = vld [vmem:[#allocation3 + $0x8] sm:$0xff]
      %v987 = vld [vmem:[#allocation3 + $0x18] sm:$0xff]
      %v988 = vld [vmem:[#allocation3 + $0x20] sm:$0xff]
      %993 = vrot.lane.b32.xlu0 %v985, 1
      %v994 = vpop.permute.xlu0 %993
      %995 = vrot.lane.b32.xlu0 %v986, 1
      %v996 = vpop.permute.xlu0 %995
      %997 = vrot.lane.b32.xlu0 %v987, 1
      %v998 = vpop.permute.xlu0 %997
      %999 = vrot.lane.b32.xlu0 %v988, 1
      %v1000 = vpop.permute.xlu0 %999
      %v1001 = vsel %vm716, %v994, %v996
      %v1002 = vsel %vm716, %v998, %v1000
      %v1005 = vsel %vm703, %v1001, 0.0
      %v1006 = vsel %vm703, %v1002, 0.0
      %1007 = vst.msk [vmem:[#allocation2 + $0x30] sm:$0xff] %vm407, %v1005
      %1008 = vst.msk [vmem:[#allocation2 + $0x38] sm:$0xff] %vm407, %v1006
      %1009 = vst.msk [vmem:[#allocation2 + $0x40] sm:$0xff] %vm407, %v909
      %1010 = vst.msk [vmem:[#allocation2 + $0x48] sm:$0xff] %vm407, %v910
      %v1011 = vld [vmem:[#allocation3 + $0x8] sm:$0xff]
      %v1012 = vld [vmem:[#allocation3 + $0x20] sm:$0xff]
      %1015 = vrot.lane.b32.xlu0 %v1011, 127
      %v1016 = vpop.permute.xlu0 %1015
      %1017 = vrot.lane.b32.xlu0 %v1012, 127
      %v1018 = vpop.permute.xlu0 %1017
      %v1021 = vsel %vm730, %v1016, 0.0
      %v1022 = vsel %vm730, %v1018, 0.0
      %1023 = vst.msk [vmem:[#allocation2 + $0x50] sm:$0xff] %vm407, %v1021
      %1024 = vst.msk [vmem:[#allocation2 + $0x58] sm:$0xff] %vm407, %v1022
      %v1025 = vld [vmem:[#allocation3 + $0x8] sm:$0xff]
      %v1026 = vld [vmem:[#allocation3 + $0x20] sm:$0xff]
      %1029 = vrot.lane.b32.xlu0 %v1025, 121
      %v1030 = vpop.permute.xlu0 %1029
      %1031 = vrot.lane.b32.xlu0 %v1026, 121
      %v1032 = vpop.permute.xlu0 %1031
      %v1035 = vsel %vm748, %v1030, 0.0
      %v1036 = vsel %vm748, %v1032, 0.0
      %1037 = vst.msk [vmem:[#allocation2 + $0x60] sm:$0xff] %vm407, %v1035
      %1038 = vst.msk [vmem:[#allocation2 + $0x68] sm:$0xff] %vm407, %v1036
      %v1039 = vld [vmem:[#allocation3 + $0x8] sm:$0xff]
      %v1040 = vld [vmem:[#allocation3 + $0x20] sm:$0xff]
      %1043 = vrot.lane.b32.xlu0 %v1039, 120
      %v1044 = vpop.permute.xlu0 %1043
      %1045 = vrot.lane.b32.xlu0 %v1040, 120
      %v1046 = vpop.permute.xlu0 %1045
      %v1049 = vsel %vm764, %v1044, 0.0
      %v1050 = vsel %vm764, %v1046, 0.0
      %1051 = vst.msk [vmem:[#allocation2 + $0x70] sm:$0xff] %vm407, %v1049
      %1052 = vst.msk [vmem:[#allocation2 + $0x78] sm:$0xff] %vm407, %v1050
      %v1053 = vld [vmem:[#allocation3 + $0x8] sm:$0xff]
      %v1054 = vld [vmem:[#allocation3 + $0x20] sm:$0xff]
      %1057 = vrot.lane.b32.xlu0 %v1053, 119
      %v1058 = vpop.permute.xlu0 %1057
      %1059 = vrot.lane.b32.xlu0 %v1054, 119
      %v1060 = vpop.permute.xlu0 %1059
      %v1063 = vsel %vm781, %v1058, 0.0
      %v1064 = vsel %vm781, %v1060, 0.0
      %1065 = vst.msk [vmem:[#allocation2 + $0x80] sm:$0xff] %vm407, %v1063
      %1066 = vst.msk [vmem:[#allocation2 + $0x88] sm:$0xff] %vm407, %v1064
      %v1067 = vld [vmem:[%s7] sm:$0xff]
      %v1068 = vld [vmem:[%s7 + $0x8] sm:$0xff]
      %v1069 = vld [vmem:[%s7 + $0x10] sm:$0xff]
      %v1070 = vld [vmem:[%s7 + $0x18] sm:$0xff]
      %v1071 = vld [vmem:[#allocation2] sm:$0xff]
      %v1072 = vld [vmem:[#allocation2 + $0x8] sm:$0xff]
      %v1073 = vld [vmem:[#allocation2 + $0x10] sm:$0xff]
      %v1074 = vld [vmem:[#allocation2 + $0x18] sm:$0xff]
      %v1075 = vld [vmem:[#allocation2 + $0x20] sm:$0xff]
      %v1076 = vld [vmem:[#allocation2 + $0x28] sm:$0xff]
      %v1077 = vld [vmem:[#allocation2 + $0x30] sm:$0xff]
      %v1078 = vld [vmem:[#allocation2 + $0x38] sm:$0xff]
      %v1079 = vld [vmem:[#allocation2 + $0x40] sm:$0xff]
      %v1080 = vld [vmem:[#allocation2 + $0x48] sm:$0xff]
      %v1081 = vld [vmem:[#allocation2 + $0x50] sm:$0xff]
      %v1082 = vld [vmem:[#allocation2 + $0x58] sm:$0xff]
      %v1083 = vld [vmem:[#allocation2 + $0x60] sm:$0xff]
      %v1084 = vld [vmem:[#allocation2 + $0x68] sm:$0xff]
      %v1085 = vld [vmem:[#allocation2 + $0x70] sm:$0xff]
      %v1086 = vld [vmem:[#allocation2 + $0x78] sm:$0xff]
      %v1087 = vld [vmem:[#allocation2 + $0x80] sm:$0xff]
      %v1088 = vld [vmem:[#allocation2 + $0x88] sm:$0xff]
      %v1089 = vld [vmem:[%s8] sm:$0xff]
      %v1090 = vld [vmem:[%s8 + $0x8] sm:$0xff]
      %1092 = vset.pattern.permute.xlu0 0
      %1093 = vperm.xlu0 %1092, %v1089
      %v1094 = vpop.permute.xlu0 %1093
      %1097 = vset.pattern.permute.xlu0 0
      %1098 = vperm.xlu0 %1097, %v1090
      %v1099 = vpop.permute.xlu0 %1098
      %v1102 = vsel %vm426, %v1068, 0
      %v1105 = vsel %vm426, %v1070, 0
      %1107 = vmatprep.subr.mxu0 0.0
      %1108 = vmatpush1.msra.mxu0 %v1071
      %1109 = vmatprep.subr.mxu0 0.0
      %1110 = vmatpush1.msra.mxu0 %v1072
      %1111 = vmatprep.subr.mxu0 0.0
      %1112 = vmatpush1.msra.mxu0 %v1073
      %1113 = vmatprep.subr.mxu0 0.0
      %1114 = vmatpush1.msra.mxu0 %v1074
      %1115 = vmatprep.subr.mxu0 0.0
      %1116 = vmatpush1.msra.mxu0 %v1075
      %1117 = vmatprep.subr.mxu0 0.0
      %1118 = vmatpush1.msra.mxu0 %v1076
      %1119 = vmatprep.subr.mxu0 0.0
      %1120 = vmatpush1.msra.mxu0 %v1077
      %1121 = vmatprep.subr.mxu0 0.0
      %1122 = vmatpush1.msra.mxu0 %v1078
      %1123 = vmatprep.subr.mxu0 0.0
      %1124 = vmatpush1.msra.mxu0 %v1079
      %1125 = vmatprep.subr.mxu0 0.0
      %1126 = vmatpush1.msra.mxu0 %v1080
      %1127 = vmatprep.subr.mxu0 0.0
      %1128 = vmatpush1.msra.mxu0 %v1081
      %1129 = vmatprep.subr.mxu0 0.0
      %1130 = vmatpush1.msra.mxu0 %v1082
      %1131 = vmatprep.subr.mxu0 0.0
      %1132 = vmatpush1.msra.mxu0 %v1083
      %1133 = vmatprep.subr.mxu0 0.0
      %1134 = vmatpush1.msra.mxu0 %v1084
      %1135 = vmatprep.subr.mxu0 0.0
      %1136 = vmatpush1.msra.mxu0 %v1085
      %1137 = vmatprep.subr.mxu0 0.0
      %1138 = vmatpush1.msra.mxu0 %v1086
      %1139 = vmatprep.subr.mxu0 0.0
      %1140 = vmatpush1.msra.mxu0 %v1087
      %1141 = vmatprep.subr.mxu0 0.0
      %1142 = vmatpush1.msra.mxu0 %v1088
      %1143 = vmatprep.subr.mxu0 0.0
      %1144 = vmatpush1.msra.mxu0 0.0
      %1145 = vmatprep.subr.mxu0 0.0
      %1146 = vmatpush1.msra.mxu0 0.0
      %1147 = vmatprep.subr.mxu0 0.0
      %1148 = vmatpush1.msra.mxu0 0.0
      %1149 = vmatprep.subr.mxu0 0.0
      %1150 = vmatpush1.msra.mxu0 0.0
      %1151 = vmatprep.subr.mxu0 0.0
      %1152 = vmatpush1.msra.mxu0 0.0
      %1153 = vmatprep.subr.mxu0 0.0
      %1154 = vmatpush1.msra.mxu0 0.0
      %1155 = vmatprep.subr.mxu0 0.0
      %1156 = vmatpush1.msra.mxu0 0.0
      %1157 = vmatprep.subr.mxu0 0.0
      %1158 = vmatpush1.msra.mxu0 0.0
      %1159 = vmatprep.subr.mxu0 0.0
      %1160 = vmatpush1.msra.mxu0 0.0
      %1161 = vmatprep.subr.mxu0 0.0
      %1162 = vmatpush1.msra.mxu0 0.0
      %1163 = vmatprep.subr.mxu0 0.0
      %1164 = vmatpush1.msra.mxu0 0.0
      %1165 = vmatprep.subr.mxu0 0.0
      %1166 = vmatpush1.msra.mxu0 0.0
      %1167 = vmatprep.subr.mxu0 0.0
      %1168 = vmatpush1.msra.mxu0 0.0
      %1169 = vmatprep.subr.mxu0 0.0
      %1170 = vmatpush1.msra.mxu0 0.0
      %1171 = vmatprep.mubr.f32.mxu0 %v1102
      %1172 = vmatmul.mubr.f32.gmra.mrb[0].mxu0 %v1067
      %v1173 = vpop.f32.mrb[0].mxu0
      %v1174 = vadd.f32 %v1094, %v1173
      %v1175 = vpop.f32.mrb[0].mxu0
      %1176 = vmatprep.mubr.f32.mxu0 %v1105
      %1177 = vmatmul.mubr.f32.gmra.mrb[0].mxu0 %v1069
      %v1178 = vpop.f32.mrb[0].mxu0
      %v1179 = vadd.f32 %v1099, %v1178
      %v1180 = vpop.f32.mrb[0].mxu0
      %1181 = vdwg.mxu0
      %v1182 = vadd.f32 %v1174, %v603
      %v1183 = vadd.f32 %v1179, %v604
      %v1184 = vmax.f32 %v1182, 0.0
      %v1185 = vmax.f32 %v1183, 0.0
      %v1186 = vld [vmem:[%s9] sm:$0xff]
      %v1187 = vld [vmem:[%s10] sm:$0xff]
      %1189 = vset.pattern.permute.xlu0 0
      %1190 = vperm.xlu0 %1189, %v1187
      %v1191 = vpop.permute.xlu0 %1190
      %v1194 = vsel %vm426, %v1186, 0
      %1196 = vmatprep.subr.mxu0 0.0
      %1197 = vmatpush1.msra.mxu0 %v1184
      %1198 = vmatprep.subr.mxu0 0.0
      %1199 = vmatpush1.msra.mxu0 %v1185
      %1200 = vmatprep.subr.mxu0 0.0
      %1201 = vmatpush1.msra.mxu0 0.0
      %1202 = vmatprep.subr.mxu0 0.0
      %1203 = vmatpush1.msra.mxu0 0.0
      %1204 = vmatprep.subr.mxu0 0.0
      %1205 = vmatpush1.msra.mxu0 0.0
      %1206 = vmatprep.subr.mxu0 0.0
      %1207 = vmatpush1.msra.mxu0 0.0
      %1208 = vmatprep.subr.mxu0 0.0
      %1209 = vmatpush1.msra.mxu0 0.0
      %1210 = vmatprep.subr.mxu0 0.0
      %1211 = vmatpush1.msra.mxu0 0.0
      %1212 = vmatprep.subr.mxu0 0.0
      %1213 = vmatpush1.msra.mxu0 0.0
      %1214 = vmatprep.subr.mxu0 0.0
      %1215 = vmatpush1.msra.mxu0 0.0
      %1216 = vmatprep.subr.mxu0 0.0
      %1217 = vmatpush1.msra.mxu0 0.0
      %1218 = vmatprep.subr.mxu0 0.0
      %1219 = vmatpush1.msra.mxu0 0.0
      %1220 = vmatprep.subr.mxu0 0.0
      %1221 = vmatpush1.msra.mxu0 0.0
      %1222 = vmatprep.subr.mxu0 0.0
      %1223 = vmatpush1.msra.mxu0 0.0
      %1224 = vmatprep.subr.mxu0 0.0
      %1225 = vmatpush1.msra.mxu0 0.0
      %1226 = vmatprep.subr.mxu0 0.0
      %1227 = vmatpush1.msra.mxu0 0.0
      %1228 = vmatprep.subr.mxu0 0.0
      %1229 = vmatpush1.msra.mxu0 0.0
      %1230 = vmatprep.subr.mxu0 0.0
      %1231 = vmatpush1.msra.mxu0 0.0
      %1232 = vmatprep.subr.mxu0 0.0
      %1233 = vmatpush1.msra.mxu0 0.0
      %1234 = vmatprep.subr.mxu0 0.0
      %1235 = vmatpush1.msra.mxu0 0.0
      %1236 = vmatprep.subr.mxu0 0.0
      %1237 = vmatpush1.msra.mxu0 0.0
      %1238 = vmatprep.subr.mxu0 0.0
      %1239 = vmatpush1.msra.mxu0 0.0
      %1240 = vmatprep.subr.mxu0 0.0
      %1241 = vmatpush1.msra.mxu0 0.0
      %1242 = vmatprep.subr.mxu0 0.0
      %1243 = vmatpush1.msra.mxu0 0.0
      %1244 = vmatprep.subr.mxu0 0.0
      %1245 = vmatpush1.msra.mxu0 0.0
      %1246 = vmatprep.subr.mxu0 0.0
      %1247 = vmatpush1.msra.mxu0 0.0
      %1248 = vmatprep.subr.mxu0 0.0
      %1249 = vmatpush1.msra.mxu0 0.0
      %1250 = vmatprep.subr.mxu0 0.0
      %1251 = vmatpush1.msra.mxu0 0.0
      %1252 = vmatprep.subr.mxu0 0.0
      %1253 = vmatpush1.msra.mxu0 0.0
      %1254 = vmatprep.subr.mxu0 0.0
      %1255 = vmatpush1.msra.mxu0 0.0
      %1256 = vmatprep.subr.mxu0 0.0
      %1257 = vmatpush1.msra.mxu0 0.0
      %1258 = vmatprep.subr.mxu0 0.0
      %1259 = vmatpush1.msra.mxu0 0.0
      %1260 = vmatprep.mubr.f32.mxu0 0.0
      %1261 = vmatmul.mubr.f32.gmra.mrb[0].mxu0 %v1194
      %v1262 = vpop.f32.mrb[0].mxu0
      %v1263 = vadd.f32 %v1191, %v1262
      %v1264 = vpop.f32.mrb[0].mxu0
      %1265 = vdwg.mxu0
      %v1266 = vpack.c.bf16 %v1263, %v1263
      %vm1267 = vcmask 519168
      %1268 = vst.msk [vmem:[%s404] sm:$0xf] %vm1267, %v1266
      %p1269 = scmp.lt.s32.totalorder %s22, 1
      %s1270 = scalar_select %p1269, %s22, 1
      %s1271 = smul.addr %s1270, 4
      %s1272 = scalar_lea.vmem %s11, %s1271
      // Predicated region
      $region65: #{unet_with_backbone.9} parent=63 // pred_check
        %p1273 = pneg %p281
      $region66: #{unet_with_backbone.9} parent=63 // pred_check_branch
        %1275 = sbr.rel (%p1273) target = $region68
      $region67: #{unet_with_backbone.9} parent=63 // pred_region
        _
      $region68: #{unet_with_backbone.9} parent=63 // pred_fallthru
        _
    $region64: #{unet_with_backbone.9} parent=5 // pred_fallthru
      _
    %p1276 = scmp.le.s32.totalorder 2, %s17
    // Predicated region
    $region69: #{unet_with_backbone.9} parent=5 // pred_check
      %p1277 = pneg %p1276
    $region70: #{unet_with_backbone.9} parent=5 // pred_check_branch
      %1279 = sbr.rel (%p1277) target = $region72
    $region71: #{unet_with_backbone.9} parent=5 // pred_region
      %s1280 = ssub.s32 %s17, 2
      // Predicated region
      $region73: #{unet_with_backbone.9} parent=71 // pred_check
        %p1281 = pneg %p287
      $region74: #{unet_with_backbone.9} parent=71 // pred_check_branch
        %1283 = sbr.rel (%p1281) target = $region76
      $region75: #{unet_with_backbone.9} parent=71 // pred_region
        %p1284 = scmp.lt.s32.totalorder %s23, 1
        %s1285 = scalar_select %p1284, %s23, 1
        %s1286 = smul.addr %s1285, 4
        %s1287 = scalar_lea.vmem %s11, %s1286
      $region76: #{unet_with_backbone.9} parent=71 // pred_fallthru
        _
    $region72: #{unet_with_backbone.9} parent=5 // pred_fallthru
      _
  $region6: #{unet_with_backbone.9} parent=0 // loop_footer
    %s21 = sadd.s32 1, %s17
  $region7: #{unet_with_backbone.9} parent=0 // loop_footer_branch
    %16 = sbr.rel target = $region3
  $region8: #{unet_with_backbone.9} parent=0 // loop_exit
    _

// kernel: unet_with_backbone.10
$region0: #{unet_with_backbone.10}
  #allocation0 [shape = 'u32[]', space=smem, size = 0x4, offset = 0x4, fixed_abs, tag = 'smem constant byte address 0x4 - core index']
  #allocation1 [shape = 'u32[144,128]{1,0:T(1,128)}', space=vmem, size = 0x12000, scoped, tag = 'internal scratch']
  #allocation2 [shape = 'f32[72,256]{1,0:T(8,128)}', space=vmem, size = 0x12000, scoped, tag = 'scratch operand']
  #allocation3 [shape = 'f32[8,512]{1,0:T(8,128)}', space=vmem, size = 0x4000, scoped, tag = 'scratch operand']
  %s0 = inlined_call_operand.vmem [shape: bf16[2,8,256], index: 0, kind: input, shape index: {}]
  %s1 = inlined_call_operand.vmem [shape: bf16[2,8,256], index: 1, kind: input, shape index: {}]
  %s2 = inlined_call_operand.vmem [shape: f32[8,8], index: 2, kind: input, shape index: {}]
  %s3 = inlined_call_operand.vmem [shape: f32[8,8], index: 3, kind: input, shape index: {}]
  %s4 = inlined_call_operand.vmem [shape: f32[8,1], index: 4, kind: input, shape index: {}]
  %s5 = inlined_call_operand.vmem [shape: f32[8,72], index: 5, kind: input, shape index: {}]
  %s6 = inlined_call_operand.vmem [shape: f32[8,1], index: 6, kind: input, shape index: {}]
  %s7 = inlined_call_operand.vmem [shape: f32[8,72], index: 7, kind: input, shape index: {}]
  %s8 = inlined_call_operand.vmem [shape: f32[8,1], index: 8, kind: input, shape index: {}]
  %s9 = inlined_call_operand.vmem [shape: f32[8,8], index: 9, kind: input, shape index: {}]
  %s10 = inlined_call_operand.vmem [shape: f32[8,1], index: 10, kind: input, shape index: {}]
  %s11 = inlined_call_operand.vmem [shape: bf16[2,8,256], index: 11, kind: output, shape index: {}]
  %s12 = sld [smem:[#allocation0]]
  $region77: #{unet_with_backbone.10} parent=0
    _
  %s14 = ssub.s32 1, %s12
  %s15 = scalar_select 0, %s14, %s12
  loop: start=0, step=1, limit=4
  $region2: #{unet_with_backbone.10} parent=0 // loop_pre_header
    _
  $region3: #{unet_with_backbone.10} parent=0 // loop_header
    %s17 = sphi 0, %s21
    %p18 = scmp.ge.s32.totalorder %s17, 4
    %s27 = sphi 0, %s29
    %s30 = sphi 0, %s27
    %s31 = sphi 0, %s30
    %s47 = sphi 0, %s31
    %s53 = sphi 0, %s55
    %s56 = sphi 0, %s53
    %s57 = sphi 0, %s56
    %s73 = sphi 0, %s57
    %s77 = sphi 0, %s77
    %s79 = sphi 0, %s77
    %s80 = sphi 0, %s79
    %s94 = sphi 0, %s80
    %s98 = sphi 0, %s98
    %s100 = sphi 0, %s98
    %s101 = sphi 0, %s100
    %s115 = sphi 0, %s101
    %s119 = sphi 0, %s119
    %s121 = sphi 0, %s119
    %s122 = sphi 0, %s121
    %s136 = sphi 0, %s122
    %s140 = sphi 0, %s140
    %s142 = sphi 0, %s140
    %s143 = sphi 0, %s142
    %s157 = sphi 0, %s143
    %s161 = sphi 0, %s161
    %s163 = sphi 0, %s161
    %s164 = sphi 0, %s163
    %s178 = sphi 0, %s164
    %s182 = sphi 0, %s182
    %s184 = sphi 0, %s182
    %s185 = sphi 0, %s184
    %s199 = sphi 0, %s185
    %s203 = sphi 0, %s203
    %s205 = sphi 0, %s203
    %s206 = sphi 0, %s205
    %s220 = sphi 0, %s206
    %s224 = sphi 0, %s224
    %s226 = sphi 0, %s224
    %s227 = sphi 0, %s226
    %s241 = sphi 0, %s227
    %s245 = sphi 0, %s245
    %s247 = sphi 0, %s245
    %s248 = sphi 0, %s247
    %s262 = sphi 0, %s248
    %s268 = sphi 0, %s270
    %s271 = sphi 0, %s268
    %s272 = sphi 0, %s271
    %s288 = sphi 0, %s272
  $region4: #{unet_with_backbone.10} parent=0 // loop_header_branch
    %20 = sbr.rel (%p18) target = $region8
  $region5: #{unet_with_backbone.10} parent=0 // loop_body
    %s22 = ssub.s32 %s17, 1
    %s23 = ssub.s32 %s17, 2
    %s24 = sadd.s32 %s17, 1
    %s25 = ssub.s32 %s17, %s24
    %p26 = scmp.eq.s32.totalorder %s25, 0
    %s28 = sadd.s32 %s27, 1
    %s29 = scalar_select %p26, %s27, %s28
    %p32 = pneg %p26
    %p33 = scmp.eq.s32.totalorder %s17, 1
    %p34 = por %p32, %p33
    %p35 = scmp.ne.s32.totalorder %s27, %s30
    %p36 = scmp.eq.s32.totalorder %s17, 0
    %p37 = por %p35, %p36
    %p38 = scmp.ne.s32.totalorder %s27, %s30
    %p39 = scmp.eq.s32.totalorder %s22, 1
    %p40 = por %p38, %p39
    %p41 = scmp.ne.s32.totalorder %s30, %s31
    %p42 = scmp.eq.s32.totalorder %s22, 0
    %p43 = por %p41, %p42
    %p44 = scmp.ne.s32.totalorder %s30, %s31
    %p45 = scmp.eq.s32.totalorder %s23, 1
    %p46 = por %p44, %p45
    %p48 = scmp.ne.s32.totalorder %s31, %s47
    %p49 = scmp.eq.s32.totalorder %s23, 0
    %p50 = por %p48, %p49
    %s51 = ssub.s32 %s17, %s24
    %p52 = scmp.eq.s32.totalorder %s51, 0
    %s54 = sadd.s32 %s53, 1
    %s55 = scalar_select %p52, %s53, %s54
    %p58 = pneg %p52
    %p59 = scmp.eq.s32.totalorder %s17, 1
    %p60 = por %p58, %p59
    %p61 = scmp.ne.s32.totalorder %s53, %s56
    %p62 = scmp.eq.s32.totalorder %s17, 0
    %p63 = por %p61, %p62
    %p64 = scmp.ne.s32.totalorder %s53, %s56
    %p65 = scmp.eq.s32.totalorder %s22, 1
    %p66 = por %p64, %p65
    %p67 = scmp.ne.s32.totalorder %s56, %s57
    %p68 = scmp.eq.s32.totalorder %s22, 0
    %p69 = por %p67, %p68
    %p70 = scmp.ne.s32.totalorder %s56, %s57
    %p71 = scmp.eq.s32.totalorder %s23, 1
    %p72 = por %p70, %p71
    %p74 = scmp.ne.s32.totalorder %s57, %s73
    %p75 = scmp.eq.s32.totalorder %s23, 0
    %p76 = por %p74, %p75
    %s78 = sadd.s32 %s77, 1
    %p81 = scmp.eq.s32.totalorder %s17, 1
    %p82 = scmp.ne.s32.totalorder %s77, %s79
    %p83 = scmp.eq.s32.totalorder %s17, 0
    %p84 = por %p82, %p83
    %p85 = scmp.ne.s32.totalorder %s77, %s79
    %p86 = scmp.eq.s32.totalorder %s22, 1
    %p87 = por %p85, %p86
    %p88 = scmp.ne.s32.totalorder %s79, %s80
    %p89 = scmp.eq.s32.totalorder %s22, 0
    %p90 = por %p88, %p89
    %p91 = scmp.ne.s32.totalorder %s79, %s80
    %p92 = scmp.eq.s32.totalorder %s23, 1
    %p93 = por %p91, %p92
    %p95 = scmp.ne.s32.totalorder %s80, %s94
    %p96 = scmp.eq.s32.totalorder %s23, 0
    %p97 = por %p95, %p96
    %s99 = sadd.s32 %s98, 1
    %p102 = scmp.eq.s32.totalorder %s17, 1
    %p103 = scmp.ne.s32.totalorder %s98, %s100
    %p104 = scmp.eq.s32.totalorder %s17, 0
    %p105 = por %p103, %p104
    %p106 = scmp.ne.s32.totalorder %s98, %s100
    %p107 = scmp.eq.s32.totalorder %s22, 1
    %p108 = por %p106, %p107
    %p109 = scmp.ne.s32.totalorder %s100, %s101
    %p110 = scmp.eq.s32.totalorder %s22, 0
    %p111 = por %p109, %p110
    %p112 = scmp.ne.s32.totalorder %s100, %s101
    %p113 = scmp.eq.s32.totalorder %s23, 1
    %p114 = por %p112, %p113
    %p116 = scmp.ne.s32.totalorder %s101, %s115
    %p117 = scmp.eq.s32.totalorder %s23, 0
    %p118 = por %p116, %p117
    %s120 = sadd.s32 %s119, 1
    %p123 = scmp.eq.s32.totalorder %s17, 1
    %p124 = scmp.ne.s32.totalorder %s119, %s121
    %p125 = scmp.eq.s32.totalorder %s17, 0
    %p126 = por %p124, %p125
    %p127 = scmp.ne.s32.totalorder %s119, %s121
    %p128 = scmp.eq.s32.totalorder %s22, 1
    %p129 = por %p127, %p128
    %p130 = scmp.ne.s32.totalorder %s121, %s122
    %p131 = scmp.eq.s32.totalorder %s22, 0
    %p132 = por %p130, %p131
    %p133 = scmp.ne.s32.totalorder %s121, %s122
    %p134 = scmp.eq.s32.totalorder %s23, 1
    %p135 = por %p133, %p134
    %p137 = scmp.ne.s32.totalorder %s122, %s136
    %p138 = scmp.eq.s32.totalorder %s23, 0
    %p139 = por %p137, %p138
    %s141 = sadd.s32 %s140, 1
    %p144 = scmp.eq.s32.totalorder %s17, 1
    %p145 = scmp.ne.s32.totalorder %s140, %s142
    %p146 = scmp.eq.s32.totalorder %s17, 0
    %p147 = por %p145, %p146
    %p148 = scmp.ne.s32.totalorder %s140, %s142
    %p149 = scmp.eq.s32.totalorder %s22, 1
    %p150 = por %p148, %p149
    %p151 = scmp.ne.s32.totalorder %s142, %s143
    %p152 = scmp.eq.s32.totalorder %s22, 0
    %p153 = por %p151, %p152
    %p154 = scmp.ne.s32.totalorder %s142, %s143
    %p155 = scmp.eq.s32.totalorder %s23, 1
    %p156 = por %p154, %p155
    %p158 = scmp.ne.s32.totalorder %s143, %s157
    %p159 = scmp.eq.s32.totalorder %s23, 0
    %p160 = por %p158, %p159
    %s162 = sadd.s32 %s161, 1
    %p165 = scmp.eq.s32.totalorder %s17, 1
    %p166 = scmp.ne.s32.totalorder %s161, %s163
    %p167 = scmp.eq.s32.totalorder %s17, 0
    %p168 = por %p166, %p167
    %p169 = scmp.ne.s32.totalorder %s161, %s163
    %p170 = scmp.eq.s32.totalorder %s22, 1
    %p171 = por %p169, %p170
    %p172 = scmp.ne.s32.totalorder %s163, %s164
    %p173 = scmp.eq.s32.totalorder %s22, 0
    %p174 = por %p172, %p173
    %p175 = scmp.ne.s32.totalorder %s163, %s164
    %p176 = scmp.eq.s32.totalorder %s23, 1
    %p177 = por %p175, %p176
    %p179 = scmp.ne.s32.totalorder %s164, %s178
    %p180 = scmp.eq.s32.totalorder %s23, 0
    %p181 = por %p179, %p180
    %s183 = sadd.s32 %s182, 1
    %p186 = scmp.eq.s32.totalorder %s17, 1
    %p187 = scmp.ne.s32.totalorder %s182, %s184
    %p188 = scmp.eq.s32.totalorder %s17, 0
    %p189 = por %p187, %p188
    %p190 = scmp.ne.s32.totalorder %s182, %s184
    %p191 = scmp.eq.s32.totalorder %s22, 1
    %p192 = por %p190, %p191
    %p193 = scmp.ne.s32.totalorder %s184, %s185
    %p194 = scmp.eq.s32.totalorder %s22, 0
    %p195 = por %p193, %p194
    %p196 = scmp.ne.s32.totalorder %s184, %s185
    %p197 = scmp.eq.s32.totalorder %s23, 1
    %p198 = por %p196, %p197
    %p200 = scmp.ne.s32.totalorder %s185, %s199
    %p201 = scmp.eq.s32.totalorder %s23, 0
    %p202 = por %p200, %p201
    %s204 = sadd.s32 %s203, 1
    %p207 = scmp.eq.s32.totalorder %s17, 1
    %p208 = scmp.ne.s32.totalorder %s203, %s205
    %p209 = scmp.eq.s32.totalorder %s17, 0
    %p210 = por %p208, %p209
    %p211 = scmp.ne.s32.totalorder %s203, %s205
    %p212 = scmp.eq.s32.totalorder %s22, 1
    %p213 = por %p211, %p212
    %p214 = scmp.ne.s32.totalorder %s205, %s206
    %p215 = scmp.eq.s32.totalorder %s22, 0
    %p216 = por %p214, %p215
    %p217 = scmp.ne.s32.totalorder %s205, %s206
    %p218 = scmp.eq.s32.totalorder %s23, 1
    %p219 = por %p217, %p218
    %p221 = scmp.ne.s32.totalorder %s206, %s220
    %p222 = scmp.eq.s32.totalorder %s23, 0
    %p223 = por %p221, %p222
    %s225 = sadd.s32 %s224, 1
    %p228 = scmp.eq.s32.totalorder %s17, 1
    %p229 = scmp.ne.s32.totalorder %s224, %s226
    %p230 = scmp.eq.s32.totalorder %s17, 0
    %p231 = por %p229, %p230
    %p232 = scmp.ne.s32.totalorder %s224, %s226
    %p233 = scmp.eq.s32.totalorder %s22, 1
    %p234 = por %p232, %p233
    %p235 = scmp.ne.s32.totalorder %s226, %s227
    %p236 = scmp.eq.s32.totalorder %s22, 0
    %p237 = por %p235, %p236
    %p238 = scmp.ne.s32.totalorder %s226, %s227
    %p239 = scmp.eq.s32.totalorder %s23, 1
    %p240 = por %p238, %p239
    %p242 = scmp.ne.s32.totalorder %s227, %s241
    %p243 = scmp.eq.s32.totalorder %s23, 0
    %p244 = por %p242, %p243
    %s246 = sadd.s32 %s245, 1
    %p249 = scmp.eq.s32.totalorder %s17, 1
    %p250 = scmp.ne.s32.totalorder %s245, %s247
    %p251 = scmp.eq.s32.totalorder %s17, 0
    %p252 = por %p250, %p251
    %p253 = scmp.ne.s32.totalorder %s245, %s247
    %p254 = scmp.eq.s32.totalorder %s22, 1
    %p255 = por %p253, %p254
    %p256 = scmp.ne.s32.totalorder %s247, %s248
    %p257 = scmp.eq.s32.totalorder %s22, 0
    %p258 = por %p256, %p257
    %p259 = scmp.ne.s32.totalorder %s247, %s248
    %p260 = scmp.eq.s32.totalorder %s23, 1
    %p261 = por %p259, %p260
    %p263 = scmp.ne.s32.totalorder %s248, %s262
    %p264 = scmp.eq.s32.totalorder %s23, 0
    %p265 = por %p263, %p264
    %s266 = ssub.s32 %s17, %s24
    %p267 = scmp.eq.s32.totalorder %s266, 0
    %s269 = sadd.s32 %s268, 1
    %s270 = scalar_select %p267, %s268, %s269
    %p273 = pneg %p267
    %p274 = scmp.eq.s32.totalorder %s17, 1
    %p275 = por %p273, %p274
    %p276 = scmp.ne.s32.totalorder %s268, %s271
    %p277 = scmp.eq.s32.totalorder %s17, 0
    %p278 = por %p276, %p277
    %p279 = scmp.ne.s32.totalorder %s268, %s271
    %p280 = scmp.eq.s32.totalorder %s22, 1
    %p281 = por %p279, %p280
    %p282 = scmp.ne.s32.totalorder %s271, %s272
    %p283 = scmp.eq.s32.totalorder %s22, 0
    %p284 = por %p282, %p283
    %p285 = scmp.ne.s32.totalorder %s271, %s272
    %p286 = scmp.eq.s32.totalorder %s23, 1
    %p287 = por %p285, %p286
    %p289 = scmp.ne.s32.totalorder %s272, %s288
    %p290 = scmp.eq.s32.totalorder %s23, 0
    %p291 = por %p289, %p290
    %p292 = scmp.le.s32.totalorder 1, %s17
    %p293 = scmp.lt.s32.totalorder %s17, 3
    %p294 = pnand %p292, %p293
    %p295 = pneg %p294
    // Predicated region
    $region9: #{unet_with_backbone.10} parent=5 // pred_check
      _
    $region10: #{unet_with_backbone.10} parent=5 // pred_check_branch
      %297 = sbr.rel (%p294) target = $region12
    $region11: #{unet_with_backbone.10} parent=5 // pred_region
      %s298 = ssub.s32 %s17, 1
      // Predicated region
      $region13: #{unet_with_backbone.10} parent=11 // pred_check
        %p299 = pneg %p90
      $region14: #{unet_with_backbone.10} parent=11 // pred_check_branch
        %301 = sbr.rel (%p299) target = $region16
      $region15: #{unet_with_backbone.10} parent=11 // pred_region
        _
      $region16: #{unet_with_backbone.10} parent=11 // pred_fallthru
        _
      // Predicated region
      $region17: #{unet_with_backbone.10} parent=11 // pred_check
        %p302 = pneg %p111
      $region18: #{unet_with_backbone.10} parent=11 // pred_check_branch
        %304 = sbr.rel (%p302) target = $region20
      $region19: #{unet_with_backbone.10} parent=11 // pred_region
        _
      $region20: #{unet_with_backbone.10} parent=11 // pred_fallthru
        _
      // Predicated region
      $region21: #{unet_with_backbone.10} parent=11 // pred_check
        %p305 = pneg %p132
      $region22: #{unet_with_backbone.10} parent=11 // pred_check_branch
        %307 = sbr.rel (%p305) target = $region24
      $region23: #{unet_with_backbone.10} parent=11 // pred_region
        _
      $region24: #{unet_with_backbone.10} parent=11 // pred_fallthru
        _
      // Predicated region
      $region25: #{unet_with_backbone.10} parent=11 // pred_check
        %p308 = pneg %p153
      $region26: #{unet_with_backbone.10} parent=11 // pred_check_branch
        %310 = sbr.rel (%p308) target = $region28
      $region27: #{unet_with_backbone.10} parent=11 // pred_region
        _
      $region28: #{unet_with_backbone.10} parent=11 // pred_fallthru
        _
      // Predicated region
      $region29: #{unet_with_backbone.10} parent=11 // pred_check
        %p311 = pneg %p174
      $region30: #{unet_with_backbone.10} parent=11 // pred_check_branch
        %313 = sbr.rel (%p311) target = $region32
      $region31: #{unet_with_backbone.10} parent=11 // pred_region
        _
      $region32: #{unet_with_backbone.10} parent=11 // pred_fallthru
        _
      // Predicated region
      $region33: #{unet_with_backbone.10} parent=11 // pred_check
        %p314 = pneg %p195
      $region34: #{unet_with_backbone.10} parent=11 // pred_check_branch
        %316 = sbr.rel (%p314) target = $region36
      $region35: #{unet_with_backbone.10} parent=11 // pred_region
        _
      $region36: #{unet_with_backbone.10} parent=11 // pred_fallthru
        _
      // Predicated region
      $region37: #{unet_with_backbone.10} parent=11 // pred_check
        %p317 = pneg %p216
      $region38: #{unet_with_backbone.10} parent=11 // pred_check_branch
        %319 = sbr.rel (%p317) target = $region40
      $region39: #{unet_with_backbone.10} parent=11 // pred_region
        _
      $region40: #{unet_with_backbone.10} parent=11 // pred_fallthru
        _
      // Predicated region
      $region41: #{unet_with_backbone.10} parent=11 // pred_check
        %p320 = pneg %p237
      $region42: #{unet_with_backbone.10} parent=11 // pred_check_branch
        %322 = sbr.rel (%p320) target = $region44
      $region43: #{unet_with_backbone.10} parent=11 // pred_region
        _
      $region44: #{unet_with_backbone.10} parent=11 // pred_fallthru
        _
      // Predicated region
      $region45: #{unet_with_backbone.10} parent=11 // pred_check
        %p323 = pneg %p258
      $region46: #{unet_with_backbone.10} parent=11 // pred_check_branch
        %325 = sbr.rel (%p323) target = $region48
      $region47: #{unet_with_backbone.10} parent=11 // pred_region
        _
      $region48: #{unet_with_backbone.10} parent=11 // pred_fallthru
        _
    $region12: #{unet_with_backbone.10} parent=5 // pred_fallthru
      _
    %p326 = scmp.lt.s32.totalorder %s17, 2
    // Predicated region
    $region49: #{unet_with_backbone.10} parent=5 // pred_check
      %p327 = pneg %p326
    $region50: #{unet_with_backbone.10} parent=5 // pred_check_branch
      %329 = sbr.rel (%p327) target = $region52
    $region51: #{unet_with_backbone.10} parent=5 // pred_region
      // Predicated region
      $region53: #{unet_with_backbone.10} parent=51 // pred_check
        %p330 = pneg %p37
      $region54: #{unet_with_backbone.10} parent=51 // pred_check_branch
        %332 = sbr.rel (%p330) target = $region56
      $region55: #{unet_with_backbone.10} parent=51 // pred_region
        %p333 = scmp.lt.s32.totalorder %s17, 1
        %s334 = scalar_select %p333, %s17, 1
        %s335 = smul.addr %s334, 2
        %s336 = smul.addr %s335, 4
        %s337 = scalar_lea.vmem %s0, %s336
      $region56: #{unet_with_backbone.10} parent=51 // pred_fallthru
        _
      // Predicated region
      $region57: #{unet_with_backbone.10} parent=51 // pred_check
        %p338 = pneg %p63
      $region58: #{unet_with_backbone.10} parent=51 // pred_check_branch
        %340 = sbr.rel (%p338) target = $region60
      $region59: #{unet_with_backbone.10} parent=51 // pred_region
        %p341 = scmp.lt.s32.totalorder %s17, 1
        %s342 = scalar_select %p341, %s17, 1
        %s343 = smul.addr %s342, 2
        %s344 = smul.addr %s343, 4
        %s345 = scalar_lea.vmem %s1, %s344
      $region60: #{unet_with_backbone.10} parent=51 // pred_fallthru
        _
    $region52: #{unet_with_backbone.10} parent=5 // pred_fallthru
      _
    %p346 = scmp.le.s32.totalorder 1, %s17
    %p347 = scmp.lt.s32.totalorder %s17, 3
    %p348 = pnand %p346, %p347
    %p349 = pneg %p348
    // Predicated region
    $region61: #{unet_with_backbone.10} parent=5 // pred_check
      _
    $region62: #{unet_with_backbone.10} parent=5 // pred_check_branch
      %351 = sbr.rel (%p348) target = $region64
    $region63: #{unet_with_backbone.10} parent=5 // pred_region
      %s352 = ssub.s32 %s17, 1
      %p353 = scmp.lt.s32.totalorder %s22, 1
      %s354 = scalar_select %p353, %s22, 1
      %s355 = smul.addr %s354, 2
      %s356 = smul.addr %s355, 4
      %s357 = scalar_lea.vmem %s0, %s356
      %p358 = pneg %p43
      %p359 = pneg %p40
      %p360 = scmp.lt.s32.totalorder %s22, 1
      %s361 = scalar_select %p360, %s22, 1
      %s362 = smul.addr %s361, 2
      %s363 = smul.addr %s362, 4
      %s364 = scalar_lea.vmem %s1, %s363
      %p365 = pneg %p69
      %p366 = pneg %p66
      %p367 = pneg %p90
      %p368 = pneg %p87
      %p369 = pneg %p111
      %p370 = pneg %p108
      %p371 = pneg %p132
      %p372 = pneg %p129
      %p373 = pneg %p153
      %p374 = pneg %p150
      %p375 = pneg %p174
      %p376 = pneg %p171
      %p377 = pneg %p195
      %p378 = pneg %p192
      %p379 = pneg %p216
      %p380 = pneg %p213
      %p381 = pneg %p237
      %p382 = pneg %p234
      %p383 = pneg %p258
      %p384 = pneg %p255
      %p385 = pneg %p284
      %p386 = pneg %p281
      %p387 = scmp.lt.s32.totalorder %s22, 1
      %s388 = scalar_select %p387, %s22, 1
      %s389 = smul.addr %s388, 2
      %s390 = smul.addr %s389, 4
      %s391 = scalar_lea.vmem %s11, %s390
      %p392 = scmp.lt.s32.totalorder %s22, 1
      %s393 = scalar_select %p392, %s22, 1
      %s394 = smul.addr %s393, 2
      %s395 = smul.addr %s394, 4
      %s396 = scalar_lea.vmem %s0, %s395
      %p397 = scmp.lt.s32.totalorder %s22, 1
      %s398 = scalar_select %p397, %s22, 1
      %s399 = smul.addr %s398, 2
      %s400 = smul.addr %s399, 4
      %s401 = scalar_lea.vmem %s1, %s400
      %p402 = scmp.lt.s32.totalorder %s22, 1
      %s403 = scalar_select %p402, %s22, 1
      %s404 = smul.addr %s403, 2
      %s405 = smul.addr %s404, 4
      %s406 = scalar_lea.vmem %s11, %s405
      %407 = vst [vmem:[#allocation3] sm:$0xff] 0.0
      %408 = vst [vmem:[#allocation3 + $0x8] sm:$0xff] 0.0
      %409 = vst [vmem:[#allocation3 + $0x10] sm:$0xff] 0.0
      %410 = vst [vmem:[#allocation3 + $0x18] sm:$0xff] 0.0
      %v411 = vld [vmem:[%s396] sm:$0xff]
      %v412 = vunpack.c.l.bf16 %v411
      %v413 = vunpack.c.h.bf16 %v411
      %v414 = vmax.f32 %v412, 0.0
      %v415 = vmax.f32 %v413, 0.0
      %v416 = vld [vmem:[%s401] sm:$0xff]
      %v417 = vunpack.c.l.bf16 %v416
      %v418 = vunpack.c.h.bf16 %v416
      %v419 = vld [vmem:[%s2] sm:$0xff]
      %v420 = vld [vmem:[%s3] sm:$0xff]
      %vm421 = vcmask 64512
      %v423 = vsel %vm421, %v420, 0
      %425 = vmatprep.subr.mxu0 %v418
      %426 = vmatpush1.msra.mxu0 %v417
      %427 = vmatprep.subr.mxu0 0.0
      %428 = vmatpush1.msra.mxu0 0.0
      %429 = vmatprep.subr.mxu0 0.0
      %430 = vmatpush1.msra.mxu0 0.0
      %431 = vmatprep.subr.mxu0 0.0
      %432 = vmatpush1.msra.mxu0 0.0
      %433 = vmatprep.subr.mxu0 0.0
      %434 = vmatpush1.msra.mxu0 0.0
      %435 = vmatprep.subr.mxu0 0.0
      %436 = vmatpush1.msra.mxu0 0.0
      %437 = vmatprep.subr.mxu0 0.0
      %438 = vmatpush1.msra.mxu0 0.0
      %439 = vmatprep.subr.mxu0 0.0
      %440 = vmatpush1.msra.mxu0 0.0
      %441 = vmatprep.subr.mxu0 0.0
      %442 = vmatpush1.msra.mxu0 0.0
      %443 = vmatprep.subr.mxu0 0.0
      %444 = vmatpush1.msra.mxu0 0.0
      %445 = vmatprep.subr.mxu0 0.0
      %446 = vmatpush1.msra.mxu0 0.0
      %447 = vmatprep.subr.mxu0 0.0
      %448 = vmatpush1.msra.mxu0 0.0
      %449 = vmatprep.subr.mxu0 0.0
      %450 = vmatpush1.msra.mxu0 0.0
      %451 = vmatprep.subr.mxu0 0.0
      %452 = vmatpush1.msra.mxu0 0.0
      %453 = vmatprep.subr.mxu0 0.0
      %454 = vmatpush1.msra.mxu0 0.0
      %455 = vmatprep.subr.mxu0 0.0
      %456 = vmatpush1.msra.mxu0 0.0
      %457 = vmatprep.subr.mxu0 0.0
      %458 = vmatpush1.msra.mxu0 0.0
      %459 = vmatprep.subr.mxu0 0.0
      %460 = vmatpush1.msra.mxu0 0.0
      %461 = vmatprep.subr.mxu0 0.0
      %462 = vmatpush1.msra.mxu0 0.0
      %463 = vmatprep.subr.mxu0 0.0
      %464 = vmatpush1.msra.mxu0 0.0
      %465 = vmatprep.subr.mxu0 0.0
      %466 = vmatpush1.msra.mxu0 0.0
      %467 = vmatprep.subr.mxu0 0.0
      %468 = vmatpush1.msra.mxu0 0.0
      %469 = vmatprep.subr.mxu0 0.0
      %470 = vmatpush1.msra.mxu0 0.0
      %471 = vmatprep.subr.mxu0 0.0
      %472 = vmatpush1.msra.mxu0 0.0
      %473 = vmatprep.subr.mxu0 0.0
      %474 = vmatpush1.msra.mxu0 0.0
      %475 = vmatprep.subr.mxu0 0.0
      %476 = vmatpush1.msra.mxu0 0.0
      %477 = vmatprep.subr.mxu0 0.0
      %478 = vmatpush1.msra.mxu0 0.0
      %479 = vmatprep.subr.mxu0 0.0
      %480 = vmatpush1.msra.mxu0 0.0
      %481 = vmatprep.subr.mxu0 0.0
      %482 = vmatpush1.msra.mxu0 0.0
      %483 = vmatprep.subr.mxu0 0.0
      %484 = vmatpush1.msra.mxu0 0.0
      %485 = vmatprep.subr.mxu0 0.0
      %486 = vmatpush1.msra.mxu0 0.0
      %487 = vmatprep.subr.mxu0 0.0
      %488 = vmatpush1.msra.mxu0 0.0
      %489 = vmatprep.mubr.f32.mxu0 0.0
      %490 = vmatmul.mubr.f32.gmra.mrb[0].mxu0 %v423
      %v491 = vpop.f32.mrb[0].mxu0
      %v492 = vadd.f32 0.0, %v491
      %v493 = vpop.f32.mrb[0].mxu0
      %v494 = vadd.f32 0.0, %v493
      %495 = vdwg.mxu0
      %v497 = vsel %vm421, %v419, 0
      %499 = vmatprep.subr.mxu0 %v415
      %500 = vmatpush1.msra.mxu0 %v414
      %501 = vmatprep.subr.mxu0 0.0
      %502 = vmatpush1.msra.mxu0 0.0
      %503 = vmatprep.subr.mxu0 0.0
      %504 = vmatpush1.msra.mxu0 0.0
      %505 = vmatprep.subr.mxu0 0.0
      %506 = vmatpush1.msra.mxu0 0.0
      %507 = vmatprep.subr.mxu0 0.0
      %508 = vmatpush1.msra.mxu0 0.0
      %509 = vmatprep.subr.mxu0 0.0
      %510 = vmatpush1.msra.mxu0 0.0
      %511 = vmatprep.subr.mxu0 0.0
      %512 = vmatpush1.msra.mxu0 0.0
      %513 = vmatprep.subr.mxu0 0.0
      %514 = vmatpush1.msra.mxu0 0.0
      %515 = vmatprep.subr.mxu0 0.0
      %516 = vmatpush1.msra.mxu0 0.0
      %517 = vmatprep.subr.mxu0 0.0
      %518 = vmatpush1.msra.mxu0 0.0
      %519 = vmatprep.subr.mxu0 0.0
      %520 = vmatpush1.msra.mxu0 0.0
      %521 = vmatprep.subr.mxu0 0.0
      %522 = vmatpush1.msra.mxu0 0.0
      %523 = vmatprep.subr.mxu0 0.0
      %524 = vmatpush1.msra.mxu0 0.0
      %525 = vmatprep.subr.mxu0 0.0
      %526 = vmatpush1.msra.mxu0 0.0
      %527 = vmatprep.subr.mxu0 0.0
      %528 = vmatpush1.msra.mxu0 0.0
      %529 = vmatprep.subr.mxu0 0.0
      %530 = vmatpush1.msra.mxu0 0.0
      %531 = vmatprep.subr.mxu0 0.0
      %532 = vmatpush1.msra.mxu0 0.0
      %533 = vmatprep.subr.mxu0 0.0
      %534 = vmatpush1.msra.mxu0 0.0
      %535 = vmatprep.subr.mxu0 0.0
      %536 = vmatpush1.msra.mxu0 0.0
      %537 = vmatprep.subr.mxu0 0.0
      %538 = vmatpush1.msra.mxu0 0.0
      %539 = vmatprep.subr.mxu0 0.0
      %540 = vmatpush1.msra.mxu0 0.0
      %541 = vmatprep.subr.mxu0 0.0
      %542 = vmatpush1.msra.mxu0 0.0
      %543 = vmatprep.subr.mxu0 0.0
      %544 = vmatpush1.msra.mxu0 0.0
      %545 = vmatprep.subr.mxu0 0.0
      %546 = vmatpush1.msra.mxu0 0.0
      %547 = vmatprep.subr.mxu0 0.0
      %548 = vmatpush1.msra.mxu0 0.0
      %549 = vmatprep.subr.mxu0 0.0
      %550 = vmatpush1.msra.mxu0 0.0
      %551 = vmatprep.subr.mxu0 0.0
      %552 = vmatpush1.msra.mxu0 0.0
      %553 = vmatprep.subr.mxu0 0.0
      %554 = vmatpush1.msra.mxu0 0.0
      %555 = vmatprep.subr.mxu0 0.0
      %556 = vmatpush1.msra.mxu0 0.0
      %557 = vmatprep.subr.mxu0 0.0
      %558 = vmatpush1.msra.mxu0 0.0
      %559 = vmatprep.subr.mxu0 0.0
      %560 = vmatpush1.msra.mxu0 0.0
      %561 = vmatprep.subr.mxu0 0.0
      %562 = vmatpush1.msra.mxu0 0.0
      %563 = vmatprep.mubr.f32.mxu0 0.0
      %564 = vmatmul.mubr.f32.gmra.mrb[0].mxu0 %v497
      %v565 = vpop.f32.mrb[0].mxu0
      %v566 = vadd.f32 %v492, %v565
      %v567 = vpop.f32.mrb[0].mxu0
      %v568 = vadd.f32 %v494, %v567
      %569 = vdwg.mxu0
      %v570 = vld [vmem:[%s4] sm:$0xff]
      %572 = vset.pattern.permute.xlu0 0
      %573 = vperm.xlu0 %572, %v570
      %v574 = vpop.permute.xlu0 %573
      %v576 = vadd.f32 %v566, %v574
      %v577 = vadd.f32 %v568, %v574
      %v578 = vmax.f32 %v576, 0.0
      %v579 = vmax.f32 %v577, 0.0
      %580 = vst [vmem:[#allocation3 + $0x8] sm:$0xff] %v578
      %581 = vst [vmem:[#allocation3 + $0x10] sm:$0xff] %v579
      %v582 = vlaneseq
      %v583 = vand.u32 %v582, 127
      %v584 = vadd.s32 %v583, 128
      %v585 = vand.u32 %v583, 15
      %v586 = vand.u32 %v584, 15
      %v587 = vshra.s32 %v583, 4
      %v588 = vshra.s32 %v584, 4
      %v589 = vand.u32 %v587, 15
      %v590 = vand.u32 %v588, 15
      %vm591 = vcmp.ge.s32.totalorder %v589, 1
      %vm592 = vcmp.ge.s32.totalorder %v590, 1
      %vm593 = vcmp.ge.s32.totalorder %v585, 1
      %vm594 = vcmp.ge.s32.totalorder %v586, 1
      %v595 = vld [vmem:[#allocation3] sm:$0xff]
      %v596 = vld [vmem:[#allocation3 + $0x8] sm:$0xff]
      %v597 = vld [vmem:[#allocation3 + $0x10] sm:$0xff]
      %vm598 = vmand %vm591, %vm593
      %vm599 = vmand %vm592, %vm594
      %v600 = vsel %vm598, 1, 0
      %v601 = vsel %vm599, 1, 0
      %vm602 = vcmp.eq.s32.totalorder %v600, 1
      %vm603 = vcmp.eq.s32.totalorder %v601, 1
      %607 = vrot.lane.b32.xlu0 %v595, 17
      %v608 = vpop.permute.xlu0 %607
      %609 = vrot.lane.b32.xlu0 %v596, 17
      %v610 = vpop.permute.xlu0 %609
      %611 = vrot.lane.b32.xlu0 %v597, 17
      %v612 = vpop.permute.xlu0 %611
      %vm613 = vcmask 138240
      %v614 = vsel %vm613, %v608, %v610
      %v615 = vsel %vm613, %v610, %v612
      %v618 = vsel %vm602, %v614, 0.0
      %v619 = vsel %vm603, %v615, 0.0
      %620 = vst [vmem:[#allocation2] sm:$0xff] %v618
      %621 = vst [vmem:[#allocation2 + $0x8] sm:$0xff] %v619
      %v622 = vld [vmem:[#allocation3] sm:$0xff]
      %v623 = vld [vmem:[#allocation3 + $0x8] sm:$0xff]
      %v624 = vld [vmem:[#allocation3 + $0x10] sm:$0xff]
      %v625 = vsel %vm591, 1, 0
      %v626 = vsel %vm592, 1, 0
      %vm627 = vcmp.eq.s32.totalorder %v625, 1
      %vm628 = vcmp.eq.s32.totalorder %v626, 1
      %632 = vrot.lane.b32.xlu0 %v622, 16
      %v633 = vpop.permute.xlu0 %632
      %634 = vrot.lane.b32.xlu0 %v623, 16
      %v635 = vpop.permute.xlu0 %634
      %636 = vrot.lane.b32.xlu0 %v624, 16
      %v637 = vpop.permute.xlu0 %636
      %vm638 = vcmask 130048
      %v639 = vsel %vm638, %v633, %v635
      %v640 = vsel %vm638, %v635, %v637
      %v643 = vsel %vm627, %v639, 0.0
      %v644 = vsel %vm628, %v640, 0.0
      %645 = vst [vmem:[#allocation2 + $0x10] sm:$0xff] %v643
      %646 = vst [vmem:[#allocation2 + $0x18] sm:$0xff] %v644
      %vm647 = vcmp.le.s32.totalorder %v585, 14
      %vm648 = vcmp.le.s32.totalorder %v586, 14
      %v649 = vld [vmem:[#allocation3] sm:$0xff]
      %v650 = vld [vmem:[#allocation3 + $0x8] sm:$0xff]
      %v651 = vld [vmem:[#allocation3 + $0x10] sm:$0xff]
      %vm652 = vmand %vm591, %vm647
      %vm653 = vmand %vm592, %vm648
      %v654 = vsel %vm652, 1, 0
      %v655 = vsel %vm653, 1, 0
      %vm656 = vcmp.eq.s32.totalorder %v654, 1
      %vm657 = vcmp.eq.s32.totalorder %v655, 1
      %661 = vrot.lane.b32.xlu0 %v649, 15
      %v662 = vpop.permute.xlu0 %661
      %663 = vrot.lane.b32.xlu0 %v650, 15
      %v664 = vpop.permute.xlu0 %663
      %665 = vrot.lane.b32.xlu0 %v651, 15
      %v666 = vpop.permute.xlu0 %665
      %vm667 = vcmask 121856
      %v668 = vsel %vm667, %v662, %v664
      %v669 = vsel %vm667, %v664, %v666
      %v672 = vsel %vm656, %v668, 0.0
      %v673 = vsel %vm657, %v669, 0.0
      %674 = vst [vmem:[#allocation2 + $0x20] sm:$0xff] %v672
      %675 = vst [vmem:[#allocation2 + $0x28] sm:$0xff] %v673
      %v676 = vld [vmem:[#allocation3] sm:$0xff]
      %v677 = vld [vmem:[#allocation3 + $0x8] sm:$0xff]
      %v678 = vld [vmem:[#allocation3 + $0x10] sm:$0xff]
      %v679 = vsel %vm593, 1, 0
      %v680 = vsel %vm594, 1, 0
      %vm681 = vcmp.eq.s32.totalorder %v679, 1
      %vm682 = vcmp.eq.s32.totalorder %v680, 1
      %686 = vrot.lane.b32.xlu0 %v676, 1
      %v687 = vpop.permute.xlu0 %686
      %688 = vrot.lane.b32.xlu0 %v677, 1
      %v689 = vpop.permute.xlu0 %688
      %690 = vrot.lane.b32.xlu0 %v678, 1
      %v691 = vpop.permute.xlu0 %690
      %vm692 = vcmask 7168
      %v693 = vsel %vm692, %v687, %v689
      %v694 = vsel %vm692, %v689, %v691
      %v697 = vsel %vm681, %v693, 0.0
      %v698 = vsel %vm682, %v694, 0.0
      %699 = vst [vmem:[#allocation2 + $0x30] sm:$0xff] %v697
      %700 = vst [vmem:[#allocation2 + $0x38] sm:$0xff] %v698
      %701 = vst [vmem:[#allocation2 + $0x40] sm:$0xff] %v578
      %702 = vst [vmem:[#allocation2 + $0x48] sm:$0xff] %v579
      %v703 = vld [vmem:[#allocation3 + $0x8] sm:$0xff]
      %v704 = vld [vmem:[#allocation3 + $0x10] sm:$0xff]
      %v705 = vld [vmem:[#allocation3 + $0x18] sm:$0xff]
      %v706 = vsel %vm647, 1, 0
      %v707 = vsel %vm648, 1, 0
      %vm708 = vcmp.eq.s32.totalorder %v706, 1
      %vm709 = vcmp.eq.s32.totalorder %v707, 1
      %713 = vrot.lane.b32.xlu0 %v703, 127
      %v714 = vpop.permute.xlu0 %713
      %715 = vrot.lane.b32.xlu0 %v704, 127
      %v716 = vpop.permute.xlu0 %715
      %717 = vrot.lane.b32.xlu0 %v705, 127
      %v718 = vpop.permute.xlu0 %717
      %vm719 = vcmask 1039360
      %v720 = vsel %vm719, %v714, %v716
      %v721 = vsel %vm719, %v716, %v718
      %v724 = vsel %vm708, %v720, 0.0
      %v725 = vsel %vm709, %v721, 0.0
      %726 = vst [vmem:[#allocation2 + $0x50] sm:$0xff] %v724
      %727 = vst [vmem:[#allocation2 + $0x58] sm:$0xff] %v725
      %vm728 = vcmp.le.s32.totalorder %v589, 14
      %vm729 = vcmp.le.s32.totalorder %v590, 14
      %v730 = vld [vmem:[#allocation3 + $0x8] sm:$0xff]
      %v731 = vld [vmem:[#allocation3 + $0x10] sm:$0xff]
      %v732 = vld [vmem:[#allocation3 + $0x18] sm:$0xff]
      %vm733 = vmand %vm728, %vm593
      %vm734 = vmand %vm729, %vm594
      %v735 = vsel %vm733, 1, 0
      %v736 = vsel %vm734, 1, 0
      %vm737 = vcmp.eq.s32.totalorder %v735, 1
      %vm738 = vcmp.eq.s32.totalorder %v736, 1
      %742 = vrot.lane.b32.xlu0 %v730, 113
      %v743 = vpop.permute.xlu0 %742
      %744 = vrot.lane.b32.xlu0 %v731, 113
      %v745 = vpop.permute.xlu0 %744
      %746 = vrot.lane.b32.xlu0 %v732, 113
      %v747 = vpop.permute.xlu0 %746
      %vm748 = vcmask 924672
      %v749 = vsel %vm748, %v743, %v745
      %v750 = vsel %vm748, %v745, %v747
      %v753 = vsel %vm737, %v749, 0.0
      %v754 = vsel %vm738, %v750, 0.0
      %755 = vst [vmem:[#allocation2 + $0x60] sm:$0xff] %v753
      %756 = vst [vmem:[#allocation2 + $0x68] sm:$0xff] %v754
      %v757 = vld [vmem:[#allocation3 + $0x8] sm:$0xff]
      %v758 = vld [vmem:[#allocation3 + $0x10] sm:$0xff]
      %v759 = vld [vmem:[#allocation3 + $0x18] sm:$0xff]
      %v760 = vsel %vm728, 1, 0
      %v761 = vsel %vm729, 1, 0
      %vm762 = vcmp.eq.s32.totalorder %v760, 1
      %vm763 = vcmp.eq.s32.totalorder %v761, 1
      %767 = vrot.lane.b32.xlu0 %v757, 112
      %v768 = vpop.permute.xlu0 %767
      %769 = vrot.lane.b32.xlu0 %v758, 112
      %v770 = vpop.permute.xlu0 %769
      %771 = vrot.lane.b32.xlu0 %v759, 112
      %v772 = vpop.permute.xlu0 %771
      %vm773 = vcmask 916480
      %v774 = vsel %vm773, %v768, %v770
      %v775 = vsel %vm773, %v770, %v772
      %v778 = vsel %vm762, %v774, 0.0
      %v779 = vsel %vm763, %v775, 0.0
      %780 = vst [vmem:[#allocation2 + $0x70] sm:$0xff] %v778
      %781 = vst [vmem:[#allocation2 + $0x78] sm:$0xff] %v779
      %v782 = vld [vmem:[#allocation3 + $0x8] sm:$0xff]
      %v783 = vld [vmem:[#allocation3 + $0x10] sm:$0xff]
      %v784 = vld [vmem:[#allocation3 + $0x18] sm:$0xff]
      %vm785 = vmand %vm728, %vm647
      %vm786 = vmand %vm729, %vm648
      %v787 = vsel %vm785, 1, 0
      %v788 = vsel %vm786, 1, 0
      %vm789 = vcmp.eq.s32.totalorder %v787, 1
      %vm790 = vcmp.eq.s32.totalorder %v788, 1
      %794 = vrot.lane.b32.xlu0 %v782, 111
      %v795 = vpop.permute.xlu0 %794
      %796 = vrot.lane.b32.xlu0 %v783, 111
      %v797 = vpop.permute.xlu0 %796
      %798 = vrot.lane.b32.xlu0 %v784, 111
      %v799 = vpop.permute.xlu0 %798
      %vm800 = vcmask 908288
      %v801 = vsel %vm800, %v795, %v797
      %v802 = vsel %vm800, %v797, %v799
      %v805 = vsel %vm789, %v801, 0.0
      %v806 = vsel %vm790, %v802, 0.0
      %807 = vst [vmem:[#allocation2 + $0x80] sm:$0xff] %v805
      %808 = vst [vmem:[#allocation2 + $0x88] sm:$0xff] %v806
      %v809 = vld [vmem:[%s5] sm:$0xff]
      %v810 = vld [vmem:[#allocation2] sm:$0xff]
      %v811 = vld [vmem:[#allocation2 + $0x8] sm:$0xff]
      %v812 = vld [vmem:[#allocation2 + $0x10] sm:$0xff]
      %v813 = vld [vmem:[#allocation2 + $0x18] sm:$0xff]
      %v814 = vld [vmem:[#allocation2 + $0x20] sm:$0xff]
      %v815 = vld [vmem:[#allocation2 + $0x28] sm:$0xff]
      %v816 = vld [vmem:[#allocation2 + $0x30] sm:$0xff]
      %v817 = vld [vmem:[#allocation2 + $0x38] sm:$0xff]
      %v818 = vld [vmem:[#allocation2 + $0x40] sm:$0xff]
      %v819 = vld [vmem:[#allocation2 + $0x48] sm:$0xff]
      %v820 = vld [vmem:[#allocation2 + $0x50] sm:$0xff]
      %v821 = vld [vmem:[#allocation2 + $0x58] sm:$0xff]
      %v822 = vld [vmem:[#allocation2 + $0x60] sm:$0xff]
      %v823 = vld [vmem:[#allocation2 + $0x68] sm:$0xff]
      %v824 = vld [vmem:[#allocation2 + $0x70] sm:$0xff]
      %v825 = vld [vmem:[#allocation2 + $0x78] sm:$0xff]
      %v826 = vld [vmem:[#allocation2 + $0x80] sm:$0xff]
      %v827 = vld [vmem:[#allocation2 + $0x88] sm:$0xff]
      %v828 = vld [vmem:[%s6] sm:$0xff]
      %830 = vset.pattern.permute.xlu0 0
      %831 = vperm.xlu0 %830, %v828
      %v832 = vpop.permute.xlu0 %831
      %vm834 = vcmask 588800
      %v836 = vsel %vm834, %v809, 0
      %838 = vmatprep.subr.mxu0 %v811
      %839 = vmatpush1.msra.mxu0 %v810
      %840 = vmatprep.subr.mxu0 %v813
      %841 = vmatpush1.msra.mxu0 %v812
      %842 = vmatprep.subr.mxu0 %v815
      %843 = vmatpush1.msra.mxu0 %v814
      %844 = vmatprep.subr.mxu0 %v817
      %845 = vmatpush1.msra.mxu0 %v816
      %846 = vmatprep.subr.mxu0 %v819
      %847 = vmatpush1.msra.mxu0 %v818
      %848 = vmatprep.subr.mxu0 %v821
      %849 = vmatpush1.msra.mxu0 %v820
      %850 = vmatprep.subr.mxu0 %v823
      %851 = vmatpush1.msra.mxu0 %v822
      %852 = vmatprep.subr.mxu0 %v825
      %853 = vmatpush1.msra.mxu0 %v824
      %854 = vmatprep.subr.mxu0 %v827
      %855 = vmatpush1.msra.mxu0 %v826
      %856 = vmatprep.subr.mxu0 0.0
      %857 = vmatpush1.msra.mxu0 0.0
      %858 = vmatprep.subr.mxu0 0.0
      %859 = vmatpush1.msra.mxu0 0.0
      %860 = vmatprep.subr.mxu0 0.0
      %861 = vmatpush1.msra.mxu0 0.0
      %862 = vmatprep.subr.mxu0 0.0
      %863 = vmatpush1.msra.mxu0 0.0
      %864 = vmatprep.subr.mxu0 0.0
      %865 = vmatpush1.msra.mxu0 0.0
      %866 = vmatprep.subr.mxu0 0.0
      %867 = vmatpush1.msra.mxu0 0.0
      %868 = vmatprep.subr.mxu0 0.0
      %869 = vmatpush1.msra.mxu0 0.0
      %870 = vmatprep.subr.mxu0 0.0
      %871 = vmatpush1.msra.mxu0 0.0
      %872 = vmatprep.subr.mxu0 0.0
      %873 = vmatpush1.msra.mxu0 0.0
      %874 = vmatprep.subr.mxu0 0.0
      %875 = vmatpush1.msra.mxu0 0.0
      %876 = vmatprep.subr.mxu0 0.0
      %877 = vmatpush1.msra.mxu0 0.0
      %878 = vmatprep.subr.mxu0 0.0
      %879 = vmatpush1.msra.mxu0 0.0
      %880 = vmatprep.subr.mxu0 0.0
      %881 = vmatpush1.msra.mxu0 0.0
      %882 = vmatprep.subr.mxu0 0.0
      %883 = vmatpush1.msra.mxu0 0.0
      %884 = vmatprep.subr.mxu0 0.0
      %885 = vmatpush1.msra.mxu0 0.0
      %886 = vmatprep.subr.mxu0 0.0
      %887 = vmatpush1.msra.mxu0 0.0
      %888 = vmatprep.subr.mxu0 0.0
      %889 = vmatpush1.msra.mxu0 0.0
      %890 = vmatprep.subr.mxu0 0.0
      %891 = vmatpush1.msra.mxu0 0.0
      %892 = vmatprep.subr.mxu0 0.0
      %893 = vmatpush1.msra.mxu0 0.0
      %894 = vmatprep.subr.mxu0 0.0
      %895 = vmatpush1.msra.mxu0 0.0
      %896 = vmatprep.subr.mxu0 0.0
      %897 = vmatpush1.msra.mxu0 0.0
      %898 = vmatprep.subr.mxu0 0.0
      %899 = vmatpush1.msra.mxu0 0.0
      %900 = vmatprep.subr.mxu0 0.0
      %901 = vmatpush1.msra.mxu0 0.0
      %902 = vmatprep.mubr.f32.mxu0 0.0
      %903 = vmatmul.mubr.f32.gmra.mrb[0].mxu0 %v836
      %v904 = vpop.f32.mrb[0].mxu0
      %v905 = vadd.f32 %v832, %v904
      %v906 = vpop.f32.mrb[0].mxu0
      %v907 = vadd.f32 %v832, %v906
      %908 = vdwg.mxu0
      %v909 = vmax.f32 %v905, 0.0
      %v910 = vmax.f32 %v907, 0.0
      %911 = vst [vmem:[#allocation3 + $0x8] sm:$0xff] %v909
      %912 = vst [vmem:[#allocation3 + $0x10] sm:$0xff] %v910
      %v913 = vld [vmem:[#allocation3] sm:$0xff]
      %v914 = vld [vmem:[#allocation3 + $0x8] sm:$0xff]
      %v915 = vld [vmem:[#allocation3 + $0x10] sm:$0xff]
      %919 = vrot.lane.b32.xlu0 %v913, 17
      %v920 = vpop.permute.xlu0 %919
      %921 = vrot.lane.b32.xlu0 %v914, 17
      %v922 = vpop.permute.xlu0 %921
      %923 = vrot.lane.b32.xlu0 %v915, 17
      %v924 = vpop.permute.xlu0 %923
      %v925 = vsel %vm613, %v920, %v922
      %v926 = vsel %vm613, %v922, %v924
      %v929 = vsel %vm602, %v925, 0.0
      %v930 = vsel %vm603, %v926, 0.0
      %931 = vst [vmem:[#allocation2] sm:$0xff] %v929
      %932 = vst [vmem:[#allocation2 + $0x8] sm:$0xff] %v930
      %v933 = vld [vmem:[#allocation3] sm:$0xff]
      %v934 = vld [vmem:[#allocation3 + $0x8] sm:$0xff]
      %v935 = vld [vmem:[#allocation3 + $0x10] sm:$0xff]
      %939 = vrot.lane.b32.xlu0 %v933, 16
      %v940 = vpop.permute.xlu0 %939
      %941 = vrot.lane.b32.xlu0 %v934, 16
      %v942 = vpop.permute.xlu0 %941
      %943 = vrot.lane.b32.xlu0 %v935, 16
      %v944 = vpop.permute.xlu0 %943
      %v945 = vsel %vm638, %v940, %v942
      %v946 = vsel %vm638, %v942, %v944
      %v949 = vsel %vm627, %v945, 0.0
      %v950 = vsel %vm628, %v946, 0.0
      %951 = vst [vmem:[#allocation2 + $0x10] sm:$0xff] %v949
      %952 = vst [vmem:[#allocation2 + $0x18] sm:$0xff] %v950
      %v953 = vld [vmem:[#allocation3] sm:$0xff]
      %v954 = vld [vmem:[#allocation3 + $0x8] sm:$0xff]
      %v955 = vld [vmem:[#allocation3 + $0x10] sm:$0xff]
      %959 = vrot.lane.b32.xlu0 %v953, 15
      %v960 = vpop.permute.xlu0 %959
      %961 = vrot.lane.b32.xlu0 %v954, 15
      %v962 = vpop.permute.xlu0 %961
      %963 = vrot.lane.b32.xlu0 %v955, 15
      %v964 = vpop.permute.xlu0 %963
      %v965 = vsel %vm667, %v960, %v962
      %v966 = vsel %vm667, %v962, %v964
      %v969 = vsel %vm656, %v965, 0.0
      %v970 = vsel %vm657, %v966, 0.0
      %971 = vst [vmem:[#allocation2 + $0x20] sm:$0xff] %v969
      %972 = vst [vmem:[#allocation2 + $0x28] sm:$0xff] %v970
      %v973 = vld [vmem:[#allocation3] sm:$0xff]
      %v974 = vld [vmem:[#allocation3 + $0x8] sm:$0xff]
      %v975 = vld [vmem:[#allocation3 + $0x10] sm:$0xff]
      %979 = vrot.lane.b32.xlu0 %v973, 1
      %v980 = vpop.permute.xlu0 %979
      %981 = vrot.lane.b32.xlu0 %v974, 1
      %v982 = vpop.permute.xlu0 %981
      %983 = vrot.lane.b32.xlu0 %v975, 1
      %v984 = vpop.permute.xlu0 %983
      %v985 = vsel %vm692, %v980, %v982
      %v986 = vsel %vm692, %v982, %v984
      %v989 = vsel %vm681, %v985, 0.0
      %v990 = vsel %vm682, %v986, 0.0
      %991 = vst [vmem:[#allocation2 + $0x30] sm:$0xff] %v989
      %992 = vst [vmem:[#allocation2 + $0x38] sm:$0xff] %v990
      %993 = vst [vmem:[#allocation2 + $0x40] sm:$0xff] %v909
      %994 = vst [vmem:[#allocation2 + $0x48] sm:$0xff] %v910
      %v995 = vld [vmem:[#allocation3 + $0x8] sm:$0xff]
      %v996 = vld [vmem:[#allocation3 + $0x10] sm:$0xff]
      %v997 = vld [vmem:[#allocation3 + $0x18] sm:$0xff]
      %1001 = vrot.lane.b32.xlu0 %v995, 127
      %v1002 = vpop.permute.xlu0 %1001
      %1003 = vrot.lane.b32.xlu0 %v996, 127
      %v1004 = vpop.permute.xlu0 %1003
      %1005 = vrot.lane.b32.xlu0 %v997, 127
      %v1006 = vpop.permute.xlu0 %1005
      %v1007 = vsel %vm719, %v1002, %v1004
      %v1008 = vsel %vm719, %v1004, %v1006
      %v1011 = vsel %vm708, %v1007, 0.0
      %v1012 = vsel %vm709, %v1008, 0.0
      %1013 = vst [vmem:[#allocation2 + $0x50] sm:$0xff] %v1011
      %1014 = vst [vmem:[#allocation2 + $0x58] sm:$0xff] %v1012
      %v1015 = vld [vmem:[#allocation3 + $0x8] sm:$0xff]
      %v1016 = vld [vmem:[#allocation3 + $0x10] sm:$0xff]
      %v1017 = vld [vmem:[#allocation3 + $0x18] sm:$0xff]
      %1021 = vrot.lane.b32.xlu0 %v1015, 113
      %v1022 = vpop.permute.xlu0 %1021
      %1023 = vrot.lane.b32.xlu0 %v1016, 113
      %v1024 = vpop.permute.xlu0 %1023
      %1025 = vrot.lane.b32.xlu0 %v1017, 113
      %v1026 = vpop.permute.xlu0 %1025
      %v1027 = vsel %vm748, %v1022, %v1024
      %v1028 = vsel %vm748, %v1024, %v1026
      %v1031 = vsel %vm737, %v1027, 0.0
      %v1032 = vsel %vm738, %v1028, 0.0
      %1033 = vst [vmem:[#allocation2 + $0x60] sm:$0xff] %v1031
      %1034 = vst [vmem:[#allocation2 + $0x68] sm:$0xff] %v1032
      %v1035 = vld [vmem:[#allocation3 + $0x8] sm:$0xff]
      %v1036 = vld [vmem:[#allocation3 + $0x10] sm:$0xff]
      %v1037 = vld [vmem:[#allocation3 + $0x18] sm:$0xff]
      %1041 = vrot.lane.b32.xlu0 %v1035, 112
      %v1042 = vpop.permute.xlu0 %1041
      %1043 = vrot.lane.b32.xlu0 %v1036, 112
      %v1044 = vpop.permute.xlu0 %1043
      %1045 = vrot.lane.b32.xlu0 %v1037, 112
      %v1046 = vpop.permute.xlu0 %1045
      %v1047 = vsel %vm773, %v1042, %v1044
      %v1048 = vsel %vm773, %v1044, %v1046
      %v1051 = vsel %vm762, %v1047, 0.0
      %v1052 = vsel %vm763, %v1048, 0.0
      %1053 = vst [vmem:[#allocation2 + $0x70] sm:$0xff] %v1051
      %1054 = vst [vmem:[#allocation2 + $0x78] sm:$0xff] %v1052
      %v1055 = vld [vmem:[#allocation3 + $0x8] sm:$0xff]
      %v1056 = vld [vmem:[#allocation3 + $0x10] sm:$0xff]
      %v1057 = vld [vmem:[#allocation3 + $0x18] sm:$0xff]
      %1061 = vrot.lane.b32.xlu0 %v1055, 111
      %v1062 = vpop.permute.xlu0 %1061
      %1063 = vrot.lane.b32.xlu0 %v1056, 111
      %v1064 = vpop.permute.xlu0 %1063
      %1065 = vrot.lane.b32.xlu0 %v1057, 111
      %v1066 = vpop.permute.xlu0 %1065
      %v1067 = vsel %vm800, %v1062, %v1064
      %v1068 = vsel %vm800, %v1064, %v1066
      %v1071 = vsel %vm789, %v1067, 0.0
      %v1072 = vsel %vm790, %v1068, 0.0
      %1073 = vst [vmem:[#allocation2 + $0x80] sm:$0xff] %v1071
      %1074 = vst [vmem:[#allocation2 + $0x88] sm:$0xff] %v1072
      %v1075 = vld [vmem:[%s7] sm:$0xff]
      %v1076 = vld [vmem:[#allocation2] sm:$0xff]
      %v1077 = vld [vmem:[#allocation2 + $0x8] sm:$0xff]
      %v1078 = vld [vmem:[#allocation2 + $0x10] sm:$0xff]
      %v1079 = vld [vmem:[#allocation2 + $0x18] sm:$0xff]
      %v1080 = vld [vmem:[#allocation2 + $0x20] sm:$0xff]
      %v1081 = vld [vmem:[#allocation2 + $0x28] sm:$0xff]
      %v1082 = vld [vmem:[#allocation2 + $0x30] sm:$0xff]
      %v1083 = vld [vmem:[#allocation2 + $0x38] sm:$0xff]
      %v1084 = vld [vmem:[#allocation2 + $0x40] sm:$0xff]
      %v1085 = vld [vmem:[#allocation2 + $0x48] sm:$0xff]
      %v1086 = vld [vmem:[#allocation2 + $0x50] sm:$0xff]
      %v1087 = vld [vmem:[#allocation2 + $0x58] sm:$0xff]
      %v1088 = vld [vmem:[#allocation2 + $0x60] sm:$0xff]
      %v1089 = vld [vmem:[#allocation2 + $0x68] sm:$0xff]
      %v1090 = vld [vmem:[#allocation2 + $0x70] sm:$0xff]
      %v1091 = vld [vmem:[#allocation2 + $0x78] sm:$0xff]
      %v1092 = vld [vmem:[#allocation2 + $0x80] sm:$0xff]
      %v1093 = vld [vmem:[#allocation2 + $0x88] sm:$0xff]
      %v1094 = vld [vmem:[%s8] sm:$0xff]
      %1096 = vset.pattern.permute.xlu0 0
      %1097 = vperm.xlu0 %1096, %v1094
      %v1098 = vpop.permute.xlu0 %1097
      %v1101 = vsel %vm834, %v1075, 0
      %1103 = vmatprep.subr.mxu0 %v1077
      %1104 = vmatpush1.msra.mxu0 %v1076
      %1105 = vmatprep.subr.mxu0 %v1079
      %1106 = vmatpush1.msra.mxu0 %v1078
      %1107 = vmatprep.subr.mxu0 %v1081
      %1108 = vmatpush1.msra.mxu0 %v1080
      %1109 = vmatprep.subr.mxu0 %v1083
      %1110 = vmatpush1.msra.mxu0 %v1082
      %1111 = vmatprep.subr.mxu0 %v1085
      %1112 = vmatpush1.msra.mxu0 %v1084
      %1113 = vmatprep.subr.mxu0 %v1087
      %1114 = vmatpush1.msra.mxu0 %v1086
      %1115 = vmatprep.subr.mxu0 %v1089
      %1116 = vmatpush1.msra.mxu0 %v1088
      %1117 = vmatprep.subr.mxu0 %v1091
      %1118 = vmatpush1.msra.mxu0 %v1090
      %1119 = vmatprep.subr.mxu0 %v1093
      %1120 = vmatpush1.msra.mxu0 %v1092
      %1121 = vmatprep.subr.mxu0 0.0
      %1122 = vmatpush1.msra.mxu0 0.0
      %1123 = vmatprep.subr.mxu0 0.0
      %1124 = vmatpush1.msra.mxu0 0.0
      %1125 = vmatprep.subr.mxu0 0.0
      %1126 = vmatpush1.msra.mxu0 0.0
      %1127 = vmatprep.subr.mxu0 0.0
      %1128 = vmatpush1.msra.mxu0 0.0
      %1129 = vmatprep.subr.mxu0 0.0
      %1130 = vmatpush1.msra.mxu0 0.0
      %1131 = vmatprep.subr.mxu0 0.0
      %1132 = vmatpush1.msra.mxu0 0.0
      %1133 = vmatprep.subr.mxu0 0.0
      %1134 = vmatpush1.msra.mxu0 0.0
      %1135 = vmatprep.subr.mxu0 0.0
      %1136 = vmatpush1.msra.mxu0 0.0
      %1137 = vmatprep.subr.mxu0 0.0
      %1138 = vmatpush1.msra.mxu0 0.0
      %1139 = vmatprep.subr.mxu0 0.0
      %1140 = vmatpush1.msra.mxu0 0.0
      %1141 = vmatprep.subr.mxu0 0.0
      %1142 = vmatpush1.msra.mxu0 0.0
      %1143 = vmatprep.subr.mxu0 0.0
      %1144 = vmatpush1.msra.mxu0 0.0
      %1145 = vmatprep.subr.mxu0 0.0
      %1146 = vmatpush1.msra.mxu0 0.0
      %1147 = vmatprep.subr.mxu0 0.0
      %1148 = vmatpush1.msra.mxu0 0.0
      %1149 = vmatprep.subr.mxu0 0.0
      %1150 = vmatpush1.msra.mxu0 0.0
      %1151 = vmatprep.subr.mxu0 0.0
      %1152 = vmatpush1.msra.mxu0 0.0
      %1153 = vmatprep.subr.mxu0 0.0
      %1154 = vmatpush1.msra.mxu0 0.0
      %1155 = vmatprep.subr.mxu0 0.0
      %1156 = vmatpush1.msra.mxu0 0.0
      %1157 = vmatprep.subr.mxu0 0.0
      %1158 = vmatpush1.msra.mxu0 0.0
      %1159 = vmatprep.subr.mxu0 0.0
      %1160 = vmatpush1.msra.mxu0 0.0
      %1161 = vmatprep.subr.mxu0 0.0
      %1162 = vmatpush1.msra.mxu0 0.0
      %1163 = vmatprep.subr.mxu0 0.0
      %1164 = vmatpush1.msra.mxu0 0.0
      %1165 = vmatprep.subr.mxu0 0.0
      %1166 = vmatpush1.msra.mxu0 0.0
      %1167 = vmatprep.mubr.f32.mxu0 0.0
      %1168 = vmatmul.mubr.f32.gmra.mrb[0].mxu0 %v1101
      %v1169 = vpop.f32.mrb[0].mxu0
      %v1170 = vadd.f32 %v1098, %v1169
      %v1171 = vpop.f32.mrb[0].mxu0
      %v1172 = vadd.f32 %v1098, %v1171
      %1173 = vdwg.mxu0
      %v1174 = vadd.f32 %v1170, %v578
      %v1175 = vadd.f32 %v1172, %v579
      %v1176 = vmax.f32 %v1174, 0.0
      %v1177 = vmax.f32 %v1175, 0.0
      %v1178 = vld [vmem:[%s9] sm:$0xff]
      %v1179 = vld [vmem:[%s10] sm:$0xff]
      %1181 = vset.pattern.permute.xlu0 0
      %1182 = vperm.xlu0 %1181, %v1179
      %v1183 = vpop.permute.xlu0 %1182
      %v1186 = vsel %vm421, %v1178, 0
      %1188 = vmatprep.subr.mxu0 %v1177
      %1189 = vmatpush1.msra.mxu0 %v1176
      %1190 = vmatprep.subr.mxu0 0.0
      %1191 = vmatpush1.msra.mxu0 0.0
      %1192 = vmatprep.subr.mxu0 0.0
      %1193 = vmatpush1.msra.mxu0 0.0
      %1194 = vmatprep.subr.mxu0 0.0
      %1195 = vmatpush1.msra.mxu0 0.0
      %1196 = vmatprep.subr.mxu0 0.0
      %1197 = vmatpush1.msra.mxu0 0.0
      %1198 = vmatprep.subr.mxu0 0.0
      %1199 = vmatpush1.msra.mxu0 0.0
      %1200 = vmatprep.subr.mxu0 0.0
      %1201 = vmatpush1.msra.mxu0 0.0
      %1202 = vmatprep.subr.mxu0 0.0
      %1203 = vmatpush1.msra.mxu0 0.0
      %1204 = vmatprep.subr.mxu0 0.0
      %1205 = vmatpush1.msra.mxu0 0.0
      %1206 = vmatprep.subr.mxu0 0.0
      %1207 = vmatpush1.msra.mxu0 0.0
      %1208 = vmatprep.subr.mxu0 0.0
      %1209 = vmatpush1.msra.mxu0 0.0
      %1210 = vmatprep.subr.mxu0 0.0
      %1211 = vmatpush1.msra.mxu0 0.0
      %1212 = vmatprep.subr.mxu0 0.0
      %1213 = vmatpush1.msra.mxu0 0.0
      %1214 = vmatprep.subr.mxu0 0.0
      %1215 = vmatpush1.msra.mxu0 0.0
      %1216 = vmatprep.subr.mxu0 0.0
      %1217 = vmatpush1.msra.mxu0 0.0
      %1218 = vmatprep.subr.mxu0 0.0
      %1219 = vmatpush1.msra.mxu0 0.0
      %1220 = vmatprep.subr.mxu0 0.0
      %1221 = vmatpush1.msra.mxu0 0.0
      %1222 = vmatprep.subr.mxu0 0.0
      %1223 = vmatpush1.msra.mxu0 0.0
      %1224 = vmatprep.subr.mxu0 0.0
      %1225 = vmatpush1.msra.mxu0 0.0
      %1226 = vmatprep.subr.mxu0 0.0
      %1227 = vmatpush1.msra.mxu0 0.0
      %1228 = vmatprep.subr.mxu0 0.0
      %1229 = vmatpush1.msra.mxu0 0.0
      %1230 = vmatprep.subr.mxu0 0.0
      %1231 = vmatpush1.msra.mxu0 0.0
      %1232 = vmatprep.subr.mxu0 0.0
      %1233 = vmatpush1.msra.mxu0 0.0
      %1234 = vmatprep.subr.mxu0 0.0
      %1235 = vmatpush1.msra.mxu0 0.0
      %1236 = vmatprep.subr.mxu0 0.0
      %1237 = vmatpush1.msra.mxu0 0.0
      %1238 = vmatprep.subr.mxu0 0.0
      %1239 = vmatpush1.msra.mxu0 0.0
      %1240 = vmatprep.subr.mxu0 0.0
      %1241 = vmatpush1.msra.mxu0 0.0
      %1242 = vmatprep.subr.mxu0 0.0
      %1243 = vmatpush1.msra.mxu0 0.0
      %1244 = vmatprep.subr.mxu0 0.0
      %1245 = vmatpush1.msra.mxu0 0.0
      %1246 = vmatprep.subr.mxu0 0.0
      %1247 = vmatpush1.msra.mxu0 0.0
      %1248 = vmatprep.subr.mxu0 0.0
      %1249 = vmatpush1.msra.mxu0 0.0
      %1250 = vmatprep.subr.mxu0 0.0
      %1251 = vmatpush1.msra.mxu0 0.0
      %1252 = vmatprep.mubr.f32.mxu0 0.0
      %1253 = vmatmul.mubr.f32.gmra.mrb[0].mxu0 %v1186
      %v1254 = vpop.f32.mrb[0].mxu0
      %v1255 = vadd.f32 %v1183, %v1254
      %v1256 = vpop.f32.mrb[0].mxu0
      %v1257 = vadd.f32 %v1183, %v1256
      %1258 = vdwg.mxu0
      %v1259 = vpack.c.bf16 %v1255, %v1255
      %v1260 = vpack.c.bf16 %v1257, %v1257
      %v1263 = vunpack.c.l.b16 %v1259
      %v1264 = vunpack.c.l.b16 %v1260
      %v1265 = vpack.c.b16 %v1264, %v1263
      %1267 = vst [vmem:[%s406] sm:$0xff] %v1265
      %p1268 = scmp.lt.s32.totalorder %s22, 1
      %s1269 = scalar_select %p1268, %s22, 1
      %s1270 = smul.addr %s1269, 2
      %s1271 = smul.addr %s1270, 4
      %s1272 = scalar_lea.vmem %s11, %s1271
      // Predicated region
      $region65: #{unet_with_backbone.10} parent=63 // pred_check
        %p1273 = pneg %p281
      $region66: #{unet_with_backbone.10} parent=63 // pred_check_branch
        %1275 = sbr.rel (%p1273) target = $region68
      $region67: #{unet_with_backbone.10} parent=63 // pred_region
        _
      $region68: #{unet_with_backbone.10} parent=63 // pred_fallthru
        _
    $region64: #{unet_with_backbone.10} parent=5 // pred_fallthru
      _
    %p1276 = scmp.le.s32.totalorder 2, %s17
    // Predicated region
    $region69: #{unet_with_backbone.10} parent=5 // pred_check
      %p1277 = pneg %p1276
    $region70: #{unet_with_backbone.10} parent=5 // pred_check_branch
      %1279 = sbr.rel (%p1277) target = $region72
    $region71: #{unet_with_backbone.10} parent=5 // pred_region
      %s1280 = ssub.s32 %s17, 2
      // Predicated region
      $region73: #{unet_with_backbone.10} parent=71 // pred_check
        %p1281 = pneg %p287
      $region74: #{unet_with_backbone.10} parent=71 // pred_check_branch
        %1283 = sbr.rel (%p1281) target = $region76
      $region75: #{unet_with_backbone.10} parent=71 // pred_region
        %p1284 = scmp.lt.s32.totalorder %s23, 1
        %s1285 = scalar_select %p1284, %s23, 1
        %s1286 = smul.addr %s1285, 2
        %s1287 = smul.addr %s1286, 4
        %s1288 = scalar_lea.vmem %s11, %s1287
      $region76: #{unet_with_backbone.10} parent=71 // pred_fallthru
        _
    $region72: #{unet_with_backbone.10} parent=5 // pred_fallthru
      _
  $region6: #{unet_with_backbone.10} parent=0 // loop_footer
    %s21 = sadd.s32 1, %s17
  $region7: #{unet_with_backbone.10} parent=0 // loop_footer_branch
    %16 = sbr.rel target = $region3
  $region8: #{unet_with_backbone.10} parent=0 // loop_exit
    _

// kernel: unet_with_backbone.11
$region0: #{unet_with_backbone.11}
  #allocation0 [shape = 'u32[]', space=smem, size = 0x4, offset = 0x4, fixed_abs, tag = 'smem constant byte address 0x4 - core index']
  #allocation1 [shape = 'u32[144,128]{1,0:T(1,128)}', space=vmem, size = 0x12000, scoped, tag = 'internal scratch']
  #allocation2 [shape = 'f32[72,1024]{1,0:T(8,128)}', space=vmem, size = 0x48000, scoped, tag = 'scratch operand']
  #allocation3 [shape = 'f32[8,1280]{1,0:T(8,128)}', space=vmem, size = 0xa000, scoped, tag = 'scratch operand']
  %s0 = inlined_call_operand.vmem [shape: bf16[2,8,1024], index: 0, kind: input, shape index: {}]
  %s1 = inlined_call_operand.vmem [shape: f32[8,72], index: 1, kind: input, shape index: {}]
  %s2 = inlined_call_operand.vmem [shape: f32[8,1], index: 2, kind: input, shape index: {}]
  %s3 = inlined_call_operand.vmem [shape: f32[8,72], index: 3, kind: input, shape index: {}]
  %s4 = inlined_call_operand.vmem [shape: f32[8,1], index: 4, kind: input, shape index: {}]
  %s5 = inlined_call_operand.vmem [shape: f32[2,8], index: 5, kind: input, shape index: {}]
  %s6 = inlined_call_operand.vmem [shape: f32[2,1], index: 6, kind: input, shape index: {}]
  %s7 = inlined_call_operand.vmem [shape: f32[2,2,1024], index: 7, kind: output, shape index: {}]
  %s8 = sld [smem:[#allocation0]]
  $region61: #{unet_with_backbone.11} parent=0
    _
  %s10 = ssub.s32 1, %s8
  %s11 = scalar_select 0, %s10, %s8
  loop: start=0, step=1, limit=4
  $region2: #{unet_with_backbone.11} parent=0 // loop_pre_header
    _
  $region3: #{unet_with_backbone.11} parent=0 // loop_header
    %s13 = sphi 0, %s17
    %p14 = scmp.ge.s32.totalorder %s13, 4
    %s23 = sphi 0, %s25
    %s26 = sphi 0, %s23
    %s27 = sphi 0, %s26
    %s43 = sphi 0, %s27
    %s47 = sphi 0, %s47
    %s49 = sphi 0, %s47
    %s50 = sphi 0, %s49
    %s64 = sphi 0, %s50
    %s68 = sphi 0, %s68
    %s70 = sphi 0, %s68
    %s71 = sphi 0, %s70
    %s85 = sphi 0, %s71
    %s89 = sphi 0, %s89
    %s91 = sphi 0, %s89
    %s92 = sphi 0, %s91
    %s106 = sphi 0, %s92
    %s110 = sphi 0, %s110
    %s112 = sphi 0, %s110
    %s113 = sphi 0, %s112
    %s127 = sphi 0, %s113
    %s131 = sphi 0, %s131
    %s133 = sphi 0, %s131
    %s134 = sphi 0, %s133
    %s148 = sphi 0, %s134
    %s152 = sphi 0, %s152
    %s154 = sphi 0, %s152
    %s155 = sphi 0, %s154
    %s169 = sphi 0, %s155
    %s175 = sphi 0, %s177
    %s178 = sphi 0, %s175
    %s179 = sphi 0, %s178
    %s195 = sphi 0, %s179
  $region4: #{unet_with_backbone.11} parent=0 // loop_header_branch
    %16 = sbr.rel (%p14) target = $region8
  $region5: #{unet_with_backbone.11} parent=0 // loop_body
    %s18 = ssub.s32 %s13, 1
    %s19 = ssub.s32 %s13, 2
    %s20 = sadd.s32 %s13, 1
    %s21 = ssub.s32 %s13, %s20
    %p22 = scmp.eq.s32.totalorder %s21, 0
    %s24 = sadd.s32 %s23, 1
    %s25 = scalar_select %p22, %s23, %s24
    %p28 = pneg %p22
    %p29 = scmp.eq.s32.totalorder %s13, 1
    %p30 = por %p28, %p29
    %p31 = scmp.ne.s32.totalorder %s23, %s26
    %p32 = scmp.eq.s32.totalorder %s13, 0
    %p33 = por %p31, %p32
    %p34 = scmp.ne.s32.totalorder %s23, %s26
    %p35 = scmp.eq.s32.totalorder %s18, 1
    %p36 = por %p34, %p35
    %p37 = scmp.ne.s32.totalorder %s26, %s27
    %p38 = scmp.eq.s32.totalorder %s18, 0
    %p39 = por %p37, %p38
    %p40 = scmp.ne.s32.totalorder %s26, %s27
    %p41 = scmp.eq.s32.totalorder %s19, 1
    %p42 = por %p40, %p41
    %p44 = scmp.ne.s32.totalorder %s27, %s43
    %p45 = scmp.eq.s32.totalorder %s19, 0
    %p46 = por %p44, %p45
    %s48 = sadd.s32 %s47, 1
    %p51 = scmp.eq.s32.totalorder %s13, 1
    %p52 = scmp.ne.s32.totalorder %s47, %s49
    %p53 = scmp.eq.s32.totalorder %s13, 0
    %p54 = por %p52, %p53
    %p55 = scmp.ne.s32.totalorder %s47, %s49
    %p56 = scmp.eq.s32.totalorder %s18, 1
    %p57 = por %p55, %p56
    %p58 = scmp.ne.s32.totalorder %s49, %s50
    %p59 = scmp.eq.s32.totalorder %s18, 0
    %p60 = por %p58, %p59
    %p61 = scmp.ne.s32.totalorder %s49, %s50
    %p62 = scmp.eq.s32.totalorder %s19, 1
    %p63 = por %p61, %p62
    %p65 = scmp.ne.s32.totalorder %s50, %s64
    %p66 = scmp.eq.s32.totalorder %s19, 0
    %p67 = por %p65, %p66
    %s69 = sadd.s32 %s68, 1
    %p72 = scmp.eq.s32.totalorder %s13, 1
    %p73 = scmp.ne.s32.totalorder %s68, %s70
    %p74 = scmp.eq.s32.totalorder %s13, 0
    %p75 = por %p73, %p74
    %p76 = scmp.ne.s32.totalorder %s68, %s70
    %p77 = scmp.eq.s32.totalorder %s18, 1
    %p78 = por %p76, %p77
    %p79 = scmp.ne.s32.totalorder %s70, %s71
    %p80 = scmp.eq.s32.totalorder %s18, 0
    %p81 = por %p79, %p80
    %p82 = scmp.ne.s32.totalorder %s70, %s71
    %p83 = scmp.eq.s32.totalorder %s19, 1
    %p84 = por %p82, %p83
    %p86 = scmp.ne.s32.totalorder %s71, %s85
    %p87 = scmp.eq.s32.totalorder %s19, 0
    %p88 = por %p86, %p87
    %s90 = sadd.s32 %s89, 1
    %p93 = scmp.eq.s32.totalorder %s13, 1
    %p94 = scmp.ne.s32.totalorder %s89, %s91
    %p95 = scmp.eq.s32.totalorder %s13, 0
    %p96 = por %p94, %p95
    %p97 = scmp.ne.s32.totalorder %s89, %s91
    %p98 = scmp.eq.s32.totalorder %s18, 1
    %p99 = por %p97, %p98
    %p100 = scmp.ne.s32.totalorder %s91, %s92
    %p101 = scmp.eq.s32.totalorder %s18, 0
    %p102 = por %p100, %p101
    %p103 = scmp.ne.s32.totalorder %s91, %s92
    %p104 = scmp.eq.s32.totalorder %s19, 1
    %p105 = por %p103, %p104
    %p107 = scmp.ne.s32.totalorder %s92, %s106
    %p108 = scmp.eq.s32.totalorder %s19, 0
    %p109 = por %p107, %p108
    %s111 = sadd.s32 %s110, 1
    %p114 = scmp.eq.s32.totalorder %s13, 1
    %p115 = scmp.ne.s32.totalorder %s110, %s112
    %p116 = scmp.eq.s32.totalorder %s13, 0
    %p117 = por %p115, %p116
    %p118 = scmp.ne.s32.totalorder %s110, %s112
    %p119 = scmp.eq.s32.totalorder %s18, 1
    %p120 = por %p118, %p119
    %p121 = scmp.ne.s32.totalorder %s112, %s113
    %p122 = scmp.eq.s32.totalorder %s18, 0
    %p123 = por %p121, %p122
    %p124 = scmp.ne.s32.totalorder %s112, %s113
    %p125 = scmp.eq.s32.totalorder %s19, 1
    %p126 = por %p124, %p125
    %p128 = scmp.ne.s32.totalorder %s113, %s127
    %p129 = scmp.eq.s32.totalorder %s19, 0
    %p130 = por %p128, %p129
    %s132 = sadd.s32 %s131, 1
    %p135 = scmp.eq.s32.totalorder %s13, 1
    %p136 = scmp.ne.s32.totalorder %s131, %s133
    %p137 = scmp.eq.s32.totalorder %s13, 0
    %p138 = por %p136, %p137
    %p139 = scmp.ne.s32.totalorder %s131, %s133
    %p140 = scmp.eq.s32.totalorder %s18, 1
    %p141 = por %p139, %p140
    %p142 = scmp.ne.s32.totalorder %s133, %s134
    %p143 = scmp.eq.s32.totalorder %s18, 0
    %p144 = por %p142, %p143
    %p145 = scmp.ne.s32.totalorder %s133, %s134
    %p146 = scmp.eq.s32.totalorder %s19, 1
    %p147 = por %p145, %p146
    %p149 = scmp.ne.s32.totalorder %s134, %s148
    %p150 = scmp.eq.s32.totalorder %s19, 0
    %p151 = por %p149, %p150
    %s153 = sadd.s32 %s152, 1
    %p156 = scmp.eq.s32.totalorder %s13, 1
    %p157 = scmp.ne.s32.totalorder %s152, %s154
    %p158 = scmp.eq.s32.totalorder %s13, 0
    %p159 = por %p157, %p158
    %p160 = scmp.ne.s32.totalorder %s152, %s154
    %p161 = scmp.eq.s32.totalorder %s18, 1
    %p162 = por %p160, %p161
    %p163 = scmp.ne.s32.totalorder %s154, %s155
    %p164 = scmp.eq.s32.totalorder %s18, 0
    %p165 = por %p163, %p164
    %p166 = scmp.ne.s32.totalorder %s154, %s155
    %p167 = scmp.eq.s32.totalorder %s19, 1
    %p168 = por %p166, %p167
    %p170 = scmp.ne.s32.totalorder %s155, %s169
    %p171 = scmp.eq.s32.totalorder %s19, 0
    %p172 = por %p170, %p171
    %s173 = ssub.s32 %s13, %s20
    %p174 = scmp.eq.s32.totalorder %s173, 0
    %s176 = sadd.s32 %s175, 1
    %s177 = scalar_select %p174, %s175, %s176
    %p180 = pneg %p174
    %p181 = scmp.eq.s32.totalorder %s13, 1
    %p182 = por %p180, %p181
    %p183 = scmp.ne.s32.totalorder %s175, %s178
    %p184 = scmp.eq.s32.totalorder %s13, 0
    %p185 = por %p183, %p184
    %p186 = scmp.ne.s32.totalorder %s175, %s178
    %p187 = scmp.eq.s32.totalorder %s18, 1
    %p188 = por %p186, %p187
    %p189 = scmp.ne.s32.totalorder %s178, %s179
    %p190 = scmp.eq.s32.totalorder %s18, 0
    %p191 = por %p189, %p190
    %p192 = scmp.ne.s32.totalorder %s178, %s179
    %p193 = scmp.eq.s32.totalorder %s19, 1
    %p194 = por %p192, %p193
    %p196 = scmp.ne.s32.totalorder %s179, %s195
    %p197 = scmp.eq.s32.totalorder %s19, 0
    %p198 = por %p196, %p197
    %p199 = scmp.le.s32.totalorder 1, %s13
    %p200 = scmp.lt.s32.totalorder %s13, 3
    %p201 = pnand %p199, %p200
    %p202 = pneg %p201
    // Predicated region
    $region9: #{unet_with_backbone.11} parent=5 // pred_check
      _
    $region10: #{unet_with_backbone.11} parent=5 // pred_check_branch
      %204 = sbr.rel (%p201) target = $region12
    $region11: #{unet_with_backbone.11} parent=5 // pred_region
      %s205 = ssub.s32 %s13, 1
      // Predicated region
      $region13: #{unet_with_backbone.11} parent=11 // pred_check
        %p206 = pneg %p60
      $region14: #{unet_with_backbone.11} parent=11 // pred_check_branch
        %208 = sbr.rel (%p206) target = $region16
      $region15: #{unet_with_backbone.11} parent=11 // pred_region
        _
      $region16: #{unet_with_backbone.11} parent=11 // pred_fallthru
        _
      // Predicated region
      $region17: #{unet_with_backbone.11} parent=11 // pred_check
        %p209 = pneg %p81
      $region18: #{unet_with_backbone.11} parent=11 // pred_check_branch
        %211 = sbr.rel (%p209) target = $region20
      $region19: #{unet_with_backbone.11} parent=11 // pred_region
        _
      $region20: #{unet_with_backbone.11} parent=11 // pred_fallthru
        _
      // Predicated region
      $region21: #{unet_with_backbone.11} parent=11 // pred_check
        %p212 = pneg %p102
      $region22: #{unet_with_backbone.11} parent=11 // pred_check_branch
        %214 = sbr.rel (%p212) target = $region24
      $region23: #{unet_with_backbone.11} parent=11 // pred_region
        _
      $region24: #{unet_with_backbone.11} parent=11 // pred_fallthru
        _
      // Predicated region
      $region25: #{unet_with_backbone.11} parent=11 // pred_check
        %p215 = pneg %p123
      $region26: #{unet_with_backbone.11} parent=11 // pred_check_branch
        %217 = sbr.rel (%p215) target = $region28
      $region27: #{unet_with_backbone.11} parent=11 // pred_region
        _
      $region28: #{unet_with_backbone.11} parent=11 // pred_fallthru
        _
      // Predicated region
      $region29: #{unet_with_backbone.11} parent=11 // pred_check
        %p218 = pneg %p144
      $region30: #{unet_with_backbone.11} parent=11 // pred_check_branch
        %220 = sbr.rel (%p218) target = $region32
      $region31: #{unet_with_backbone.11} parent=11 // pred_region
        _
      $region32: #{unet_with_backbone.11} parent=11 // pred_fallthru
        _
      // Predicated region
      $region33: #{unet_with_backbone.11} parent=11 // pred_check
        %p221 = pneg %p165
      $region34: #{unet_with_backbone.11} parent=11 // pred_check_branch
        %223 = sbr.rel (%p221) target = $region36
      $region35: #{unet_with_backbone.11} parent=11 // pred_region
        _
      $region36: #{unet_with_backbone.11} parent=11 // pred_fallthru
        _
    $region12: #{unet_with_backbone.11} parent=5 // pred_fallthru
      _
    %p224 = scmp.lt.s32.totalorder %s13, 2
    // Predicated region
    $region37: #{unet_with_backbone.11} parent=5 // pred_check
      %p225 = pneg %p224
    $region38: #{unet_with_backbone.11} parent=5 // pred_check_branch
      %227 = sbr.rel (%p225) target = $region40
    $region39: #{unet_with_backbone.11} parent=5 // pred_region
      // Predicated region
      $region41: #{unet_with_backbone.11} parent=39 // pred_check
        %p228 = pneg %p33
      $region42: #{unet_with_backbone.11} parent=39 // pred_check_branch
        %230 = sbr.rel (%p228) target = $region44
      $region43: #{unet_with_backbone.11} parent=39 // pred_region
        %p231 = scmp.lt.s32.totalorder %s13, 1
        %s232 = scalar_select %p231, %s13, 1
        %s233 = smul.addr %s232, 8
        %s234 = smul.addr %s233, 4
        %s235 = scalar_lea.vmem %s0, %s234
      $region44: #{unet_with_backbone.11} parent=39 // pred_fallthru
        _
    $region40: #{unet_with_backbone.11} parent=5 // pred_fallthru
      _
    %p236 = scmp.le.s32.totalorder 1, %s13
    %p237 = scmp.lt.s32.totalorder %s13, 3
    %p238 = pnand %p236, %p237
    %p239 = pneg %p238
    // Predicated region
    $region45: #{unet_with_backbone.11} parent=5 // pred_check
      _
    $region46: #{unet_with_backbone.11} parent=5 // pred_check_branch
      %241 = sbr.rel (%p238) target = $region48
    $region47: #{unet_with_backbone.11} parent=5 // pred_region
      %s242 = ssub.s32 %s13, 1
      %p243 = scmp.lt.s32.totalorder %s18, 1
      %s244 = scalar_select %p243, %s18, 1
      %s245 = smul.addr %s244, 8
      %s246 = smul.addr %s245, 4
      %s247 = scalar_lea.vmem %s0, %s246
      %p248 = pneg %p39
      %p249 = pneg %p36
      %p250 = pneg %p60
      %p251 = pneg %p57
      %p252 = pneg %p81
      %p253 = pneg %p78
      %p254 = pneg %p102
      %p255 = pneg %p99
      %p256 = pneg %p123
      %p257 = pneg %p120
      %p258 = pneg %p144
      %p259 = pneg %p141
      %p260 = pneg %p165
      %p261 = pneg %p162
      %p262 = pneg %p191
      %p263 = pneg %p188
      %p264 = scmp.lt.s32.totalorder %s18, 1
      %s265 = scalar_select %p264, %s18, 1
      %s266 = smul.addr %s265, 8
      %s267 = smul.addr %s266, 2
      %s268 = scalar_lea.vmem %s7, %s267
      %p269 = scmp.lt.s32.totalorder %s18, 1
      %s270 = scalar_select %p269, %s18, 1
      %s271 = smul.addr %s270, 8
      %s272 = smul.addr %s271, 4
      %s273 = scalar_lea.vmem %s0, %s272
      %p274 = scmp.lt.s32.totalorder %s18, 1
      %s275 = scalar_select %p274, %s18, 1
      %s276 = smul.addr %s275, 8
      %s277 = smul.addr %s276, 2
      %s278 = scalar_lea.vmem %s7, %s277
      %279 = vst [vmem:[#allocation3] sm:$0xff] 0.0
      %280 = vst [vmem:[#allocation3 + $0x8] sm:$0xff] 0.0
      %281 = vst [vmem:[#allocation3 + $0x10] sm:$0xff] 0.0
      %282 = vst [vmem:[#allocation3 + $0x18] sm:$0xff] 0.0
      %283 = vst [vmem:[#allocation3 + $0x20] sm:$0xff] 0.0
      %284 = vst [vmem:[#allocation3 + $0x28] sm:$0xff] 0.0
      %285 = vst [vmem:[#allocation3 + $0x30] sm:$0xff] 0.0
      %286 = vst [vmem:[#allocation3 + $0x38] sm:$0xff] 0.0
      %287 = vst [vmem:[#allocation3 + $0x40] sm:$0xff] 0.0
      %288 = vst [vmem:[#allocation3 + $0x48] sm:$0xff] 0.0
      %v289 = vld [vmem:[%s273] sm:$0xff]
      %v290 = vld [vmem:[%s273 + $0x8] sm:$0xff]
      %v291 = vld [vmem:[%s273 + $0x10] sm:$0xff]
      %v292 = vld [vmem:[%s273 + $0x18] sm:$0xff]
      %v293 = vunpack.c.l.bf16 %v289
      %v294 = vunpack.c.h.bf16 %v289
      %v295 = vunpack.c.l.bf16 %v290
      %v296 = vunpack.c.h.bf16 %v290
      %v297 = vunpack.c.l.bf16 %v291
      %v298 = vunpack.c.h.bf16 %v291
      %v299 = vunpack.c.l.bf16 %v292
      %v300 = vunpack.c.h.bf16 %v292
      %v301 = vmax.f32 %v293, 0.0
      %v302 = vmax.f32 %v294, 0.0
      %v303 = vmax.f32 %v295, 0.0
      %v304 = vmax.f32 %v296, 0.0
      %v305 = vmax.f32 %v297, 0.0
      %v306 = vmax.f32 %v298, 0.0
      %v307 = vmax.f32 %v299, 0.0
      %v308 = vmax.f32 %v300, 0.0
      %309 = vst [vmem:[#allocation3 + $0x8] sm:$0xff] %v301
      %310 = vst [vmem:[#allocation3 + $0x10] sm:$0xff] %v302
      %311 = vst [vmem:[#allocation3 + $0x18] sm:$0xff] %v303
      %312 = vst [vmem:[#allocation3 + $0x20] sm:$0xff] %v304
      %313 = vst [vmem:[#allocation3 + $0x28] sm:$0xff] %v305
      %314 = vst [vmem:[#allocation3 + $0x30] sm:$0xff] %v306
      %315 = vst [vmem:[#allocation3 + $0x38] sm:$0xff] %v307
      %316 = vst [vmem:[#allocation3 + $0x40] sm:$0xff] %v308
      %v317 = vlaneseq
      %v318 = vand.u32 %v317, 127
      %v319 = vadd.s32 %v318, 128
      %v320 = vadd.s32 %v318, 256
      %v321 = vadd.s32 %v318, 384
      %v322 = vadd.s32 %v318, 512
      %v323 = vadd.s32 %v318, 640
      %v324 = vadd.s32 %v318, 768
      %v325 = vadd.s32 %v318, 896
      %v326 = vand.u32 %v318, 31
      %v327 = vand.u32 %v319, 31
      %v328 = vand.u32 %v320, 31
      %v329 = vand.u32 %v321, 31
      %v330 = vand.u32 %v322, 31
      %v331 = vand.u32 %v323, 31
      %v332 = vand.u32 %v324, 31
      %v333 = vand.u32 %v325, 31
      %v334 = vshra.s32 %v318, 5
      %v335 = vshra.s32 %v319, 5
      %v336 = vshra.s32 %v320, 5
      %v337 = vshra.s32 %v321, 5
      %v338 = vshra.s32 %v322, 5
      %v339 = vshra.s32 %v323, 5
      %v340 = vshra.s32 %v324, 5
      %v341 = vshra.s32 %v325, 5
      %v342 = vand.u32 %v334, 31
      %v343 = vand.u32 %v335, 31
      %v344 = vand.u32 %v336, 31
      %v345 = vand.u32 %v337, 31
      %v346 = vand.u32 %v338, 31
      %v347 = vand.u32 %v339, 31
      %v348 = vand.u32 %v340, 31
      %v349 = vand.u32 %v341, 31
      %vm350 = vcmp.ge.s32.totalorder %v342, 1
      %vm351 = vcmp.ge.s32.totalorder %v343, 1
      %vm352 = vcmp.ge.s32.totalorder %v344, 1
      %vm353 = vcmp.ge.s32.totalorder %v345, 1
      %vm354 = vcmp.ge.s32.totalorder %v346, 1
      %vm355 = vcmp.ge.s32.totalorder %v347, 1
      %vm356 = vcmp.ge.s32.totalorder %v348, 1
      %vm357 = vcmp.ge.s32.totalorder %v349, 1
      %vm358 = vcmp.ge.s32.totalorder %v326, 1
      %vm359 = vcmp.ge.s32.totalorder %v327, 1
      %vm360 = vcmp.ge.s32.totalorder %v328, 1
      %vm361 = vcmp.ge.s32.totalorder %v329, 1
      %vm362 = vcmp.ge.s32.totalorder %v330, 1
      %vm363 = vcmp.ge.s32.totalorder %v331, 1
      %vm364 = vcmp.ge.s32.totalorder %v332, 1
      %vm365 = vcmp.ge.s32.totalorder %v333, 1
      %v366 = vld [vmem:[#allocation3] sm:$0xff]
      %v367 = vld [vmem:[#allocation3 + $0x8] sm:$0xff]
      %v368 = vld [vmem:[#allocation3 + $0x10] sm:$0xff]
      %v369 = vld [vmem:[#allocation3 + $0x18] sm:$0xff]
      %v370 = vld [vmem:[#allocation3 + $0x20] sm:$0xff]
      %v371 = vld [vmem:[#allocation3 + $0x28] sm:$0xff]
      %v372 = vld [vmem:[#allocation3 + $0x30] sm:$0xff]
      %v373 = vld [vmem:[#allocation3 + $0x38] sm:$0xff]
      %v374 = vld [vmem:[#allocation3 + $0x40] sm:$0xff]
      %vm375 = vmand %vm350, %vm358
      %vm376 = vmand %vm351, %vm359
      %vm377 = vmand %vm352, %vm360
      %vm378 = vmand %vm353, %vm361
      %vm379 = vmand %vm354, %vm362
      %vm380 = vmand %vm355, %vm363
      %vm381 = vmand %vm356, %vm364
      %vm382 = vmand %vm357, %vm365
      %v383 = vsel %vm375, 1, 0
      %v384 = vsel %vm376, 1, 0
      %v385 = vsel %vm377, 1, 0
      %v386 = vsel %vm378, 1, 0
      %v387 = vsel %vm379, 1, 0
      %v388 = vsel %vm380, 1, 0
      %v389 = vsel %vm381, 1, 0
      %v390 = vsel %vm382, 1, 0
      %vm391 = vcmp.eq.s32.totalorder %v383, 1
      %vm392 = vcmp.eq.s32.totalorder %v384, 1
      %vm393 = vcmp.eq.s32.totalorder %v385, 1
      %vm394 = vcmp.eq.s32.totalorder %v386, 1
      %vm395 = vcmp.eq.s32.totalorder %v387, 1
      %vm396 = vcmp.eq.s32.totalorder %v388, 1
      %vm397 = vcmp.eq.s32.totalorder %v389, 1
      %vm398 = vcmp.eq.s32.totalorder %v390, 1
      %408 = vrot.lane.b32.xlu0 %v366, 33
      %v409 = vpop.permute.xlu0 %408
      %410 = vrot.lane.b32.xlu0 %v367, 33
      %v411 = vpop.permute.xlu0 %410
      %412 = vrot.lane.b32.xlu0 %v368, 33
      %v413 = vpop.permute.xlu0 %412
      %414 = vrot.lane.b32.xlu0 %v369, 33
      %v415 = vpop.permute.xlu0 %414
      %416 = vrot.lane.b32.xlu0 %v370, 33
      %v417 = vpop.permute.xlu0 %416
      %418 = vrot.lane.b32.xlu0 %v371, 33
      %v419 = vpop.permute.xlu0 %418
      %420 = vrot.lane.b32.xlu0 %v372, 33
      %v421 = vpop.permute.xlu0 %420
      %422 = vrot.lane.b32.xlu0 %v373, 33
      %v423 = vpop.permute.xlu0 %422
      %424 = vrot.lane.b32.xlu0 %v374, 33
      %v425 = vpop.permute.xlu0 %424
      %vm426 = vcmask 269312
      %v427 = vsel %vm426, %v409, %v411
      %v428 = vsel %vm426, %v411, %v413
      %v429 = vsel %vm426, %v413, %v415
      %v430 = vsel %vm426, %v415, %v417
      %v431 = vsel %vm426, %v417, %v419
      %v432 = vsel %vm426, %v419, %v421
      %v433 = vsel %vm426, %v421, %v423
      %v434 = vsel %vm426, %v423, %v425
      %v443 = vsel %vm391, %v427, 0.0
      %v444 = vsel %vm392, %v428, 0.0
      %v445 = vsel %vm393, %v429, 0.0
      %v446 = vsel %vm394, %v430, 0.0
      %v447 = vsel %vm395, %v431, 0.0
      %v448 = vsel %vm396, %v432, 0.0
      %v449 = vsel %vm397, %v433, 0.0
      %v450 = vsel %vm398, %v434, 0.0
      %451 = vst [vmem:[#allocation2] sm:$0xff] %v443
      %452 = vst [vmem:[#allocation2 + $0x8] sm:$0xff] %v444
      %453 = vst [vmem:[#allocation2 + $0x10] sm:$0xff] %v445
      %454 = vst [vmem:[#allocation2 + $0x18] sm:$0xff] %v446
      %455 = vst [vmem:[#allocation2 + $0x20] sm:$0xff] %v447
      %456 = vst [vmem:[#allocation2 + $0x28] sm:$0xff] %v448
      %457 = vst [vmem:[#allocation2 + $0x30] sm:$0xff] %v449
      %458 = vst [vmem:[#allocation2 + $0x38] sm:$0xff] %v450
      %v459 = vld [vmem:[#allocation3] sm:$0xff]
      %v460 = vld [vmem:[#allocation3 + $0x8] sm:$0xff]
      %v461 = vld [vmem:[#allocation3 + $0x10] sm:$0xff]
      %v462 = vld [vmem:[#allocation3 + $0x18] sm:$0xff]
      %v463 = vld [vmem:[#allocation3 + $0x20] sm:$0xff]
      %v464 = vld [vmem:[#allocation3 + $0x28] sm:$0xff]
      %v465 = vld [vmem:[#allocation3 + $0x30] sm:$0xff]
      %v466 = vld [vmem:[#allocation3 + $0x38] sm:$0xff]
      %v467 = vld [vmem:[#allocation3 + $0x40] sm:$0xff]
      %v468 = vsel %vm350, 1, 0
      %v469 = vsel %vm351, 1, 0
      %v470 = vsel %vm352, 1, 0
      %v471 = vsel %vm353, 1, 0
      %v472 = vsel %vm354, 1, 0
      %v473 = vsel %vm355, 1, 0
      %v474 = vsel %vm356, 1, 0
      %v475 = vsel %vm357, 1, 0
      %vm476 = vcmp.eq.s32.totalorder %v468, 1
      %vm477 = vcmp.eq.s32.totalorder %v469, 1
      %vm478 = vcmp.eq.s32.totalorder %v470, 1
      %vm479 = vcmp.eq.s32.totalorder %v471, 1
      %vm480 = vcmp.eq.s32.totalorder %v472, 1
      %vm481 = vcmp.eq.s32.totalorder %v473, 1
      %vm482 = vcmp.eq.s32.totalorder %v474, 1
      %vm483 = vcmp.eq.s32.totalorder %v475, 1
      %493 = vrot.lane.b32.xlu0 %v459, 32
      %v494 = vpop.permute.xlu0 %493
      %495 = vrot.lane.b32.xlu0 %v460, 32
      %v496 = vpop.permute.xlu0 %495
      %497 = vrot.lane.b32.xlu0 %v461, 32
      %v498 = vpop.permute.xlu0 %497
      %499 = vrot.lane.b32.xlu0 %v462, 32
      %v500 = vpop.permute.xlu0 %499
      %501 = vrot.lane.b32.xlu0 %v463, 32
      %v502 = vpop.permute.xlu0 %501
      %503 = vrot.lane.b32.xlu0 %v464, 32
      %v504 = vpop.permute.xlu0 %503
      %505 = vrot.lane.b32.xlu0 %v465, 32
      %v506 = vpop.permute.xlu0 %505
      %507 = vrot.lane.b32.xlu0 %v466, 32
      %v508 = vpop.permute.xlu0 %507
      %509 = vrot.lane.b32.xlu0 %v467, 32
      %v510 = vpop.permute.xlu0 %509
      %vm511 = vcmask 261120
      %v512 = vsel %vm511, %v494, %v496
      %v513 = vsel %vm511, %v496, %v498
      %v514 = vsel %vm511, %v498, %v500
      %v515 = vsel %vm511, %v500, %v502
      %v516 = vsel %vm511, %v502, %v504
      %v517 = vsel %vm511, %v504, %v506
      %v518 = vsel %vm511, %v506, %v508
      %v519 = vsel %vm511, %v508, %v510
      %v528 = vsel %vm476, %v512, 0.0
      %v529 = vsel %vm477, %v513, 0.0
      %v530 = vsel %vm478, %v514, 0.0
      %v531 = vsel %vm479, %v515, 0.0
      %v532 = vsel %vm480, %v516, 0.0
      %v533 = vsel %vm481, %v517, 0.0
      %v534 = vsel %vm482, %v518, 0.0
      %v535 = vsel %vm483, %v519, 0.0
      %536 = vst [vmem:[#allocation2 + $0x40] sm:$0xff] %v528
      %537 = vst [vmem:[#allocation2 + $0x48] sm:$0xff] %v529
      %538 = vst [vmem:[#allocation2 + $0x50] sm:$0xff] %v530
      %539 = vst [vmem:[#allocation2 + $0x58] sm:$0xff] %v531
      %540 = vst [vmem:[#allocation2 + $0x60] sm:$0xff] %v532
      %541 = vst [vmem:[#allocation2 + $0x68] sm:$0xff] %v533
      %542 = vst [vmem:[#allocation2 + $0x70] sm:$0xff] %v534
      %543 = vst [vmem:[#allocation2 + $0x78] sm:$0xff] %v535
      %vm544 = vcmp.le.s32.totalorder %v326, 30
      %vm545 = vcmp.le.s32.totalorder %v327, 30
      %vm546 = vcmp.le.s32.totalorder %v328, 30
      %vm547 = vcmp.le.s32.totalorder %v329, 30
      %vm548 = vcmp.le.s32.totalorder %v330, 30
      %vm549 = vcmp.le.s32.totalorder %v331, 30
      %vm550 = vcmp.le.s32.totalorder %v332, 30
      %vm551 = vcmp.le.s32.totalorder %v333, 30
      %v552 = vld [vmem:[#allocation3] sm:$0xff]
      %v553 = vld [vmem:[#allocation3 + $0x8] sm:$0xff]
      %v554 = vld [vmem:[#allocation3 + $0x10] sm:$0xff]
      %v555 = vld [vmem:[#allocation3 + $0x18] sm:$0xff]
      %v556 = vld [vmem:[#allocation3 + $0x20] sm:$0xff]
      %v557 = vld [vmem:[#allocation3 + $0x28] sm:$0xff]
      %v558 = vld [vmem:[#allocation3 + $0x30] sm:$0xff]
      %v559 = vld [vmem:[#allocation3 + $0x38] sm:$0xff]
      %v560 = vld [vmem:[#allocation3 + $0x40] sm:$0xff]
      %vm561 = vmand %vm350, %vm544
      %vm562 = vmand %vm351, %vm545
      %vm563 = vmand %vm352, %vm546
      %vm564 = vmand %vm353, %vm547
      %vm565 = vmand %vm354, %vm548
      %vm566 = vmand %vm355, %vm549
      %vm567 = vmand %vm356, %vm550
      %vm568 = vmand %vm357, %vm551
      %v569 = vsel %vm561, 1, 0
      %v570 = vsel %vm562, 1, 0
      %v571 = vsel %vm563, 1, 0
      %v572 = vsel %vm564, 1, 0
      %v573 = vsel %vm565, 1, 0
      %v574 = vsel %vm566, 1, 0
      %v575 = vsel %vm567, 1, 0
      %v576 = vsel %vm568, 1, 0
      %vm577 = vcmp.eq.s32.totalorder %v569, 1
      %vm578 = vcmp.eq.s32.totalorder %v570, 1
      %vm579 = vcmp.eq.s32.totalorder %v571, 1
      %vm580 = vcmp.eq.s32.totalorder %v572, 1
      %vm581 = vcmp.eq.s32.totalorder %v573, 1
      %vm582 = vcmp.eq.s32.totalorder %v574, 1
      %vm583 = vcmp.eq.s32.totalorder %v575, 1
      %vm584 = vcmp.eq.s32.totalorder %v576, 1
      %594 = vrot.lane.b32.xlu0 %v552, 31
      %v595 = vpop.permute.xlu0 %594
      %596 = vrot.lane.b32.xlu0 %v553, 31
      %v597 = vpop.permute.xlu0 %596
      %598 = vrot.lane.b32.xlu0 %v554, 31
      %v599 = vpop.permute.xlu0 %598
      %600 = vrot.lane.b32.xlu0 %v555, 31
      %v601 = vpop.permute.xlu0 %600
      %602 = vrot.lane.b32.xlu0 %v556, 31
      %v603 = vpop.permute.xlu0 %602
      %604 = vrot.lane.b32.xlu0 %v557, 31
      %v605 = vpop.permute.xlu0 %604
      %606 = vrot.lane.b32.xlu0 %v558, 31
      %v607 = vpop.permute.xlu0 %606
      %608 = vrot.lane.b32.xlu0 %v559, 31
      %v609 = vpop.permute.xlu0 %608
      %610 = vrot.lane.b32.xlu0 %v560, 31
      %v611 = vpop.permute.xlu0 %610
      %vm612 = vcmask 252928
      %v613 = vsel %vm612, %v595, %v597
      %v614 = vsel %vm612, %v597, %v599
      %v615 = vsel %vm612, %v599, %v601
      %v616 = vsel %vm612, %v601, %v603
      %v617 = vsel %vm612, %v603, %v605
      %v618 = vsel %vm612, %v605, %v607
      %v619 = vsel %vm612, %v607, %v609
      %v620 = vsel %vm612, %v609, %v611
      %v629 = vsel %vm577, %v613, 0.0
      %v630 = vsel %vm578, %v614, 0.0
      %v631 = vsel %vm579, %v615, 0.0
      %v632 = vsel %vm580, %v616, 0.0
      %v633 = vsel %vm581, %v617, 0.0
      %v634 = vsel %vm582, %v618, 0.0
      %v635 = vsel %vm583, %v619, 0.0
      %v636 = vsel %vm584, %v620, 0.0
      %637 = vst [vmem:[#allocation2 + $0x80] sm:$0xff] %v629
      %638 = vst [vmem:[#allocation2 + $0x88] sm:$0xff] %v630
      %639 = vst [vmem:[#allocation2 + $0x90] sm:$0xff] %v631
      %640 = vst [vmem:[#allocation2 + $0x98] sm:$0xff] %v632
      %641 = vst [vmem:[#allocation2 + $0xa0] sm:$0xff] %v633
      %642 = vst [vmem:[#allocation2 + $0xa8] sm:$0xff] %v634
      %643 = vst [vmem:[#allocation2 + $0xb0] sm:$0xff] %v635
      %644 = vst [vmem:[#allocation2 + $0xb8] sm:$0xff] %v636
      %v645 = vld [vmem:[#allocation3] sm:$0xff]
      %v646 = vld [vmem:[#allocation3 + $0x8] sm:$0xff]
      %v647 = vld [vmem:[#allocation3 + $0x10] sm:$0xff]
      %v648 = vld [vmem:[#allocation3 + $0x18] sm:$0xff]
      %v649 = vld [vmem:[#allocation3 + $0x20] sm:$0xff]
      %v650 = vld [vmem:[#allocation3 + $0x28] sm:$0xff]
      %v651 = vld [vmem:[#allocation3 + $0x30] sm:$0xff]
      %v652 = vld [vmem:[#allocation3 + $0x38] sm:$0xff]
      %v653 = vld [vmem:[#allocation3 + $0x40] sm:$0xff]
      %v654 = vsel %vm358, 1, 0
      %v655 = vsel %vm359, 1, 0
      %v656 = vsel %vm360, 1, 0
      %v657 = vsel %vm361, 1, 0
      %v658 = vsel %vm362, 1, 0
      %v659 = vsel %vm363, 1, 0
      %v660 = vsel %vm364, 1, 0
      %v661 = vsel %vm365, 1, 0
      %vm662 = vcmp.eq.s32.totalorder %v654, 1
      %vm663 = vcmp.eq.s32.totalorder %v655, 1
      %vm664 = vcmp.eq.s32.totalorder %v656, 1
      %vm665 = vcmp.eq.s32.totalorder %v657, 1
      %vm666 = vcmp.eq.s32.totalorder %v658, 1
      %vm667 = vcmp.eq.s32.totalorder %v659, 1
      %vm668 = vcmp.eq.s32.totalorder %v660, 1
      %vm669 = vcmp.eq.s32.totalorder %v661, 1
      %679 = vrot.lane.b32.xlu0 %v645, 1
      %v680 = vpop.permute.xlu0 %679
      %681 = vrot.lane.b32.xlu0 %v646, 1
      %v682 = vpop.permute.xlu0 %681
      %683 = vrot.lane.b32.xlu0 %v647, 1
      %v684 = vpop.permute.xlu0 %683
      %685 = vrot.lane.b32.xlu0 %v648, 1
      %v686 = vpop.permute.xlu0 %685
      %687 = vrot.lane.b32.xlu0 %v649, 1
      %v688 = vpop.permute.xlu0 %687
      %689 = vrot.lane.b32.xlu0 %v650, 1
      %v690 = vpop.permute.xlu0 %689
      %691 = vrot.lane.b32.xlu0 %v651, 1
      %v692 = vpop.permute.xlu0 %691
      %693 = vrot.lane.b32.xlu0 %v652, 1
      %v694 = vpop.permute.xlu0 %693
      %695 = vrot.lane.b32.xlu0 %v653, 1
      %v696 = vpop.permute.xlu0 %695
      %vm697 = vcmask 7168
      %v698 = vsel %vm697, %v680, %v682
      %v699 = vsel %vm697, %v682, %v684
      %v700 = vsel %vm697, %v684, %v686
      %v701 = vsel %vm697, %v686, %v688
      %v702 = vsel %vm697, %v688, %v690
      %v703 = vsel %vm697, %v690, %v692
      %v704 = vsel %vm697, %v692, %v694
      %v705 = vsel %vm697, %v694, %v696
      %v714 = vsel %vm662, %v698, 0.0
      %v715 = vsel %vm663, %v699, 0.0
      %v716 = vsel %vm664, %v700, 0.0
      %v717 = vsel %vm665, %v701, 0.0
      %v718 = vsel %vm666, %v702, 0.0
      %v719 = vsel %vm667, %v703, 0.0
      %v720 = vsel %vm668, %v704, 0.0
      %v721 = vsel %vm669, %v705, 0.0
      %722 = vst [vmem:[#allocation2 + $0xc0] sm:$0xff] %v714
      %723 = vst [vmem:[#allocation2 + $0xc8] sm:$0xff] %v715
      %724 = vst [vmem:[#allocation2 + $0xd0] sm:$0xff] %v716
      %725 = vst [vmem:[#allocation2 + $0xd8] sm:$0xff] %v717
      %726 = vst [vmem:[#allocation2 + $0xe0] sm:$0xff] %v718
      %727 = vst [vmem:[#allocation2 + $0xe8] sm:$0xff] %v719
      %728 = vst [vmem:[#allocation2 + $0xf0] sm:$0xff] %v720
      %729 = vst [vmem:[#allocation2 + $0xf8] sm:$0xff] %v721
      %730 = vst [vmem:[#allocation2 + $0x100] sm:$0xff] %v301
      %731 = vst [vmem:[#allocation2 + $0x108] sm:$0xff] %v302
      %732 = vst [vmem:[#allocation2 + $0x110] sm:$0xff] %v303
      %733 = vst [vmem:[#allocation2 + $0x118] sm:$0xff] %v304
      %734 = vst [vmem:[#allocation2 + $0x120] sm:$0xff] %v305
      %735 = vst [vmem:[#allocation2 + $0x128] sm:$0xff] %v306
      %736 = vst [vmem:[#allocation2 + $0x130] sm:$0xff] %v307
      %737 = vst [vmem:[#allocation2 + $0x138] sm:$0xff] %v308
      %v738 = vld [vmem:[#allocation3 + $0x8] sm:$0xff]
      %v739 = vld [vmem:[#allocation3 + $0x10] sm:$0xff]
      %v740 = vld [vmem:[#allocation3 + $0x18] sm:$0xff]
      %v741 = vld [vmem:[#allocation3 + $0x20] sm:$0xff]
      %v742 = vld [vmem:[#allocation3 + $0x28] sm:$0xff]
      %v743 = vld [vmem:[#allocation3 + $0x30] sm:$0xff]
      %v744 = vld [vmem:[#allocation3 + $0x38] sm:$0xff]
      %v745 = vld [vmem:[#allocation3 + $0x40] sm:$0xff]
      %v746 = vld [vmem:[#allocation3 + $0x48] sm:$0xff]
      %v747 = vsel %vm544, 1, 0
      %v748 = vsel %vm545, 1, 0
      %v749 = vsel %vm546, 1, 0
      %v750 = vsel %vm547, 1, 0
      %v751 = vsel %vm548, 1, 0
      %v752 = vsel %vm549, 1, 0
      %v753 = vsel %vm550, 1, 0
      %v754 = vsel %vm551, 1, 0
      %vm755 = vcmp.eq.s32.totalorder %v747, 1
      %vm756 = vcmp.eq.s32.totalorder %v748, 1
      %vm757 = vcmp.eq.s32.totalorder %v749, 1
      %vm758 = vcmp.eq.s32.totalorder %v750, 1
      %vm759 = vcmp.eq.s32.totalorder %v751, 1
      %vm760 = vcmp.eq.s32.totalorder %v752, 1
      %vm761 = vcmp.eq.s32.totalorder %v753, 1
      %vm762 = vcmp.eq.s32.totalorder %v754, 1
      %772 = vrot.lane.b32.xlu0 %v738, 127
      %v773 = vpop.permute.xlu0 %772
      %774 = vrot.lane.b32.xlu0 %v739, 127
      %v775 = vpop.permute.xlu0 %774
      %776 = vrot.lane.b32.xlu0 %v740, 127
      %v777 = vpop.permute.xlu0 %776
      %778 = vrot.lane.b32.xlu0 %v741, 127
      %v779 = vpop.permute.xlu0 %778
      %780 = vrot.lane.b32.xlu0 %v742, 127
      %v781 = vpop.permute.xlu0 %780
      %782 = vrot.lane.b32.xlu0 %v743, 127
      %v783 = vpop.permute.xlu0 %782
      %784 = vrot.lane.b32.xlu0 %v744, 127
      %v785 = vpop.permute.xlu0 %784
      %786 = vrot.lane.b32.xlu0 %v745, 127
      %v787 = vpop.permute.xlu0 %786
      %788 = vrot.lane.b32.xlu0 %v746, 127
      %v789 = vpop.permute.xlu0 %788
      %vm790 = vcmask 1039360
      %v791 = vsel %vm790, %v773, %v775
      %v792 = vsel %vm790, %v775, %v777
      %v793 = vsel %vm790, %v777, %v779
      %v794 = vsel %vm790, %v779, %v781
      %v795 = vsel %vm790, %v781, %v783
      %v796 = vsel %vm790, %v783, %v785
      %v797 = vsel %vm790, %v785, %v787
      %v798 = vsel %vm790, %v787, %v789
      %v807 = vsel %vm755, %v791, 0.0
      %v808 = vsel %vm756, %v792, 0.0
      %v809 = vsel %vm757, %v793, 0.0
      %v810 = vsel %vm758, %v794, 0.0
      %v811 = vsel %vm759, %v795, 0.0
      %v812 = vsel %vm760, %v796, 0.0
      %v813 = vsel %vm761, %v797, 0.0
      %v814 = vsel %vm762, %v798, 0.0
      %815 = vst [vmem:[#allocation2 + $0x140] sm:$0xff] %v807
      %816 = vst [vmem:[#allocation2 + $0x148] sm:$0xff] %v808
      %817 = vst [vmem:[#allocation2 + $0x150] sm:$0xff] %v809
      %818 = vst [vmem:[#allocation2 + $0x158] sm:$0xff] %v810
      %819 = vst [vmem:[#allocation2 + $0x160] sm:$0xff] %v811
      %820 = vst [vmem:[#allocation2 + $0x168] sm:$0xff] %v812
      %821 = vst [vmem:[#allocation2 + $0x170] sm:$0xff] %v813
      %822 = vst [vmem:[#allocation2 + $0x178] sm:$0xff] %v814
      %vm823 = vcmp.le.s32.totalorder %v342, 30
      %vm824 = vcmp.le.s32.totalorder %v343, 30
      %vm825 = vcmp.le.s32.totalorder %v344, 30
      %vm826 = vcmp.le.s32.totalorder %v345, 30
      %vm827 = vcmp.le.s32.totalorder %v346, 30
      %vm828 = vcmp.le.s32.totalorder %v347, 30
      %vm829 = vcmp.le.s32.totalorder %v348, 30
      %vm830 = vcmp.le.s32.totalorder %v349, 30
      %v831 = vld [vmem:[#allocation3 + $0x8] sm:$0xff]
      %v832 = vld [vmem:[#allocation3 + $0x10] sm:$0xff]
      %v833 = vld [vmem:[#allocation3 + $0x18] sm:$0xff]
      %v834 = vld [vmem:[#allocation3 + $0x20] sm:$0xff]
      %v835 = vld [vmem:[#allocation3 + $0x28] sm:$0xff]
      %v836 = vld [vmem:[#allocation3 + $0x30] sm:$0xff]
      %v837 = vld [vmem:[#allocation3 + $0x38] sm:$0xff]
      %v838 = vld [vmem:[#allocation3 + $0x40] sm:$0xff]
      %v839 = vld [vmem:[#allocation3 + $0x48] sm:$0xff]
      %vm840 = vmand %vm823, %vm358
      %vm841 = vmand %vm824, %vm359
      %vm842 = vmand %vm825, %vm360
      %vm843 = vmand %vm826, %vm361
      %vm844 = vmand %vm827, %vm362
      %vm845 = vmand %vm828, %vm363
      %vm846 = vmand %vm829, %vm364
      %vm847 = vmand %vm830, %vm365
      %v848 = vsel %vm840, 1, 0
      %v849 = vsel %vm841, 1, 0
      %v850 = vsel %vm842, 1, 0
      %v851 = vsel %vm843, 1, 0
      %v852 = vsel %vm844, 1, 0
      %v853 = vsel %vm845, 1, 0
      %v854 = vsel %vm846, 1, 0
      %v855 = vsel %vm847, 1, 0
      %vm856 = vcmp.eq.s32.totalorder %v848, 1
      %vm857 = vcmp.eq.s32.totalorder %v849, 1
      %vm858 = vcmp.eq.s32.totalorder %v850, 1
      %vm859 = vcmp.eq.s32.totalorder %v851, 1
      %vm860 = vcmp.eq.s32.totalorder %v852, 1
      %vm861 = vcmp.eq.s32.totalorder %v853, 1
      %vm862 = vcmp.eq.s32.totalorder %v854, 1
      %vm863 = vcmp.eq.s32.totalorder %v855, 1
      %873 = vrot.lane.b32.xlu0 %v831, 97
      %v874 = vpop.permute.xlu0 %873
      %875 = vrot.lane.b32.xlu0 %v832, 97
      %v876 = vpop.permute.xlu0 %875
      %877 = vrot.lane.b32.xlu0 %v833, 97
      %v878 = vpop.permute.xlu0 %877
      %879 = vrot.lane.b32.xlu0 %v834, 97
      %v880 = vpop.permute.xlu0 %879
      %881 = vrot.lane.b32.xlu0 %v835, 97
      %v882 = vpop.permute.xlu0 %881
      %883 = vrot.lane.b32.xlu0 %v836, 97
      %v884 = vpop.permute.xlu0 %883
      %885 = vrot.lane.b32.xlu0 %v837, 97
      %v886 = vpop.permute.xlu0 %885
      %887 = vrot.lane.b32.xlu0 %v838, 97
      %v888 = vpop.permute.xlu0 %887
      %889 = vrot.lane.b32.xlu0 %v839, 97
      %v890 = vpop.permute.xlu0 %889
      %vm891 = vcmask 793600
      %v892 = vsel %vm891, %v874, %v876
      %v893 = vsel %vm891, %v876, %v878
      %v894 = vsel %vm891, %v878, %v880
      %v895 = vsel %vm891, %v880, %v882
      %v896 = vsel %vm891, %v882, %v884
      %v897 = vsel %vm891, %v884, %v886
      %v898 = vsel %vm891, %v886, %v888
      %v899 = vsel %vm891, %v888, %v890
      %v908 = vsel %vm856, %v892, 0.0
      %v909 = vsel %vm857, %v893, 0.0
      %v910 = vsel %vm858, %v894, 0.0
      %v911 = vsel %vm859, %v895, 0.0
      %v912 = vsel %vm860, %v896, 0.0
      %v913 = vsel %vm861, %v897, 0.0
      %v914 = vsel %vm862, %v898, 0.0
      %v915 = vsel %vm863, %v899, 0.0
      %916 = vst [vmem:[#allocation2 + $0x180] sm:$0xff] %v908
      %917 = vst [vmem:[#allocation2 + $0x188] sm:$0xff] %v909
      %918 = vst [vmem:[#allocation2 + $0x190] sm:$0xff] %v910
      %919 = vst [vmem:[#allocation2 + $0x198] sm:$0xff] %v911
      %920 = vst [vmem:[#allocation2 + $0x1a0] sm:$0xff] %v912
      %921 = vst [vmem:[#allocation2 + $0x1a8] sm:$0xff] %v913
      %922 = vst [vmem:[#allocation2 + $0x1b0] sm:$0xff] %v914
      %923 = vst [vmem:[#allocation2 + $0x1b8] sm:$0xff] %v915
      %v924 = vld [vmem:[#allocation3 + $0x8] sm:$0xff]
      %v925 = vld [vmem:[#allocation3 + $0x10] sm:$0xff]
      %v926 = vld [vmem:[#allocation3 + $0x18] sm:$0xff]
      %v927 = vld [vmem:[#allocation3 + $0x20] sm:$0xff]
      %v928 = vld [vmem:[#allocation3 + $0x28] sm:$0xff]
      %v929 = vld [vmem:[#allocation3 + $0x30] sm:$0xff]
      %v930 = vld [vmem:[#allocation3 + $0x38] sm:$0xff]
      %v931 = vld [vmem:[#allocation3 + $0x40] sm:$0xff]
      %v932 = vld [vmem:[#allocation3 + $0x48] sm:$0xff]
      %v933 = vsel %vm823, 1, 0
      %v934 = vsel %vm824, 1, 0
      %v935 = vsel %vm825, 1, 0
      %v936 = vsel %vm826, 1, 0
      %v937 = vsel %vm827, 1, 0
      %v938 = vsel %vm828, 1, 0
      %v939 = vsel %vm829, 1, 0
      %v940 = vsel %vm830, 1, 0
      %vm941 = vcmp.eq.s32.totalorder %v933, 1
      %vm942 = vcmp.eq.s32.totalorder %v934, 1
      %vm943 = vcmp.eq.s32.totalorder %v935, 1
      %vm944 = vcmp.eq.s32.totalorder %v936, 1
      %vm945 = vcmp.eq.s32.totalorder %v937, 1
      %vm946 = vcmp.eq.s32.totalorder %v938, 1
      %vm947 = vcmp.eq.s32.totalorder %v939, 1
      %vm948 = vcmp.eq.s32.totalorder %v940, 1
      %958 = vrot.lane.b32.xlu0 %v924, 96
      %v959 = vpop.permute.xlu0 %958
      %960 = vrot.lane.b32.xlu0 %v925, 96
      %v961 = vpop.permute.xlu0 %960
      %962 = vrot.lane.b32.xlu0 %v926, 96
      %v963 = vpop.permute.xlu0 %962
      %964 = vrot.lane.b32.xlu0 %v927, 96
      %v965 = vpop.permute.xlu0 %964
      %966 = vrot.lane.b32.xlu0 %v928, 96
      %v967 = vpop.permute.xlu0 %966
      %968 = vrot.lane.b32.xlu0 %v929, 96
      %v969 = vpop.permute.xlu0 %968
      %970 = vrot.lane.b32.xlu0 %v930, 96
      %v971 = vpop.permute.xlu0 %970
      %972 = vrot.lane.b32.xlu0 %v931, 96
      %v973 = vpop.permute.xlu0 %972
      %974 = vrot.lane.b32.xlu0 %v932, 96
      %v975 = vpop.permute.xlu0 %974
      %vm976 = vcmask 785408
      %v977 = vsel %vm976, %v959, %v961
      %v978 = vsel %vm976, %v961, %v963
      %v979 = vsel %vm976, %v963, %v965
      %v980 = vsel %vm976, %v965, %v967
      %v981 = vsel %vm976, %v967, %v969
      %v982 = vsel %vm976, %v969, %v971
      %v983 = vsel %vm976, %v971, %v973
      %v984 = vsel %vm976, %v973, %v975
      %v993 = vsel %vm941, %v977, 0.0
      %v994 = vsel %vm942, %v978, 0.0
      %v995 = vsel %vm943, %v979, 0.0
      %v996 = vsel %vm944, %v980, 0.0
      %v997 = vsel %vm945, %v981, 0.0
      %v998 = vsel %vm946, %v982, 0.0
      %v999 = vsel %vm947, %v983, 0.0
      %v1000 = vsel %vm948, %v984, 0.0
      %1001 = vst [vmem:[#allocation2 + $0x1c0] sm:$0xff] %v993
      %1002 = vst [vmem:[#allocation2 + $0x1c8] sm:$0xff] %v994
      %1003 = vst [vmem:[#allocation2 + $0x1d0] sm:$0xff] %v995
      %1004 = vst [vmem:[#allocation2 + $0x1d8] sm:$0xff] %v996
      %1005 = vst [vmem:[#allocation2 + $0x1e0] sm:$0xff] %v997
      %1006 = vst [vmem:[#allocation2 + $0x1e8] sm:$0xff] %v998
      %1007 = vst [vmem:[#allocation2 + $0x1f0] sm:$0xff] %v999
      %1008 = vst [vmem:[#allocation2 + $0x1f8] sm:$0xff] %v1000
      %v1009 = vld [vmem:[#allocation3 + $0x8] sm:$0xff]
      %v1010 = vld [vmem:[#allocation3 + $0x10] sm:$0xff]
      %v1011 = vld [vmem:[#allocation3 + $0x18] sm:$0xff]
      %v1012 = vld [vmem:[#allocation3 + $0x20] sm:$0xff]
      %v1013 = vld [vmem:[#allocation3 + $0x28] sm:$0xff]
      %v1014 = vld [vmem:[#allocation3 + $0x30] sm:$0xff]
      %v1015 = vld [vmem:[#allocation3 + $0x38] sm:$0xff]
      %v1016 = vld [vmem:[#allocation3 + $0x40] sm:$0xff]
      %v1017 = vld [vmem:[#allocation3 + $0x48] sm:$0xff]
      %vm1018 = vmand %vm823, %vm544
      %vm1019 = vmand %vm824, %vm545
      %vm1020 = vmand %vm825, %vm546
      %vm1021 = vmand %vm826, %vm547
      %vm1022 = vmand %vm827, %vm548
      %vm1023 = vmand %vm828, %vm549
      %vm1024 = vmand %vm829, %vm550
      %vm1025 = vmand %vm830, %vm551
      %v1026 = vsel %vm1018, 1, 0
      %v1027 = vsel %vm1019, 1, 0
      %v1028 = vsel %vm1020, 1, 0
      %v1029 = vsel %vm1021, 1, 0
      %v1030 = vsel %vm1022, 1, 0
      %v1031 = vsel %vm1023, 1, 0
      %v1032 = vsel %vm1024, 1, 0
      %v1033 = vsel %vm1025, 1, 0
      %vm1034 = vcmp.eq.s32.totalorder %v1026, 1
      %vm1035 = vcmp.eq.s32.totalorder %v1027, 1
      %vm1036 = vcmp.eq.s32.totalorder %v1028, 1
      %vm1037 = vcmp.eq.s32.totalorder %v1029, 1
      %vm1038 = vcmp.eq.s32.totalorder %v1030, 1
      %vm1039 = vcmp.eq.s32.totalorder %v1031, 1
      %vm1040 = vcmp.eq.s32.totalorder %v1032, 1
      %vm1041 = vcmp.eq.s32.totalorder %v1033, 1
      %1051 = vrot.lane.b32.xlu0 %v1009, 95
      %v1052 = vpop.permute.xlu0 %1051
      %1053 = vrot.lane.b32.xlu0 %v1010, 95
      %v1054 = vpop.permute.xlu0 %1053
      %1055 = vrot.lane.b32.xlu0 %v1011, 95
      %v1056 = vpop.permute.xlu0 %1055
      %1057 = vrot.lane.b32.xlu0 %v1012, 95
      %v1058 = vpop.permute.xlu0 %1057
      %1059 = vrot.lane.b32.xlu0 %v1013, 95
      %v1060 = vpop.permute.xlu0 %1059
      %1061 = vrot.lane.b32.xlu0 %v1014, 95
      %v1062 = vpop.permute.xlu0 %1061
      %1063 = vrot.lane.b32.xlu0 %v1015, 95
      %v1064 = vpop.permute.xlu0 %1063
      %1065 = vrot.lane.b32.xlu0 %v1016, 95
      %v1066 = vpop.permute.xlu0 %1065
      %1067 = vrot.lane.b32.xlu0 %v1017, 95
      %v1068 = vpop.permute.xlu0 %1067
      %vm1069 = vcmask 777216
      %v1070 = vsel %vm1069, %v1052, %v1054
      %v1071 = vsel %vm1069, %v1054, %v1056
      %v1072 = vsel %vm1069, %v1056, %v1058
      %v1073 = vsel %vm1069, %v1058, %v1060
      %v1074 = vsel %vm1069, %v1060, %v1062
      %v1075 = vsel %vm1069, %v1062, %v1064
      %v1076 = vsel %vm1069, %v1064, %v1066
      %v1077 = vsel %vm1069, %v1066, %v1068
      %v1086 = vsel %vm1034, %v1070, 0.0
      %v1087 = vsel %vm1035, %v1071, 0.0
      %v1088 = vsel %vm1036, %v1072, 0.0
      %v1089 = vsel %vm1037, %v1073, 0.0
      %v1090 = vsel %vm1038, %v1074, 0.0
      %v1091 = vsel %vm1039, %v1075, 0.0
      %v1092 = vsel %vm1040, %v1076, 0.0
      %v1093 = vsel %vm1041, %v1077, 0.0
      %1094 = vst [vmem:[#allocation2 + $0x200] sm:$0xff] %v1086
      %1095 = vst [vmem:[#allocation2 + $0x208] sm:$0xff] %v1087
      %1096 = vst [vmem:[#allocation2 + $0x210] sm:$0xff] %v1088
      %1097 = vst [vmem:[#allocation2 + $0x218] sm:$0xff] %v1089
      %1098 = vst [vmem:[#allocation2 + $0x220] sm:$0xff] %v1090
      %1099 = vst [vmem:[#allocation2 + $0x228] sm:$0xff] %v1091
      %1100 = vst [vmem:[#allocation2 + $0x230] sm:$0xff] %v1092
      %1101 = vst [vmem:[#allocation2 + $0x238] sm:$0xff] %v1093
      %v1102 = vld [vmem:[%s1] sm:$0xff]
      %v1103 = vld [vmem:[#allocation2] sm:$0xff]
      %v1104 = vld [vmem:[#allocation2 + $0x8] sm:$0xff]
      %v1105 = vld [vmem:[#allocation2 + $0x10] sm:$0xff]
      %v1106 = vld [vmem:[#allocation2 + $0x18] sm:$0xff]
      %v1107 = vld [vmem:[#allocation2 + $0x20] sm:$0xff]
      %v1108 = vld [vmem:[#allocation2 + $0x28] sm:$0xff]
      %v1109 = vld [vmem:[#allocation2 + $0x30] sm:$0xff]
      %v1110 = vld [vmem:[#allocation2 + $0x38] sm:$0xff]
      %v1111 = vld [vmem:[#allocation2 + $0x40] sm:$0xff]
      %v1112 = vld [vmem:[#allocation2 + $0x48] sm:$0xff]
      %v1113 = vld [vmem:[#allocation2 + $0x50] sm:$0xff]
      %v1114 = vld [vmem:[#allocation2 + $0x58] sm:$0xff]
      %v1115 = vld [vmem:[#allocation2 + $0x60] sm:$0xff]
      %v1116 = vld [vmem:[#allocation2 + $0x68] sm:$0xff]
      %v1117 = vld [vmem:[#allocation2 + $0x70] sm:$0xff]
      %v1118 = vld [vmem:[#allocation2 + $0x78] sm:$0xff]
      %v1119 = vld [vmem:[#allocation2 + $0x80] sm:$0xff]
      %v1120 = vld [vmem:[#allocation2 + $0x88] sm:$0xff]
      %v1121 = vld [vmem:[#allocation2 + $0x90] sm:$0xff]
      %v1122 = vld [vmem:[#allocation2 + $0x98] sm:$0xff]
      %v1123 = vld [vmem:[#allocation2 + $0xa0] sm:$0xff]
      %v1124 = vld [vmem:[#allocation2 + $0xa8] sm:$0xff]
      %v1125 = vld [vmem:[#allocation2 + $0xb0] sm:$0xff]
      %v1126 = vld [vmem:[#allocation2 + $0xb8] sm:$0xff]
      %v1127 = vld [vmem:[#allocation2 + $0xc0] sm:$0xff]
      %v1128 = vld [vmem:[#allocation2 + $0xc8] sm:$0xff]
      %v1129 = vld [vmem:[#allocation2 + $0xd0] sm:$0xff]
      %v1130 = vld [vmem:[#allocation2 + $0xd8] sm:$0xff]
      %v1131 = vld [vmem:[#allocation2 + $0xe0] sm:$0xff]
      %v1132 = vld [vmem:[#allocation2 + $0xe8] sm:$0xff]
      %v1133 = vld [vmem:[#allocation2 + $0xf0] sm:$0xff]
      %v1134 = vld [vmem:[#allocation2 + $0xf8] sm:$0xff]
      %v1135 = vld [vmem:[#allocation2 + $0x100] sm:$0xff]
      %v1136 = vld [vmem:[#allocation2 + $0x108] sm:$0xff]
      %v1137 = vld [vmem:[#allocation2 + $0x110] sm:$0xff]
      %v1138 = vld [vmem:[#allocation2 + $0x118] sm:$0xff]
      %v1139 = vld [vmem:[#allocation2 + $0x120] sm:$0xff]
      %v1140 = vld [vmem:[#allocation2 + $0x128] sm:$0xff]
      %v1141 = vld [vmem:[#allocation2 + $0x130] sm:$0xff]
      %v1142 = vld [vmem:[#allocation2 + $0x138] sm:$0xff]
      %v1143 = vld [vmem:[#allocation2 + $0x140] sm:$0xff]
      %v1144 = vld [vmem:[#allocation2 + $0x148] sm:$0xff]
      %v1145 = vld [vmem:[#allocation2 + $0x150] sm:$0xff]
      %v1146 = vld [vmem:[#allocation2 + $0x158] sm:$0xff]
      %v1147 = vld [vmem:[#allocation2 + $0x160] sm:$0xff]
      %v1148 = vld [vmem:[#allocation2 + $0x168] sm:$0xff]
      %v1149 = vld [vmem:[#allocation2 + $0x170] sm:$0xff]
      %v1150 = vld [vmem:[#allocation2 + $0x178] sm:$0xff]
      %v1151 = vld [vmem:[#allocation2 + $0x180] sm:$0xff]
      %v1152 = vld [vmem:[#allocation2 + $0x188] sm:$0xff]
      %v1153 = vld [vmem:[#allocation2 + $0x190] sm:$0xff]
      %v1154 = vld [vmem:[#allocation2 + $0x198] sm:$0xff]
      %v1155 = vld [vmem:[#allocation2 + $0x1a0] sm:$0xff]
      %v1156 = vld [vmem:[#allocation2 + $0x1a8] sm:$0xff]
      %v1157 = vld [vmem:[#allocation2 + $0x1b0] sm:$0xff]
      %v1158 = vld [vmem:[#allocation2 + $0x1b8] sm:$0xff]
      %v1159 = vld [vmem:[#allocation2 + $0x1c0] sm:$0xff]
      %v1160 = vld [vmem:[#allocation2 + $0x1c8] sm:$0xff]
      %v1161 = vld [vmem:[#allocation2 + $0x1d0] sm:$0xff]
      %v1162 = vld [vmem:[#allocation2 + $0x1d8] sm:$0xff]
      %v1163 = vld [vmem:[#allocation2 + $0x1e0] sm:$0xff]
      %v1164 = vld [vmem:[#allocation2 + $0x1e8] sm:$0xff]
      %v1165 = vld [vmem:[#allocation2 + $0x1f0] sm:$0xff]
      %v1166 = vld [vmem:[#allocation2 + $0x1f8] sm:$0xff]
      %v1167 = vld [vmem:[#allocation2 + $0x200] sm:$0xff]
      %v1168 = vld [vmem:[#allocation2 + $0x208] sm:$0xff]
      %v1169 = vld [vmem:[#allocation2 + $0x210] sm:$0xff]
      %v1170 = vld [vmem:[#allocation2 + $0x218] sm:$0xff]
      %v1171 = vld [vmem:[#allocation2 + $0x220] sm:$0xff]
      %v1172 = vld [vmem:[#allocation2 + $0x228] sm:$0xff]
      %v1173 = vld [vmem:[#allocation2 + $0x230] sm:$0xff]
      %v1174 = vld [vmem:[#allocation2 + $0x238] sm:$0xff]
      %v1175 = vld [vmem:[%s2] sm:$0xff]
      %1177 = vset.pattern.permute.xlu0 0
      %1178 = vperm.xlu0 %1177, %v1175
      %v1179 = vpop.permute.xlu0 %1178
      %vm1181 = vcmask 588800
      %v1183 = vsel %vm1181, %v1102, 0
      %1185 = vmatprep.subr.mxu0 %v1104
      %1186 = vmatpush1.msra.mxu0 %v1103
      %1187 = vmatprep.subr.mxu0 %v1112
      %1188 = vmatpush1.msra.mxu0 %v1111
      %1189 = vmatprep.subr.mxu0 %v1120
      %1190 = vmatpush1.msra.mxu0 %v1119
      %1191 = vmatprep.subr.mxu0 %v1128
      %1192 = vmatpush1.msra.mxu0 %v1127
      %1193 = vmatprep.subr.mxu0 %v1136
      %1194 = vmatpush1.msra.mxu0 %v1135
      %1195 = vmatprep.subr.mxu0 %v1144
      %1196 = vmatpush1.msra.mxu0 %v1143
      %1197 = vmatprep.subr.mxu0 %v1152
      %1198 = vmatpush1.msra.mxu0 %v1151
      %1199 = vmatprep.subr.mxu0 %v1160
      %1200 = vmatpush1.msra.mxu0 %v1159
      %1201 = vmatprep.subr.mxu0 %v1168
      %1202 = vmatpush1.msra.mxu0 %v1167
      %1203 = vmatprep.subr.mxu0 0.0
      %1204 = vmatpush1.msra.mxu0 0.0
      %1205 = vmatprep.subr.mxu0 0.0
      %1206 = vmatpush1.msra.mxu0 0.0
      %1207 = vmatprep.subr.mxu0 0.0
      %1208 = vmatpush1.msra.mxu0 0.0
      %1209 = vmatprep.subr.mxu0 0.0
      %1210 = vmatpush1.msra.mxu0 0.0
      %1211 = vmatprep.subr.mxu0 0.0
      %1212 = vmatpush1.msra.mxu0 0.0
      %1213 = vmatprep.subr.mxu0 0.0
      %1214 = vmatpush1.msra.mxu0 0.0
      %1215 = vmatprep.subr.mxu0 0.0
      %1216 = vmatpush1.msra.mxu0 0.0
      %1217 = vmatprep.subr.mxu0 0.0
      %1218 = vmatpush1.msra.mxu0 0.0
      %1219 = vmatprep.subr.mxu0 0.0
      %1220 = vmatpush1.msra.mxu0 0.0
      %1221 = vmatprep.subr.mxu0 0.0
      %1222 = vmatpush1.msra.mxu0 0.0
      %1223 = vmatprep.subr.mxu0 0.0
      %1224 = vmatpush1.msra.mxu0 0.0
      %1225 = vmatprep.subr.mxu0 0.0
      %1226 = vmatpush1.msra.mxu0 0.0
      %1227 = vmatprep.subr.mxu0 0.0
      %1228 = vmatpush1.msra.mxu0 0.0
      %1229 = vmatprep.subr.mxu0 0.0
      %1230 = vmatpush1.msra.mxu0 0.0
      %1231 = vmatprep.subr.mxu0 0.0
      %1232 = vmatpush1.msra.mxu0 0.0
      %1233 = vmatprep.subr.mxu0 0.0
      %1234 = vmatpush1.msra.mxu0 0.0
      %1235 = vmatprep.subr.mxu0 0.0
      %1236 = vmatpush1.msra.mxu0 0.0
      %1237 = vmatprep.subr.mxu0 0.0
      %1238 = vmatpush1.msra.mxu0 0.0
      %1239 = vmatprep.subr.mxu0 0.0
      %1240 = vmatpush1.msra.mxu0 0.0
      %1241 = vmatprep.subr.mxu0 0.0
      %1242 = vmatpush1.msra.mxu0 0.0
      %1243 = vmatprep.subr.mxu0 0.0
      %1244 = vmatpush1.msra.mxu0 0.0
      %1245 = vmatprep.subr.mxu0 0.0
      %1246 = vmatpush1.msra.mxu0 0.0
      %1247 = vmatprep.subr.mxu0 0.0
      %1248 = vmatpush1.msra.mxu0 0.0
      %1249 = vmatprep.mubr.f32.mxu0 0.0
      %1250 = vmatmul.mubr.f32.gmra.mrb[0].mxu0 %v1183
      %v1251 = vpop.f32.mrb[0].mxu0
      %v1252 = vadd.f32 %v1179, %v1251
      %v1253 = vpop.f32.mrb[0].mxu0
      %v1254 = vadd.f32 %v1179, %v1253
      %1255 = vdwg.mxu0
      %1256 = vmatprep.subr.mxu0 %v1106
      %1257 = vmatpush1.msra.mxu0 %v1105
      %1258 = vmatprep.subr.mxu0 %v1114
      %1259 = vmatpush1.msra.mxu0 %v1113
      %1260 = vmatprep.subr.mxu0 %v1122
      %1261 = vmatpush1.msra.mxu0 %v1121
      %1262 = vmatprep.subr.mxu0 %v1130
      %1263 = vmatpush1.msra.mxu0 %v1129
      %1264 = vmatprep.subr.mxu0 %v1138
      %1265 = vmatpush1.msra.mxu0 %v1137
      %1266 = vmatprep.subr.mxu0 %v1146
      %1267 = vmatpush1.msra.mxu0 %v1145
      %1268 = vmatprep.subr.mxu0 %v1154
      %1269 = vmatpush1.msra.mxu0 %v1153
      %1270 = vmatprep.subr.mxu0 %v1162
      %1271 = vmatpush1.msra.mxu0 %v1161
      %1272 = vmatprep.subr.mxu0 %v1170
      %1273 = vmatpush1.msra.mxu0 %v1169
      %1274 = vmatprep.subr.mxu0 0.0
      %1275 = vmatpush1.msra.mxu0 0.0
      %1276 = vmatprep.subr.mxu0 0.0
      %1277 = vmatpush1.msra.mxu0 0.0
      %1278 = vmatprep.subr.mxu0 0.0
      %1279 = vmatpush1.msra.mxu0 0.0
      %1280 = vmatprep.subr.mxu0 0.0
      %1281 = vmatpush1.msra.mxu0 0.0
      %1282 = vmatprep.subr.mxu0 0.0
      %1283 = vmatpush1.msra.mxu0 0.0
      %1284 = vmatprep.subr.mxu0 0.0
      %1285 = vmatpush1.msra.mxu0 0.0
      %1286 = vmatprep.subr.mxu0 0.0
      %1287 = vmatpush1.msra.mxu0 0.0
      %1288 = vmatprep.subr.mxu0 0.0
      %1289 = vmatpush1.msra.mxu0 0.0
      %1290 = vmatprep.subr.mxu0 0.0
      %1291 = vmatpush1.msra.mxu0 0.0
      %1292 = vmatprep.subr.mxu0 0.0
      %1293 = vmatpush1.msra.mxu0 0.0
      %1294 = vmatprep.subr.mxu0 0.0
      %1295 = vmatpush1.msra.mxu0 0.0
      %1296 = vmatprep.subr.mxu0 0.0
      %1297 = vmatpush1.msra.mxu0 0.0
      %1298 = vmatprep.subr.mxu0 0.0
      %1299 = vmatpush1.msra.mxu0 0.0
      %1300 = vmatprep.subr.mxu0 0.0
      %1301 = vmatpush1.msra.mxu0 0.0
      %1302 = vmatprep.subr.mxu0 0.0
      %1303 = vmatpush1.msra.mxu0 0.0
      %1304 = vmatprep.subr.mxu0 0.0
      %1305 = vmatpush1.msra.mxu0 0.0
      %1306 = vmatprep.subr.mxu0 0.0
      %1307 = vmatpush1.msra.mxu0 0.0
      %1308 = vmatprep.subr.mxu0 0.0
      %1309 = vmatpush1.msra.mxu0 0.0
      %1310 = vmatprep.subr.mxu0 0.0
      %1311 = vmatpush1.msra.mxu0 0.0
      %1312 = vmatprep.subr.mxu0 0.0
      %1313 = vmatpush1.msra.mxu0 0.0
      %1314 = vmatprep.subr.mxu0 0.0
      %1315 = vmatpush1.msra.mxu0 0.0
      %1316 = vmatprep.subr.mxu0 0.0
      %1317 = vmatpush1.msra.mxu0 0.0
      %1318 = vmatprep.subr.mxu0 0.0
      %1319 = vmatpush1.msra.mxu0 0.0
      %1320 = vmatprep.mubr.f32.mxu0 0.0
      %1321 = vmatmul.mubr.f32.gmra.mrb[0].mxu0 %v1183
      %v1322 = vpop.f32.mrb[0].mxu0
      %v1323 = vadd.f32 %v1179, %v1322
      %v1324 = vpop.f32.mrb[0].mxu0
      %v1325 = vadd.f32 %v1179, %v1324
      %1326 = vdwg.mxu0
      %1327 = vmatprep.subr.mxu0 %v1108
      %1328 = vmatpush1.msra.mxu0 %v1107
      %1329 = vmatprep.subr.mxu0 %v1116
      %1330 = vmatpush1.msra.mxu0 %v1115
      %1331 = vmatprep.subr.mxu0 %v1124
      %1332 = vmatpush1.msra.mxu0 %v1123
      %1333 = vmatprep.subr.mxu0 %v1132
      %1334 = vmatpush1.msra.mxu0 %v1131
      %1335 = vmatprep.subr.mxu0 %v1140
      %1336 = vmatpush1.msra.mxu0 %v1139
      %1337 = vmatprep.subr.mxu0 %v1148
      %1338 = vmatpush1.msra.mxu0 %v1147
      %1339 = vmatprep.subr.mxu0 %v1156
      %1340 = vmatpush1.msra.mxu0 %v1155
      %1341 = vmatprep.subr.mxu0 %v1164
      %1342 = vmatpush1.msra.mxu0 %v1163
      %1343 = vmatprep.subr.mxu0 %v1172
      %1344 = vmatpush1.msra.mxu0 %v1171
      %1345 = vmatprep.subr.mxu0 0.0
      %1346 = vmatpush1.msra.mxu0 0.0
      %1347 = vmatprep.subr.mxu0 0.0
      %1348 = vmatpush1.msra.mxu0 0.0
      %1349 = vmatprep.subr.mxu0 0.0
      %1350 = vmatpush1.msra.mxu0 0.0
      %1351 = vmatprep.subr.mxu0 0.0
      %1352 = vmatpush1.msra.mxu0 0.0
      %1353 = vmatprep.subr.mxu0 0.0
      %1354 = vmatpush1.msra.mxu0 0.0
      %1355 = vmatprep.subr.mxu0 0.0
      %1356 = vmatpush1.msra.mxu0 0.0
      %1357 = vmatprep.subr.mxu0 0.0
      %1358 = vmatpush1.msra.mxu0 0.0
      %1359 = vmatprep.subr.mxu0 0.0
      %1360 = vmatpush1.msra.mxu0 0.0
      %1361 = vmatprep.subr.mxu0 0.0
      %1362 = vmatpush1.msra.mxu0 0.0
      %1363 = vmatprep.subr.mxu0 0.0
      %1364 = vmatpush1.msra.mxu0 0.0
      %1365 = vmatprep.subr.mxu0 0.0
      %1366 = vmatpush1.msra.mxu0 0.0
      %1367 = vmatprep.subr.mxu0 0.0
      %1368 = vmatpush1.msra.mxu0 0.0
      %1369 = vmatprep.subr.mxu0 0.0
      %1370 = vmatpush1.msra.mxu0 0.0
      %1371 = vmatprep.subr.mxu0 0.0
      %1372 = vmatpush1.msra.mxu0 0.0
      %1373 = vmatprep.subr.mxu0 0.0
      %1374 = vmatpush1.msra.mxu0 0.0
      %1375 = vmatprep.subr.mxu0 0.0
      %1376 = vmatpush1.msra.mxu0 0.0
      %1377 = vmatprep.subr.mxu0 0.0
      %1378 = vmatpush1.msra.mxu0 0.0
      %1379 = vmatprep.subr.mxu0 0.0
      %1380 = vmatpush1.msra.mxu0 0.0
      %1381 = vmatprep.subr.mxu0 0.0
      %1382 = vmatpush1.msra.mxu0 0.0
      %1383 = vmatprep.subr.mxu0 0.0
      %1384 = vmatpush1.msra.mxu0 0.0
      %1385 = vmatprep.subr.mxu0 0.0
      %1386 = vmatpush1.msra.mxu0 0.0
      %1387 = vmatprep.subr.mxu0 0.0
      %1388 = vmatpush1.msra.mxu0 0.0
      %1389 = vmatprep.subr.mxu0 0.0
      %1390 = vmatpush1.msra.mxu0 0.0
      %1391 = vmatprep.mubr.f32.mxu0 0.0
      %1392 = vmatmul.mubr.f32.gmra.mrb[0].mxu0 %v1183
      %v1393 = vpop.f32.mrb[0].mxu0
      %v1394 = vadd.f32 %v1179, %v1393
      %v1395 = vpop.f32.mrb[0].mxu0
      %v1396 = vadd.f32 %v1179, %v1395
      %1397 = vdwg.mxu0
      %1398 = vmatprep.subr.mxu0 %v1110
      %1399 = vmatpush1.msra.mxu0 %v1109
      %1400 = vmatprep.subr.mxu0 %v1118
      %1401 = vmatpush1.msra.mxu0 %v1117
      %1402 = vmatprep.subr.mxu0 %v1126
      %1403 = vmatpush1.msra.mxu0 %v1125
      %1404 = vmatprep.subr.mxu0 %v1134
      %1405 = vmatpush1.msra.mxu0 %v1133
      %1406 = vmatprep.subr.mxu0 %v1142
      %1407 = vmatpush1.msra.mxu0 %v1141
      %1408 = vmatprep.subr.mxu0 %v1150
      %1409 = vmatpush1.msra.mxu0 %v1149
      %1410 = vmatprep.subr.mxu0 %v1158
      %1411 = vmatpush1.msra.mxu0 %v1157
      %1412 = vmatprep.subr.mxu0 %v1166
      %1413 = vmatpush1.msra.mxu0 %v1165
      %1414 = vmatprep.subr.mxu0 %v1174
      %1415 = vmatpush1.msra.mxu0 %v1173
      %1416 = vmatprep.subr.mxu0 0.0
      %1417 = vmatpush1.msra.mxu0 0.0
      %1418 = vmatprep.subr.mxu0 0.0
      %1419 = vmatpush1.msra.mxu0 0.0
      %1420 = vmatprep.subr.mxu0 0.0
      %1421 = vmatpush1.msra.mxu0 0.0
      %1422 = vmatprep.subr.mxu0 0.0
      %1423 = vmatpush1.msra.mxu0 0.0
      %1424 = vmatprep.subr.mxu0 0.0
      %1425 = vmatpush1.msra.mxu0 0.0
      %1426 = vmatprep.subr.mxu0 0.0
      %1427 = vmatpush1.msra.mxu0 0.0
      %1428 = vmatprep.subr.mxu0 0.0
      %1429 = vmatpush1.msra.mxu0 0.0
      %1430 = vmatprep.subr.mxu0 0.0
      %1431 = vmatpush1.msra.mxu0 0.0
      %1432 = vmatprep.subr.mxu0 0.0
      %1433 = vmatpush1.msra.mxu0 0.0
      %1434 = vmatprep.subr.mxu0 0.0
      %1435 = vmatpush1.msra.mxu0 0.0
      %1436 = vmatprep.subr.mxu0 0.0
      %1437 = vmatpush1.msra.mxu0 0.0
      %1438 = vmatprep.subr.mxu0 0.0
      %1439 = vmatpush1.msra.mxu0 0.0
      %1440 = vmatprep.subr.mxu0 0.0
      %1441 = vmatpush1.msra.mxu0 0.0
      %1442 = vmatprep.subr.mxu0 0.0
      %1443 = vmatpush1.msra.mxu0 0.0
      %1444 = vmatprep.subr.mxu0 0.0
      %1445 = vmatpush1.msra.mxu0 0.0
      %1446 = vmatprep.subr.mxu0 0.0
      %1447 = vmatpush1.msra.mxu0 0.0
      %1448 = vmatprep.subr.mxu0 0.0
      %1449 = vmatpush1.msra.mxu0 0.0
      %1450 = vmatprep.subr.mxu0 0.0
      %1451 = vmatpush1.msra.mxu0 0.0
      %1452 = vmatprep.subr.mxu0 0.0
      %1453 = vmatpush1.msra.mxu0 0.0
      %1454 = vmatprep.subr.mxu0 0.0
      %1455 = vmatpush1.msra.mxu0 0.0
      %1456 = vmatprep.subr.mxu0 0.0
      %1457 = vmatpush1.msra.mxu0 0.0
      %1458 = vmatprep.subr.mxu0 0.0
      %1459 = vmatpush1.msra.mxu0 0.0
      %1460 = vmatprep.subr.mxu0 0.0
      %1461 = vmatpush1.msra.mxu0 0.0
      %1462 = vmatprep.mubr.f32.mxu0 0.0
      %1463 = vmatmul.mubr.f32.gmra.mrb[0].mxu0 %v1183
      %v1464 = vpop.f32.mrb[0].mxu0
      %v1465 = vadd.f32 %v1179, %v1464
      %v1466 = vpop.f32.mrb[0].mxu0
      %v1467 = vadd.f32 %v1179, %v1466
      %1468 = vdwg.mxu0
      %v1469 = vmax.f32 %v1252, 0.0
      %v1470 = vmax.f32 %v1254, 0.0
      %v1471 = vmax.f32 %v1323, 0.0
      %v1472 = vmax.f32 %v1325, 0.0
      %v1473 = vmax.f32 %v1394, 0.0
      %v1474 = vmax.f32 %v1396, 0.0
      %v1475 = vmax.f32 %v1465, 0.0
      %v1476 = vmax.f32 %v1467, 0.0
      %1477 = vst [vmem:[#allocation3 + $0x8] sm:$0xff] %v1469
      %1478 = vst [vmem:[#allocation3 + $0x10] sm:$0xff] %v1470
      %1479 = vst [vmem:[#allocation3 + $0x18] sm:$0xff] %v1471
      %1480 = vst [vmem:[#allocation3 + $0x20] sm:$0xff] %v1472
      %1481 = vst [vmem:[#allocation3 + $0x28] sm:$0xff] %v1473
      %1482 = vst [vmem:[#allocation3 + $0x30] sm:$0xff] %v1474
      %1483 = vst [vmem:[#allocation3 + $0x38] sm:$0xff] %v1475
      %1484 = vst [vmem:[#allocation3 + $0x40] sm:$0xff] %v1476
      %v1485 = vld [vmem:[#allocation3] sm:$0xff]
      %v1486 = vld [vmem:[#allocation3 + $0x8] sm:$0xff]
      %v1487 = vld [vmem:[#allocation3 + $0x10] sm:$0xff]
      %v1488 = vld [vmem:[#allocation3 + $0x18] sm:$0xff]
      %v1489 = vld [vmem:[#allocation3 + $0x20] sm:$0xff]
      %v1490 = vld [vmem:[#allocation3 + $0x28] sm:$0xff]
      %v1491 = vld [vmem:[#allocation3 + $0x30] sm:$0xff]
      %v1492 = vld [vmem:[#allocation3 + $0x38] sm:$0xff]
      %v1493 = vld [vmem:[#allocation3 + $0x40] sm:$0xff]
      %1503 = vrot.lane.b32.xlu0 %v1485, 33
      %v1504 = vpop.permute.xlu0 %1503
      %1505 = vrot.lane.b32.xlu0 %v1486, 33
      %v1506 = vpop.permute.xlu0 %1505
      %1507 = vrot.lane.b32.xlu0 %v1487, 33
      %v1508 = vpop.permute.xlu0 %1507
      %1509 = vrot.lane.b32.xlu0 %v1488, 33
      %v1510 = vpop.permute.xlu0 %1509
      %1511 = vrot.lane.b32.xlu0 %v1489, 33
      %v1512 = vpop.permute.xlu0 %1511
      %1513 = vrot.lane.b32.xlu0 %v1490, 33
      %v1514 = vpop.permute.xlu0 %1513
      %1515 = vrot.lane.b32.xlu0 %v1491, 33
      %v1516 = vpop.permute.xlu0 %1515
      %1517 = vrot.lane.b32.xlu0 %v1492, 33
      %v1518 = vpop.permute.xlu0 %1517
      %1519 = vrot.lane.b32.xlu0 %v1493, 33
      %v1520 = vpop.permute.xlu0 %1519
      %v1521 = vsel %vm426, %v1504, %v1506
      %v1522 = vsel %vm426, %v1506, %v1508
      %v1523 = vsel %vm426, %v1508, %v1510
      %v1524 = vsel %vm426, %v1510, %v1512
      %v1525 = vsel %vm426, %v1512, %v1514
      %v1526 = vsel %vm426, %v1514, %v1516
      %v1527 = vsel %vm426, %v1516, %v1518
      %v1528 = vsel %vm426, %v1518, %v1520
      %v1537 = vsel %vm391, %v1521, 0.0
      %v1538 = vsel %vm392, %v1522, 0.0
      %v1539 = vsel %vm393, %v1523, 0.0
      %v1540 = vsel %vm394, %v1524, 0.0
      %v1541 = vsel %vm395, %v1525, 0.0
      %v1542 = vsel %vm396, %v1526, 0.0
      %v1543 = vsel %vm397, %v1527, 0.0
      %v1544 = vsel %vm398, %v1528, 0.0
      %1545 = vst [vmem:[#allocation2] sm:$0xff] %v1537
      %1546 = vst [vmem:[#allocation2 + $0x8] sm:$0xff] %v1538
      %1547 = vst [vmem:[#allocation2 + $0x10] sm:$0xff] %v1539
      %1548 = vst [vmem:[#allocation2 + $0x18] sm:$0xff] %v1540
      %1549 = vst [vmem:[#allocation2 + $0x20] sm:$0xff] %v1541
      %1550 = vst [vmem:[#allocation2 + $0x28] sm:$0xff] %v1542
      %1551 = vst [vmem:[#allocation2 + $0x30] sm:$0xff] %v1543
      %1552 = vst [vmem:[#allocation2 + $0x38] sm:$0xff] %v1544
      %v1553 = vld [vmem:[#allocation3] sm:$0xff]
      %v1554 = vld [vmem:[#allocation3 + $0x8] sm:$0xff]
      %v1555 = vld [vmem:[#allocation3 + $0x10] sm:$0xff]
      %v1556 = vld [vmem:[#allocation3 + $0x18] sm:$0xff]
      %v1557 = vld [vmem:[#allocation3 + $0x20] sm:$0xff]
      %v1558 = vld [vmem:[#allocation3 + $0x28] sm:$0xff]
      %v1559 = vld [vmem:[#allocation3 + $0x30] sm:$0xff]
      %v1560 = vld [vmem:[#allocation3 + $0x38] sm:$0xff]
      %v1561 = vld [vmem:[#allocation3 + $0x40] sm:$0xff]
      %1571 = vrot.lane.b32.xlu0 %v1553, 32
      %v1572 = vpop.permute.xlu0 %1571
      %1573 = vrot.lane.b32.xlu0 %v1554, 32
      %v1574 = vpop.permute.xlu0 %1573
      %1575 = vrot.lane.b32.xlu0 %v1555, 32
      %v1576 = vpop.permute.xlu0 %1575
      %1577 = vrot.lane.b32.xlu0 %v1556, 32
      %v1578 = vpop.permute.xlu0 %1577
      %1579 = vrot.lane.b32.xlu0 %v1557, 32
      %v1580 = vpop.permute.xlu0 %1579
      %1581 = vrot.lane.b32.xlu0 %v1558, 32
      %v1582 = vpop.permute.xlu0 %1581
      %1583 = vrot.lane.b32.xlu0 %v1559, 32
      %v1584 = vpop.permute.xlu0 %1583
      %1585 = vrot.lane.b32.xlu0 %v1560, 32
      %v1586 = vpop.permute.xlu0 %1585
      %1587 = vrot.lane.b32.xlu0 %v1561, 32
      %v1588 = vpop.permute.xlu0 %1587
      %v1589 = vsel %vm511, %v1572, %v1574
      %v1590 = vsel %vm511, %v1574, %v1576
      %v1591 = vsel %vm511, %v1576, %v1578
      %v1592 = vsel %vm511, %v1578, %v1580
      %v1593 = vsel %vm511, %v1580, %v1582
      %v1594 = vsel %vm511, %v1582, %v1584
      %v1595 = vsel %vm511, %v1584, %v1586
      %v1596 = vsel %vm511, %v1586, %v1588
      %v1605 = vsel %vm476, %v1589, 0.0
      %v1606 = vsel %vm477, %v1590, 0.0
      %v1607 = vsel %vm478, %v1591, 0.0
      %v1608 = vsel %vm479, %v1592, 0.0
      %v1609 = vsel %vm480, %v1593, 0.0
      %v1610 = vsel %vm481, %v1594, 0.0
      %v1611 = vsel %vm482, %v1595, 0.0
      %v1612 = vsel %vm483, %v1596, 0.0
      %1613 = vst [vmem:[#allocation2 + $0x40] sm:$0xff] %v1605
      %1614 = vst [vmem:[#allocation2 + $0x48] sm:$0xff] %v1606
      %1615 = vst [vmem:[#allocation2 + $0x50] sm:$0xff] %v1607
      %1616 = vst [vmem:[#allocation2 + $0x58] sm:$0xff] %v1608
      %1617 = vst [vmem:[#allocation2 + $0x60] sm:$0xff] %v1609
      %1618 = vst [vmem:[#allocation2 + $0x68] sm:$0xff] %v1610
      %1619 = vst [vmem:[#allocation2 + $0x70] sm:$0xff] %v1611
      %1620 = vst [vmem:[#allocation2 + $0x78] sm:$0xff] %v1612
      %v1621 = vld [vmem:[#allocation3] sm:$0xff]
      %v1622 = vld [vmem:[#allocation3 + $0x8] sm:$0xff]
      %v1623 = vld [vmem:[#allocation3 + $0x10] sm:$0xff]
      %v1624 = vld [vmem:[#allocation3 + $0x18] sm:$0xff]
      %v1625 = vld [vmem:[#allocation3 + $0x20] sm:$0xff]
      %v1626 = vld [vmem:[#allocation3 + $0x28] sm:$0xff]
      %v1627 = vld [vmem:[#allocation3 + $0x30] sm:$0xff]
      %v1628 = vld [vmem:[#allocation3 + $0x38] sm:$0xff]
      %v1629 = vld [vmem:[#allocation3 + $0x40] sm:$0xff]
      %1639 = vrot.lane.b32.xlu0 %v1621, 31
      %v1640 = vpop.permute.xlu0 %1639
      %1641 = vrot.lane.b32.xlu0 %v1622, 31
      %v1642 = vpop.permute.xlu0 %1641
      %1643 = vrot.lane.b32.xlu0 %v1623, 31
      %v1644 = vpop.permute.xlu0 %1643
      %1645 = vrot.lane.b32.xlu0 %v1624, 31
      %v1646 = vpop.permute.xlu0 %1645
      %1647 = vrot.lane.b32.xlu0 %v1625, 31
      %v1648 = vpop.permute.xlu0 %1647
      %1649 = vrot.lane.b32.xlu0 %v1626, 31
      %v1650 = vpop.permute.xlu0 %1649
      %1651 = vrot.lane.b32.xlu0 %v1627, 31
      %v1652 = vpop.permute.xlu0 %1651
      %1653 = vrot.lane.b32.xlu0 %v1628, 31
      %v1654 = vpop.permute.xlu0 %1653
      %1655 = vrot.lane.b32.xlu0 %v1629, 31
      %v1656 = vpop.permute.xlu0 %1655
      %v1657 = vsel %vm612, %v1640, %v1642
      %v1658 = vsel %vm612, %v1642, %v1644
      %v1659 = vsel %vm612, %v1644, %v1646
      %v1660 = vsel %vm612, %v1646, %v1648
      %v1661 = vsel %vm612, %v1648, %v1650
      %v1662 = vsel %vm612, %v1650, %v1652
      %v1663 = vsel %vm612, %v1652, %v1654
      %v1664 = vsel %vm612, %v1654, %v1656
      %v1673 = vsel %vm577, %v1657, 0.0
      %v1674 = vsel %vm578, %v1658, 0.0
      %v1675 = vsel %vm579, %v1659, 0.0
      %v1676 = vsel %vm580, %v1660, 0.0
      %v1677 = vsel %vm581, %v1661, 0.0
      %v1678 = vsel %vm582, %v1662, 0.0
      %v1679 = vsel %vm583, %v1663, 0.0
      %v1680 = vsel %vm584, %v1664, 0.0
      %1681 = vst [vmem:[#allocation2 + $0x80] sm:$0xff] %v1673
      %1682 = vst [vmem:[#allocation2 + $0x88] sm:$0xff] %v1674
      %1683 = vst [vmem:[#allocation2 + $0x90] sm:$0xff] %v1675
      %1684 = vst [vmem:[#allocation2 + $0x98] sm:$0xff] %v1676
      %1685 = vst [vmem:[#allocation2 + $0xa0] sm:$0xff] %v1677
      %1686 = vst [vmem:[#allocation2 + $0xa8] sm:$0xff] %v1678
      %1687 = vst [vmem:[#allocation2 + $0xb0] sm:$0xff] %v1679
      %1688 = vst [vmem:[#allocation2 + $0xb8] sm:$0xff] %v1680
      %v1689 = vld [vmem:[#allocation3] sm:$0xff]
      %v1690 = vld [vmem:[#allocation3 + $0x8] sm:$0xff]
      %v1691 = vld [vmem:[#allocation3 + $0x10] sm:$0xff]
      %v1692 = vld [vmem:[#allocation3 + $0x18] sm:$0xff]
      %v1693 = vld [vmem:[#allocation3 + $0x20] sm:$0xff]
      %v1694 = vld [vmem:[#allocation3 + $0x28] sm:$0xff]
      %v1695 = vld [vmem:[#allocation3 + $0x30] sm:$0xff]
      %v1696 = vld [vmem:[#allocation3 + $0x38] sm:$0xff]
      %v1697 = vld [vmem:[#allocation3 + $0x40] sm:$0xff]
      %1707 = vrot.lane.b32.xlu0 %v1689, 1
      %v1708 = vpop.permute.xlu0 %1707
      %1709 = vrot.lane.b32.xlu0 %v1690, 1
      %v1710 = vpop.permute.xlu0 %1709
      %1711 = vrot.lane.b32.xlu0 %v1691, 1
      %v1712 = vpop.permute.xlu0 %1711
      %1713 = vrot.lane.b32.xlu0 %v1692, 1
      %v1714 = vpop.permute.xlu0 %1713
      %1715 = vrot.lane.b32.xlu0 %v1693, 1
      %v1716 = vpop.permute.xlu0 %1715
      %1717 = vrot.lane.b32.xlu0 %v1694, 1
      %v1718 = vpop.permute.xlu0 %1717
      %1719 = vrot.lane.b32.xlu0 %v1695, 1
      %v1720 = vpop.permute.xlu0 %1719
      %1721 = vrot.lane.b32.xlu0 %v1696, 1
      %v1722 = vpop.permute.xlu0 %1721
      %1723 = vrot.lane.b32.xlu0 %v1697, 1
      %v1724 = vpop.permute.xlu0 %1723
      %v1725 = vsel %vm697, %v1708, %v1710
      %v1726 = vsel %vm697, %v1710, %v1712
      %v1727 = vsel %vm697, %v1712, %v1714
      %v1728 = vsel %vm697, %v1714, %v1716
      %v1729 = vsel %vm697, %v1716, %v1718
      %v1730 = vsel %vm697, %v1718, %v1720
      %v1731 = vsel %vm697, %v1720, %v1722
      %v1732 = vsel %vm697, %v1722, %v1724
      %v1741 = vsel %vm662, %v1725, 0.0
      %v1742 = vsel %vm663, %v1726, 0.0
      %v1743 = vsel %vm664, %v1727, 0.0
      %v1744 = vsel %vm665, %v1728, 0.0
      %v1745 = vsel %vm666, %v1729, 0.0
      %v1746 = vsel %vm667, %v1730, 0.0
      %v1747 = vsel %vm668, %v1731, 0.0
      %v1748 = vsel %vm669, %v1732, 0.0
      %1749 = vst [vmem:[#allocation2 + $0xc0] sm:$0xff] %v1741
      %1750 = vst [vmem:[#allocation2 + $0xc8] sm:$0xff] %v1742
      %1751 = vst [vmem:[#allocation2 + $0xd0] sm:$0xff] %v1743
      %1752 = vst [vmem:[#allocation2 + $0xd8] sm:$0xff] %v1744
      %1753 = vst [vmem:[#allocation2 + $0xe0] sm:$0xff] %v1745
      %1754 = vst [vmem:[#allocation2 + $0xe8] sm:$0xff] %v1746
      %1755 = vst [vmem:[#allocation2 + $0xf0] sm:$0xff] %v1747
      %1756 = vst [vmem:[#allocation2 + $0xf8] sm:$0xff] %v1748
      %1757 = vst [vmem:[#allocation2 + $0x100] sm:$0xff] %v1469
      %1758 = vst [vmem:[#allocation2 + $0x108] sm:$0xff] %v1470
      %1759 = vst [vmem:[#allocation2 + $0x110] sm:$0xff] %v1471
      %1760 = vst [vmem:[#allocation2 + $0x118] sm:$0xff] %v1472
      %1761 = vst [vmem:[#allocation2 + $0x120] sm:$0xff] %v1473
      %1762 = vst [vmem:[#allocation2 + $0x128] sm:$0xff] %v1474
      %1763 = vst [vmem:[#allocation2 + $0x130] sm:$0xff] %v1475
      %1764 = vst [vmem:[#allocation2 + $0x138] sm:$0xff] %v1476
      %v1765 = vld [vmem:[#allocation3 + $0x8] sm:$0xff]
      %v1766 = vld [vmem:[#allocation3 + $0x10] sm:$0xff]
      %v1767 = vld [vmem:[#allocation3 + $0x18] sm:$0xff]
      %v1768 = vld [vmem:[#allocation3 + $0x20] sm:$0xff]
      %v1769 = vld [vmem:[#allocation3 + $0x28] sm:$0xff]
      %v1770 = vld [vmem:[#allocation3 + $0x30] sm:$0xff]
      %v1771 = vld [vmem:[#allocation3 + $0x38] sm:$0xff]
      %v1772 = vld [vmem:[#allocation3 + $0x40] sm:$0xff]
      %v1773 = vld [vmem:[#allocation3 + $0x48] sm:$0xff]
      %1783 = vrot.lane.b32.xlu0 %v1765, 127
      %v1784 = vpop.permute.xlu0 %1783
      %1785 = vrot.lane.b32.xlu0 %v1766, 127
      %v1786 = vpop.permute.xlu0 %1785
      %1787 = vrot.lane.b32.xlu0 %v1767, 127
      %v1788 = vpop.permute.xlu0 %1787
      %1789 = vrot.lane.b32.xlu0 %v1768, 127
      %v1790 = vpop.permute.xlu0 %1789
      %1791 = vrot.lane.b32.xlu0 %v1769, 127
      %v1792 = vpop.permute.xlu0 %1791
      %1793 = vrot.lane.b32.xlu0 %v1770, 127
      %v1794 = vpop.permute.xlu0 %1793
      %1795 = vrot.lane.b32.xlu0 %v1771, 127
      %v1796 = vpop.permute.xlu0 %1795
      %1797 = vrot.lane.b32.xlu0 %v1772, 127
      %v1798 = vpop.permute.xlu0 %1797
      %1799 = vrot.lane.b32.xlu0 %v1773, 127
      %v1800 = vpop.permute.xlu0 %1799
      %v1801 = vsel %vm790, %v1784, %v1786
      %v1802 = vsel %vm790, %v1786, %v1788
      %v1803 = vsel %vm790, %v1788, %v1790
      %v1804 = vsel %vm790, %v1790, %v1792
      %v1805 = vsel %vm790, %v1792, %v1794
      %v1806 = vsel %vm790, %v1794, %v1796
      %v1807 = vsel %vm790, %v1796, %v1798
      %v1808 = vsel %vm790, %v1798, %v1800
      %v1817 = vsel %vm755, %v1801, 0.0
      %v1818 = vsel %vm756, %v1802, 0.0
      %v1819 = vsel %vm757, %v1803, 0.0
      %v1820 = vsel %vm758, %v1804, 0.0
      %v1821 = vsel %vm759, %v1805, 0.0
      %v1822 = vsel %vm760, %v1806, 0.0
      %v1823 = vsel %vm761, %v1807, 0.0
      %v1824 = vsel %vm762, %v1808, 0.0
      %1825 = vst [vmem:[#allocation2 + $0x140] sm:$0xff] %v1817
      %1826 = vst [vmem:[#allocation2 + $0x148] sm:$0xff] %v1818
      %1827 = vst [vmem:[#allocation2 + $0x150] sm:$0xff] %v1819
      %1828 = vst [vmem:[#allocation2 + $0x158] sm:$0xff] %v1820
      %1829 = vst [vmem:[#allocation2 + $0x160] sm:$0xff] %v1821
      %1830 = vst [vmem:[#allocation2 + $0x168] sm:$0xff] %v1822
      %1831 = vst [vmem:[#allocation2 + $0x170] sm:$0xff] %v1823
      %1832 = vst [vmem:[#allocation2 + $0x178] sm:$0xff] %v1824
      %v1833 = vld [vmem:[#allocation3 + $0x8] sm:$0xff]
      %v1834 = vld [vmem:[#allocation3 + $0x10] sm:$0xff]
      %v1835 = vld [vmem:[#allocation3 + $0x18] sm:$0xff]
      %v1836 = vld [vmem:[#allocation3 + $0x20] sm:$0xff]
      %v1837 = vld [vmem:[#allocation3 + $0x28] sm:$0xff]
      %v1838 = vld [vmem:[#allocation3 + $0x30] sm:$0xff]
      %v1839 = vld [vmem:[#allocation3 + $0x38] sm:$0xff]
      %v1840 = vld [vmem:[#allocation3 + $0x40] sm:$0xff]
      %v1841 = vld [vmem:[#allocation3 + $0x48] sm:$0xff]
      %1851 = vrot.lane.b32.xlu0 %v1833, 97
      %v1852 = vpop.permute.xlu0 %1851
      %1853 = vrot.lane.b32.xlu0 %v1834, 97
      %v1854 = vpop.permute.xlu0 %1853
      %1855 = vrot.lane.b32.xlu0 %v1835, 97
      %v1856 = vpop.permute.xlu0 %1855
      %1857 = vrot.lane.b32.xlu0 %v1836, 97
      %v1858 = vpop.permute.xlu0 %1857
      %1859 = vrot.lane.b32.xlu0 %v1837, 97
      %v1860 = vpop.permute.xlu0 %1859
      %1861 = vrot.lane.b32.xlu0 %v1838, 97
      %v1862 = vpop.permute.xlu0 %1861
      %1863 = vrot.lane.b32.xlu0 %v1839, 97
      %v1864 = vpop.permute.xlu0 %1863
      %1865 = vrot.lane.b32.xlu0 %v1840, 97
      %v1866 = vpop.permute.xlu0 %1865
      %1867 = vrot.lane.b32.xlu0 %v1841, 97
      %v1868 = vpop.permute.xlu0 %1867
      %v1869 = vsel %vm891, %v1852, %v1854
      %v1870 = vsel %vm891, %v1854, %v1856
      %v1871 = vsel %vm891, %v1856, %v1858
      %v1872 = vsel %vm891, %v1858, %v1860
      %v1873 = vsel %vm891, %v1860, %v1862
      %v1874 = vsel %vm891, %v1862, %v1864
      %v1875 = vsel %vm891, %v1864, %v1866
      %v1876 = vsel %vm891, %v1866, %v1868
      %v1885 = vsel %vm856, %v1869, 0.0
      %v1886 = vsel %vm857, %v1870, 0.0
      %v1887 = vsel %vm858, %v1871, 0.0
      %v1888 = vsel %vm859, %v1872, 0.0
      %v1889 = vsel %vm860, %v1873, 0.0
      %v1890 = vsel %vm861, %v1874, 0.0
      %v1891 = vsel %vm862, %v1875, 0.0
      %v1892 = vsel %vm863, %v1876, 0.0
      %1893 = vst [vmem:[#allocation2 + $0x180] sm:$0xff] %v1885
      %1894 = vst [vmem:[#allocation2 + $0x188] sm:$0xff] %v1886
      %1895 = vst [vmem:[#allocation2 + $0x190] sm:$0xff] %v1887
      %1896 = vst [vmem:[#allocation2 + $0x198] sm:$0xff] %v1888
      %1897 = vst [vmem:[#allocation2 + $0x1a0] sm:$0xff] %v1889
      %1898 = vst [vmem:[#allocation2 + $0x1a8] sm:$0xff] %v1890
      %1899 = vst [vmem:[#allocation2 + $0x1b0] sm:$0xff] %v1891
      %1900 = vst [vmem:[#allocation2 + $0x1b8] sm:$0xff] %v1892
      %v1901 = vld [vmem:[#allocation3 + $0x8] sm:$0xff]
      %v1902 = vld [vmem:[#allocation3 + $0x10] sm:$0xff]
      %v1903 = vld [vmem:[#allocation3 + $0x18] sm:$0xff]
      %v1904 = vld [vmem:[#allocation3 + $0x20] sm:$0xff]
      %v1905 = vld [vmem:[#allocation3 + $0x28] sm:$0xff]
      %v1906 = vld [vmem:[#allocation3 + $0x30] sm:$0xff]
      %v1907 = vld [vmem:[#allocation3 + $0x38] sm:$0xff]
      %v1908 = vld [vmem:[#allocation3 + $0x40] sm:$0xff]
      %v1909 = vld [vmem:[#allocation3 + $0x48] sm:$0xff]
      %1919 = vrot.lane.b32.xlu0 %v1901, 96
      %v1920 = vpop.permute.xlu0 %1919
      %1921 = vrot.lane.b32.xlu0 %v1902, 96
      %v1922 = vpop.permute.xlu0 %1921
      %1923 = vrot.lane.b32.xlu0 %v1903, 96
      %v1924 = vpop.permute.xlu0 %1923
      %1925 = vrot.lane.b32.xlu0 %v1904, 96
      %v1926 = vpop.permute.xlu0 %1925
      %1927 = vrot.lane.b32.xlu0 %v1905, 96
      %v1928 = vpop.permute.xlu0 %1927
      %1929 = vrot.lane.b32.xlu0 %v1906, 96
      %v1930 = vpop.permute.xlu0 %1929
      %1931 = vrot.lane.b32.xlu0 %v1907, 96
      %v1932 = vpop.permute.xlu0 %1931
      %1933 = vrot.lane.b32.xlu0 %v1908, 96
      %v1934 = vpop.permute.xlu0 %1933
      %1935 = vrot.lane.b32.xlu0 %v1909, 96
      %v1936 = vpop.permute.xlu0 %1935
      %v1937 = vsel %vm976, %v1920, %v1922
      %v1938 = vsel %vm976, %v1922, %v1924
      %v1939 = vsel %vm976, %v1924, %v1926
      %v1940 = vsel %vm976, %v1926, %v1928
      %v1941 = vsel %vm976, %v1928, %v1930
      %v1942 = vsel %vm976, %v1930, %v1932
      %v1943 = vsel %vm976, %v1932, %v1934
      %v1944 = vsel %vm976, %v1934, %v1936
      %v1953 = vsel %vm941, %v1937, 0.0
      %v1954 = vsel %vm942, %v1938, 0.0
      %v1955 = vsel %vm943, %v1939, 0.0
      %v1956 = vsel %vm944, %v1940, 0.0
      %v1957 = vsel %vm945, %v1941, 0.0
      %v1958 = vsel %vm946, %v1942, 0.0
      %v1959 = vsel %vm947, %v1943, 0.0
      %v1960 = vsel %vm948, %v1944, 0.0
      %1961 = vst [vmem:[#allocation2 + $0x1c0] sm:$0xff] %v1953
      %1962 = vst [vmem:[#allocation2 + $0x1c8] sm:$0xff] %v1954
      %1963 = vst [vmem:[#allocation2 + $0x1d0] sm:$0xff] %v1955
      %1964 = vst [vmem:[#allocation2 + $0x1d8] sm:$0xff] %v1956
      %1965 = vst [vmem:[#allocation2 + $0x1e0] sm:$0xff] %v1957
      %1966 = vst [vmem:[#allocation2 + $0x1e8] sm:$0xff] %v1958
      %1967 = vst [vmem:[#allocation2 + $0x1f0] sm:$0xff] %v1959
      %1968 = vst [vmem:[#allocation2 + $0x1f8] sm:$0xff] %v1960
      %v1969 = vld [vmem:[#allocation3 + $0x8] sm:$0xff]
      %v1970 = vld [vmem:[#allocation3 + $0x10] sm:$0xff]
      %v1971 = vld [vmem:[#allocation3 + $0x18] sm:$0xff]
      %v1972 = vld [vmem:[#allocation3 + $0x20] sm:$0xff]
      %v1973 = vld [vmem:[#allocation3 + $0x28] sm:$0xff]
      %v1974 = vld [vmem:[#allocation3 + $0x30] sm:$0xff]
      %v1975 = vld [vmem:[#allocation3 + $0x38] sm:$0xff]
      %v1976 = vld [vmem:[#allocation3 + $0x40] sm:$0xff]
      %v1977 = vld [vmem:[#allocation3 + $0x48] sm:$0xff]
      %1987 = vrot.lane.b32.xlu0 %v1969, 95
      %v1988 = vpop.permute.xlu0 %1987
      %1989 = vrot.lane.b32.xlu0 %v1970, 95
      %v1990 = vpop.permute.xlu0 %1989
      %1991 = vrot.lane.b32.xlu0 %v1971, 95
      %v1992 = vpop.permute.xlu0 %1991
      %1993 = vrot.lane.b32.xlu0 %v1972, 95
      %v1994 = vpop.permute.xlu0 %1993
      %1995 = vrot.lane.b32.xlu0 %v1973, 95
      %v1996 = vpop.permute.xlu0 %1995
      %1997 = vrot.lane.b32.xlu0 %v1974, 95
      %v1998 = vpop.permute.xlu0 %1997
      %1999 = vrot.lane.b32.xlu0 %v1975, 95
      %v2000 = vpop.permute.xlu0 %1999
      %2001 = vrot.lane.b32.xlu0 %v1976, 95
      %v2002 = vpop.permute.xlu0 %2001
      %2003 = vrot.lane.b32.xlu0 %v1977, 95
      %v2004 = vpop.permute.xlu0 %2003
      %v2005 = vsel %vm1069, %v1988, %v1990
      %v2006 = vsel %vm1069, %v1990, %v1992
      %v2007 = vsel %vm1069, %v1992, %v1994
      %v2008 = vsel %vm1069, %v1994, %v1996
      %v2009 = vsel %vm1069, %v1996, %v1998
      %v2010 = vsel %vm1069, %v1998, %v2000
      %v2011 = vsel %vm1069, %v2000, %v2002
      %v2012 = vsel %vm1069, %v2002, %v2004
      %v2021 = vsel %vm1034, %v2005, 0.0
      %v2022 = vsel %vm1035, %v2006, 0.0
      %v2023 = vsel %vm1036, %v2007, 0.0
      %v2024 = vsel %vm1037, %v2008, 0.0
      %v2025 = vsel %vm1038, %v2009, 0.0
      %v2026 = vsel %vm1039, %v2010, 0.0
      %v2027 = vsel %vm1040, %v2011, 0.0
      %v2028 = vsel %vm1041, %v2012, 0.0
      %2029 = vst [vmem:[#allocation2 + $0x200] sm:$0xff] %v2021
      %2030 = vst [vmem:[#allocation2 + $0x208] sm:$0xff] %v2022
      %2031 = vst [vmem:[#allocation2 + $0x210] sm:$0xff] %v2023
      %2032 = vst [vmem:[#allocation2 + $0x218] sm:$0xff] %v2024
      %2033 = vst [vmem:[#allocation2 + $0x220] sm:$0xff] %v2025
      %2034 = vst [vmem:[#allocation2 + $0x228] sm:$0xff] %v2026
      %2035 = vst [vmem:[#allocation2 + $0x230] sm:$0xff] %v2027
      %2036 = vst [vmem:[#allocation2 + $0x238] sm:$0xff] %v2028
      %v2037 = vld [vmem:[%s3] sm:$0xff]
      %v2038 = vld [vmem:[#allocation2] sm:$0xff]
      %v2039 = vld [vmem:[#allocation2 + $0x8] sm:$0xff]
      %v2040 = vld [vmem:[#allocation2 + $0x10] sm:$0xff]
      %v2041 = vld [vmem:[#allocation2 + $0x18] sm:$0xff]
      %v2042 = vld [vmem:[#allocation2 + $0x20] sm:$0xff]
      %v2043 = vld [vmem:[#allocation2 + $0x28] sm:$0xff]
      %v2044 = vld [vmem:[#allocation2 + $0x30] sm:$0xff]
      %v2045 = vld [vmem:[#allocation2 + $0x38] sm:$0xff]
      %v2046 = vld [vmem:[#allocation2 + $0x40] sm:$0xff]
      %v2047 = vld [vmem:[#allocation2 + $0x48] sm:$0xff]
      %v2048 = vld [vmem:[#allocation2 + $0x50] sm:$0xff]
      %v2049 = vld [vmem:[#allocation2 + $0x58] sm:$0xff]
      %v2050 = vld [vmem:[#allocation2 + $0x60] sm:$0xff]
      %v2051 = vld [vmem:[#allocation2 + $0x68] sm:$0xff]
      %v2052 = vld [vmem:[#allocation2 + $0x70] sm:$0xff]
      %v2053 = vld [vmem:[#allocation2 + $0x78] sm:$0xff]
      %v2054 = vld [vmem:[#allocation2 + $0x80] sm:$0xff]
      %v2055 = vld [vmem:[#allocation2 + $0x88] sm:$0xff]
      %v2056 = vld [vmem:[#allocation2 + $0x90] sm:$0xff]
      %v2057 = vld [vmem:[#allocation2 + $0x98] sm:$0xff]
      %v2058 = vld [vmem:[#allocation2 + $0xa0] sm:$0xff]
      %v2059 = vld [vmem:[#allocation2 + $0xa8] sm:$0xff]
      %v2060 = vld [vmem:[#allocation2 + $0xb0] sm:$0xff]
      %v2061 = vld [vmem:[#allocation2 + $0xb8] sm:$0xff]
      %v2062 = vld [vmem:[#allocation2 + $0xc0] sm:$0xff]
      %v2063 = vld [vmem:[#allocation2 + $0xc8] sm:$0xff]
      %v2064 = vld [vmem:[#allocation2 + $0xd0] sm:$0xff]
      %v2065 = vld [vmem:[#allocation2 + $0xd8] sm:$0xff]
      %v2066 = vld [vmem:[#allocation2 + $0xe0] sm:$0xff]
      %v2067 = vld [vmem:[#allocation2 + $0xe8] sm:$0xff]
      %v2068 = vld [vmem:[#allocation2 + $0xf0] sm:$0xff]
      %v2069 = vld [vmem:[#allocation2 + $0xf8] sm:$0xff]
      %v2070 = vld [vmem:[#allocation2 + $0x100] sm:$0xff]
      %v2071 = vld [vmem:[#allocation2 + $0x108] sm:$0xff]
      %v2072 = vld [vmem:[#allocation2 + $0x110] sm:$0xff]
      %v2073 = vld [vmem:[#allocation2 + $0x118] sm:$0xff]
      %v2074 = vld [vmem:[#allocation2 + $0x120] sm:$0xff]
      %v2075 = vld [vmem:[#allocation2 + $0x128] sm:$0xff]
      %v2076 = vld [vmem:[#allocation2 + $0x130] sm:$0xff]
      %v2077 = vld [vmem:[#allocation2 + $0x138] sm:$0xff]
      %v2078 = vld [vmem:[#allocation2 + $0x140] sm:$0xff]
      %v2079 = vld [vmem:[#allocation2 + $0x148] sm:$0xff]
      %v2080 = vld [vmem:[#allocation2 + $0x150] sm:$0xff]
      %v2081 = vld [vmem:[#allocation2 + $0x158] sm:$0xff]
      %v2082 = vld [vmem:[#allocation2 + $0x160] sm:$0xff]
      %v2083 = vld [vmem:[#allocation2 + $0x168] sm:$0xff]
      %v2084 = vld [vmem:[#allocation2 + $0x170] sm:$0xff]
      %v2085 = vld [vmem:[#allocation2 + $0x178] sm:$0xff]
      %v2086 = vld [vmem:[#allocation2 + $0x180] sm:$0xff]
      %v2087 = vld [vmem:[#allocation2 + $0x188] sm:$0xff]
      %v2088 = vld [vmem:[#allocation2 + $0x190] sm:$0xff]
      %v2089 = vld [vmem:[#allocation2 + $0x198] sm:$0xff]
      %v2090 = vld [vmem:[#allocation2 + $0x1a0] sm:$0xff]
      %v2091 = vld [vmem:[#allocation2 + $0x1a8] sm:$0xff]
      %v2092 = vld [vmem:[#allocation2 + $0x1b0] sm:$0xff]
      %v2093 = vld [vmem:[#allocation2 + $0x1b8] sm:$0xff]
      %v2094 = vld [vmem:[#allocation2 + $0x1c0] sm:$0xff]
      %v2095 = vld [vmem:[#allocation2 + $0x1c8] sm:$0xff]
      %v2096 = vld [vmem:[#allocation2 + $0x1d0] sm:$0xff]
      %v2097 = vld [vmem:[#allocation2 + $0x1d8] sm:$0xff]
      %v2098 = vld [vmem:[#allocation2 + $0x1e0] sm:$0xff]
      %v2099 = vld [vmem:[#allocation2 + $0x1e8] sm:$0xff]
      %v2100 = vld [vmem:[#allocation2 + $0x1f0] sm:$0xff]
      %v2101 = vld [vmem:[#allocation2 + $0x1f8] sm:$0xff]
      %v2102 = vld [vmem:[#allocation2 + $0x200] sm:$0xff]
      %v2103 = vld [vmem:[#allocation2 + $0x208] sm:$0xff]
      %v2104 = vld [vmem:[#allocation2 + $0x210] sm:$0xff]
      %v2105 = vld [vmem:[#allocation2 + $0x218] sm:$0xff]
      %v2106 = vld [vmem:[#allocation2 + $0x220] sm:$0xff]
      %v2107 = vld [vmem:[#allocation2 + $0x228] sm:$0xff]
      %v2108 = vld [vmem:[#allocation2 + $0x230] sm:$0xff]
      %v2109 = vld [vmem:[#allocation2 + $0x238] sm:$0xff]
      %v2110 = vld [vmem:[%s4] sm:$0xff]
      %2112 = vset.pattern.permute.xlu0 0
      %2113 = vperm.xlu0 %2112, %v2110
      %v2114 = vpop.permute.xlu0 %2113
      %v2117 = vsel %vm1181, %v2037, 0
      %2119 = vmatprep.subr.mxu0 %v2039
      %2120 = vmatpush1.msra.mxu0 %v2038
      %2121 = vmatprep.subr.mxu0 %v2047
      %2122 = vmatpush1.msra.mxu0 %v2046
      %2123 = vmatprep.subr.mxu0 %v2055
      %2124 = vmatpush1.msra.mxu0 %v2054
      %2125 = vmatprep.subr.mxu0 %v2063
      %2126 = vmatpush1.msra.mxu0 %v2062
      %2127 = vmatprep.subr.mxu0 %v2071
      %2128 = vmatpush1.msra.mxu0 %v2070
      %2129 = vmatprep.subr.mxu0 %v2079
      %2130 = vmatpush1.msra.mxu0 %v2078
      %2131 = vmatprep.subr.mxu0 %v2087
      %2132 = vmatpush1.msra.mxu0 %v2086
      %2133 = vmatprep.subr.mxu0 %v2095
      %2134 = vmatpush1.msra.mxu0 %v2094
      %2135 = vmatprep.subr.mxu0 %v2103
      %2136 = vmatpush1.msra.mxu0 %v2102
      %2137 = vmatprep.subr.mxu0 0.0
      %2138 = vmatpush1.msra.mxu0 0.0
      %2139 = vmatprep.subr.mxu0 0.0
      %2140 = vmatpush1.msra.mxu0 0.0
      %2141 = vmatprep.subr.mxu0 0.0
      %2142 = vmatpush1.msra.mxu0 0.0
      %2143 = vmatprep.subr.mxu0 0.0
      %2144 = vmatpush1.msra.mxu0 0.0
      %2145 = vmatprep.subr.mxu0 0.0
      %2146 = vmatpush1.msra.mxu0 0.0
      %2147 = vmatprep.subr.mxu0 0.0
      %2148 = vmatpush1.msra.mxu0 0.0
      %2149 = vmatprep.subr.mxu0 0.0
      %2150 = vmatpush1.msra.mxu0 0.0
      %2151 = vmatprep.subr.mxu0 0.0
      %2152 = vmatpush1.msra.mxu0 0.0
      %2153 = vmatprep.subr.mxu0 0.0
      %2154 = vmatpush1.msra.mxu0 0.0
      %2155 = vmatprep.subr.mxu0 0.0
      %2156 = vmatpush1.msra.mxu0 0.0
      %2157 = vmatprep.subr.mxu0 0.0
      %2158 = vmatpush1.msra.mxu0 0.0
      %2159 = vmatprep.subr.mxu0 0.0
      %2160 = vmatpush1.msra.mxu0 0.0
      %2161 = vmatprep.subr.mxu0 0.0
      %2162 = vmatpush1.msra.mxu0 0.0
      %2163 = vmatprep.subr.mxu0 0.0
      %2164 = vmatpush1.msra.mxu0 0.0
      %2165 = vmatprep.subr.mxu0 0.0
      %2166 = vmatpush1.msra.mxu0 0.0
      %2167 = vmatprep.subr.mxu0 0.0
      %2168 = vmatpush1.msra.mxu0 0.0
      %2169 = vmatprep.subr.mxu0 0.0
      %2170 = vmatpush1.msra.mxu0 0.0
      %2171 = vmatprep.subr.mxu0 0.0
      %2172 = vmatpush1.msra.mxu0 0.0
      %2173 = vmatprep.subr.mxu0 0.0
      %2174 = vmatpush1.msra.mxu0 0.0
      %2175 = vmatprep.subr.mxu0 0.0
      %2176 = vmatpush1.msra.mxu0 0.0
      %2177 = vmatprep.subr.mxu0 0.0
      %2178 = vmatpush1.msra.mxu0 0.0
      %2179 = vmatprep.subr.mxu0 0.0
      %2180 = vmatpush1.msra.mxu0 0.0
      %2181 = vmatprep.subr.mxu0 0.0
      %2182 = vmatpush1.msra.mxu0 0.0
      %2183 = vmatprep.mubr.f32.mxu0 0.0
      %2184 = vmatmul.mubr.f32.gmra.mrb[0].mxu0 %v2117
      %v2185 = vpop.f32.mrb[0].mxu0
      %v2186 = vadd.f32 %v2114, %v2185
      %v2187 = vpop.f32.mrb[0].mxu0
      %v2188 = vadd.f32 %v2114, %v2187
      %2189 = vdwg.mxu0
      %2190 = vmatprep.subr.mxu0 %v2041
      %2191 = vmatpush1.msra.mxu0 %v2040
      %2192 = vmatprep.subr.mxu0 %v2049
      %2193 = vmatpush1.msra.mxu0 %v2048
      %2194 = vmatprep.subr.mxu0 %v2057
      %2195 = vmatpush1.msra.mxu0 %v2056
      %2196 = vmatprep.subr.mxu0 %v2065
      %2197 = vmatpush1.msra.mxu0 %v2064
      %2198 = vmatprep.subr.mxu0 %v2073
      %2199 = vmatpush1.msra.mxu0 %v2072
      %2200 = vmatprep.subr.mxu0 %v2081
      %2201 = vmatpush1.msra.mxu0 %v2080
      %2202 = vmatprep.subr.mxu0 %v2089
      %2203 = vmatpush1.msra.mxu0 %v2088
      %2204 = vmatprep.subr.mxu0 %v2097
      %2205 = vmatpush1.msra.mxu0 %v2096
      %2206 = vmatprep.subr.mxu0 %v2105
      %2207 = vmatpush1.msra.mxu0 %v2104
      %2208 = vmatprep.subr.mxu0 0.0
      %2209 = vmatpush1.msra.mxu0 0.0
      %2210 = vmatprep.subr.mxu0 0.0
      %2211 = vmatpush1.msra.mxu0 0.0
      %2212 = vmatprep.subr.mxu0 0.0
      %2213 = vmatpush1.msra.mxu0 0.0
      %2214 = vmatprep.subr.mxu0 0.0
      %2215 = vmatpush1.msra.mxu0 0.0
      %2216 = vmatprep.subr.mxu0 0.0
      %2217 = vmatpush1.msra.mxu0 0.0
      %2218 = vmatprep.subr.mxu0 0.0
      %2219 = vmatpush1.msra.mxu0 0.0
      %2220 = vmatprep.subr.mxu0 0.0
      %2221 = vmatpush1.msra.mxu0 0.0
      %2222 = vmatprep.subr.mxu0 0.0
      %2223 = vmatpush1.msra.mxu0 0.0
      %2224 = vmatprep.subr.mxu0 0.0
      %2225 = vmatpush1.msra.mxu0 0.0
      %2226 = vmatprep.subr.mxu0 0.0
      %2227 = vmatpush1.msra.mxu0 0.0
      %2228 = vmatprep.subr.mxu0 0.0
      %2229 = vmatpush1.msra.mxu0 0.0
      %2230 = vmatprep.subr.mxu0 0.0
      %2231 = vmatpush1.msra.mxu0 0.0
      %2232 = vmatprep.subr.mxu0 0.0
      %2233 = vmatpush1.msra.mxu0 0.0
      %2234 = vmatprep.subr.mxu0 0.0
      %2235 = vmatpush1.msra.mxu0 0.0
      %2236 = vmatprep.subr.mxu0 0.0
      %2237 = vmatpush1.msra.mxu0 0.0
      %2238 = vmatprep.subr.mxu0 0.0
      %2239 = vmatpush1.msra.mxu0 0.0
      %2240 = vmatprep.subr.mxu0 0.0
      %2241 = vmatpush1.msra.mxu0 0.0
      %2242 = vmatprep.subr.mxu0 0.0
      %2243 = vmatpush1.msra.mxu0 0.0
      %2244 = vmatprep.subr.mxu0 0.0
      %2245 = vmatpush1.msra.mxu0 0.0
      %2246 = vmatprep.subr.mxu0 0.0
      %2247 = vmatpush1.msra.mxu0 0.0
      %2248 = vmatprep.subr.mxu0 0.0
      %2249 = vmatpush1.msra.mxu0 0.0
      %2250 = vmatprep.subr.mxu0 0.0
      %2251 = vmatpush1.msra.mxu0 0.0
      %2252 = vmatprep.subr.mxu0 0.0
      %2253 = vmatpush1.msra.mxu0 0.0
      %2254 = vmatprep.mubr.f32.mxu0 0.0
      %2255 = vmatmul.mubr.f32.gmra.mrb[0].mxu0 %v2117
      %v2256 = vpop.f32.mrb[0].mxu0
      %v2257 = vadd.f32 %v2114, %v2256
      %v2258 = vpop.f32.mrb[0].mxu0
      %v2259 = vadd.f32 %v2114, %v2258
      %2260 = vdwg.mxu0
      %2261 = vmatprep.subr.mxu0 %v2043
      %2262 = vmatpush1.msra.mxu0 %v2042
      %2263 = vmatprep.subr.mxu0 %v2051
      %2264 = vmatpush1.msra.mxu0 %v2050
      %2265 = vmatprep.subr.mxu0 %v2059
      %2266 = vmatpush1.msra.mxu0 %v2058
      %2267 = vmatprep.subr.mxu0 %v2067
      %2268 = vmatpush1.msra.mxu0 %v2066
      %2269 = vmatprep.subr.mxu0 %v2075
      %2270 = vmatpush1.msra.mxu0 %v2074
      %2271 = vmatprep.subr.mxu0 %v2083
      %2272 = vmatpush1.msra.mxu0 %v2082
      %2273 = vmatprep.subr.mxu0 %v2091
      %2274 = vmatpush1.msra.mxu0 %v2090
      %2275 = vmatprep.subr.mxu0 %v2099
      %2276 = vmatpush1.msra.mxu0 %v2098
      %2277 = vmatprep.subr.mxu0 %v2107
      %2278 = vmatpush1.msra.mxu0 %v2106
      %2279 = vmatprep.subr.mxu0 0.0
      %2280 = vmatpush1.msra.mxu0 0.0
      %2281 = vmatprep.subr.mxu0 0.0
      %2282 = vmatpush1.msra.mxu0 0.0
      %2283 = vmatprep.subr.mxu0 0.0
      %2284 = vmatpush1.msra.mxu0 0.0
      %2285 = vmatprep.subr.mxu0 0.0
      %2286 = vmatpush1.msra.mxu0 0.0
      %2287 = vmatprep.subr.mxu0 0.0
      %2288 = vmatpush1.msra.mxu0 0.0
      %2289 = vmatprep.subr.mxu0 0.0
      %2290 = vmatpush1.msra.mxu0 0.0
      %2291 = vmatprep.subr.mxu0 0.0
      %2292 = vmatpush1.msra.mxu0 0.0
      %2293 = vmatprep.subr.mxu0 0.0
      %2294 = vmatpush1.msra.mxu0 0.0
      %2295 = vmatprep.subr.mxu0 0.0
      %2296 = vmatpush1.msra.mxu0 0.0
      %2297 = vmatprep.subr.mxu0 0.0
      %2298 = vmatpush1.msra.mxu0 0.0
      %2299 = vmatprep.subr.mxu0 0.0
      %2300 = vmatpush1.msra.mxu0 0.0
      %2301 = vmatprep.subr.mxu0 0.0
      %2302 = vmatpush1.msra.mxu0 0.0
      %2303 = vmatprep.subr.mxu0 0.0
      %2304 = vmatpush1.msra.mxu0 0.0
      %2305 = vmatprep.subr.mxu0 0.0
      %2306 = vmatpush1.msra.mxu0 0.0
      %2307 = vmatprep.subr.mxu0 0.0
      %2308 = vmatpush1.msra.mxu0 0.0
      %2309 = vmatprep.subr.mxu0 0.0
      %2310 = vmatpush1.msra.mxu0 0.0
      %2311 = vmatprep.subr.mxu0 0.0
      %2312 = vmatpush1.msra.mxu0 0.0
      %2313 = vmatprep.subr.mxu0 0.0
      %2314 = vmatpush1.msra.mxu0 0.0
      %2315 = vmatprep.subr.mxu0 0.0
      %2316 = vmatpush1.msra.mxu0 0.0
      %2317 = vmatprep.subr.mxu0 0.0
      %2318 = vmatpush1.msra.mxu0 0.0
      %2319 = vmatprep.subr.mxu0 0.0
      %2320 = vmatpush1.msra.mxu0 0.0
      %2321 = vmatprep.subr.mxu0 0.0
      %2322 = vmatpush1.msra.mxu0 0.0
      %2323 = vmatprep.subr.mxu0 0.0
      %2324 = vmatpush1.msra.mxu0 0.0
      %2325 = vmatprep.mubr.f32.mxu0 0.0
      %2326 = vmatmul.mubr.f32.gmra.mrb[0].mxu0 %v2117
      %v2327 = vpop.f32.mrb[0].mxu0
      %v2328 = vadd.f32 %v2114, %v2327
      %v2329 = vpop.f32.mrb[0].mxu0
      %v2330 = vadd.f32 %v2114, %v2329
      %2331 = vdwg.mxu0
      %2332 = vmatprep.subr.mxu0 %v2045
      %2333 = vmatpush1.msra.mxu0 %v2044
      %2334 = vmatprep.subr.mxu0 %v2053
      %2335 = vmatpush1.msra.mxu0 %v2052
      %2336 = vmatprep.subr.mxu0 %v2061
      %2337 = vmatpush1.msra.mxu0 %v2060
      %2338 = vmatprep.subr.mxu0 %v2069
      %2339 = vmatpush1.msra.mxu0 %v2068
      %2340 = vmatprep.subr.mxu0 %v2077
      %2341 = vmatpush1.msra.mxu0 %v2076
      %2342 = vmatprep.subr.mxu0 %v2085
      %2343 = vmatpush1.msra.mxu0 %v2084
      %2344 = vmatprep.subr.mxu0 %v2093
      %2345 = vmatpush1.msra.mxu0 %v2092
      %2346 = vmatprep.subr.mxu0 %v2101
      %2347 = vmatpush1.msra.mxu0 %v2100
      %2348 = vmatprep.subr.mxu0 %v2109
      %2349 = vmatpush1.msra.mxu0 %v2108
      %2350 = vmatprep.subr.mxu0 0.0
      %2351 = vmatpush1.msra.mxu0 0.0
      %2352 = vmatprep.subr.mxu0 0.0
      %2353 = vmatpush1.msra.mxu0 0.0
      %2354 = vmatprep.subr.mxu0 0.0
      %2355 = vmatpush1.msra.mxu0 0.0
      %2356 = vmatprep.subr.mxu0 0.0
      %2357 = vmatpush1.msra.mxu0 0.0
      %2358 = vmatprep.subr.mxu0 0.0
      %2359 = vmatpush1.msra.mxu0 0.0
      %2360 = vmatprep.subr.mxu0 0.0
      %2361 = vmatpush1.msra.mxu0 0.0
      %2362 = vmatprep.subr.mxu0 0.0
      %2363 = vmatpush1.msra.mxu0 0.0
      %2364 = vmatprep.subr.mxu0 0.0
      %2365 = vmatpush1.msra.mxu0 0.0
      %2366 = vmatprep.subr.mxu0 0.0
      %2367 = vmatpush1.msra.mxu0 0.0
      %2368 = vmatprep.subr.mxu0 0.0
      %2369 = vmatpush1.msra.mxu0 0.0
      %2370 = vmatprep.subr.mxu0 0.0
      %2371 = vmatpush1.msra.mxu0 0.0
      %2372 = vmatprep.subr.mxu0 0.0
      %2373 = vmatpush1.msra.mxu0 0.0
      %2374 = vmatprep.subr.mxu0 0.0
      %2375 = vmatpush1.msra.mxu0 0.0
      %2376 = vmatprep.subr.mxu0 0.0
      %2377 = vmatpush1.msra.mxu0 0.0
      %2378 = vmatprep.subr.mxu0 0.0
      %2379 = vmatpush1.msra.mxu0 0.0
      %2380 = vmatprep.subr.mxu0 0.0
      %2381 = vmatpush1.msra.mxu0 0.0
      %2382 = vmatprep.subr.mxu0 0.0
      %2383 = vmatpush1.msra.mxu0 0.0
      %2384 = vmatprep.subr.mxu0 0.0
      %2385 = vmatpush1.msra.mxu0 0.0
      %2386 = vmatprep.subr.mxu0 0.0
      %2387 = vmatpush1.msra.mxu0 0.0
      %2388 = vmatprep.subr.mxu0 0.0
      %2389 = vmatpush1.msra.mxu0 0.0
      %2390 = vmatprep.subr.mxu0 0.0
      %2391 = vmatpush1.msra.mxu0 0.0
      %2392 = vmatprep.subr.mxu0 0.0
      %2393 = vmatpush1.msra.mxu0 0.0
      %2394 = vmatprep.subr.mxu0 0.0
      %2395 = vmatpush1.msra.mxu0 0.0
      %2396 = vmatprep.mubr.f32.mxu0 0.0
      %2397 = vmatmul.mubr.f32.gmra.mrb[0].mxu0 %v2117
      %v2398 = vpop.f32.mrb[0].mxu0
      %v2399 = vadd.f32 %v2114, %v2398
      %v2400 = vpop.f32.mrb[0].mxu0
      %v2401 = vadd.f32 %v2114, %v2400
      %2402 = vdwg.mxu0
      %v2403 = vadd.f32 %v2186, %v301
      %v2404 = vadd.f32 %v2188, %v302
      %v2405 = vadd.f32 %v2257, %v303
      %v2406 = vadd.f32 %v2259, %v304
      %v2407 = vadd.f32 %v2328, %v305
      %v2408 = vadd.f32 %v2330, %v306
      %v2409 = vadd.f32 %v2399, %v307
      %v2410 = vadd.f32 %v2401, %v308
      %v2411 = vmax.f32 %v2403, 0.0
      %v2412 = vmax.f32 %v2404, 0.0
      %v2413 = vmax.f32 %v2405, 0.0
      %v2414 = vmax.f32 %v2406, 0.0
      %v2415 = vmax.f32 %v2407, 0.0
      %v2416 = vmax.f32 %v2408, 0.0
      %v2417 = vmax.f32 %v2409, 0.0
      %v2418 = vmax.f32 %v2410, 0.0
      %v2419 = vld [vmem:[%s5] sm:$0x3]
      %v2420 = vld [vmem:[%s6] sm:$0x3]
      %2422 = vset.pattern.permute.xlu0 0
      %2423 = vperm.xlu0 %2422, %v2420
      %v2424 = vpop.permute.xlu0 %2423
      %vm2426 = vcmask 64512
      %v2428 = vsel %vm2426, %v2419, 0
      %2430 = vmatprep.subr.mxu0 %v2412
      %2431 = vmatpush1.msra.mxu0 %v2411
      %2432 = vmatprep.subr.mxu0 0.0
      %2433 = vmatpush1.msra.mxu0 0.0
      %2434 = vmatprep.subr.mxu0 0.0
      %2435 = vmatpush1.msra.mxu0 0.0
      %2436 = vmatprep.subr.mxu0 0.0
      %2437 = vmatpush1.msra.mxu0 0.0
      %2438 = vmatprep.subr.mxu0 0.0
      %2439 = vmatpush1.msra.mxu0 0.0
      %2440 = vmatprep.subr.mxu0 0.0
      %2441 = vmatpush1.msra.mxu0 0.0
      %2442 = vmatprep.subr.mxu0 0.0
      %2443 = vmatpush1.msra.mxu0 0.0
      %2444 = vmatprep.subr.mxu0 0.0
      %2445 = vmatpush1.msra.mxu0 0.0
      %2446 = vmatprep.subr.mxu0 0.0
      %2447 = vmatpush1.msra.mxu0 0.0
      %2448 = vmatprep.subr.mxu0 0.0
      %2449 = vmatpush1.msra.mxu0 0.0
      %2450 = vmatprep.subr.mxu0 0.0
      %2451 = vmatpush1.msra.mxu0 0.0
      %2452 = vmatprep.subr.mxu0 0.0
      %2453 = vmatpush1.msra.mxu0 0.0
      %2454 = vmatprep.subr.mxu0 0.0
      %2455 = vmatpush1.msra.mxu0 0.0
      %2456 = vmatprep.subr.mxu0 0.0
      %2457 = vmatpush1.msra.mxu0 0.0
      %2458 = vmatprep.subr.mxu0 0.0
      %2459 = vmatpush1.msra.mxu0 0.0
      %2460 = vmatprep.subr.mxu0 0.0
      %2461 = vmatpush1.msra.mxu0 0.0
      %2462 = vmatprep.subr.mxu0 0.0
      %2463 = vmatpush1.msra.mxu0 0.0
      %2464 = vmatprep.subr.mxu0 0.0
      %2465 = vmatpush1.msra.mxu0 0.0
      %2466 = vmatprep.subr.mxu0 0.0
      %2467 = vmatpush1.msra.mxu0 0.0
      %2468 = vmatprep.subr.mxu0 0.0
      %2469 = vmatpush1.msra.mxu0 0.0
      %2470 = vmatprep.subr.mxu0 0.0
      %2471 = vmatpush1.msra.mxu0 0.0
      %2472 = vmatprep.subr.mxu0 0.0
      %2473 = vmatpush1.msra.mxu0 0.0
      %2474 = vmatprep.subr.mxu0 0.0
      %2475 = vmatpush1.msra.mxu0 0.0
      %2476 = vmatprep.subr.mxu0 0.0
      %2477 = vmatpush1.msra.mxu0 0.0
      %2478 = vmatprep.subr.mxu0 0.0
      %2479 = vmatpush1.msra.mxu0 0.0
      %2480 = vmatprep.subr.mxu0 0.0
      %2481 = vmatpush1.msra.mxu0 0.0
      %2482 = vmatprep.subr.mxu0 0.0
      %2483 = vmatpush1.msra.mxu0 0.0
      %2484 = vmatprep.subr.mxu0 0.0
      %2485 = vmatpush1.msra.mxu0 0.0
      %2486 = vmatprep.subr.mxu0 0.0
      %2487 = vmatpush1.msra.mxu0 0.0
      %2488 = vmatprep.subr.mxu0 0.0
      %2489 = vmatpush1.msra.mxu0 0.0
      %2490 = vmatprep.subr.mxu0 0.0
      %2491 = vmatpush1.msra.mxu0 0.0
      %2492 = vmatprep.subr.mxu0 0.0
      %2493 = vmatpush1.msra.mxu0 0.0
      %2494 = vmatprep.mubr.f32.mxu0 0.0
      %2495 = vmatmul.mubr.f32.gmra.mrb[0].mxu0 %v2428
      %v2496 = vpop.f32.mrb[0].mxu0
      %v2497 = vadd.f32 %v2424, %v2496
      %v2498 = vpop.f32.mrb[0].mxu0
      %v2499 = vadd.f32 %v2424, %v2498
      %2500 = vdwg.mxu0
      %2501 = vmatprep.subr.mxu0 %v2414
      %2502 = vmatpush1.msra.mxu0 %v2413
      %2503 = vmatprep.subr.mxu0 0.0
      %2504 = vmatpush1.msra.mxu0 0.0
      %2505 = vmatprep.subr.mxu0 0.0
      %2506 = vmatpush1.msra.mxu0 0.0
      %2507 = vmatprep.subr.mxu0 0.0
      %2508 = vmatpush1.msra.mxu0 0.0
      %2509 = vmatprep.subr.mxu0 0.0
      %2510 = vmatpush1.msra.mxu0 0.0
      %2511 = vmatprep.subr.mxu0 0.0
      %2512 = vmatpush1.msra.mxu0 0.0
      %2513 = vmatprep.subr.mxu0 0.0
      %2514 = vmatpush1.msra.mxu0 0.0
      %2515 = vmatprep.subr.mxu0 0.0
      %2516 = vmatpush1.msra.mxu0 0.0
      %2517 = vmatprep.subr.mxu0 0.0
      %2518 = vmatpush1.msra.mxu0 0.0
      %2519 = vmatprep.subr.mxu0 0.0
      %2520 = vmatpush1.msra.mxu0 0.0
      %2521 = vmatprep.subr.mxu0 0.0
      %2522 = vmatpush1.msra.mxu0 0.0
      %2523 = vmatprep.subr.mxu0 0.0
      %2524 = vmatpush1.msra.mxu0 0.0
      %2525 = vmatprep.subr.mxu0 0.0
      %2526 = vmatpush1.msra.mxu0 0.0
      %2527 = vmatprep.subr.mxu0 0.0
      %2528 = vmatpush1.msra.mxu0 0.0
      %2529 = vmatprep.subr.mxu0 0.0
      %2530 = vmatpush1.msra.mxu0 0.0
      %2531 = vmatprep.subr.mxu0 0.0
      %2532 = vmatpush1.msra.mxu0 0.0
      %2533 = vmatprep.subr.mxu0 0.0
      %2534 = vmatpush1.msra.mxu0 0.0
      %2535 = vmatprep.subr.mxu0 0.0
      %2536 = vmatpush1.msra.mxu0 0.0
      %2537 = vmatprep.subr.mxu0 0.0
      %2538 = vmatpush1.msra.mxu0 0.0
      %2539 = vmatprep.subr.mxu0 0.0
      %2540 = vmatpush1.msra.mxu0 0.0
      %2541 = vmatprep.subr.mxu0 0.0
      %2542 = vmatpush1.msra.mxu0 0.0
      %2543 = vmatprep.subr.mxu0 0.0
      %2544 = vmatpush1.msra.mxu0 0.0
      %2545 = vmatprep.subr.mxu0 0.0
      %2546 = vmatpush1.msra.mxu0 0.0
      %2547 = vmatprep.subr.mxu0 0.0
      %2548 = vmatpush1.msra.mxu0 0.0
      %2549 = vmatprep.subr.mxu0 0.0
      %2550 = vmatpush1.msra.mxu0 0.0
      %2551 = vmatprep.subr.mxu0 0.0
      %2552 = vmatpush1.msra.mxu0 0.0
      %2553 = vmatprep.subr.mxu0 0.0
      %2554 = vmatpush1.msra.mxu0 0.0
      %2555 = vmatprep.subr.mxu0 0.0
      %2556 = vmatpush1.msra.mxu0 0.0
      %2557 = vmatprep.subr.mxu0 0.0
      %2558 = vmatpush1.msra.mxu0 0.0
      %2559 = vmatprep.subr.mxu0 0.0
      %2560 = vmatpush1.msra.mxu0 0.0
      %2561 = vmatprep.subr.mxu0 0.0
      %2562 = vmatpush1.msra.mxu0 0.0
      %2563 = vmatprep.subr.mxu0 0.0
      %2564 = vmatpush1.msra.mxu0 0.0
      %2565 = vmatprep.mubr.f32.mxu0 0.0
      %2566 = vmatmul.mubr.f32.gmra.mrb[0].mxu0 %v2428
      %v2567 = vpop.f32.mrb[0].mxu0
      %v2568 = vadd.f32 %v2424, %v2567
      %v2569 = vpop.f32.mrb[0].mxu0
      %v2570 = vadd.f32 %v2424, %v2569
      %2571 = vdwg.mxu0
      %2572 = vmatprep.subr.mxu0 %v2416
      %2573 = vmatpush1.msra.mxu0 %v2415
      %2574 = vmatprep.subr.mxu0 0.0
      %2575 = vmatpush1.msra.mxu0 0.0
      %2576 = vmatprep.subr.mxu0 0.0
      %2577 = vmatpush1.msra.mxu0 0.0
      %2578 = vmatprep.subr.mxu0 0.0
      %2579 = vmatpush1.msra.mxu0 0.0
      %2580 = vmatprep.subr.mxu0 0.0
      %2581 = vmatpush1.msra.mxu0 0.0
      %2582 = vmatprep.subr.mxu0 0.0
      %2583 = vmatpush1.msra.mxu0 0.0
      %2584 = vmatprep.subr.mxu0 0.0
      %2585 = vmatpush1.msra.mxu0 0.0
      %2586 = vmatprep.subr.mxu0 0.0
      %2587 = vmatpush1.msra.mxu0 0.0
      %2588 = vmatprep.subr.mxu0 0.0
      %2589 = vmatpush1.msra.mxu0 0.0
      %2590 = vmatprep.subr.mxu0 0.0
      %2591 = vmatpush1.msra.mxu0 0.0
      %2592 = vmatprep.subr.mxu0 0.0
      %2593 = vmatpush1.msra.mxu0 0.0
      %2594 = vmatprep.subr.mxu0 0.0
      %2595 = vmatpush1.msra.mxu0 0.0
      %2596 = vmatprep.subr.mxu0 0.0
      %2597 = vmatpush1.msra.mxu0 0.0
      %2598 = vmatprep.subr.mxu0 0.0
      %2599 = vmatpush1.msra.mxu0 0.0
      %2600 = vmatprep.subr.mxu0 0.0
      %2601 = vmatpush1.msra.mxu0 0.0
      %2602 = vmatprep.subr.mxu0 0.0
      %2603 = vmatpush1.msra.mxu0 0.0
      %2604 = vmatprep.subr.mxu0 0.0
      %2605 = vmatpush1.msra.mxu0 0.0
      %2606 = vmatprep.subr.mxu0 0.0
      %2607 = vmatpush1.msra.mxu0 0.0
      %2608 = vmatprep.subr.mxu0 0.0
      %2609 = vmatpush1.msra.mxu0 0.0
      %2610 = vmatprep.subr.mxu0 0.0
      %2611 = vmatpush1.msra.mxu0 0.0
      %2612 = vmatprep.subr.mxu0 0.0
      %2613 = vmatpush1.msra.mxu0 0.0
      %2614 = vmatprep.subr.mxu0 0.0
      %2615 = vmatpush1.msra.mxu0 0.0
      %2616 = vmatprep.subr.mxu0 0.0
      %2617 = vmatpush1.msra.mxu0 0.0
      %2618 = vmatprep.subr.mxu0 0.0
      %2619 = vmatpush1.msra.mxu0 0.0
      %2620 = vmatprep.subr.mxu0 0.0
      %2621 = vmatpush1.msra.mxu0 0.0
      %2622 = vmatprep.subr.mxu0 0.0
      %2623 = vmatpush1.msra.mxu0 0.0
      %2624 = vmatprep.subr.mxu0 0.0
      %2625 = vmatpush1.msra.mxu0 0.0
      %2626 = vmatprep.subr.mxu0 0.0
      %2627 = vmatpush1.msra.mxu0 0.0
      %2628 = vmatprep.subr.mxu0 0.0
      %2629 = vmatpush1.msra.mxu0 0.0
      %2630 = vmatprep.subr.mxu0 0.0
      %2631 = vmatpush1.msra.mxu0 0.0
      %2632 = vmatprep.subr.mxu0 0.0
      %2633 = vmatpush1.msra.mxu0 0.0
      %2634 = vmatprep.subr.mxu0 0.0
      %2635 = vmatpush1.msra.mxu0 0.0
      %2636 = vmatprep.mubr.f32.mxu0 0.0
      %2637 = vmatmul.mubr.f32.gmra.mrb[0].mxu0 %v2428
      %v2638 = vpop.f32.mrb[0].mxu0
      %v2639 = vadd.f32 %v2424, %v2638
      %v2640 = vpop.f32.mrb[0].mxu0
      %v2641 = vadd.f32 %v2424, %v2640
      %2642 = vdwg.mxu0
      %2643 = vmatprep.subr.mxu0 %v2418
      %2644 = vmatpush1.msra.mxu0 %v2417
      %2645 = vmatprep.subr.mxu0 0.0
      %2646 = vmatpush1.msra.mxu0 0.0
      %2647 = vmatprep.subr.mxu0 0.0
      %2648 = vmatpush1.msra.mxu0 0.0
      %2649 = vmatprep.subr.mxu0 0.0
      %2650 = vmatpush1.msra.mxu0 0.0
      %2651 = vmatprep.subr.mxu0 0.0
      %2652 = vmatpush1.msra.mxu0 0.0
      %2653 = vmatprep.subr.mxu0 0.0
      %2654 = vmatpush1.msra.mxu0 0.0
      %2655 = vmatprep.subr.mxu0 0.0
      %2656 = vmatpush1.msra.mxu0 0.0
      %2657 = vmatprep.subr.mxu0 0.0
      %2658 = vmatpush1.msra.mxu0 0.0
      %2659 = vmatprep.subr.mxu0 0.0
      %2660 = vmatpush1.msra.mxu0 0.0
      %2661 = vmatprep.subr.mxu0 0.0
      %2662 = vmatpush1.msra.mxu0 0.0
      %2663 = vmatprep.subr.mxu0 0.0
      %2664 = vmatpush1.msra.mxu0 0.0
      %2665 = vmatprep.subr.mxu0 0.0
      %2666 = vmatpush1.msra.mxu0 0.0
      %2667 = vmatprep.subr.mxu0 0.0
      %2668 = vmatpush1.msra.mxu0 0.0
      %2669 = vmatprep.subr.mxu0 0.0
      %2670 = vmatpush1.msra.mxu0 0.0
      %2671 = vmatprep.subr.mxu0 0.0
      %2672 = vmatpush1.msra.mxu0 0.0
      %2673 = vmatprep.subr.mxu0 0.0
      %2674 = vmatpush1.msra.mxu0 0.0
      %2675 = vmatprep.subr.mxu0 0.0
      %2676 = vmatpush1.msra.mxu0 0.0
      %2677 = vmatprep.subr.mxu0 0.0
      %2678 = vmatpush1.msra.mxu0 0.0
      %2679 = vmatprep.subr.mxu0 0.0
      %2680 = vmatpush1.msra.mxu0 0.0
      %2681 = vmatprep.subr.mxu0 0.0
      %2682 = vmatpush1.msra.mxu0 0.0
      %2683 = vmatprep.subr.mxu0 0.0
      %2684 = vmatpush1.msra.mxu0 0.0
      %2685 = vmatprep.subr.mxu0 0.0
      %2686 = vmatpush1.msra.mxu0 0.0
      %2687 = vmatprep.subr.mxu0 0.0
      %2688 = vmatpush1.msra.mxu0 0.0
      %2689 = vmatprep.subr.mxu0 0.0
      %2690 = vmatpush1.msra.mxu0 0.0
      %2691 = vmatprep.subr.mxu0 0.0
      %2692 = vmatpush1.msra.mxu0 0.0
      %2693 = vmatprep.subr.mxu0 0.0
      %2694 = vmatpush1.msra.mxu0 0.0
      %2695 = vmatprep.subr.mxu0 0.0
      %2696 = vmatpush1.msra.mxu0 0.0
      %2697 = vmatprep.subr.mxu0 0.0
      %2698 = vmatpush1.msra.mxu0 0.0
      %2699 = vmatprep.subr.mxu0 0.0
      %2700 = vmatpush1.msra.mxu0 0.0
      %2701 = vmatprep.subr.mxu0 0.0
      %2702 = vmatpush1.msra.mxu0 0.0
      %2703 = vmatprep.subr.mxu0 0.0
      %2704 = vmatpush1.msra.mxu0 0.0
      %2705 = vmatprep.subr.mxu0 0.0
      %2706 = vmatpush1.msra.mxu0 0.0
      %2707 = vmatprep.mubr.f32.mxu0 0.0
      %2708 = vmatmul.mubr.f32.gmra.mrb[0].mxu0 %v2428
      %v2709 = vpop.f32.mrb[0].mxu0
      %v2710 = vadd.f32 %v2424, %v2709
      %v2711 = vpop.f32.mrb[0].mxu0
      %v2712 = vadd.f32 %v2424, %v2711
      %2713 = vdwg.mxu0
      %v2714 = vxor.u32 %v2497, 2147483648
      %v2715 = vxor.u32 %v2499, 2147483648
      %v2716 = vxor.u32 %v2568, 2147483648
      %v2717 = vxor.u32 %v2570, 2147483648
      %v2718 = vxor.u32 %v2639, 2147483648
      %v2719 = vxor.u32 %v2641, 2147483648
      %v2720 = vxor.u32 %v2710, 2147483648
      %v2721 = vxor.u32 %v2712, 2147483648
      %v2722 = vmul.f32 %v2714, 1.442695
      %v2723 = vpow.pop %v2722
      %v2724 = vmul.f32 %v2715, 1.442695
      %v2725 = vpow.pop %v2724
      %v2726 = vmul.f32 %v2716, 1.442695
      %v2727 = vpow.pop %v2726
      %v2728 = vmul.f32 %v2717, 1.442695
      %v2729 = vpow.pop %v2728
      %v2730 = vmul.f32 %v2718, 1.442695
      %v2731 = vpow.pop %v2730
      %v2732 = vmul.f32 %v2719, 1.442695
      %v2733 = vpow.pop %v2732
      %v2734 = vmul.f32 %v2720, 1.442695
      %v2735 = vpow.pop %v2734
      %v2736 = vmul.f32 %v2721, 1.442695
      %v2737 = vpow.pop %v2736
      %v2738 = vadd.f32 %v2723, 1.0
      %v2739 = vadd.f32 %v2725, 1.0
      %v2740 = vadd.f32 %v2727, 1.0
      %v2741 = vadd.f32 %v2729, 1.0
      %v2742 = vadd.f32 %v2731, 1.0
      %v2743 = vadd.f32 %v2733, 1.0
      %v2744 = vadd.f32 %v2735, 1.0
      %v2745 = vadd.f32 %v2737, 1.0
      %v2746 = vrcp.pop %v2738
      %v2747 = vmul.f32 1.0, %v2746
      %v2748 = vrcp.pop %v2739
      %v2749 = vmul.f32 1.0, %v2748
      %v2750 = vrcp.pop %v2740
      %v2751 = vmul.f32 1.0, %v2750
      %v2752 = vrcp.pop %v2741
      %v2753 = vmul.f32 1.0, %v2752
      %v2754 = vrcp.pop %v2742
      %v2755 = vmul.f32 1.0, %v2754
      %v2756 = vrcp.pop %v2743
      %v2757 = vmul.f32 1.0, %v2756
      %v2758 = vrcp.pop %v2744
      %v2759 = vmul.f32 1.0, %v2758
      %v2760 = vrcp.pop %v2745
      %v2761 = vmul.f32 1.0, %v2760
      %v2770 = vcombine.low %v2747, %v2749
      %v2771 = vcombine.low %v2751, %v2753
      %v2773 = vunpack.c.l.s4 1983009808
      %v2774 = vunpack.c.0.s8 %v2773
      %v2775 = vlaneseq
      %v2776 = vshrl.u32 %v2775, 7
      %v2777 = vsub.s32 %v2774, %v2776
      %v2778 = vrot.slane %v2770, %v2777
      %v2780 = vunpack.c.l.s4 1983009808
      %v2781 = vunpack.c.0.s8 %v2780
      %v2782 = vlaneseq
      %v2783 = vshrl.u32 %v2782, 7
      %v2784 = vsub.s32 %v2781, %v2783
      %v2785 = vrot.slane %v2771, %v2784
      %v2786 = vcombine.low %v2778, %v2785
      %v2787 = vcombine.low %v2755, %v2757
      %v2788 = vcombine.low %v2759, %v2761
      %v2790 = vunpack.c.l.s4 1983009808
      %v2791 = vunpack.c.0.s8 %v2790
      %v2792 = vlaneseq
      %v2793 = vshrl.u32 %v2792, 7
      %v2794 = vsub.s32 %v2791, %v2793
      %v2795 = vrot.slane %v2787, %v2794
      %v2797 = vunpack.c.l.s4 1983009808
      %v2798 = vunpack.c.0.s8 %v2797
      %v2799 = vlaneseq
      %v2800 = vshrl.u32 %v2799, 7
      %v2801 = vsub.s32 %v2798, %v2800
      %v2802 = vrot.slane %v2788, %v2801
      %v2803 = vcombine.low %v2795, %v2802
      %2806 = vst [vmem:[%s278] sm:$0xff] %v2786
      %2807 = vst [vmem:[%s278 + $0x8] sm:$0xff] %v2803
      %p2808 = scmp.lt.s32.totalorder %s18, 1
      %s2809 = scalar_select %p2808, %s18, 1
      %s2810 = smul.addr %s2809, 8
      %s2811 = smul.addr %s2810, 2
      %s2812 = scalar_lea.vmem %s7, %s2811
      // Predicated region
      $region49: #{unet_with_backbone.11} parent=47 // pred_check
        %p2813 = pneg %p188
      $region50: #{unet_with_backbone.11} parent=47 // pred_check_branch
        %2815 = sbr.rel (%p2813) target = $region52
      $region51: #{unet_with_backbone.11} parent=47 // pred_region
        _
      $region52: #{unet_with_backbone.11} parent=47 // pred_fallthru
        _
    $region48: #{unet_with_backbone.11} parent=5 // pred_fallthru
      _
    %p2816 = scmp.le.s32.totalorder 2, %s13
    // Predicated region
    $region53: #{unet_with_backbone.11} parent=5 // pred_check
      %p2817 = pneg %p2816
    $region54: #{unet_with_backbone.11} parent=5 // pred_check_branch
      %2819 = sbr.rel (%p2817) target = $region56
    $region55: #{unet_with_backbone.11} parent=5 // pred_region
      %s2820 = ssub.s32 %s13, 2
      // Predicated region
      $region57: #{unet_with_backbone.11} parent=55 // pred_check
        %p2821 = pneg %p194
      $region58: #{unet_with_backbone.11} parent=55 // pred_check_branch
        %2823 = sbr.rel (%p2821) target = $region60
      $region59: #{unet_with_backbone.11} parent=55 // pred_region
        %p2824 = scmp.lt.s32.totalorder %s19, 1
        %s2825 = scalar_select %p2824, %s19, 1
        %s2826 = smul.addr %s2825, 8
        %s2827 = smul.addr %s2826, 2
        %s2828 = scalar_lea.vmem %s7, %s2827
      $region60: #{unet_with_backbone.11} parent=55 // pred_fallthru
        _
    $region56: #{unet_with_backbone.11} parent=5 // pred_fallthru
      _
  $region6: #{unet_with_backbone.11} parent=0 // loop_footer
    %s17 = sadd.s32 1, %s13
  $region7: #{unet_with_backbone.11} parent=0 // loop_footer_branch
    %12 = sbr.rel target = $region3
  $region8: #{unet_with_backbone.11} parent=0 // loop_exit
    _

</llo_original>
